<compile_context>
chip_gen: v7x
topology: tpu7x:2x2x1
jax: 0.10.0
libtpu: 0.0.40
codegen_flags: <defaults>
</compile_context>

<pallas_src>
import functools

import jax
import jax.numpy as jnp
from jax.experimental import pallas as pl
from jax.experimental.pallas import tpu as pltpu


def _expanding_block_kernel(xdil_ref, skip_ref, wt_ref, bt_ref,
                            w2a_ref, w2b_ref, b2_ref, o_ref, tc_ref,
                            *, use_in, negative_slope, eps):
    # xdil_ref: (1, Ho+2, Wo+2, Cin)  dilated+padded input for this batch elem
    # skip_ref: (1, Ho+2, Wo+2, C1)   cropped skip, pre-padded by 1
    # wt_ref:   (3, 3, Cin, C1)       tconv as equivalent forward-conv taps
    # w2a_ref:  (3, 3, C1, C1)        conv2 taps acting on the tconv half
    # w2b_ref:  (3, 3, C1, C1)        conv2 taps acting on the skip half
    # bt_ref/b2_ref: (1, C1)          biases
    # o_ref:    (1, Ho, Wo, C1)
    # tc_ref:   VMEM scratch (Ho+2, Wo+2, C1) — tconv output with zero halo
    _, Ho, Wo, C1 = o_ref.shape
    Cin = xdil_ref.shape[-1]
    n = Ho * Wo

    # ---- transposed conv == 3x3 VALID conv over the dilated/padded input ----
    acc = jnp.zeros((n, C1), jnp.float32)
    for di in range(3):
        for dj in range(3):
            xs = xdil_ref[0, di:di + Ho, dj:dj + Wo, :].reshape(n, Cin)
            acc = acc + jnp.dot(xs, wt_ref[di, dj],
                                preferred_element_type=jnp.float32)
    acc = acc + bt_ref[...]

    # Stash tconv output inside a zero halo so conv2's padding=1 taps read
    # zeros at the border (intermediate never leaves VMEM).
    tc_ref[...] = jnp.zeros_like(tc_ref)
    tc_ref[1:Ho + 1, 1:Wo + 1, :] = acc.reshape(Ho, Wo, C1)

    # ---- conv2 over cat([tconv_out, cropped skip], channels) ----
    acc2 = jnp.zeros((n, C1), jnp.float32)
    for di in range(3):
        for dj in range(3):
            a = tc_ref[di:di + Ho, dj:dj + Wo, :].reshape(n, C1)
            s = skip_ref[0, di:di + Ho, dj:dj + Wo, :].reshape(n, C1)
            acc2 = acc2 + jnp.dot(a, w2a_ref[di, dj],
                                  preferred_element_type=jnp.float32)
            acc2 = acc2 + jnp.dot(s, w2b_ref[di, dj],
                                  preferred_element_type=jnp.float32)
    acc2 = acc2 + b2_ref[...]

    # ---- InstanceNorm2d (affine=False, biased variance) ----
    if use_in:
        mean = jnp.mean(acc2, axis=0, keepdims=True)
        centered = acc2 - mean
        var = jnp.mean(centered * centered, axis=0, keepdims=True)
        acc2 = centered * jax.lax.rsqrt(var + eps)

    # ---- LeakyReLU(negative_slope) ----
    acc2 = jnp.where(acc2 > 0, acc2, negative_slope * acc2)

    o_ref[...] = acc2.reshape(1, Ho, Wo, C1).astype(o_ref.dtype)


@functools.partial(jax.jit, static_argnames=("use_in", "negative_slope", "eps"))
def expanding_block(x, skip_x, wt, bt, w2, b2, *,
                    use_in=True, negative_slope=0.2, eps=1e-5):
    """x: (B, Cin, H, W); skip_x: (B, Cin//2, Hs, Ws);
    wt: (Cin, Cin//2, 3, 3) ConvTranspose2d weight; bt: (Cin//2,);
    w2: (Cin//2, Cin, 3, 3) Conv2d weight;           b2: (Cin//2,)."""
    B, Cin, H, W = x.shape
    C1 = Cin // 2
    Ho, Wo = 2 * H, 2 * W          # tconv output spatial size
    Hd, Wd = Ho + 2, Wo + 2        # dilated/padded size (also scratch halo size)

    # --- layout plumbing in the XLA wrapper (pure data movement) ---
    x_nhwc = jnp.transpose(x, (0, 2, 3, 1))
    # stride-2 zero insertion + (1, 2) spatial padding
    xdil = jnp.zeros((B, Hd, Wd, Cin), x.dtype)
    xdil = xdil.at[:, 1:Ho:2, 1:Wo:2, :].set(x_nhwc)

    # center-crop skip (PyTorch crop()) and pre-pad by 1 for conv2's padding=1
    sy = skip_x.shape[2] // 2 - round(Ho / 2)
    sx = skip_x.shape[3] // 2 - round(Wo / 2)
    skip_c = skip_x[:, :, sy:sy + Ho, sx:sx + Wo]
    skip_p = jnp.pad(jnp.transpose(skip_c, (0, 2, 3, 1)),
                     ((0, 0), (1, 1), (1, 1), (0, 0)))

    # ConvTranspose2d weight (Cin, C1, kh, kw) -> fwd-conv taps (kh, kw, Cin, C1)
    wt_k = jnp.transpose(wt[:, :, ::-1, ::-1], (2, 3, 0, 1))
    # Conv2d weight (C1, 2*C1, kh, kw) -> (kh, kw, 2*C1, C1), split on in-chans
    w2_k = jnp.transpose(w2, (2, 3, 1, 0))
    w2a = w2_k[:, :, :C1, :]       # acts on the tconv half of the concat
    w2b = w2_k[:, :, C1:, :]       # acts on the skip half
    bt2 = bt.reshape(1, C1)
    b22 = b2.reshape(1, C1)

    flops = 2 * 9 * B * Ho * Wo * (Cin * C1 + 2 * C1 * C1)
    bytes_accessed = 4 * (xdil.size + skip_p.size + B * Ho * Wo * C1
                          + wt_k.size + w2a.size + w2b.size
                          + bt2.size + b22.size)

    kernel = functools.partial(_expanding_block_kernel, use_in=use_in,
                               negative_slope=negative_slope, eps=eps)

    out_nhwc = pl.pallas_call(
        kernel,
        out_shape=jax.ShapeDtypeStruct((B, Ho, Wo, C1), x.dtype),
        grid_spec=pltpu.PrefetchScalarGridSpec(
            num_scalar_prefetch=0,
            grid=(B,),
            in_specs=[
                pl.BlockSpec((1, Hd, Wd, Cin), lambda b: (b, 0, 0, 0)),
                pl.BlockSpec((1, Hd, Wd, C1), lambda b: (b, 0, 0, 0)),
                pl.BlockSpec((3, 3, Cin, C1), lambda b: (0, 0, 0, 0)),
                pl.BlockSpec((1, C1), lambda b: (0, 0)),
                pl.BlockSpec((3, 3, C1, C1), lambda b: (0, 0, 0, 0)),
                pl.BlockSpec((3, 3, C1, C1), lambda b: (0, 0, 0, 0)),
                pl.BlockSpec((1, C1), lambda b: (0, 0)),
            ],
            out_specs=pl.BlockSpec((1, Ho, Wo, C1), lambda b: (b, 0, 0, 0)),
            scratch_shapes=[pltpu.VMEM((Hd, Wd, C1), jnp.float32)],
        ),
        compiler_params=pltpu.CompilerParams(
            dimension_semantics=("parallel",),
            vmem_limit_bytes=48 * 1024 * 1024),
        cost_estimate=pl.CostEstimate(
            flops=flops, transcendentals=B * C1,
            bytes_accessed=bytes_accessed),
    )(xdil, skip_p, wt_k, bt2, w2a, w2b, b22)

    return jnp.transpose(out_nhwc, (0, 3, 1, 2))   # back to NCHW


def reference_expanding_block(x, skip_x, wt, bt, w2, b2, use_in=True):
    """Pure-JAX reference matching PyTorch ExpandingBlock.forward."""
    Ho, Wo = 2 * x.shape[2], 2 * x.shape[3]
    # ConvTranspose2d(k=3, s=2, p=1, op=1) == dilated conv with flipped kernel
    w_eff = jnp.transpose(wt[:, :, ::-1, ::-1], (1, 0, 2, 3))   # (C1, Cin, 3, 3)
    y = jax.lax.conv_general_dilated(
        x, w_eff, window_strides=(1, 1), padding=((1, 2), (1, 2)),
        lhs_dilation=(2, 2), dimension_numbers=('NCHW', 'OIHW', 'NCHW'),
        precision=jax.lax.Precision.HIGHEST)
    y = y + bt[None, :, None, None]
    # crop()
    sy = skip_x.shape[2] // 2 - round(Ho / 2)
    sx = skip_x.shape[3] // 2 - round(Wo / 2)
    sk = skip_x[:, :, sy:sy + Ho, sx:sx + Wo]
    z = jnp.concatenate([y, sk], axis=1)
    out = jax.lax.conv_general_dilated(
        z, w2, window_strides=(1, 1), padding=((1, 1), (1, 1)),
        dimension_numbers=('NCHW', 'OIHW', 'NCHW'),
        precision=jax.lax.Precision.HIGHEST)
    out = out + b2[None, :, None, None]
    if use_in:
        mean = out.mean(axis=(2, 3), keepdims=True)
        var = ((out - mean) ** 2).mean(axis=(2, 3), keepdims=True)
        out = (out - mean) * jax.lax.rsqrt(var + 1e-5)
    return jnp.where(out > 0, out, 0.2 * out)


if __name__ == "__main__":
    B, Cin, H, W = 2, 16, 8, 8          # input_channels=16 -> output channels 8
    C1 = Cin // 2
    Hs, Ws = 2 * H + 2, 2 * W + 2       # skip is larger so the crop is non-trivial

    key = jax.random.PRNGKey(0)
    kx, ks, kw1, kb1, kw2, kb2 = jax.random.split(key, 6)
    x = jax.random.normal(kx, (B, Cin, H, W), dtype=jnp.float32)
    skip = jax.random.normal(ks, (B, C1, Hs, Ws), dtype=jnp.float32)
    wt = jax.random.normal(kw1, (Cin, C1, 3, 3), dtype=jnp.float32) * 0.1
    bt = jax.random.normal(kb1, (C1,), dtype=jnp.float32) * 0.1
    w2 = jax.random.normal(kw2, (C1, Cin, 3, 3), dtype=jnp.float32) * 0.1
    b2 = jax.random.normal(kb2, (C1,), dtype=jnp.float32) * 0.1

    out = expanding_block(x, skip, wt, bt, w2, b2, use_in=True)
    out = jax.block_until_ready(out)

    ref = reference_expanding_block(x, skip, wt, bt, w2, b2, use_in=True)
    assert out.shape == (B, C1, 2 * H, 2 * W), out.shape
    max_err = float(jnp.max(jnp.abs(out - ref)))
    assert jnp.allclose(out, ref, atol=2e-3, rtol=2e-3), f"mismatch, max err {max_err}"

    print("KERNEL_OK")
</pallas_src>

<mosaic_0001>
module attributes {stable_mosaic.version = 11 : i64} {
  func.func @_expanding_block_kernel(%arg0: i32, %arg1: memref<1x18x18x16xf32, #tpu.memory_space<vmem>>, %arg2: memref<1x18x18x8xf32, #tpu.memory_space<vmem>>, %arg3: memref<3x3x16x8xf32, #tpu.memory_space<vmem>>, %arg4: memref<1x8xf32, #tpu.memory_space<vmem>>, %arg5: memref<3x3x8x8xf32, #tpu.memory_space<vmem>>, %arg6: memref<3x3x8x8xf32, #tpu.memory_space<vmem>>, %arg7: memref<1x8xf32, #tpu.memory_space<vmem>>, %arg8: memref<1x16x16x8xf32, #tpu.memory_space<vmem>>, %arg9: memref<18x18x8xf32, #tpu.memory_space<vmem>>) attributes {dimension_semantics = [#tpu.dimension_semantics<parallel>], iteration_bounds = array<i64: 2>, scalar_prefetch = 0 : i64, scratch_operands = 1 : i64, tpu.core_type = #tpu.core_type<tc>, window_params = [{transform_indices = @transform_0, window_bounds = array<i64: 1, 18, 18, 16>}, {transform_indices = @transform_1, window_bounds = array<i64: 1, 18, 18, 8>}, {pipeline_mode = #tpu.pipeline_mode<synchronous>, transform_indices = @transform_2, window_bounds = array<i64: 3, 3, 16, 8>}, {pipeline_mode = #tpu.pipeline_mode<synchronous>, transform_indices = @transform_3, window_bounds = array<i64: 1, 8>}, {pipeline_mode = #tpu.pipeline_mode<synchronous>, transform_indices = @transform_4, window_bounds = array<i64: 3, 3, 8, 8>}, {pipeline_mode = #tpu.pipeline_mode<synchronous>, transform_indices = @transform_5, window_bounds = array<i64: 3, 3, 8, 8>}, {pipeline_mode = #tpu.pipeline_mode<synchronous>, transform_indices = @transform_6, window_bounds = array<i64: 1, 8>}, {transform_indices = @transform_7, window_bounds = array<i64: 1, 16, 16, 8>}]} {
    %cst = arith.constant 0.000000e+00 : f32
    %0 = vector.broadcast %cst : f32 to vector<256x8xf32>
    %c0 = arith.constant 0 : index
    %c0_0 = arith.constant 0 : index
    %c0_1 = arith.constant 0 : index
    %c0_2 = arith.constant 0 : index
    %1 = vector.load %arg1[%c0, %c0_0, %c0_1, %c0_2] : memref<1x18x18x16xf32, #tpu.memory_space<vmem>>, vector<1x16x16x16xf32>
    %2 = vector.shape_cast %1 : vector<1x16x16x16xf32> to vector<16x16x16xf32>
    %3 = vector.shape_cast %2 : vector<16x16x16xf32> to vector<256x16xf32>
    %c0_3 = arith.constant 0 : index
    %c0_4 = arith.constant 0 : index
    %c0_5 = arith.constant 0 : index
    %c0_6 = arith.constant 0 : index
    %4 = vector.load %arg3[%c0_3, %c0_4, %c0_5, %c0_6] : memref<3x3x16x8xf32, #tpu.memory_space<vmem>>, vector<1x1x16x8xf32>
    %5 = vector.shape_cast %4 : vector<1x1x16x8xf32> to vector<16x8xf32>
    %cst_7 = arith.constant dense<0.000000e+00> : vector<256x8xf32>
    %6 = tpu.matmul %3, %5, %cst_7 {dimension_numbers = #tpu.dot_dimension_numbers<[1], [0], [0], [1], [0, 0, 1, 1], [], []>} : vector<256x16xf32>, vector<16x8xf32>, vector<256x8xf32> -> vector<256x8xf32>
    %7 = arith.addf %0, %6 : vector<256x8xf32>
    %c0_8 = arith.constant 0 : index
    %c0_9 = arith.constant 0 : index
    %c1 = arith.constant 1 : index
    %c0_10 = arith.constant 0 : index
    %8 = vector.load %arg1[%c0_8, %c0_9, %c1, %c0_10] : memref<1x18x18x16xf32, #tpu.memory_space<vmem>>, vector<1x16x16x16xf32>
    %9 = vector.shape_cast %8 : vector<1x16x16x16xf32> to vector<16x16x16xf32>
    %10 = vector.shape_cast %9 : vector<16x16x16xf32> to vector<256x16xf32>
    %c0_11 = arith.constant 0 : index
    %c1_12 = arith.constant 1 : index
    %c0_13 = arith.constant 0 : index
    %c0_14 = arith.constant 0 : index
    %11 = vector.load %arg3[%c0_11, %c1_12, %c0_13, %c0_14] : memref<3x3x16x8xf32, #tpu.memory_space<vmem>>, vector<1x1x16x8xf32>
    %12 = vector.shape_cast %11 : vector<1x1x16x8xf32> to vector<16x8xf32>
    %cst_15 = arith.constant dense<0.000000e+00> : vector<256x8xf32>
    %13 = tpu.matmul %10, %12, %cst_15 {dimension_numbers = #tpu.dot_dimension_numbers<[1], [0], [0], [1], [0, 0, 1, 1], [], []>} : vector<256x16xf32>, vector<16x8xf32>, vector<256x8xf32> -> vector<256x8xf32>
    %14 = arith.addf %7, %13 : vector<256x8xf32>
    %c0_16 = arith.constant 0 : index
    %c0_17 = arith.constant 0 : index
    %c2 = arith.constant 2 : index
    %c0_18 = arith.constant 0 : index
    %15 = vector.load %arg1[%c0_16, %c0_17, %c2, %c0_18] : memref<1x18x18x16xf32, #tpu.memory_space<vmem>>, vector<1x16x16x16xf32>
    %16 = vector.shape_cast %15 : vector<1x16x16x16xf32> to vector<16x16x16xf32>
    %17 = vector.shape_cast %16 : vector<16x16x16xf32> to vector<256x16xf32>
    %c0_19 = arith.constant 0 : index
    %c2_20 = arith.constant 2 : index
    %c0_21 = arith.constant 0 : index
    %c0_22 = arith.constant 0 : index
    %18 = vector.load %arg3[%c0_19, %c2_20, %c0_21, %c0_22] : memref<3x3x16x8xf32, #tpu.memory_space<vmem>>, vector<1x1x16x8xf32>
    %19 = vector.shape_cast %18 : vector<1x1x16x8xf32> to vector<16x8xf32>
    %cst_23 = arith.constant dense<0.000000e+00> : vector<256x8xf32>
    %20 = tpu.matmul %17, %19, %cst_23 {dimension_numbers = #tpu.dot_dimension_numbers<[1], [0], [0], [1], [0, 0, 1, 1], [], []>} : vector<256x16xf32>, vector<16x8xf32>, vector<256x8xf32> -> vector<256x8xf32>
    %21 = arith.addf %14, %20 : vector<256x8xf32>
    %c0_24 = arith.constant 0 : index
    %c1_25 = arith.constant 1 : index
    %c0_26 = arith.constant 0 : index
    %c0_27 = arith.constant 0 : index
    %22 = vector.load %arg1[%c0_24, %c1_25, %c0_26, %c0_27] : memref<1x18x18x16xf32, #tpu.memory_space<vmem>>, vector<1x16x16x16xf32>
    %23 = vector.shape_cast %22 : vector<1x16x16x16xf32> to vector<16x16x16xf32>
    %24 = vector.shape_cast %23 : vector<16x16x16xf32> to vector<256x16xf32>
    %c1_28 = arith.constant 1 : index
    %c0_29 = arith.constant 0 : index
    %c0_30 = arith.constant 0 : index
    %c0_31 = arith.constant 0 : index
    %25 = vector.load %arg3[%c1_28, %c0_29, %c0_30, %c0_31] : memref<3x3x16x8xf32, #tpu.memory_space<vmem>>, vector<1x1x16x8xf32>
    %26 = vector.shape_cast %25 : vector<1x1x16x8xf32> to vector<16x8xf32>
    %cst_32 = arith.constant dense<0.000000e+00> : vector<256x8xf32>
    %27 = tpu.matmul %24, %26, %cst_32 {dimension_numbers = #tpu.dot_dimension_numbers<[1], [0], [0], [1], [0, 0, 1, 1], [], []>} : vector<256x16xf32>, vector<16x8xf32>, vector<256x8xf32> -> vector<256x8xf32>
    %28 = arith.addf %21, %27 : vector<256x8xf32>
    %c0_33 = arith.constant 0 : index
    %c1_34 = arith.constant 1 : index
    %c1_35 = arith.constant 1 : index
    %c0_36 = arith.constant 0 : index
    %29 = vector.load %arg1[%c0_33, %c1_34, %c1_35, %c0_36] : memref<1x18x18x16xf32, #tpu.memory_space<vmem>>, vector<1x16x16x16xf32>
    %30 = vector.shape_cast %29 : vector<1x16x16x16xf32> to vector<16x16x16xf32>
    %31 = vector.shape_cast %30 : vector<16x16x16xf32> to vector<256x16xf32>
    %c1_37 = arith.constant 1 : index
    %c1_38 = arith.constant 1 : index
    %c0_39 = arith.constant 0 : index
    %c0_40 = arith.constant 0 : index
    %32 = vector.load %arg3[%c1_37, %c1_38, %c0_39, %c0_40] : memref<3x3x16x8xf32, #tpu.memory_space<vmem>>, vector<1x1x16x8xf32>
    %33 = vector.shape_cast %32 : vector<1x1x16x8xf32> to vector<16x8xf32>
    %cst_41 = arith.constant dense<0.000000e+00> : vector<256x8xf32>
    %34 = tpu.matmul %31, %33, %cst_41 {dimension_numbers = #tpu.dot_dimension_numbers<[1], [0], [0], [1], [0, 0, 1, 1], [], []>} : vector<256x16xf32>, vector<16x8xf32>, vector<256x8xf32> -> vector<256x8xf32>
    %35 = arith.addf %28, %34 : vector<256x8xf32>
    %c0_42 = arith.constant 0 : index
    %c1_43 = arith.constant 1 : index
    %c2_44 = arith.constant 2 : index
    %c0_45 = arith.constant 0 : index
    %36 = vector.load %arg1[%c0_42, %c1_43, %c2_44, %c0_45] : memref<1x18x18x16xf32, #tpu.memory_space<vmem>>, vector<1x16x16x16xf32>
    %37 = vector.shape_cast %36 : vector<1x16x16x16xf32> to vector<16x16x16xf32>
    %38 = vector.shape_cast %37 : vector<16x16x16xf32> to vector<256x16xf32>
    %c1_46 = arith.constant 1 : index
    %c2_47 = arith.constant 2 : index
    %c0_48 = arith.constant 0 : index
    %c0_49 = arith.constant 0 : index
    %39 = vector.load %arg3[%c1_46, %c2_47, %c0_48, %c0_49] : memref<3x3x16x8xf32, #tpu.memory_space<vmem>>, vector<1x1x16x8xf32>
    %40 = vector.shape_cast %39 : vector<1x1x16x8xf32> to vector<16x8xf32>
    %cst_50 = arith.constant dense<0.000000e+00> : vector<256x8xf32>
    %41 = tpu.matmul %38, %40, %cst_50 {dimension_numbers = #tpu.dot_dimension_numbers<[1], [0], [0], [1], [0, 0, 1, 1], [], []>} : vector<256x16xf32>, vector<16x8xf32>, vector<256x8xf32> -> vector<256x8xf32>
    %42 = arith.addf %35, %41 : vector<256x8xf32>
    %c0_51 = arith.constant 0 : index
    %c2_52 = arith.constant 2 : index
    %c0_53 = arith.constant 0 : index
    %c0_54 = arith.constant 0 : index
    %43 = vector.load %arg1[%c0_51, %c2_52, %c0_53, %c0_54] : memref<1x18x18x16xf32, #tpu.memory_space<vmem>>, vector<1x16x16x16xf32>
    %44 = vector.shape_cast %43 : vector<1x16x16x16xf32> to vector<16x16x16xf32>
    %45 = vector.shape_cast %44 : vector<16x16x16xf32> to vector<256x16xf32>
    %c2_55 = arith.constant 2 : index
    %c0_56 = arith.constant 0 : index
    %c0_57 = arith.constant 0 : index
    %c0_58 = arith.constant 0 : index
    %46 = vector.load %arg3[%c2_55, %c0_56, %c0_57, %c0_58] : memref<3x3x16x8xf32, #tpu.memory_space<vmem>>, vector<1x1x16x8xf32>
    %47 = vector.shape_cast %46 : vector<1x1x16x8xf32> to vector<16x8xf32>
    %cst_59 = arith.constant dense<0.000000e+00> : vector<256x8xf32>
    %48 = tpu.matmul %45, %47, %cst_59 {dimension_numbers = #tpu.dot_dimension_numbers<[1], [0], [0], [1], [0, 0, 1, 1], [], []>} : vector<256x16xf32>, vector<16x8xf32>, vector<256x8xf32> -> vector<256x8xf32>
    %49 = arith.addf %42, %48 : vector<256x8xf32>
    %c0_60 = arith.constant 0 : index
    %c2_61 = arith.constant 2 : index
    %c1_62 = arith.constant 1 : index
    %c0_63 = arith.constant 0 : index
    %50 = vector.load %arg1[%c0_60, %c2_61, %c1_62, %c0_63] : memref<1x18x18x16xf32, #tpu.memory_space<vmem>>, vector<1x16x16x16xf32>
    %51 = vector.shape_cast %50 : vector<1x16x16x16xf32> to vector<16x16x16xf32>
    %52 = vector.shape_cast %51 : vector<16x16x16xf32> to vector<256x16xf32>
    %c2_64 = arith.constant 2 : index
    %c1_65 = arith.constant 1 : index
    %c0_66 = arith.constant 0 : index
    %c0_67 = arith.constant 0 : index
    %53 = vector.load %arg3[%c2_64, %c1_65, %c0_66, %c0_67] : memref<3x3x16x8xf32, #tpu.memory_space<vmem>>, vector<1x1x16x8xf32>
    %54 = vector.shape_cast %53 : vector<1x1x16x8xf32> to vector<16x8xf32>
    %cst_68 = arith.constant dense<0.000000e+00> : vector<256x8xf32>
    %55 = tpu.matmul %52, %54, %cst_68 {dimension_numbers = #tpu.dot_dimension_numbers<[1], [0], [0], [1], [0, 0, 1, 1], [], []>} : vector<256x16xf32>, vector<16x8xf32>, vector<256x8xf32> -> vector<256x8xf32>
    %56 = arith.addf %49, %55 : vector<256x8xf32>
    %c0_69 = arith.constant 0 : index
    %c2_70 = arith.constant 2 : index
    %c2_71 = arith.constant 2 : index
    %c0_72 = arith.constant 0 : index
    %57 = vector.load %arg1[%c0_69, %c2_70, %c2_71, %c0_72] : memref<1x18x18x16xf32, #tpu.memory_space<vmem>>, vector<1x16x16x16xf32>
    %58 = vector.shape_cast %57 : vector<1x16x16x16xf32> to vector<16x16x16xf32>
    %59 = vector.shape_cast %58 : vector<16x16x16xf32> to vector<256x16xf32>
    %c2_73 = arith.constant 2 : index
    %c2_74 = arith.constant 2 : index
    %c0_75 = arith.constant 0 : index
    %c0_76 = arith.constant 0 : index
    %60 = vector.load %arg3[%c2_73, %c2_74, %c0_75, %c0_76] : memref<3x3x16x8xf32, #tpu.memory_space<vmem>>, vector<1x1x16x8xf32>
    %61 = vector.shape_cast %60 : vector<1x1x16x8xf32> to vector<16x8xf32>
    %cst_77 = arith.constant dense<0.000000e+00> : vector<256x8xf32>
    %62 = tpu.matmul %59, %61, %cst_77 {dimension_numbers = #tpu.dot_dimension_numbers<[1], [0], [0], [1], [0, 0, 1, 1], [], []>} : vector<256x16xf32>, vector<16x8xf32>, vector<256x8xf32> -> vector<256x8xf32>
    %63 = arith.addf %56, %62 : vector<256x8xf32>
    %c0_78 = arith.constant 0 : index
    %c0_79 = arith.constant 0 : index
    %64 = vector.load %arg4[%c0_78, %c0_79] : memref<1x8xf32, #tpu.memory_space<vmem>>, vector<1x8xf32>
    %65 = vector.broadcast %64 : vector<1x8xf32> to vector<256x8xf32>
    %66 = arith.addf %63, %65 : vector<256x8xf32>
    %cst_80 = arith.constant 0.000000e+00 : f32
    %67 = vector.broadcast %cst_80 : f32 to vector<18x18x8xf32>
    %c0_81 = arith.constant 0 : index
    %c0_82 = arith.constant 0 : index
    %c0_83 = arith.constant 0 : index
    %68 = vector.load %arg9[%c0_81, %c0_82, %c0_83] : memref<18x18x8xf32, #tpu.memory_space<vmem>>, vector<18x18x8xf32>
    tpu.vector_store %arg9[%c0_81, %c0_82, %c0_83], %67 {strides = array<i32>} : memref<18x18x8xf32, #tpu.memory_space<vmem>>, vector<18x18x8xf32>,
    %69 = vector.shape_cast %66 : vector<256x8xf32> to vector<16x16x8xf32>
    %c1_84 = arith.constant 1 : index
    %c1_85 = arith.constant 1 : index
    %c0_86 = arith.constant 0 : index
    %70 = vector.load %arg9[%c1_84, %c1_85, %c0_86] : memref<18x18x8xf32, #tpu.memory_space<vmem>>, vector<16x16x8xf32>
    tpu.vector_store %arg9[%c1_84, %c1_85, %c0_86], %69 {strides = array<i32>} : memref<18x18x8xf32, #tpu.memory_space<vmem>>, vector<16x16x8xf32>,
    %cst_87 = arith.constant 0.000000e+00 : f32
    %71 = vector.broadcast %cst_87 : f32 to vector<256x8xf32>
    %c0_88 = arith.constant 0 : index
    %c0_89 = arith.constant 0 : index
    %c0_90 = arith.constant 0 : index
    %72 = vector.load %arg9[%c0_88, %c0_89, %c0_90] : memref<18x18x8xf32, #tpu.memory_space<vmem>>, vector<16x16x8xf32>
    %73 = vector.shape_cast %72 : vector<16x16x8xf32> to vector<256x8xf32>
    %c0_91 = arith.constant 0 : index
    %c0_92 = arith.constant 0 : index
    %c0_93 = arith.constant 0 : index
    %c0_94 = arith.constant 0 : index
    %74 = vector.load %arg2[%c0_91, %c0_92, %c0_93, %c0_94] : memref<1x18x18x8xf32, #tpu.memory_space<vmem>>, vector<1x16x16x8xf32>
    %75 = vector.shape_cast %74 : vector<1x16x16x8xf32> to vector<16x16x8xf32>
    %76 = vector.shape_cast %75 : vector<16x16x8xf32> to vector<256x8xf32>
    %c0_95 = arith.constant 0 : index
    %c0_96 = arith.constant 0 : index
    %c0_97 = arith.constant 0 : index
    %c0_98 = arith.constant 0 : index
    %77 = vector.load %arg5[%c0_95, %c0_96, %c0_97, %c0_98] : memref<3x3x8x8xf32, #tpu.memory_space<vmem>>, vector<1x1x8x8xf32>
    %78 = vector.shape_cast %77 : vector<1x1x8x8xf32> to vector<8x8xf32>
    %cst_99 = arith.constant dense<0.000000e+00> : vector<256x8xf32>
    %79 = tpu.matmul %73, %78, %cst_99 {dimension_numbers = #tpu.dot_dimension_numbers<[1], [0], [0], [1], [0, 0, 1, 1], [], []>} : vector<256x8xf32>, vector<8x8xf32>, vector<256x8xf32> -> vector<256x8xf32>
    %80 = arith.addf %71, %79 : vector<256x8xf32>
    %c0_100 = arith.constant 0 : index
    %c0_101 = arith.constant 0 : index
    %c0_102 = arith.constant 0 : index
    %c0_103 = arith.constant 0 : index
    %81 = vector.load %arg6[%c0_100, %c0_101, %c0_102, %c0_103] : memref<3x3x8x8xf32, #tpu.memory_space<vmem>>, vector<1x1x8x8xf32>
    %82 = vector.shape_cast %81 : vector<1x1x8x8xf32> to vector<8x8xf32>
    %cst_104 = arith.constant dense<0.000000e+00> : vector<256x8xf32>
    %83 = tpu.matmul %76, %82, %cst_104 {dimension_numbers = #tpu.dot_dimension_numbers<[1], [0], [0], [1], [0, 0, 1, 1], [], []>} : vector<256x8xf32>, vector<8x8xf32>, vector<256x8xf32> -> vector<256x8xf32>
    %84 = arith.addf %80, %83 : vector<256x8xf32>
    %c0_105 = arith.constant 0 : index
    %c1_106 = arith.constant 1 : index
    %c0_107 = arith.constant 0 : index
    %85 = vector.load %arg9[%c0_105, %c1_106, %c0_107] : memref<18x18x8xf32, #tpu.memory_space<vmem>>, vector<16x16x8xf32>
    %86 = vector.shape_cast %85 : vector<16x16x8xf32> to vector<256x8xf32>
    %c0_108 = arith.constant 0 : index
    %c0_109 = arith.constant 0 : index
    %c1_110 = arith.constant 1 : index
    %c0_111 = arith.constant 0 : index
    %87 = vector.load %arg2[%c0_108, %c0_109, %c1_110, %c0_111] : memref<1x18x18x8xf32, #tpu.memory_space<vmem>>, vector<1x16x16x8xf32>
    %88 = vector.shape_cast %87 : vector<1x16x16x8xf32> to vector<16x16x8xf32>
    %89 = vector.shape_cast %88 : vector<16x16x8xf32> to vector<256x8xf32>
    %c0_112 = arith.constant 0 : index
    %c1_113 = arith.constant 1 : index
    %c0_114 = arith.constant 0 : index
    %c0_115 = arith.constant 0 : index
    %90 = vector.load %arg5[%c0_112, %c1_113, %c0_114, %c0_115] : memref<3x3x8x8xf32, #tpu.memory_space<vmem>>, vector<1x1x8x8xf32>
    %91 = vector.shape_cast %90 : vector<1x1x8x8xf32> to vector<8x8xf32>
    %cst_116 = arith.constant dense<0.000000e+00> : vector<256x8xf32>
    %92 = tpu.matmul %86, %91, %cst_116 {dimension_numbers = #tpu.dot_dimension_numbers<[1], [0], [0], [1], [0, 0, 1, 1], [], []>} : vector<256x8xf32>, vector<8x8xf32>, vector<256x8xf32> -> vector<256x8xf32>
    %93 = arith.addf %84, %92 : vector<256x8xf32>
    %c0_117 = arith.constant 0 : index
    %c1_118 = arith.constant 1 : index
    %c0_119 = arith.constant 0 : index
    %c0_120 = arith.constant 0 : index
    %94 = vector.load %arg6[%c0_117, %c1_118, %c0_119, %c0_120] : memref<3x3x8x8xf32, #tpu.memory_space<vmem>>, vector<1x1x8x8xf32>
    %95 = vector.shape_cast %94 : vector<1x1x8x8xf32> to vector<8x8xf32>
    %cst_121 = arith.constant dense<0.000000e+00> : vector<256x8xf32>
    %96 = tpu.matmul %89, %95, %cst_121 {dimension_numbers = #tpu.dot_dimension_numbers<[1], [0], [0], [1], [0, 0, 1, 1], [], []>} : vector<256x8xf32>, vector<8x8xf32>, vector<256x8xf32> -> vector<256x8xf32>
    %97 = arith.addf %93, %96 : vector<256x8xf32>
    %c0_122 = arith.constant 0 : index
    %c2_123 = arith.constant 2 : index
    %c0_124 = arith.constant 0 : index
    %98 = vector.load %arg9[%c0_122, %c2_123, %c0_124] : memref<18x18x8xf32, #tpu.memory_space<vmem>>, vector<16x16x8xf32>
    %99 = vector.shape_cast %98 : vector<16x16x8xf32> to vector<256x8xf32>
    %c0_125 = arith.constant 0 : index
    %c0_126 = arith.constant 0 : index
    %c2_127 = arith.constant 2 : index
    %c0_128 = arith.constant 0 : index
    %100 = vector.load %arg2[%c0_125, %c0_126, %c2_127, %c0_128] : memref<1x18x18x8xf32, #tpu.memory_space<vmem>>, vector<1x16x16x8xf32>
    %101 = vector.shape_cast %100 : vector<1x16x16x8xf32> to vector<16x16x8xf32>
    %102 = vector.shape_cast %101 : vector<16x16x8xf32> to vector<256x8xf32>
    %c0_129 = arith.constant 0 : index
    %c2_130 = arith.constant 2 : index
    %c0_131 = arith.constant 0 : index
    %c0_132 = arith.constant 0 : index
    %103 = vector.load %arg5[%c0_129, %c2_130, %c0_131, %c0_132] : memref<3x3x8x8xf32, #tpu.memory_space<vmem>>, vector<1x1x8x8xf32>
    %104 = vector.shape_cast %103 : vector<1x1x8x8xf32> to vector<8x8xf32>
    %cst_133 = arith.constant dense<0.000000e+00> : vector<256x8xf32>
    %105 = tpu.matmul %99, %104, %cst_133 {dimension_numbers = #tpu.dot_dimension_numbers<[1], [0], [0], [1], [0, 0, 1, 1], [], []>} : vector<256x8xf32>, vector<8x8xf32>, vector<256x8xf32> -> vector<256x8xf32>
    %106 = arith.addf %97, %105 : vector<256x8xf32>
    %c0_134 = arith.constant 0 : index
    %c2_135 = arith.constant 2 : index
    %c0_136 = arith.constant 0 : index
    %c0_137 = arith.constant 0 : index
    %107 = vector.load %arg6[%c0_134, %c2_135, %c0_136, %c0_137] : memref<3x3x8x8xf32, #tpu.memory_space<vmem>>, vector<1x1x8x8xf32>
    %108 = vector.shape_cast %107 : vector<1x1x8x8xf32> to vector<8x8xf32>
    %cst_138 = arith.constant dense<0.000000e+00> : vector<256x8xf32>
    %109 = tpu.matmul %102, %108, %cst_138 {dimension_numbers = #tpu.dot_dimension_numbers<[1], [0], [0], [1], [0, 0, 1, 1], [], []>} : vector<256x8xf32>, vector<8x8xf32>, vector<256x8xf32> -> vector<256x8xf32>
    %110 = arith.addf %106, %109 : vector<256x8xf32>
    %c1_139 = arith.constant 1 : index
    %c0_140 = arith.constant 0 : index
    %c0_141 = arith.constant 0 : index
    %111 = vector.load %arg9[%c1_139, %c0_140, %c0_141] : memref<18x18x8xf32, #tpu.memory_space<vmem>>, vector<16x16x8xf32>
    %112 = vector.shape_cast %111 : vector<16x16x8xf32> to vector<256x8xf32>
    %c0_142 = arith.constant 0 : index
    %c1_143 = arith.constant 1 : index
    %c0_144 = arith.constant 0 : index
    %c0_145 = arith.constant 0 : index
    %113 = vector.load %arg2[%c0_142, %c1_143, %c0_144, %c0_145] : memref<1x18x18x8xf32, #tpu.memory_space<vmem>>, vector<1x16x16x8xf32>
    %114 = vector.shape_cast %113 : vector<1x16x16x8xf32> to vector<16x16x8xf32>
    %115 = vector.shape_cast %114 : vector<16x16x8xf32> to vector<256x8xf32>
    %c1_146 = arith.constant 1 : index
    %c0_147 = arith.constant 0 : index
    %c0_148 = arith.constant 0 : index
    %c0_149 = arith.constant 0 : index
    %116 = vector.load %arg5[%c1_146, %c0_147, %c0_148, %c0_149] : memref<3x3x8x8xf32, #tpu.memory_space<vmem>>, vector<1x1x8x8xf32>
    %117 = vector.shape_cast %116 : vector<1x1x8x8xf32> to vector<8x8xf32>
    %cst_150 = arith.constant dense<0.000000e+00> : vector<256x8xf32>
    %118 = tpu.matmul %112, %117, %cst_150 {dimension_numbers = #tpu.dot_dimension_numbers<[1], [0], [0], [1], [0, 0, 1, 1], [], []>} : vector<256x8xf32>, vector<8x8xf32>, vector<256x8xf32> -> vector<256x8xf32>
    %119 = arith.addf %110, %118 : vector<256x8xf32>
    %c1_151 = arith.constant 1 : index
    %c0_152 = arith.constant 0 : index
    %c0_153 = arith.constant 0 : index
    %c0_154 = arith.constant 0 : index
    %120 = vector.load %arg6[%c1_151, %c0_152, %c0_153, %c0_154] : memref<3x3x8x8xf32, #tpu.memory_space<vmem>>, vector<1x1x8x8xf32>
    %121 = vector.shape_cast %120 : vector<1x1x8x8xf32> to vector<8x8xf32>
    %cst_155 = arith.constant dense<0.000000e+00> : vector<256x8xf32>
    %122 = tpu.matmul %115, %121, %cst_155 {dimension_numbers = #tpu.dot_dimension_numbers<[1], [0], [0], [1], [0, 0, 1, 1], [], []>} : vector<256x8xf32>, vector<8x8xf32>, vector<256x8xf32> -> vector<256x8xf32>
    %123 = arith.addf %119, %122 : vector<256x8xf32>
    %c1_156 = arith.constant 1 : index
    %c1_157 = arith.constant 1 : index
    %c0_158 = arith.constant 0 : index
    %124 = vector.load %arg9[%c1_156, %c1_157, %c0_158] : memref<18x18x8xf32, #tpu.memory_space<vmem>>, vector<16x16x8xf32>
    %125 = vector.shape_cast %124 : vector<16x16x8xf32> to vector<256x8xf32>
    %c0_159 = arith.constant 0 : index
    %c1_160 = arith.constant 1 : index
    %c1_161 = arith.constant 1 : index
    %c0_162 = arith.constant 0 : index
    %126 = vector.load %arg2[%c0_159, %c1_160, %c1_161, %c0_162] : memref<1x18x18x8xf32, #tpu.memory_space<vmem>>, vector<1x16x16x8xf32>
    %127 = vector.shape_cast %126 : vector<1x16x16x8xf32> to vector<16x16x8xf32>
    %128 = vector.shape_cast %127 : vector<16x16x8xf32> to vector<256x8xf32>
    %c1_163 = arith.constant 1 : index
    %c1_164 = arith.constant 1 : index
    %c0_165 = arith.constant 0 : index
    %c0_166 = arith.constant 0 : index
    %129 = vector.load %arg5[%c1_163, %c1_164, %c0_165, %c0_166] : memref<3x3x8x8xf32, #tpu.memory_space<vmem>>, vector<1x1x8x8xf32>
    %130 = vector.shape_cast %129 : vector<1x1x8x8xf32> to vector<8x8xf32>
    %cst_167 = arith.constant dense<0.000000e+00> : vector<256x8xf32>
    %131 = tpu.matmul %125, %130, %cst_167 {dimension_numbers = #tpu.dot_dimension_numbers<[1], [0], [0], [1], [0, 0, 1, 1], [], []>} : vector<256x8xf32>, vector<8x8xf32>, vector<256x8xf32> -> vector<256x8xf32>
    %132 = arith.addf %123, %131 : vector<256x8xf32>
    %c1_168 = arith.constant 1 : index
    %c1_169 = arith.constant 1 : index
    %c0_170 = arith.constant 0 : index
    %c0_171 = arith.constant 0 : index
    %133 = vector.load %arg6[%c1_168, %c1_169, %c0_170, %c0_171] : memref<3x3x8x8xf32, #tpu.memory_space<vmem>>, vector<1x1x8x8xf32>
    %134 = vector.shape_cast %133 : vector<1x1x8x8xf32> to vector<8x8xf32>
    %cst_172 = arith.constant dense<0.000000e+00> : vector<256x8xf32>
    %135 = tpu.matmul %128, %134, %cst_172 {dimension_numbers = #tpu.dot_dimension_numbers<[1], [0], [0], [1], [0, 0, 1, 1], [], []>} : vector<256x8xf32>, vector<8x8xf32>, vector<256x8xf32> -> vector<256x8xf32>
    %136 = arith.addf %132, %135 : vector<256x8xf32>
    %c1_173 = arith.constant 1 : index
    %c2_174 = arith.constant 2 : index
    %c0_175 = arith.constant 0 : index
    %137 = vector.load %arg9[%c1_173, %c2_174, %c0_175] : memref<18x18x8xf32, #tpu.memory_space<vmem>>, vector<16x16x8xf32>
    %138 = vector.shape_cast %137 : vector<16x16x8xf32> to vector<256x8xf32>
    %c0_176 = arith.constant 0 : index
    %c1_177 = arith.constant 1 : index
    %c2_178 = arith.constant 2 : index
    %c0_179 = arith.constant 0 : index
    %139 = vector.load %arg2[%c0_176, %c1_177, %c2_178, %c0_179] : memref<1x18x18x8xf32, #tpu.memory_space<vmem>>, vector<1x16x16x8xf32>
    %140 = vector.shape_cast %139 : vector<1x16x16x8xf32> to vector<16x16x8xf32>
    %141 = vector.shape_cast %140 : vector<16x16x8xf32> to vector<256x8xf32>
    %c1_180 = arith.constant 1 : index
    %c2_181 = arith.constant 2 : index
    %c0_182 = arith.constant 0 : index
    %c0_183 = arith.constant 0 : index
    %142 = vector.load %arg5[%c1_180, %c2_181, %c0_182, %c0_183] : memref<3x3x8x8xf32, #tpu.memory_space<vmem>>, vector<1x1x8x8xf32>
    %143 = vector.shape_cast %142 : vector<1x1x8x8xf32> to vector<8x8xf32>
    %cst_184 = arith.constant dense<0.000000e+00> : vector<256x8xf32>
    %144 = tpu.matmul %138, %143, %cst_184 {dimension_numbers = #tpu.dot_dimension_numbers<[1], [0], [0], [1], [0, 0, 1, 1], [], []>} : vector<256x8xf32>, vector<8x8xf32>, vector<256x8xf32> -> vector<256x8xf32>
    %145 = arith.addf %136, %144 : vector<256x8xf32>
    %c1_185 = arith.constant 1 : index
    %c2_186 = arith.constant 2 : index
    %c0_187 = arith.constant 0 : index
    %c0_188 = arith.constant 0 : index
    %146 = vector.load %arg6[%c1_185, %c2_186, %c0_187, %c0_188] : memref<3x3x8x8xf32, #tpu.memory_space<vmem>>, vector<1x1x8x8xf32>
    %147 = vector.shape_cast %146 : vector<1x1x8x8xf32> to vector<8x8xf32>
    %cst_189 = arith.constant dense<0.000000e+00> : vector<256x8xf32>
    %148 = tpu.matmul %141, %147, %cst_189 {dimension_numbers = #tpu.dot_dimension_numbers<[1], [0], [0], [1], [0, 0, 1, 1], [], []>} : vector<256x8xf32>, vector<8x8xf32>, vector<256x8xf32> -> vector<256x8xf32>
    %149 = arith.addf %145, %148 : vector<256x8xf32>
    %c2_190 = arith.constant 2 : index
    %c0_191 = arith.constant 0 : index
    %c0_192 = arith.constant 0 : index
    %150 = vector.load %arg9[%c2_190, %c0_191, %c0_192] : memref<18x18x8xf32, #tpu.memory_space<vmem>>, vector<16x16x8xf32>
    %151 = vector.shape_cast %150 : vector<16x16x8xf32> to vector<256x8xf32>
    %c0_193 = arith.constant 0 : index
    %c2_194 = arith.constant 2 : index
    %c0_195 = arith.constant 0 : index
    %c0_196 = arith.constant 0 : index
    %152 = vector.load %arg2[%c0_193, %c2_194, %c0_195, %c0_196] : memref<1x18x18x8xf32, #tpu.memory_space<vmem>>, vector<1x16x16x8xf32>
    %153 = vector.shape_cast %152 : vector<1x16x16x8xf32> to vector<16x16x8xf32>
    %154 = vector.shape_cast %153 : vector<16x16x8xf32> to vector<256x8xf32>
    %c2_197 = arith.constant 2 : index
    %c0_198 = arith.constant 0 : index
    %c0_199 = arith.constant 0 : index
    %c0_200 = arith.constant 0 : index
    %155 = vector.load %arg5[%c2_197, %c0_198, %c0_199, %c0_200] : memref<3x3x8x8xf32, #tpu.memory_space<vmem>>, vector<1x1x8x8xf32>
    %156 = vector.shape_cast %155 : vector<1x1x8x8xf32> to vector<8x8xf32>
    %cst_201 = arith.constant dense<0.000000e+00> : vector<256x8xf32>
    %157 = tpu.matmul %151, %156, %cst_201 {dimension_numbers = #tpu.dot_dimension_numbers<[1], [0], [0], [1], [0, 0, 1, 1], [], []>} : vector<256x8xf32>, vector<8x8xf32>, vector<256x8xf32> -> vector<256x8xf32>
    %158 = arith.addf %149, %157 : vector<256x8xf32>
    %c2_202 = arith.constant 2 : index
    %c0_203 = arith.constant 0 : index
    %c0_204 = arith.constant 0 : index
    %c0_205 = arith.constant 0 : index
    %159 = vector.load %arg6[%c2_202, %c0_203, %c0_204, %c0_205] : memref<3x3x8x8xf32, #tpu.memory_space<vmem>>, vector<1x1x8x8xf32>
    %160 = vector.shape_cast %159 : vector<1x1x8x8xf32> to vector<8x8xf32>
    %cst_206 = arith.constant dense<0.000000e+00> : vector<256x8xf32>
    %161 = tpu.matmul %154, %160, %cst_206 {dimension_numbers = #tpu.dot_dimension_numbers<[1], [0], [0], [1], [0, 0, 1, 1], [], []>} : vector<256x8xf32>, vector<8x8xf32>, vector<256x8xf32> -> vector<256x8xf32>
    %162 = arith.addf %158, %161 : vector<256x8xf32>
    %c2_207 = arith.constant 2 : index
    %c1_208 = arith.constant 1 : index
    %c0_209 = arith.constant 0 : index
    %163 = vector.load %arg9[%c2_207, %c1_208, %c0_209] : memref<18x18x8xf32, #tpu.memory_space<vmem>>, vector<16x16x8xf32>
    %164 = vector.shape_cast %163 : vector<16x16x8xf32> to vector<256x8xf32>
    %c0_210 = arith.constant 0 : index
    %c2_211 = arith.constant 2 : index
    %c1_212 = arith.constant 1 : index
    %c0_213 = arith.constant 0 : index
    %165 = vector.load %arg2[%c0_210, %c2_211, %c1_212, %c0_213] : memref<1x18x18x8xf32, #tpu.memory_space<vmem>>, vector<1x16x16x8xf32>
    %166 = vector.shape_cast %165 : vector<1x16x16x8xf32> to vector<16x16x8xf32>
    %167 = vector.shape_cast %166 : vector<16x16x8xf32> to vector<256x8xf32>
    %c2_214 = arith.constant 2 : index
    %c1_215 = arith.constant 1 : index
    %c0_216 = arith.constant 0 : index
    %c0_217 = arith.constant 0 : index
    %168 = vector.load %arg5[%c2_214, %c1_215, %c0_216, %c0_217] : memref<3x3x8x8xf32, #tpu.memory_space<vmem>>, vector<1x1x8x8xf32>
    %169 = vector.shape_cast %168 : vector<1x1x8x8xf32> to vector<8x8xf32>
    %cst_218 = arith.constant dense<0.000000e+00> : vector<256x8xf32>
    %170 = tpu.matmul %164, %169, %cst_218 {dimension_numbers = #tpu.dot_dimension_numbers<[1], [0], [0], [1], [0, 0, 1, 1], [], []>} : vector<256x8xf32>, vector<8x8xf32>, vector<256x8xf32> -> vector<256x8xf32>
    %171 = arith.addf %162, %170 : vector<256x8xf32>
    %c2_219 = arith.constant 2 : index
    %c1_220 = arith.constant 1 : index
    %c0_221 = arith.constant 0 : index
    %c0_222 = arith.constant 0 : index
    %172 = vector.load %arg6[%c2_219, %c1_220, %c0_221, %c0_222] : memref<3x3x8x8xf32, #tpu.memory_space<vmem>>, vector<1x1x8x8xf32>
    %173 = vector.shape_cast %172 : vector<1x1x8x8xf32> to vector<8x8xf32>
    %cst_223 = arith.constant dense<0.000000e+00> : vector<256x8xf32>
    %174 = tpu.matmul %167, %173, %cst_223 {dimension_numbers = #tpu.dot_dimension_numbers<[1], [0], [0], [1], [0, 0, 1, 1], [], []>} : vector<256x8xf32>, vector<8x8xf32>, vector<256x8xf32> -> vector<256x8xf32>
    %175 = arith.addf %171, %174 : vector<256x8xf32>
    %c2_224 = arith.constant 2 : index
    %c2_225 = arith.constant 2 : index
    %c0_226 = arith.constant 0 : index
    %176 = vector.load %arg9[%c2_224, %c2_225, %c0_226] : memref<18x18x8xf32, #tpu.memory_space<vmem>>, vector<16x16x8xf32>
    %177 = vector.shape_cast %176 : vector<16x16x8xf32> to vector<256x8xf32>
    %c0_227 = arith.constant 0 : index
    %c2_228 = arith.constant 2 : index
    %c2_229 = arith.constant 2 : index
    %c0_230 = arith.constant 0 : index
    %178 = vector.load %arg2[%c0_227, %c2_228, %c2_229, %c0_230] : memref<1x18x18x8xf32, #tpu.memory_space<vmem>>, vector<1x16x16x8xf32>
    %179 = vector.shape_cast %178 : vector<1x16x16x8xf32> to vector<16x16x8xf32>
    %180 = vector.shape_cast %179 : vector<16x16x8xf32> to vector<256x8xf32>
    %c2_231 = arith.constant 2 : index
    %c2_232 = arith.constant 2 : index
    %c0_233 = arith.constant 0 : index
    %c0_234 = arith.constant 0 : index
    %181 = vector.load %arg5[%c2_231, %c2_232, %c0_233, %c0_234] : memref<3x3x8x8xf32, #tpu.memory_space<vmem>>, vector<1x1x8x8xf32>
    %182 = vector.shape_cast %181 : vector<1x1x8x8xf32> to vector<8x8xf32>
    %cst_235 = arith.constant dense<0.000000e+00> : vector<256x8xf32>
    %183 = tpu.matmul %177, %182, %cst_235 {dimension_numbers = #tpu.dot_dimension_numbers<[1], [0], [0], [1], [0, 0, 1, 1], [], []>} : vector<256x8xf32>, vector<8x8xf32>, vector<256x8xf32> -> vector<256x8xf32>
    %184 = arith.addf %175, %183 : vector<256x8xf32>
    %c2_236 = arith.constant 2 : index
    %c2_237 = arith.constant 2 : index
    %c0_238 = arith.constant 0 : index
    %c0_239 = arith.constant 0 : index
    %185 = vector.load %arg6[%c2_236, %c2_237, %c0_238, %c0_239] : memref<3x3x8x8xf32, #tpu.memory_space<vmem>>, vector<1x1x8x8xf32>
    %186 = vector.shape_cast %185 : vector<1x1x8x8xf32> to vector<8x8xf32>
    %cst_240 = arith.constant dense<0.000000e+00> : vector<256x8xf32>
    %187 = tpu.matmul %180, %186, %cst_240 {dimension_numbers = #tpu.dot_dimension_numbers<[1], [0], [0], [1], [0, 0, 1, 1], [], []>} : vector<256x8xf32>, vector<8x8xf32>, vector<256x8xf32> -> vector<256x8xf32>
    %188 = arith.addf %184, %187 : vector<256x8xf32>
    %c0_241 = arith.constant 0 : index
    %c0_242 = arith.constant 0 : index
    %189 = vector.load %arg7[%c0_241, %c0_242] : memref<1x8xf32, #tpu.memory_space<vmem>>, vector<1x8xf32>
    %190 = vector.broadcast %189 : vector<1x8xf32> to vector<256x8xf32>
    %191 = arith.addf %188, %190 : vector<256x8xf32>
    %cst_243 = arith.constant dense<0.000000e+00> : vector<8xf32>
    %192 = vector.multi_reduction <add>, %191, %cst_243 [0] : vector<256x8xf32> to vector<8xf32>
    %193 = vector.shape_cast %192 : vector<8xf32> to vector<1x8xf32>
    %cst_244 = arith.constant 2.560000e+02 : f32
    %194 = vector.broadcast %cst_244 : f32 to vector<1x8xf32>
    %195 = arith.divf %193, %194 : vector<1x8xf32>
    %196 = vector.broadcast %195 : vector<1x8xf32> to vector<256x8xf32>
    %197 = arith.subf %191, %196 : vector<256x8xf32>
    %198 = arith.mulf %197, %197 : vector<256x8xf32>
    %cst_245 = arith.constant dense<0.000000e+00> : vector<8xf32>
    %199 = vector.multi_reduction <add>, %198, %cst_245 [0] : vector<256x8xf32> to vector<8xf32>
    %200 = vector.shape_cast %199 : vector<8xf32> to vector<1x8xf32>
    %cst_246 = arith.constant 2.560000e+02 : f32
    %201 = vector.broadcast %cst_246 : f32 to vector<1x8xf32>
    %202 = arith.divf %200, %201 : vector<1x8xf32>
    %cst_247 = arith.constant 9.99999974E-6 : f32
    %203 = vector.broadcast %cst_247 : f32 to vector<1x8xf32>
    %204 = arith.addf %202, %203 : vector<1x8xf32>
    %205 = math.rsqrt %204 : vector<1x8xf32>
    %206 = vector.broadcast %205 : vector<1x8xf32> to vector<256x8xf32>
    %207 = arith.mulf %197, %206 : vector<256x8xf32>
    %cst_248 = arith.constant 0.000000e+00 : f32
    %208 = vector.broadcast %cst_248 : f32 to vector<256x8xf32>
    %209 = arith.cmpf ogt, %207, %208 : vector<256x8xf32>
    %cst_249 = arith.constant 2.000000e-01 : f32
    %210 = vector.broadcast %cst_249 : f32 to vector<256x8xf32>
    %211 = arith.mulf %210, %207 : vector<256x8xf32>
    %212 = arith.select %209, %207, %211 : vector<256x8xi1>, vector<256x8xf32>
    %213 = vector.shape_cast %212 : vector<256x8xf32> to vector<1x16x16x8xf32>
    %c0_250 = arith.constant 0 : index
    %c0_251 = arith.constant 0 : index
    %c0_252 = arith.constant 0 : index
    %c0_253 = arith.constant 0 : index
    %214 = vector.load %arg8[%c0_250, %c0_251, %c0_252, %c0_253] : memref<1x16x16x8xf32, #tpu.memory_space<vmem>>, vector<1x16x16x8xf32>
    tpu.vector_store %arg8[%c0_250, %c0_251, %c0_252, %c0_253], %213 {strides = array<i32>} : memref<1x16x16x8xf32, #tpu.memory_space<vmem>>, vector<1x16x16x8xf32>,
    return
  }
  func.func @transform_0(%arg0: i32) -> (i32, i32, i32, i32) {
    %c0_i32 = arith.constant 0 : i32
    %c0_i32_0 = arith.constant 0 : i32
    %c0_i32_1 = arith.constant 0 : i32
    %c0_i32_2 = arith.constant 0 : i32
    return %arg0, %c0_i32, %c0_i32_0, %c0_i32_1 : i32, i32, i32, i32
  }
  func.func @transform_1(%arg0: i32) -> (i32, i32, i32, i32) {
    %c0_i32 = arith.constant 0 : i32
    %c0_i32_0 = arith.constant 0 : i32
    %c0_i32_1 = arith.constant 0 : i32
    %c0_i32_2 = arith.constant 0 : i32
    return %arg0, %c0_i32, %c0_i32_0, %c0_i32_1 : i32, i32, i32, i32
  }
  func.func @transform_2(%arg0: i32) -> (i32, i32, i32, i32) {
    %c0_i32 = arith.constant 0 : i32
    %c0_i32_0 = arith.constant 0 : i32
    %c0_i32_1 = arith.constant 0 : i32
    %c0_i32_2 = arith.constant 0 : i32
    %c0_i32_3 = arith.constant 0 : i32
    return %c0_i32, %c0_i32_0, %c0_i32_1, %c0_i32_2 : i32, i32, i32, i32
  }
  func.func @transform_3(%arg0: i32) -> (i32, i32) {
    %c0_i32 = arith.constant 0 : i32
    %c0_i32_0 = arith.constant 0 : i32
    %c0_i32_1 = arith.constant 0 : i32
    return %c0_i32, %c0_i32_0 : i32, i32
  }
  func.func @transform_4(%arg0: i32) -> (i32, i32, i32, i32) {
    %c0_i32 = arith.constant 0 : i32
    %c0_i32_0 = arith.constant 0 : i32
    %c0_i32_1 = arith.constant 0 : i32
    %c0_i32_2 = arith.constant 0 : i32
    %c0_i32_3 = arith.constant 0 : i32
    return %c0_i32, %c0_i32_0, %c0_i32_1, %c0_i32_2 : i32, i32, i32, i32
  }
  func.func @transform_5(%arg0: i32) -> (i32, i32, i32, i32) {
    %c0_i32 = arith.constant 0 : i32
    %c0_i32_0 = arith.constant 0 : i32
    %c0_i32_1 = arith.constant 0 : i32
    %c0_i32_2 = arith.constant 0 : i32
    %c0_i32_3 = arith.constant 0 : i32
    return %c0_i32, %c0_i32_0, %c0_i32_1, %c0_i32_2 : i32, i32, i32, i32
  }
  func.func @transform_6(%arg0: i32) -> (i32, i32) {
    %c0_i32 = arith.constant 0 : i32
    %c0_i32_0 = arith.constant 0 : i32
    %c0_i32_1 = arith.constant 0 : i32
    return %c0_i32, %c0_i32_0 : i32, i32
  }
  func.func @transform_7(%arg0: i32) -> (i32, i32, i32, i32) {
    %c0_i32 = arith.constant 0 : i32
    %c0_i32_0 = arith.constant 0 : i32
    %c0_i32_1 = arith.constant 0 : i32
    %c0_i32_2 = arith.constant 0 : i32
    return %arg0, %c0_i32, %c0_i32_0, %c0_i32_1 : i32, i32, i32, i32
  }
}

</mosaic_0001>

<llo_original>
// kernel: expanding_block.1
$region0: #{expanding_block.1}
  #allocation0 [shape = 'u32[]', space=smem, size = 0x4, offset = 0x4, fixed_abs, tag = 'smem constant byte address 0x4 - core index']
  #allocation1 [shape = 'u32[144,128]{1,0:T(1,128)}', space=vmem, size = 0x12000, scoped, tag = 'internal scratch']
  #allocation2 [shape = 'f32[18,18,8]{2,1,0:T(8,128)}', space=vmem, size = 0x36000, scoped, tag = 'scratch operand']
  %s0 = inlined_call_operand.vmem [shape: f32[2,18,18,16], index: 0, kind: input, shape index: {}]
  %s1 = inlined_call_operand.vmem [shape: f32[2,18,18,8], index: 1, kind: input, shape index: {}]
  %s2 = inlined_call_operand.vmem [shape: f32[3,3,16,8], index: 2, kind: input, shape index: {}]
  %s3 = inlined_call_operand.vmem [shape: f32[1,8], index: 3, kind: input, shape index: {}]
  %s4 = inlined_call_operand.vmem [shape: f32[3,3,8,8], index: 4, kind: input, shape index: {}]
  %s5 = inlined_call_operand.vmem [shape: f32[3,3,8,8], index: 5, kind: input, shape index: {}]
  %s6 = inlined_call_operand.vmem [shape: f32[1,8], index: 6, kind: input, shape index: {}]
  %s7 = inlined_call_operand.vmem [shape: f32[2,16,16,8], index: 7, kind: output, shape index: {}]
  %s8 = sld [smem:[#allocation0]]
  $region61: #{expanding_block.1} parent=0
    _
  %s10 = ssub.s32 1, %s8
  %s11 = scalar_select 0, %s10, %s8
  loop: start=0, step=1, limit=4
  $region2: #{expanding_block.1} parent=0 // loop_pre_header
    _
  $region3: #{expanding_block.1} parent=0 // loop_header
    %s13 = sphi 0, %s17
    %p14 = scmp.ge.s32.totalorder %s13, 4
    %s23 = sphi 0, %s25
    %s26 = sphi 0, %s23
    %s27 = sphi 0, %s26
    %s43 = sphi 0, %s27
    %s49 = sphi 0, %s51
    %s52 = sphi 0, %s49
    %s53 = sphi 0, %s52
    %s69 = sphi 0, %s53
    %s73 = sphi 0, %s73
    %s75 = sphi 0, %s73
    %s76 = sphi 0, %s75
    %s90 = sphi 0, %s76
    %s94 = sphi 0, %s94
    %s96 = sphi 0, %s94
    %s97 = sphi 0, %s96
    %s111 = sphi 0, %s97
    %s115 = sphi 0, %s115
    %s117 = sphi 0, %s115
    %s118 = sphi 0, %s117
    %s132 = sphi 0, %s118
    %s136 = sphi 0, %s136
    %s138 = sphi 0, %s136
    %s139 = sphi 0, %s138
    %s153 = sphi 0, %s139
    %s157 = sphi 0, %s157
    %s159 = sphi 0, %s157
    %s160 = sphi 0, %s159
    %s174 = sphi 0, %s160
    %s180 = sphi 0, %s182
    %s183 = sphi 0, %s180
    %s184 = sphi 0, %s183
    %s200 = sphi 0, %s184
  $region4: #{expanding_block.1} parent=0 // loop_header_branch
    %16 = sbr.rel (%p14) target = $region8
  $region5: #{expanding_block.1} parent=0 // loop_body
    %s18 = ssub.s32 %s13, 1
    %s19 = ssub.s32 %s13, 2
    %s20 = sadd.s32 %s13, 1
    %s21 = ssub.s32 %s13, %s20
    %p22 = scmp.eq.s32.totalorder %s21, 0
    %s24 = sadd.s32 %s23, 1
    %s25 = scalar_select %p22, %s23, %s24
    %p28 = pneg %p22
    %p29 = scmp.eq.s32.totalorder %s13, 1
    %p30 = por %p28, %p29
    %p31 = scmp.ne.s32.totalorder %s23, %s26
    %p32 = scmp.eq.s32.totalorder %s13, 0
    %p33 = por %p31, %p32
    %p34 = scmp.ne.s32.totalorder %s23, %s26
    %p35 = scmp.eq.s32.totalorder %s18, 1
    %p36 = por %p34, %p35
    %p37 = scmp.ne.s32.totalorder %s26, %s27
    %p38 = scmp.eq.s32.totalorder %s18, 0
    %p39 = por %p37, %p38
    %p40 = scmp.ne.s32.totalorder %s26, %s27
    %p41 = scmp.eq.s32.totalorder %s19, 1
    %p42 = por %p40, %p41
    %p44 = scmp.ne.s32.totalorder %s27, %s43
    %p45 = scmp.eq.s32.totalorder %s19, 0
    %p46 = por %p44, %p45
    %s47 = ssub.s32 %s13, %s20
    %p48 = scmp.eq.s32.totalorder %s47, 0
    %s50 = sadd.s32 %s49, 1
    %s51 = scalar_select %p48, %s49, %s50
    %p54 = pneg %p48
    %p55 = scmp.eq.s32.totalorder %s13, 1
    %p56 = por %p54, %p55
    %p57 = scmp.ne.s32.totalorder %s49, %s52
    %p58 = scmp.eq.s32.totalorder %s13, 0
    %p59 = por %p57, %p58
    %p60 = scmp.ne.s32.totalorder %s49, %s52
    %p61 = scmp.eq.s32.totalorder %s18, 1
    %p62 = por %p60, %p61
    %p63 = scmp.ne.s32.totalorder %s52, %s53
    %p64 = scmp.eq.s32.totalorder %s18, 0
    %p65 = por %p63, %p64
    %p66 = scmp.ne.s32.totalorder %s52, %s53
    %p67 = scmp.eq.s32.totalorder %s19, 1
    %p68 = por %p66, %p67
    %p70 = scmp.ne.s32.totalorder %s53, %s69
    %p71 = scmp.eq.s32.totalorder %s19, 0
    %p72 = por %p70, %p71
    %s74 = sadd.s32 %s73, 1
    %p77 = scmp.eq.s32.totalorder %s13, 1
    %p78 = scmp.ne.s32.totalorder %s73, %s75
    %p79 = scmp.eq.s32.totalorder %s13, 0
    %p80 = por %p78, %p79
    %p81 = scmp.ne.s32.totalorder %s73, %s75
    %p82 = scmp.eq.s32.totalorder %s18, 1
    %p83 = por %p81, %p82
    %p84 = scmp.ne.s32.totalorder %s75, %s76
    %p85 = scmp.eq.s32.totalorder %s18, 0
    %p86 = por %p84, %p85
    %p87 = scmp.ne.s32.totalorder %s75, %s76
    %p88 = scmp.eq.s32.totalorder %s19, 1
    %p89 = por %p87, %p88
    %p91 = scmp.ne.s32.totalorder %s76, %s90
    %p92 = scmp.eq.s32.totalorder %s19, 0
    %p93 = por %p91, %p92
    %s95 = sadd.s32 %s94, 1
    %p98 = scmp.eq.s32.totalorder %s13, 1
    %p99 = scmp.ne.s32.totalorder %s94, %s96
    %p100 = scmp.eq.s32.totalorder %s13, 0
    %p101 = por %p99, %p100
    %p102 = scmp.ne.s32.totalorder %s94, %s96
    %p103 = scmp.eq.s32.totalorder %s18, 1
    %p104 = por %p102, %p103
    %p105 = scmp.ne.s32.totalorder %s96, %s97
    %p106 = scmp.eq.s32.totalorder %s18, 0
    %p107 = por %p105, %p106
    %p108 = scmp.ne.s32.totalorder %s96, %s97
    %p109 = scmp.eq.s32.totalorder %s19, 1
    %p110 = por %p108, %p109
    %p112 = scmp.ne.s32.totalorder %s97, %s111
    %p113 = scmp.eq.s32.totalorder %s19, 0
    %p114 = por %p112, %p113
    %s116 = sadd.s32 %s115, 1
    %p119 = scmp.eq.s32.totalorder %s13, 1
    %p120 = scmp.ne.s32.totalorder %s115, %s117
    %p121 = scmp.eq.s32.totalorder %s13, 0
    %p122 = por %p120, %p121
    %p123 = scmp.ne.s32.totalorder %s115, %s117
    %p124 = scmp.eq.s32.totalorder %s18, 1
    %p125 = por %p123, %p124
    %p126 = scmp.ne.s32.totalorder %s117, %s118
    %p127 = scmp.eq.s32.totalorder %s18, 0
    %p128 = por %p126, %p127
    %p129 = scmp.ne.s32.totalorder %s117, %s118
    %p130 = scmp.eq.s32.totalorder %s19, 1
    %p131 = por %p129, %p130
    %p133 = scmp.ne.s32.totalorder %s118, %s132
    %p134 = scmp.eq.s32.totalorder %s19, 0
    %p135 = por %p133, %p134
    %s137 = sadd.s32 %s136, 1
    %p140 = scmp.eq.s32.totalorder %s13, 1
    %p141 = scmp.ne.s32.totalorder %s136, %s138
    %p142 = scmp.eq.s32.totalorder %s13, 0
    %p143 = por %p141, %p142
    %p144 = scmp.ne.s32.totalorder %s136, %s138
    %p145 = scmp.eq.s32.totalorder %s18, 1
    %p146 = por %p144, %p145
    %p147 = scmp.ne.s32.totalorder %s138, %s139
    %p148 = scmp.eq.s32.totalorder %s18, 0
    %p149 = por %p147, %p148
    %p150 = scmp.ne.s32.totalorder %s138, %s139
    %p151 = scmp.eq.s32.totalorder %s19, 1
    %p152 = por %p150, %p151
    %p154 = scmp.ne.s32.totalorder %s139, %s153
    %p155 = scmp.eq.s32.totalorder %s19, 0
    %p156 = por %p154, %p155
    %s158 = sadd.s32 %s157, 1
    %p161 = scmp.eq.s32.totalorder %s13, 1
    %p162 = scmp.ne.s32.totalorder %s157, %s159
    %p163 = scmp.eq.s32.totalorder %s13, 0
    %p164 = por %p162, %p163
    %p165 = scmp.ne.s32.totalorder %s157, %s159
    %p166 = scmp.eq.s32.totalorder %s18, 1
    %p167 = por %p165, %p166
    %p168 = scmp.ne.s32.totalorder %s159, %s160
    %p169 = scmp.eq.s32.totalorder %s18, 0
    %p170 = por %p168, %p169
    %p171 = scmp.ne.s32.totalorder %s159, %s160
    %p172 = scmp.eq.s32.totalorder %s19, 1
    %p173 = por %p171, %p172
    %p175 = scmp.ne.s32.totalorder %s160, %s174
    %p176 = scmp.eq.s32.totalorder %s19, 0
    %p177 = por %p175, %p176
    %s178 = ssub.s32 %s13, %s20
    %p179 = scmp.eq.s32.totalorder %s178, 0
    %s181 = sadd.s32 %s180, 1
    %s182 = scalar_select %p179, %s180, %s181
    %p185 = pneg %p179
    %p186 = scmp.eq.s32.totalorder %s13, 1
    %p187 = por %p185, %p186
    %p188 = scmp.ne.s32.totalorder %s180, %s183
    %p189 = scmp.eq.s32.totalorder %s13, 0
    %p190 = por %p188, %p189
    %p191 = scmp.ne.s32.totalorder %s180, %s183
    %p192 = scmp.eq.s32.totalorder %s18, 1
    %p193 = por %p191, %p192
    %p194 = scmp.ne.s32.totalorder %s183, %s184
    %p195 = scmp.eq.s32.totalorder %s18, 0
    %p196 = por %p194, %p195
    %p197 = scmp.ne.s32.totalorder %s183, %s184
    %p198 = scmp.eq.s32.totalorder %s19, 1
    %p199 = por %p197, %p198
    %p201 = scmp.ne.s32.totalorder %s184, %s200
    %p202 = scmp.eq.s32.totalorder %s19, 0
    %p203 = por %p201, %p202
    %p204 = scmp.le.s32.totalorder 1, %s13
    %p205 = scmp.lt.s32.totalorder %s13, 3
    %p206 = pnand %p204, %p205
    %p207 = pneg %p206
    // Predicated region
    $region9: #{expanding_block.1} parent=5 // pred_check
      _
    $region10: #{expanding_block.1} parent=5 // pred_check_branch
      %209 = sbr.rel (%p206) target = $region12
    $region11: #{expanding_block.1} parent=5 // pred_region
      %s210 = ssub.s32 %s13, 1
      // Predicated region
      $region13: #{expanding_block.1} parent=11 // pred_check
        %p211 = pneg %p86
      $region14: #{expanding_block.1} parent=11 // pred_check_branch
        %213 = sbr.rel (%p211) target = $region16
      $region15: #{expanding_block.1} parent=11 // pred_region
        _
      $region16: #{expanding_block.1} parent=11 // pred_fallthru
        _
      // Predicated region
      $region17: #{expanding_block.1} parent=11 // pred_check
        %p214 = pneg %p107
      $region18: #{expanding_block.1} parent=11 // pred_check_branch
        %216 = sbr.rel (%p214) target = $region20
      $region19: #{expanding_block.1} parent=11 // pred_region
        _
      $region20: #{expanding_block.1} parent=11 // pred_fallthru
        _
      // Predicated region
      $region21: #{expanding_block.1} parent=11 // pred_check
        %p217 = pneg %p128
      $region22: #{expanding_block.1} parent=11 // pred_check_branch
        %219 = sbr.rel (%p217) target = $region24
      $region23: #{expanding_block.1} parent=11 // pred_region
        _
      $region24: #{expanding_block.1} parent=11 // pred_fallthru
        _
      // Predicated region
      $region25: #{expanding_block.1} parent=11 // pred_check
        %p220 = pneg %p149
      $region26: #{expanding_block.1} parent=11 // pred_check_branch
        %222 = sbr.rel (%p220) target = $region28
      $region27: #{expanding_block.1} parent=11 // pred_region
        _
      $region28: #{expanding_block.1} parent=11 // pred_fallthru
        _
      // Predicated region
      $region29: #{expanding_block.1} parent=11 // pred_check
        %p223 = pneg %p170
      $region30: #{expanding_block.1} parent=11 // pred_check_branch
        %225 = sbr.rel (%p223) target = $region32
      $region31: #{expanding_block.1} parent=11 // pred_region
        _
      $region32: #{expanding_block.1} parent=11 // pred_fallthru
        _
    $region12: #{expanding_block.1} parent=5 // pred_fallthru
      _
    %p226 = scmp.lt.s32.totalorder %s13, 2
    // Predicated region
    $region33: #{expanding_block.1} parent=5 // pred_check
      %p227 = pneg %p226
    $region34: #{expanding_block.1} parent=5 // pred_check_branch
      %229 = sbr.rel (%p227) target = $region36
    $region35: #{expanding_block.1} parent=5 // pred_region
      // Predicated region
      $region37: #{expanding_block.1} parent=35 // pred_check
        %p230 = pneg %p33
      $region38: #{expanding_block.1} parent=35 // pred_check_branch
        %232 = sbr.rel (%p230) target = $region40
      $region39: #{expanding_block.1} parent=35 // pred_region
        %p233 = scmp.lt.s32.totalorder %s13, 1
        %s234 = scalar_select %p233, %s13, 1
        %s235 = smul.addr %s234, 54
        %s236 = smul.addr %s235, 8
        %s237 = scalar_lea.vmem %s0, %s236
      $region40: #{expanding_block.1} parent=35 // pred_fallthru
        _
      // Predicated region
      $region41: #{expanding_block.1} parent=35 // pred_check
        %p238 = pneg %p59
      $region42: #{expanding_block.1} parent=35 // pred_check_branch
        %240 = sbr.rel (%p238) target = $region44
      $region43: #{expanding_block.1} parent=35 // pred_region
        %p241 = scmp.lt.s32.totalorder %s13, 1
        %s242 = scalar_select %p241, %s13, 1
        %s243 = smul.addr %s242, 54
        %s244 = smul.addr %s243, 8
        %s245 = scalar_lea.vmem %s1, %s244
      $region44: #{expanding_block.1} parent=35 // pred_fallthru
        _
    $region36: #{expanding_block.1} parent=5 // pred_fallthru
      _
    %p246 = scmp.le.s32.totalorder 1, %s13
    %p247 = scmp.lt.s32.totalorder %s13, 3
    %p248 = pnand %p246, %p247
    %p249 = pneg %p248
    // Predicated region
    $region45: #{expanding_block.1} parent=5 // pred_check
      _
    $region46: #{expanding_block.1} parent=5 // pred_check_branch
      %251 = sbr.rel (%p248) target = $region48
    $region47: #{expanding_block.1} parent=5 // pred_region
      %s252 = ssub.s32 %s13, 1
      %p253 = scmp.lt.s32.totalorder %s18, 1
      %s254 = scalar_select %p253, %s18, 1
      %s255 = smul.addr %s254, 54
      %s256 = smul.addr %s255, 8
      %s257 = scalar_lea.vmem %s0, %s256
      %p258 = pneg %p39
      %p259 = pneg %p36
      %p260 = scmp.lt.s32.totalorder %s18, 1
      %s261 = scalar_select %p260, %s18, 1
      %s262 = smul.addr %s261, 54
      %s263 = smul.addr %s262, 8
      %s264 = scalar_lea.vmem %s1, %s263
      %p265 = pneg %p65
      %p266 = pneg %p62
      %p267 = pneg %p86
      %p268 = pneg %p83
      %p269 = pneg %p107
      %p270 = pneg %p104
      %p271 = pneg %p128
      %p272 = pneg %p125
      %p273 = pneg %p149
      %p274 = pneg %p146
      %p275 = pneg %p170
      %p276 = pneg %p167
      %p277 = pneg %p196
      %p278 = pneg %p193
      %p279 = scmp.lt.s32.totalorder %s18, 1
      %s280 = scalar_select %p279, %s18, 1
      %s281 = smul.addr %s280, 32
      %s282 = smul.addr %s281, 8
      %s283 = scalar_lea.vmem %s7, %s282
      %p284 = scmp.lt.s32.totalorder %s18, 1
      %s285 = scalar_select %p284, %s18, 1
      %s286 = smul.addr %s285, 54
      %s287 = smul.addr %s286, 8
      %s288 = scalar_lea.vmem %s0, %s287
      %p289 = scmp.lt.s32.totalorder %s18, 1
      %s290 = scalar_select %p289, %s18, 1
      %s291 = smul.addr %s290, 54
      %s292 = smul.addr %s291, 8
      %s293 = scalar_lea.vmem %s1, %s292
      %p294 = scmp.lt.s32.totalorder %s18, 1
      %s295 = scalar_select %p294, %s18, 1
      %s296 = smul.addr %s295, 32
      %s297 = smul.addr %s296, 8
      %s298 = scalar_lea.vmem %s7, %s297
      %v299 = vld [vmem:[%s288] sm:$0xff]
      %v300 = vld [vmem:[%s288 + $0x8] sm:$0xff]
      %v301 = vld [vmem:[%s288 + $0x18] sm:$0xff]
      %v302 = vld [vmem:[%s288 + $0x20] sm:$0xff]
      %v303 = vld [vmem:[%s288 + $0x30] sm:$0xff]
      %v304 = vld [vmem:[%s288 + $0x38] sm:$0xff]
      %v305 = vld [vmem:[%s288 + $0x48] sm:$0xff]
      %v306 = vld [vmem:[%s288 + $0x50] sm:$0xff]
      %v307 = vld [vmem:[%s288 + $0x60] sm:$0xff]
      %v308 = vld [vmem:[%s288 + $0x68] sm:$0xff]
      %v309 = vld [vmem:[%s288 + $0x78] sm:$0xff]
      %v310 = vld [vmem:[%s288 + $0x80] sm:$0xff]
      %v311 = vld [vmem:[%s288 + $0x90] sm:$0xff]
      %v312 = vld [vmem:[%s288 + $0x98] sm:$0xff]
      %v313 = vld [vmem:[%s288 + $0xa8] sm:$0xff]
      %v314 = vld [vmem:[%s288 + $0xb0] sm:$0xff]
      %v315 = vld [vmem:[%s288 + $0xc0] sm:$0xff]
      %v316 = vld [vmem:[%s288 + $0xc8] sm:$0xff]
      %v317 = vld [vmem:[%s288 + $0xd8] sm:$0xff]
      %v318 = vld [vmem:[%s288 + $0xe0] sm:$0xff]
      %v319 = vld [vmem:[%s288 + $0xf0] sm:$0xff]
      %v320 = vld [vmem:[%s288 + $0xf8] sm:$0xff]
      %v321 = vld [vmem:[%s288 + $0x108] sm:$0xff]
      %v322 = vld [vmem:[%s288 + $0x110] sm:$0xff]
      %v323 = vld [vmem:[%s288 + $0x120] sm:$0xff]
      %v324 = vld [vmem:[%s288 + $0x128] sm:$0xff]
      %v325 = vld [vmem:[%s288 + $0x138] sm:$0xff]
      %v326 = vld [vmem:[%s288 + $0x140] sm:$0xff]
      %v327 = vld [vmem:[%s288 + $0x150] sm:$0xff]
      %v328 = vld [vmem:[%s288 + $0x158] sm:$0xff]
      %v329 = vld [vmem:[%s288 + $0x168] sm:$0xff]
      %v330 = vld [vmem:[%s288 + $0x170] sm:$0xff]
      %v331 = vld [vmem:[%s2] sm:$0xff]
      %v332 = vld [vmem:[%s2 + $0x8] sm:$0xff]
      %v333 = vld [vmem:[%s288 + $0x1] sm:$0xff]
      %v334 = vld [vmem:[%s288 + $0x9] sm:$0xff]
      %v335 = vld [vmem:[%s288 + $0x19] sm:$0xff]
      %v336 = vld [vmem:[%s288 + $0x21] sm:$0xff]
      %v337 = vld [vmem:[%s288 + $0x31] sm:$0xff]
      %v338 = vld [vmem:[%s288 + $0x39] sm:$0xff]
      %v339 = vld [vmem:[%s288 + $0x49] sm:$0xff]
      %v340 = vld [vmem:[%s288 + $0x51] sm:$0xff]
      %v341 = vld [vmem:[%s288 + $0x61] sm:$0xff]
      %v342 = vld [vmem:[%s288 + $0x69] sm:$0xff]
      %v343 = vld [vmem:[%s288 + $0x79] sm:$0xff]
      %v344 = vld [vmem:[%s288 + $0x81] sm:$0xff]
      %v345 = vld [vmem:[%s288 + $0x91] sm:$0xff]
      %v346 = vld [vmem:[%s288 + $0x99] sm:$0xff]
      %v347 = vld [vmem:[%s288 + $0xa9] sm:$0xff]
      %v348 = vld [vmem:[%s288 + $0xb1] sm:$0xff]
      %v349 = vld [vmem:[%s288 + $0xc1] sm:$0xff]
      %v350 = vld [vmem:[%s288 + $0xc9] sm:$0xff]
      %v351 = vld [vmem:[%s288 + $0xd9] sm:$0xff]
      %v352 = vld [vmem:[%s288 + $0xe1] sm:$0xff]
      %v353 = vld [vmem:[%s288 + $0xf1] sm:$0xff]
      %v354 = vld [vmem:[%s288 + $0xf9] sm:$0xff]
      %v355 = vld [vmem:[%s288 + $0x109] sm:$0xff]
      %v356 = vld [vmem:[%s288 + $0x111] sm:$0xff]
      %v357 = vld [vmem:[%s288 + $0x121] sm:$0xff]
      %v358 = vld [vmem:[%s288 + $0x129] sm:$0xff]
      %v359 = vld [vmem:[%s288 + $0x139] sm:$0xff]
      %v360 = vld [vmem:[%s288 + $0x141] sm:$0xff]
      %v361 = vld [vmem:[%s288 + $0x151] sm:$0xff]
      %v362 = vld [vmem:[%s288 + $0x159] sm:$0xff]
      %v363 = vld [vmem:[%s288 + $0x169] sm:$0xff]
      %v364 = vld [vmem:[%s288 + $0x171] sm:$0xff]
      %s365 = scalar_lea.vmem %s2, 16
      %v366 = vld [vmem:[%s365] sm:$0xff]
      %v367 = vld [vmem:[%s365 + $0x8] sm:$0xff]
      %vm368 = vcmask 130048
      %v370 = vsel %vm368, %v333, 0
      %v373 = vsel %vm368, %v334, 0
      %v376 = vsel %vm368, %v335, 0
      %v379 = vsel %vm368, %v336, 0
      %v382 = vsel %vm368, %v337, 0
      %v385 = vsel %vm368, %v338, 0
      %v388 = vsel %vm368, %v339, 0
      %v391 = vsel %vm368, %v340, 0
      %v394 = vsel %vm368, %v341, 0
      %v397 = vsel %vm368, %v342, 0
      %v400 = vsel %vm368, %v343, 0
      %v403 = vsel %vm368, %v344, 0
      %v406 = vsel %vm368, %v345, 0
      %v409 = vsel %vm368, %v346, 0
      %v412 = vsel %vm368, %v347, 0
      %v415 = vsel %vm368, %v348, 0
      %v418 = vsel %vm368, %v349, 0
      %v421 = vsel %vm368, %v350, 0
      %v424 = vsel %vm368, %v351, 0
      %v427 = vsel %vm368, %v352, 0
      %v430 = vsel %vm368, %v353, 0
      %v433 = vsel %vm368, %v354, 0
      %v436 = vsel %vm368, %v355, 0
      %v439 = vsel %vm368, %v356, 0
      %v442 = vsel %vm368, %v357, 0
      %v445 = vsel %vm368, %v358, 0
      %v448 = vsel %vm368, %v359, 0
      %v451 = vsel %vm368, %v360, 0
      %v454 = vsel %vm368, %v361, 0
      %v457 = vsel %vm368, %v362, 0
      %v460 = vsel %vm368, %v363, 0
      %v463 = vsel %vm368, %v364, 0
      %465 = vmatprep.subr.mxu0 0.0
      %466 = vmatpush1.msra.mxu0 %v366
      %467 = vmatprep.subr.mxu0 0.0
      %468 = vmatpush1.msra.mxu0 %v367
      %469 = vmatprep.subr.mxu0 0.0
      %470 = vmatpush1.msra.mxu0 0.0
      %471 = vmatprep.subr.mxu0 0.0
      %472 = vmatpush1.msra.mxu0 0.0
      %473 = vmatprep.subr.mxu0 0.0
      %474 = vmatpush1.msra.mxu0 0.0
      %475 = vmatprep.subr.mxu0 0.0
      %476 = vmatpush1.msra.mxu0 0.0
      %477 = vmatprep.subr.mxu0 0.0
      %478 = vmatpush1.msra.mxu0 0.0
      %479 = vmatprep.subr.mxu0 0.0
      %480 = vmatpush1.msra.mxu0 0.0
      %481 = vmatprep.subr.mxu0 0.0
      %482 = vmatpush1.msra.mxu0 0.0
      %483 = vmatprep.subr.mxu0 0.0
      %484 = vmatpush1.msra.mxu0 0.0
      %485 = vmatprep.subr.mxu0 0.0
      %486 = vmatpush1.msra.mxu0 0.0
      %487 = vmatprep.subr.mxu0 0.0
      %488 = vmatpush1.msra.mxu0 0.0
      %489 = vmatprep.subr.mxu0 0.0
      %490 = vmatpush1.msra.mxu0 0.0
      %491 = vmatprep.subr.mxu0 0.0
      %492 = vmatpush1.msra.mxu0 0.0
      %493 = vmatprep.subr.mxu0 0.0
      %494 = vmatpush1.msra.mxu0 0.0
      %495 = vmatprep.subr.mxu0 0.0
      %496 = vmatpush1.msra.mxu0 0.0
      %497 = vmatprep.subr.mxu0 0.0
      %498 = vmatpush1.msra.mxu0 0.0
      %499 = vmatprep.subr.mxu0 0.0
      %500 = vmatpush1.msra.mxu0 0.0
      %501 = vmatprep.subr.mxu0 0.0
      %502 = vmatpush1.msra.mxu0 0.0
      %503 = vmatprep.subr.mxu0 0.0
      %504 = vmatpush1.msra.mxu0 0.0
      %505 = vmatprep.subr.mxu0 0.0
      %506 = vmatpush1.msra.mxu0 0.0
      %507 = vmatprep.subr.mxu0 0.0
      %508 = vmatpush1.msra.mxu0 0.0
      %509 = vmatprep.subr.mxu0 0.0
      %510 = vmatpush1.msra.mxu0 0.0
      %511 = vmatprep.subr.mxu0 0.0
      %512 = vmatpush1.msra.mxu0 0.0
      %513 = vmatprep.subr.mxu0 0.0
      %514 = vmatpush1.msra.mxu0 0.0
      %515 = vmatprep.subr.mxu0 0.0
      %516 = vmatpush1.msra.mxu0 0.0
      %517 = vmatprep.subr.mxu0 0.0
      %518 = vmatpush1.msra.mxu0 0.0
      %519 = vmatprep.subr.mxu0 0.0
      %520 = vmatpush1.msra.mxu0 0.0
      %521 = vmatprep.subr.mxu0 0.0
      %522 = vmatpush1.msra.mxu0 0.0
      %523 = vmatprep.subr.mxu0 0.0
      %524 = vmatpush1.msra.mxu0 0.0
      %525 = vmatprep.subr.mxu0 0.0
      %526 = vmatpush1.msra.mxu0 0.0
      %527 = vmatprep.subr.mxu0 0.0
      %528 = vmatpush1.msra.mxu0 0.0
      %529 = vmatprep.mubr.f32.mxu0 0.0
      %530 = vmatmul.mubr.f32.gmra.mrb[0].mxu0 %v370
      %v531 = vpop.f32.mrb[0].mxu0
      %v532 = vadd.f32 0.0, %v531
      %v533 = vpop.f32.mrb[0].mxu0
      %534 = vmatprep.mubr.f32.mxu0 0.0
      %535 = vmatmul.mubr.f32.gmra.mrb[0].mxu0 %v373
      %v536 = vpop.f32.mrb[0].mxu0
      %v537 = vadd.f32 0.0, %v536
      %v538 = vpop.f32.mrb[0].mxu0
      %539 = vmatprep.mubr.f32.mxu0 0.0
      %540 = vmatmul.mubr.f32.gmra.mrb[0].mxu0 %v376
      %v541 = vpop.f32.mrb[0].mxu0
      %v542 = vadd.f32 0.0, %v541
      %v543 = vpop.f32.mrb[0].mxu0
      %544 = vmatprep.mubr.f32.mxu0 0.0
      %545 = vmatmul.mubr.f32.gmra.mrb[0].mxu0 %v379
      %v546 = vpop.f32.mrb[0].mxu0
      %v547 = vadd.f32 0.0, %v546
      %v548 = vpop.f32.mrb[0].mxu0
      %549 = vmatprep.mubr.f32.mxu0 0.0
      %550 = vmatmul.mubr.f32.gmra.mrb[0].mxu0 %v382
      %v551 = vpop.f32.mrb[0].mxu0
      %v552 = vadd.f32 0.0, %v551
      %v553 = vpop.f32.mrb[0].mxu0
      %554 = vmatprep.mubr.f32.mxu0 0.0
      %555 = vmatmul.mubr.f32.gmra.mrb[0].mxu0 %v385
      %v556 = vpop.f32.mrb[0].mxu0
      %v557 = vadd.f32 0.0, %v556
      %v558 = vpop.f32.mrb[0].mxu0
      %559 = vmatprep.mubr.f32.mxu0 0.0
      %560 = vmatmul.mubr.f32.gmra.mrb[0].mxu0 %v388
      %v561 = vpop.f32.mrb[0].mxu0
      %v562 = vadd.f32 0.0, %v561
      %v563 = vpop.f32.mrb[0].mxu0
      %564 = vmatprep.mubr.f32.mxu0 0.0
      %565 = vmatmul.mubr.f32.gmra.mrb[0].mxu0 %v391
      %v566 = vpop.f32.mrb[0].mxu0
      %v567 = vadd.f32 0.0, %v566
      %v568 = vpop.f32.mrb[0].mxu0
      %569 = vmatprep.mubr.f32.mxu0 0.0
      %570 = vmatmul.mubr.f32.gmra.mrb[0].mxu0 %v394
      %v571 = vpop.f32.mrb[0].mxu0
      %v572 = vadd.f32 0.0, %v571
      %v573 = vpop.f32.mrb[0].mxu0
      %574 = vmatprep.mubr.f32.mxu0 0.0
      %575 = vmatmul.mubr.f32.gmra.mrb[0].mxu0 %v397
      %v576 = vpop.f32.mrb[0].mxu0
      %v577 = vadd.f32 0.0, %v576
      %v578 = vpop.f32.mrb[0].mxu0
      %579 = vmatprep.mubr.f32.mxu0 0.0
      %580 = vmatmul.mubr.f32.gmra.mrb[0].mxu0 %v400
      %v581 = vpop.f32.mrb[0].mxu0
      %v582 = vadd.f32 0.0, %v581
      %v583 = vpop.f32.mrb[0].mxu0
      %584 = vmatprep.mubr.f32.mxu0 0.0
      %585 = vmatmul.mubr.f32.gmra.mrb[0].mxu0 %v403
      %v586 = vpop.f32.mrb[0].mxu0
      %v587 = vadd.f32 0.0, %v586
      %v588 = vpop.f32.mrb[0].mxu0
      %589 = vmatprep.mubr.f32.mxu0 0.0
      %590 = vmatmul.mubr.f32.gmra.mrb[0].mxu0 %v406
      %v591 = vpop.f32.mrb[0].mxu0
      %v592 = vadd.f32 0.0, %v591
      %v593 = vpop.f32.mrb[0].mxu0
      %594 = vmatprep.mubr.f32.mxu0 0.0
      %595 = vmatmul.mubr.f32.gmra.mrb[0].mxu0 %v409
      %v596 = vpop.f32.mrb[0].mxu0
      %v597 = vadd.f32 0.0, %v596
      %v598 = vpop.f32.mrb[0].mxu0
      %599 = vmatprep.mubr.f32.mxu0 0.0
      %600 = vmatmul.mubr.f32.gmra.mrb[0].mxu0 %v412
      %v601 = vpop.f32.mrb[0].mxu0
      %v602 = vadd.f32 0.0, %v601
      %v603 = vpop.f32.mrb[0].mxu0
      %604 = vmatprep.mubr.f32.mxu0 0.0
      %605 = vmatmul.mubr.f32.gmra.mrb[0].mxu0 %v415
      %v606 = vpop.f32.mrb[0].mxu0
      %v607 = vadd.f32 0.0, %v606
      %v608 = vpop.f32.mrb[0].mxu0
      %609 = vmatprep.mubr.f32.mxu0 0.0
      %610 = vmatmul.mubr.f32.gmra.mrb[0].mxu0 %v418
      %v611 = vpop.f32.mrb[0].mxu0
      %v612 = vadd.f32 0.0, %v611
      %v613 = vpop.f32.mrb[0].mxu0
      %614 = vmatprep.mubr.f32.mxu0 0.0
      %615 = vmatmul.mubr.f32.gmra.mrb[0].mxu0 %v421
      %v616 = vpop.f32.mrb[0].mxu0
      %v617 = vadd.f32 0.0, %v616
      %v618 = vpop.f32.mrb[0].mxu0
      %619 = vmatprep.mubr.f32.mxu0 0.0
      %620 = vmatmul.mubr.f32.gmra.mrb[0].mxu0 %v424
      %v621 = vpop.f32.mrb[0].mxu0
      %v622 = vadd.f32 0.0, %v621
      %v623 = vpop.f32.mrb[0].mxu0
      %624 = vmatprep.mubr.f32.mxu0 0.0
      %625 = vmatmul.mubr.f32.gmra.mrb[0].mxu0 %v427
      %v626 = vpop.f32.mrb[0].mxu0
      %v627 = vadd.f32 0.0, %v626
      %v628 = vpop.f32.mrb[0].mxu0
      %629 = vmatprep.mubr.f32.mxu0 0.0
      %630 = vmatmul.mubr.f32.gmra.mrb[0].mxu0 %v430
      %v631 = vpop.f32.mrb[0].mxu0
      %v632 = vadd.f32 0.0, %v631
      %v633 = vpop.f32.mrb[0].mxu0
      %634 = vmatprep.mubr.f32.mxu0 0.0
      %635 = vmatmul.mubr.f32.gmra.mrb[0].mxu0 %v433
      %v636 = vpop.f32.mrb[0].mxu0
      %v637 = vadd.f32 0.0, %v636
      %v638 = vpop.f32.mrb[0].mxu0
      %639 = vmatprep.mubr.f32.mxu0 0.0
      %640 = vmatmul.mubr.f32.gmra.mrb[0].mxu0 %v436
      %v641 = vpop.f32.mrb[0].mxu0
      %v642 = vadd.f32 0.0, %v641
      %v643 = vpop.f32.mrb[0].mxu0
      %644 = vmatprep.mubr.f32.mxu0 0.0
      %645 = vmatmul.mubr.f32.gmra.mrb[0].mxu0 %v439
      %v646 = vpop.f32.mrb[0].mxu0
      %v647 = vadd.f32 0.0, %v646
      %v648 = vpop.f32.mrb[0].mxu0
      %649 = vmatprep.mubr.f32.mxu0 0.0
      %650 = vmatmul.mubr.f32.gmra.mrb[0].mxu0 %v442
      %v651 = vpop.f32.mrb[0].mxu0
      %v652 = vadd.f32 0.0, %v651
      %v653 = vpop.f32.mrb[0].mxu0
      %654 = vmatprep.mubr.f32.mxu0 0.0
      %655 = vmatmul.mubr.f32.gmra.mrb[0].mxu0 %v445
      %v656 = vpop.f32.mrb[0].mxu0
      %v657 = vadd.f32 0.0, %v656
      %v658 = vpop.f32.mrb[0].mxu0
      %659 = vmatprep.mubr.f32.mxu0 0.0
      %660 = vmatmul.mubr.f32.gmra.mrb[0].mxu0 %v448
      %v661 = vpop.f32.mrb[0].mxu0
      %v662 = vadd.f32 0.0, %v661
      %v663 = vpop.f32.mrb[0].mxu0
      %664 = vmatprep.mubr.f32.mxu0 0.0
      %665 = vmatmul.mubr.f32.gmra.mrb[0].mxu0 %v451
      %v666 = vpop.f32.mrb[0].mxu0
      %v667 = vadd.f32 0.0, %v666
      %v668 = vpop.f32.mrb[0].mxu0
      %669 = vmatprep.mubr.f32.mxu0 0.0
      %670 = vmatmul.mubr.f32.gmra.mrb[0].mxu0 %v454
      %v671 = vpop.f32.mrb[0].mxu0
      %v672 = vadd.f32 0.0, %v671
      %v673 = vpop.f32.mrb[0].mxu0
      %674 = vmatprep.mubr.f32.mxu0 0.0
      %675 = vmatmul.mubr.f32.gmra.mrb[0].mxu0 %v457
      %v676 = vpop.f32.mrb[0].mxu0
      %v677 = vadd.f32 0.0, %v676
      %v678 = vpop.f32.mrb[0].mxu0
      %679 = vmatprep.mubr.f32.mxu0 0.0
      %680 = vmatmul.mubr.f32.gmra.mrb[0].mxu0 %v460
      %v681 = vpop.f32.mrb[0].mxu0
      %v682 = vadd.f32 0.0, %v681
      %v683 = vpop.f32.mrb[0].mxu0
      %684 = vmatprep.mubr.f32.mxu0 0.0
      %685 = vmatmul.mubr.f32.gmra.mrb[0].mxu0 %v463
      %v686 = vpop.f32.mrb[0].mxu0
      %v687 = vadd.f32 0.0, %v686
      %v688 = vpop.f32.mrb[0].mxu0
      %689 = vdwg.mxu0
      %v691 = vsel %vm368, %v299, 0
      %v694 = vsel %vm368, %v300, 0
      %v697 = vsel %vm368, %v301, 0
      %v700 = vsel %vm368, %v302, 0
      %v703 = vsel %vm368, %v303, 0
      %v706 = vsel %vm368, %v304, 0
      %v709 = vsel %vm368, %v305, 0
      %v712 = vsel %vm368, %v306, 0
      %v715 = vsel %vm368, %v307, 0
      %v718 = vsel %vm368, %v308, 0
      %v721 = vsel %vm368, %v309, 0
      %v724 = vsel %vm368, %v310, 0
      %v727 = vsel %vm368, %v311, 0
      %v730 = vsel %vm368, %v312, 0
      %v733 = vsel %vm368, %v313, 0
      %v736 = vsel %vm368, %v314, 0
      %v739 = vsel %vm368, %v315, 0
      %v742 = vsel %vm368, %v316, 0
      %v745 = vsel %vm368, %v317, 0
      %v748 = vsel %vm368, %v318, 0
      %v751 = vsel %vm368, %v319, 0
      %v754 = vsel %vm368, %v320, 0
      %v757 = vsel %vm368, %v321, 0
      %v760 = vsel %vm368, %v322, 0
      %v763 = vsel %vm368, %v323, 0
      %v766 = vsel %vm368, %v324, 0
      %v769 = vsel %vm368, %v325, 0
      %v772 = vsel %vm368, %v326, 0
      %v775 = vsel %vm368, %v327, 0
      %v778 = vsel %vm368, %v328, 0
      %v781 = vsel %vm368, %v329, 0
      %v784 = vsel %vm368, %v330, 0
      %786 = vmatprep.subr.mxu0 0.0
      %787 = vmatpush1.msra.mxu0 %v331
      %788 = vmatprep.subr.mxu0 0.0
      %789 = vmatpush1.msra.mxu0 %v332
      %790 = vmatprep.subr.mxu0 0.0
      %791 = vmatpush1.msra.mxu0 0.0
      %792 = vmatprep.subr.mxu0 0.0
      %793 = vmatpush1.msra.mxu0 0.0
      %794 = vmatprep.subr.mxu0 0.0
      %795 = vmatpush1.msra.mxu0 0.0
      %796 = vmatprep.subr.mxu0 0.0
      %797 = vmatpush1.msra.mxu0 0.0
      %798 = vmatprep.subr.mxu0 0.0
      %799 = vmatpush1.msra.mxu0 0.0
      %800 = vmatprep.subr.mxu0 0.0
      %801 = vmatpush1.msra.mxu0 0.0
      %802 = vmatprep.subr.mxu0 0.0
      %803 = vmatpush1.msra.mxu0 0.0
      %804 = vmatprep.subr.mxu0 0.0
      %805 = vmatpush1.msra.mxu0 0.0
      %806 = vmatprep.subr.mxu0 0.0
      %807 = vmatpush1.msra.mxu0 0.0
      %808 = vmatprep.subr.mxu0 0.0
      %809 = vmatpush1.msra.mxu0 0.0
      %810 = vmatprep.subr.mxu0 0.0
      %811 = vmatpush1.msra.mxu0 0.0
      %812 = vmatprep.subr.mxu0 0.0
      %813 = vmatpush1.msra.mxu0 0.0
      %814 = vmatprep.subr.mxu0 0.0
      %815 = vmatpush1.msra.mxu0 0.0
      %816 = vmatprep.subr.mxu0 0.0
      %817 = vmatpush1.msra.mxu0 0.0
      %818 = vmatprep.subr.mxu0 0.0
      %819 = vmatpush1.msra.mxu0 0.0
      %820 = vmatprep.subr.mxu0 0.0
      %821 = vmatpush1.msra.mxu0 0.0
      %822 = vmatprep.subr.mxu0 0.0
      %823 = vmatpush1.msra.mxu0 0.0
      %824 = vmatprep.subr.mxu0 0.0
      %825 = vmatpush1.msra.mxu0 0.0
      %826 = vmatprep.subr.mxu0 0.0
      %827 = vmatpush1.msra.mxu0 0.0
      %828 = vmatprep.subr.mxu0 0.0
      %829 = vmatpush1.msra.mxu0 0.0
      %830 = vmatprep.subr.mxu0 0.0
      %831 = vmatpush1.msra.mxu0 0.0
      %832 = vmatprep.subr.mxu0 0.0
      %833 = vmatpush1.msra.mxu0 0.0
      %834 = vmatprep.subr.mxu0 0.0
      %835 = vmatpush1.msra.mxu0 0.0
      %836 = vmatprep.subr.mxu0 0.0
      %837 = vmatpush1.msra.mxu0 0.0
      %838 = vmatprep.subr.mxu0 0.0
      %839 = vmatpush1.msra.mxu0 0.0
      %840 = vmatprep.subr.mxu0 0.0
      %841 = vmatpush1.msra.mxu0 0.0
      %842 = vmatprep.subr.mxu0 0.0
      %843 = vmatpush1.msra.mxu0 0.0
      %844 = vmatprep.subr.mxu0 0.0
      %845 = vmatpush1.msra.mxu0 0.0
      %846 = vmatprep.subr.mxu0 0.0
      %847 = vmatpush1.msra.mxu0 0.0
      %848 = vmatprep.subr.mxu0 0.0
      %849 = vmatpush1.msra.mxu0 0.0
      %850 = vmatprep.mubr.f32.mxu0 0.0
      %851 = vmatmul.mubr.f32.gmra.mrb[0].mxu0 %v691
      %v852 = vpop.f32.mrb[0].mxu0
      %v853 = vadd.f32 %v532, %v852
      %v854 = vpop.f32.mrb[0].mxu0
      %855 = vmatprep.mubr.f32.mxu0 0.0
      %856 = vmatmul.mubr.f32.gmra.mrb[0].mxu0 %v694
      %v857 = vpop.f32.mrb[0].mxu0
      %v858 = vadd.f32 %v537, %v857
      %v859 = vpop.f32.mrb[0].mxu0
      %860 = vmatprep.mubr.f32.mxu0 0.0
      %861 = vmatmul.mubr.f32.gmra.mrb[0].mxu0 %v697
      %v862 = vpop.f32.mrb[0].mxu0
      %v863 = vadd.f32 %v542, %v862
      %v864 = vpop.f32.mrb[0].mxu0
      %865 = vmatprep.mubr.f32.mxu0 0.0
      %866 = vmatmul.mubr.f32.gmra.mrb[0].mxu0 %v700
      %v867 = vpop.f32.mrb[0].mxu0
      %v868 = vadd.f32 %v547, %v867
      %v869 = vpop.f32.mrb[0].mxu0
      %870 = vmatprep.mubr.f32.mxu0 0.0
      %871 = vmatmul.mubr.f32.gmra.mrb[0].mxu0 %v703
      %v872 = vpop.f32.mrb[0].mxu0
      %v873 = vadd.f32 %v552, %v872
      %v874 = vpop.f32.mrb[0].mxu0
      %875 = vmatprep.mubr.f32.mxu0 0.0
      %876 = vmatmul.mubr.f32.gmra.mrb[0].mxu0 %v706
      %v877 = vpop.f32.mrb[0].mxu0
      %v878 = vadd.f32 %v557, %v877
      %v879 = vpop.f32.mrb[0].mxu0
      %880 = vmatprep.mubr.f32.mxu0 0.0
      %881 = vmatmul.mubr.f32.gmra.mrb[0].mxu0 %v709
      %v882 = vpop.f32.mrb[0].mxu0
      %v883 = vadd.f32 %v562, %v882
      %v884 = vpop.f32.mrb[0].mxu0
      %885 = vmatprep.mubr.f32.mxu0 0.0
      %886 = vmatmul.mubr.f32.gmra.mrb[0].mxu0 %v712
      %v887 = vpop.f32.mrb[0].mxu0
      %v888 = vadd.f32 %v567, %v887
      %v889 = vpop.f32.mrb[0].mxu0
      %890 = vmatprep.mubr.f32.mxu0 0.0
      %891 = vmatmul.mubr.f32.gmra.mrb[0].mxu0 %v715
      %v892 = vpop.f32.mrb[0].mxu0
      %v893 = vadd.f32 %v572, %v892
      %v894 = vpop.f32.mrb[0].mxu0
      %895 = vmatprep.mubr.f32.mxu0 0.0
      %896 = vmatmul.mubr.f32.gmra.mrb[0].mxu0 %v718
      %v897 = vpop.f32.mrb[0].mxu0
      %v898 = vadd.f32 %v577, %v897
      %v899 = vpop.f32.mrb[0].mxu0
      %900 = vmatprep.mubr.f32.mxu0 0.0
      %901 = vmatmul.mubr.f32.gmra.mrb[0].mxu0 %v721
      %v902 = vpop.f32.mrb[0].mxu0
      %v903 = vadd.f32 %v582, %v902
      %v904 = vpop.f32.mrb[0].mxu0
      %905 = vmatprep.mubr.f32.mxu0 0.0
      %906 = vmatmul.mubr.f32.gmra.mrb[0].mxu0 %v724
      %v907 = vpop.f32.mrb[0].mxu0
      %v908 = vadd.f32 %v587, %v907
      %v909 = vpop.f32.mrb[0].mxu0
      %910 = vmatprep.mubr.f32.mxu0 0.0
      %911 = vmatmul.mubr.f32.gmra.mrb[0].mxu0 %v727
      %v912 = vpop.f32.mrb[0].mxu0
      %v913 = vadd.f32 %v592, %v912
      %v914 = vpop.f32.mrb[0].mxu0
      %915 = vmatprep.mubr.f32.mxu0 0.0
      %916 = vmatmul.mubr.f32.gmra.mrb[0].mxu0 %v730
      %v917 = vpop.f32.mrb[0].mxu0
      %v918 = vadd.f32 %v597, %v917
      %v919 = vpop.f32.mrb[0].mxu0
      %920 = vmatprep.mubr.f32.mxu0 0.0
      %921 = vmatmul.mubr.f32.gmra.mrb[0].mxu0 %v733
      %v922 = vpop.f32.mrb[0].mxu0
      %v923 = vadd.f32 %v602, %v922
      %v924 = vpop.f32.mrb[0].mxu0
      %925 = vmatprep.mubr.f32.mxu0 0.0
      %926 = vmatmul.mubr.f32.gmra.mrb[0].mxu0 %v736
      %v927 = vpop.f32.mrb[0].mxu0
      %v928 = vadd.f32 %v607, %v927
      %v929 = vpop.f32.mrb[0].mxu0
      %930 = vmatprep.mubr.f32.mxu0 0.0
      %931 = vmatmul.mubr.f32.gmra.mrb[0].mxu0 %v739
      %v932 = vpop.f32.mrb[0].mxu0
      %v933 = vadd.f32 %v612, %v932
      %v934 = vpop.f32.mrb[0].mxu0
      %935 = vmatprep.mubr.f32.mxu0 0.0
      %936 = vmatmul.mubr.f32.gmra.mrb[0].mxu0 %v742
      %v937 = vpop.f32.mrb[0].mxu0
      %v938 = vadd.f32 %v617, %v937
      %v939 = vpop.f32.mrb[0].mxu0
      %940 = vmatprep.mubr.f32.mxu0 0.0
      %941 = vmatmul.mubr.f32.gmra.mrb[0].mxu0 %v745
      %v942 = vpop.f32.mrb[0].mxu0
      %v943 = vadd.f32 %v622, %v942
      %v944 = vpop.f32.mrb[0].mxu0
      %945 = vmatprep.mubr.f32.mxu0 0.0
      %946 = vmatmul.mubr.f32.gmra.mrb[0].mxu0 %v748
      %v947 = vpop.f32.mrb[0].mxu0
      %v948 = vadd.f32 %v627, %v947
      %v949 = vpop.f32.mrb[0].mxu0
      %950 = vmatprep.mubr.f32.mxu0 0.0
      %951 = vmatmul.mubr.f32.gmra.mrb[0].mxu0 %v751
      %v952 = vpop.f32.mrb[0].mxu0
      %v953 = vadd.f32 %v632, %v952
      %v954 = vpop.f32.mrb[0].mxu0
      %955 = vmatprep.mubr.f32.mxu0 0.0
      %956 = vmatmul.mubr.f32.gmra.mrb[0].mxu0 %v754
      %v957 = vpop.f32.mrb[0].mxu0
      %v958 = vadd.f32 %v637, %v957
      %v959 = vpop.f32.mrb[0].mxu0
      %960 = vmatprep.mubr.f32.mxu0 0.0
      %961 = vmatmul.mubr.f32.gmra.mrb[0].mxu0 %v757
      %v962 = vpop.f32.mrb[0].mxu0
      %v963 = vadd.f32 %v642, %v962
      %v964 = vpop.f32.mrb[0].mxu0
      %965 = vmatprep.mubr.f32.mxu0 0.0
      %966 = vmatmul.mubr.f32.gmra.mrb[0].mxu0 %v760
      %v967 = vpop.f32.mrb[0].mxu0
      %v968 = vadd.f32 %v647, %v967
      %v969 = vpop.f32.mrb[0].mxu0
      %970 = vmatprep.mubr.f32.mxu0 0.0
      %971 = vmatmul.mubr.f32.gmra.mrb[0].mxu0 %v763
      %v972 = vpop.f32.mrb[0].mxu0
      %v973 = vadd.f32 %v652, %v972
      %v974 = vpop.f32.mrb[0].mxu0
      %975 = vmatprep.mubr.f32.mxu0 0.0
      %976 = vmatmul.mubr.f32.gmra.mrb[0].mxu0 %v766
      %v977 = vpop.f32.mrb[0].mxu0
      %v978 = vadd.f32 %v657, %v977
      %v979 = vpop.f32.mrb[0].mxu0
      %980 = vmatprep.mubr.f32.mxu0 0.0
      %981 = vmatmul.mubr.f32.gmra.mrb[0].mxu0 %v769
      %v982 = vpop.f32.mrb[0].mxu0
      %v983 = vadd.f32 %v662, %v982
      %v984 = vpop.f32.mrb[0].mxu0
      %985 = vmatprep.mubr.f32.mxu0 0.0
      %986 = vmatmul.mubr.f32.gmra.mrb[0].mxu0 %v772
      %v987 = vpop.f32.mrb[0].mxu0
      %v988 = vadd.f32 %v667, %v987
      %v989 = vpop.f32.mrb[0].mxu0
      %990 = vmatprep.mubr.f32.mxu0 0.0
      %991 = vmatmul.mubr.f32.gmra.mrb[0].mxu0 %v775
      %v992 = vpop.f32.mrb[0].mxu0
      %v993 = vadd.f32 %v672, %v992
      %v994 = vpop.f32.mrb[0].mxu0
      %995 = vmatprep.mubr.f32.mxu0 0.0
      %996 = vmatmul.mubr.f32.gmra.mrb[0].mxu0 %v778
      %v997 = vpop.f32.mrb[0].mxu0
      %v998 = vadd.f32 %v677, %v997
      %v999 = vpop.f32.mrb[0].mxu0
      %1000 = vmatprep.mubr.f32.mxu0 0.0
      %1001 = vmatmul.mubr.f32.gmra.mrb[0].mxu0 %v781
      %v1002 = vpop.f32.mrb[0].mxu0
      %v1003 = vadd.f32 %v682, %v1002
      %v1004 = vpop.f32.mrb[0].mxu0
      %1005 = vmatprep.mubr.f32.mxu0 0.0
      %1006 = vmatmul.mubr.f32.gmra.mrb[0].mxu0 %v784
      %v1007 = vpop.f32.mrb[0].mxu0
      %v1008 = vadd.f32 %v687, %v1007
      %v1009 = vpop.f32.mrb[0].mxu0
      %1010 = vdwg.mxu0
      %v1011 = vld [vmem:[%s288 + $0x2] sm:$0xff]
      %v1012 = vld [vmem:[%s288 + $0xa] sm:$0xff]
      %v1013 = vld [vmem:[%s288 + $0x1a] sm:$0xff]
      %v1014 = vld [vmem:[%s288 + $0x22] sm:$0xff]
      %v1015 = vld [vmem:[%s288 + $0x32] sm:$0xff]
      %v1016 = vld [vmem:[%s288 + $0x3a] sm:$0xff]
      %v1017 = vld [vmem:[%s288 + $0x4a] sm:$0xff]
      %v1018 = vld [vmem:[%s288 + $0x52] sm:$0xff]
      %v1019 = vld [vmem:[%s288 + $0x62] sm:$0xff]
      %v1020 = vld [vmem:[%s288 + $0x6a] sm:$0xff]
      %v1021 = vld [vmem:[%s288 + $0x7a] sm:$0xff]
      %v1022 = vld [vmem:[%s288 + $0x82] sm:$0xff]
      %v1023 = vld [vmem:[%s288 + $0x92] sm:$0xff]
      %v1024 = vld [vmem:[%s288 + $0x9a] sm:$0xff]
      %v1025 = vld [vmem:[%s288 + $0xaa] sm:$0xff]
      %v1026 = vld [vmem:[%s288 + $0xb2] sm:$0xff]
      %v1027 = vld [vmem:[%s288 + $0xc2] sm:$0xff]
      %v1028 = vld [vmem:[%s288 + $0xca] sm:$0xff]
      %v1029 = vld [vmem:[%s288 + $0xda] sm:$0xff]
      %v1030 = vld [vmem:[%s288 + $0xe2] sm:$0xff]
      %v1031 = vld [vmem:[%s288 + $0xf2] sm:$0xff]
      %v1032 = vld [vmem:[%s288 + $0xfa] sm:$0xff]
      %v1033 = vld [vmem:[%s288 + $0x10a] sm:$0xff]
      %v1034 = vld [vmem:[%s288 + $0x112] sm:$0xff]
      %v1035 = vld [vmem:[%s288 + $0x122] sm:$0xff]
      %v1036 = vld [vmem:[%s288 + $0x12a] sm:$0xff]
      %v1037 = vld [vmem:[%s288 + $0x13a] sm:$0xff]
      %v1038 = vld [vmem:[%s288 + $0x142] sm:$0xff]
      %v1039 = vld [vmem:[%s288 + $0x152] sm:$0xff]
      %v1040 = vld [vmem:[%s288 + $0x15a] sm:$0xff]
      %v1041 = vld [vmem:[%s288 + $0x16a] sm:$0xff]
      %v1042 = vld [vmem:[%s288 + $0x172] sm:$0xff]
      %s1043 = scalar_lea.vmem %s2, 32
      %v1044 = vld [vmem:[%s1043] sm:$0xff]
      %v1045 = vld [vmem:[%s1043 + $0x8] sm:$0xff]
      %v1047 = vsel %vm368, %v1011, 0
      %v1050 = vsel %vm368, %v1012, 0
      %v1053 = vsel %vm368, %v1013, 0
      %v1056 = vsel %vm368, %v1014, 0
      %v1059 = vsel %vm368, %v1015, 0
      %v1062 = vsel %vm368, %v1016, 0
      %v1065 = vsel %vm368, %v1017, 0
      %v1068 = vsel %vm368, %v1018, 0
      %v1071 = vsel %vm368, %v1019, 0
      %v1074 = vsel %vm368, %v1020, 0
      %v1077 = vsel %vm368, %v1021, 0
      %v1080 = vsel %vm368, %v1022, 0
      %v1083 = vsel %vm368, %v1023, 0
      %v1086 = vsel %vm368, %v1024, 0
      %v1089 = vsel %vm368, %v1025, 0
      %v1092 = vsel %vm368, %v1026, 0
      %v1095 = vsel %vm368, %v1027, 0
      %v1098 = vsel %vm368, %v1028, 0
      %v1101 = vsel %vm368, %v1029, 0
      %v1104 = vsel %vm368, %v1030, 0
      %v1107 = vsel %vm368, %v1031, 0
      %v1110 = vsel %vm368, %v1032, 0
      %v1113 = vsel %vm368, %v1033, 0
      %v1116 = vsel %vm368, %v1034, 0
      %v1119 = vsel %vm368, %v1035, 0
      %v1122 = vsel %vm368, %v1036, 0
      %v1125 = vsel %vm368, %v1037, 0
      %v1128 = vsel %vm368, %v1038, 0
      %v1131 = vsel %vm368, %v1039, 0
      %v1134 = vsel %vm368, %v1040, 0
      %v1137 = vsel %vm368, %v1041, 0
      %v1140 = vsel %vm368, %v1042, 0
      %1142 = vmatprep.subr.mxu0 0.0
      %1143 = vmatpush1.msra.mxu0 %v1044
      %1144 = vmatprep.subr.mxu0 0.0
      %1145 = vmatpush1.msra.mxu0 %v1045
      %1146 = vmatprep.subr.mxu0 0.0
      %1147 = vmatpush1.msra.mxu0 0.0
      %1148 = vmatprep.subr.mxu0 0.0
      %1149 = vmatpush1.msra.mxu0 0.0
      %1150 = vmatprep.subr.mxu0 0.0
      %1151 = vmatpush1.msra.mxu0 0.0
      %1152 = vmatprep.subr.mxu0 0.0
      %1153 = vmatpush1.msra.mxu0 0.0
      %1154 = vmatprep.subr.mxu0 0.0
      %1155 = vmatpush1.msra.mxu0 0.0
      %1156 = vmatprep.subr.mxu0 0.0
      %1157 = vmatpush1.msra.mxu0 0.0
      %1158 = vmatprep.subr.mxu0 0.0
      %1159 = vmatpush1.msra.mxu0 0.0
      %1160 = vmatprep.subr.mxu0 0.0
      %1161 = vmatpush1.msra.mxu0 0.0
      %1162 = vmatprep.subr.mxu0 0.0
      %1163 = vmatpush1.msra.mxu0 0.0
      %1164 = vmatprep.subr.mxu0 0.0
      %1165 = vmatpush1.msra.mxu0 0.0
      %1166 = vmatprep.subr.mxu0 0.0
      %1167 = vmatpush1.msra.mxu0 0.0
      %1168 = vmatprep.subr.mxu0 0.0
      %1169 = vmatpush1.msra.mxu0 0.0
      %1170 = vmatprep.subr.mxu0 0.0
      %1171 = vmatpush1.msra.mxu0 0.0
      %1172 = vmatprep.subr.mxu0 0.0
      %1173 = vmatpush1.msra.mxu0 0.0
      %1174 = vmatprep.subr.mxu0 0.0
      %1175 = vmatpush1.msra.mxu0 0.0
      %1176 = vmatprep.subr.mxu0 0.0
      %1177 = vmatpush1.msra.mxu0 0.0
      %1178 = vmatprep.subr.mxu0 0.0
      %1179 = vmatpush1.msra.mxu0 0.0
      %1180 = vmatprep.subr.mxu0 0.0
      %1181 = vmatpush1.msra.mxu0 0.0
      %1182 = vmatprep.subr.mxu0 0.0
      %1183 = vmatpush1.msra.mxu0 0.0
      %1184 = vmatprep.subr.mxu0 0.0
      %1185 = vmatpush1.msra.mxu0 0.0
      %1186 = vmatprep.subr.mxu0 0.0
      %1187 = vmatpush1.msra.mxu0 0.0
      %1188 = vmatprep.subr.mxu0 0.0
      %1189 = vmatpush1.msra.mxu0 0.0
      %1190 = vmatprep.subr.mxu0 0.0
      %1191 = vmatpush1.msra.mxu0 0.0
      %1192 = vmatprep.subr.mxu0 0.0
      %1193 = vmatpush1.msra.mxu0 0.0
      %1194 = vmatprep.subr.mxu0 0.0
      %1195 = vmatpush1.msra.mxu0 0.0
      %1196 = vmatprep.subr.mxu0 0.0
      %1197 = vmatpush1.msra.mxu0 0.0
      %1198 = vmatprep.subr.mxu0 0.0
      %1199 = vmatpush1.msra.mxu0 0.0
      %1200 = vmatprep.subr.mxu0 0.0
      %1201 = vmatpush1.msra.mxu0 0.0
      %1202 = vmatprep.subr.mxu0 0.0
      %1203 = vmatpush1.msra.mxu0 0.0
      %1204 = vmatprep.subr.mxu0 0.0
      %1205 = vmatpush1.msra.mxu0 0.0
      %1206 = vmatprep.mubr.f32.mxu0 0.0
      %1207 = vmatmul.mubr.f32.gmra.mrb[0].mxu0 %v1047
      %v1208 = vpop.f32.mrb[0].mxu0
      %v1209 = vadd.f32 0.0, %v1208
      %v1210 = vpop.f32.mrb[0].mxu0
      %1211 = vmatprep.mubr.f32.mxu0 0.0
      %1212 = vmatmul.mubr.f32.gmra.mrb[0].mxu0 %v1050
      %v1213 = vpop.f32.mrb[0].mxu0
      %v1214 = vadd.f32 0.0, %v1213
      %v1215 = vpop.f32.mrb[0].mxu0
      %1216 = vmatprep.mubr.f32.mxu0 0.0
      %1217 = vmatmul.mubr.f32.gmra.mrb[0].mxu0 %v1053
      %v1218 = vpop.f32.mrb[0].mxu0
      %v1219 = vadd.f32 0.0, %v1218
      %v1220 = vpop.f32.mrb[0].mxu0
      %1221 = vmatprep.mubr.f32.mxu0 0.0
      %1222 = vmatmul.mubr.f32.gmra.mrb[0].mxu0 %v1056
      %v1223 = vpop.f32.mrb[0].mxu0
      %v1224 = vadd.f32 0.0, %v1223
      %v1225 = vpop.f32.mrb[0].mxu0
      %1226 = vmatprep.mubr.f32.mxu0 0.0
      %1227 = vmatmul.mubr.f32.gmra.mrb[0].mxu0 %v1059
      %v1228 = vpop.f32.mrb[0].mxu0
      %v1229 = vadd.f32 0.0, %v1228
      %v1230 = vpop.f32.mrb[0].mxu0
      %1231 = vmatprep.mubr.f32.mxu0 0.0
      %1232 = vmatmul.mubr.f32.gmra.mrb[0].mxu0 %v1062
      %v1233 = vpop.f32.mrb[0].mxu0
      %v1234 = vadd.f32 0.0, %v1233
      %v1235 = vpop.f32.mrb[0].mxu0
      %1236 = vmatprep.mubr.f32.mxu0 0.0
      %1237 = vmatmul.mubr.f32.gmra.mrb[0].mxu0 %v1065
      %v1238 = vpop.f32.mrb[0].mxu0
      %v1239 = vadd.f32 0.0, %v1238
      %v1240 = vpop.f32.mrb[0].mxu0
      %1241 = vmatprep.mubr.f32.mxu0 0.0
      %1242 = vmatmul.mubr.f32.gmra.mrb[0].mxu0 %v1068
      %v1243 = vpop.f32.mrb[0].mxu0
      %v1244 = vadd.f32 0.0, %v1243
      %v1245 = vpop.f32.mrb[0].mxu0
      %1246 = vmatprep.mubr.f32.mxu0 0.0
      %1247 = vmatmul.mubr.f32.gmra.mrb[0].mxu0 %v1071
      %v1248 = vpop.f32.mrb[0].mxu0
      %v1249 = vadd.f32 0.0, %v1248
      %v1250 = vpop.f32.mrb[0].mxu0
      %1251 = vmatprep.mubr.f32.mxu0 0.0
      %1252 = vmatmul.mubr.f32.gmra.mrb[0].mxu0 %v1074
      %v1253 = vpop.f32.mrb[0].mxu0
      %v1254 = vadd.f32 0.0, %v1253
      %v1255 = vpop.f32.mrb[0].mxu0
      %1256 = vmatprep.mubr.f32.mxu0 0.0
      %1257 = vmatmul.mubr.f32.gmra.mrb[0].mxu0 %v1077
      %v1258 = vpop.f32.mrb[0].mxu0
      %v1259 = vadd.f32 0.0, %v1258
      %v1260 = vpop.f32.mrb[0].mxu0
      %1261 = vmatprep.mubr.f32.mxu0 0.0
      %1262 = vmatmul.mubr.f32.gmra.mrb[0].mxu0 %v1080
      %v1263 = vpop.f32.mrb[0].mxu0
      %v1264 = vadd.f32 0.0, %v1263
      %v1265 = vpop.f32.mrb[0].mxu0
      %1266 = vmatprep.mubr.f32.mxu0 0.0
      %1267 = vmatmul.mubr.f32.gmra.mrb[0].mxu0 %v1083
      %v1268 = vpop.f32.mrb[0].mxu0
      %v1269 = vadd.f32 0.0, %v1268
      %v1270 = vpop.f32.mrb[0].mxu0
      %1271 = vmatprep.mubr.f32.mxu0 0.0
      %1272 = vmatmul.mubr.f32.gmra.mrb[0].mxu0 %v1086
      %v1273 = vpop.f32.mrb[0].mxu0
      %v1274 = vadd.f32 0.0, %v1273
      %v1275 = vpop.f32.mrb[0].mxu0
      %1276 = vmatprep.mubr.f32.mxu0 0.0
      %1277 = vmatmul.mubr.f32.gmra.mrb[0].mxu0 %v1089
      %v1278 = vpop.f32.mrb[0].mxu0
      %v1279 = vadd.f32 0.0, %v1278
      %v1280 = vpop.f32.mrb[0].mxu0
      %1281 = vmatprep.mubr.f32.mxu0 0.0
      %1282 = vmatmul.mubr.f32.gmra.mrb[0].mxu0 %v1092
      %v1283 = vpop.f32.mrb[0].mxu0
      %v1284 = vadd.f32 0.0, %v1283
      %v1285 = vpop.f32.mrb[0].mxu0
      %1286 = vmatprep.mubr.f32.mxu0 0.0
      %1287 = vmatmul.mubr.f32.gmra.mrb[0].mxu0 %v1095
      %v1288 = vpop.f32.mrb[0].mxu0
      %v1289 = vadd.f32 0.0, %v1288
      %v1290 = vpop.f32.mrb[0].mxu0
      %1291 = vmatprep.mubr.f32.mxu0 0.0
      %1292 = vmatmul.mubr.f32.gmra.mrb[0].mxu0 %v1098
      %v1293 = vpop.f32.mrb[0].mxu0
      %v1294 = vadd.f32 0.0, %v1293
      %v1295 = vpop.f32.mrb[0].mxu0
      %1296 = vmatprep.mubr.f32.mxu0 0.0
      %1297 = vmatmul.mubr.f32.gmra.mrb[0].mxu0 %v1101
      %v1298 = vpop.f32.mrb[0].mxu0
      %v1299 = vadd.f32 0.0, %v1298
      %v1300 = vpop.f32.mrb[0].mxu0
      %1301 = vmatprep.mubr.f32.mxu0 0.0
      %1302 = vmatmul.mubr.f32.gmra.mrb[0].mxu0 %v1104
      %v1303 = vpop.f32.mrb[0].mxu0
      %v1304 = vadd.f32 0.0, %v1303
      %v1305 = vpop.f32.mrb[0].mxu0
      %1306 = vmatprep.mubr.f32.mxu0 0.0
      %1307 = vmatmul.mubr.f32.gmra.mrb[0].mxu0 %v1107
      %v1308 = vpop.f32.mrb[0].mxu0
      %v1309 = vadd.f32 0.0, %v1308
      %v1310 = vpop.f32.mrb[0].mxu0
      %1311 = vmatprep.mubr.f32.mxu0 0.0
      %1312 = vmatmul.mubr.f32.gmra.mrb[0].mxu0 %v1110
      %v1313 = vpop.f32.mrb[0].mxu0
      %v1314 = vadd.f32 0.0, %v1313
      %v1315 = vpop.f32.mrb[0].mxu0
      %1316 = vmatprep.mubr.f32.mxu0 0.0
      %1317 = vmatmul.mubr.f32.gmra.mrb[0].mxu0 %v1113
      %v1318 = vpop.f32.mrb[0].mxu0
      %v1319 = vadd.f32 0.0, %v1318
      %v1320 = vpop.f32.mrb[0].mxu0
      %1321 = vmatprep.mubr.f32.mxu0 0.0
      %1322 = vmatmul.mubr.f32.gmra.mrb[0].mxu0 %v1116
      %v1323 = vpop.f32.mrb[0].mxu0
      %v1324 = vadd.f32 0.0, %v1323
      %v1325 = vpop.f32.mrb[0].mxu0
      %1326 = vmatprep.mubr.f32.mxu0 0.0
      %1327 = vmatmul.mubr.f32.gmra.mrb[0].mxu0 %v1119
      %v1328 = vpop.f32.mrb[0].mxu0
      %v1329 = vadd.f32 0.0, %v1328
      %v1330 = vpop.f32.mrb[0].mxu0
      %1331 = vmatprep.mubr.f32.mxu0 0.0
      %1332 = vmatmul.mubr.f32.gmra.mrb[0].mxu0 %v1122
      %v1333 = vpop.f32.mrb[0].mxu0
      %v1334 = vadd.f32 0.0, %v1333
      %v1335 = vpop.f32.mrb[0].mxu0
      %1336 = vmatprep.mubr.f32.mxu0 0.0
      %1337 = vmatmul.mubr.f32.gmra.mrb[0].mxu0 %v1125
      %v1338 = vpop.f32.mrb[0].mxu0
      %v1339 = vadd.f32 0.0, %v1338
      %v1340 = vpop.f32.mrb[0].mxu0
      %1341 = vmatprep.mubr.f32.mxu0 0.0
      %1342 = vmatmul.mubr.f32.gmra.mrb[0].mxu0 %v1128
      %v1343 = vpop.f32.mrb[0].mxu0
      %v1344 = vadd.f32 0.0, %v1343
      %v1345 = vpop.f32.mrb[0].mxu0
      %1346 = vmatprep.mubr.f32.mxu0 0.0
      %1347 = vmatmul.mubr.f32.gmra.mrb[0].mxu0 %v1131
      %v1348 = vpop.f32.mrb[0].mxu0
      %v1349 = vadd.f32 0.0, %v1348
      %v1350 = vpop.f32.mrb[0].mxu0
      %1351 = vmatprep.mubr.f32.mxu0 0.0
      %1352 = vmatmul.mubr.f32.gmra.mrb[0].mxu0 %v1134
      %v1353 = vpop.f32.mrb[0].mxu0
      %v1354 = vadd.f32 0.0, %v1353
      %v1355 = vpop.f32.mrb[0].mxu0
      %1356 = vmatprep.mubr.f32.mxu0 0.0
      %1357 = vmatmul.mubr.f32.gmra.mrb[0].mxu0 %v1137
      %v1358 = vpop.f32.mrb[0].mxu0
      %v1359 = vadd.f32 0.0, %v1358
      %v1360 = vpop.f32.mrb[0].mxu0
      %1361 = vmatprep.mubr.f32.mxu0 0.0
      %1362 = vmatmul.mubr.f32.gmra.mrb[0].mxu0 %v1140
      %v1363 = vpop.f32.mrb[0].mxu0
      %v1364 = vadd.f32 0.0, %v1363
      %v1365 = vpop.f32.mrb[0].mxu0
      %1366 = vdwg.mxu0
      %v1367 = vadd.f32 %v853, %v1209
      %v1368 = vadd.f32 %v858, %v1214
      %v1369 = vadd.f32 %v863, %v1219
      %v1370 = vadd.f32 %v868, %v1224
      %v1371 = vadd.f32 %v873, %v1229
      %v1372 = vadd.f32 %v878, %v1234
      %v1373 = vadd.f32 %v883, %v1239
      %v1374 = vadd.f32 %v888, %v1244
      %v1375 = vadd.f32 %v893, %v1249
      %v1376 = vadd.f32 %v898, %v1254
      %v1377 = vadd.f32 %v903, %v1259
      %v1378 = vadd.f32 %v908, %v1264
      %v1379 = vadd.f32 %v913, %v1269
      %v1380 = vadd.f32 %v918, %v1274
      %v1381 = vadd.f32 %v923, %v1279
      %v1382 = vadd.f32 %v928, %v1284
      %v1383 = vadd.f32 %v933, %v1289
      %v1384 = vadd.f32 %v938, %v1294
      %v1385 = vadd.f32 %v943, %v1299
      %v1386 = vadd.f32 %v948, %v1304
      %v1387 = vadd.f32 %v953, %v1309
      %v1388 = vadd.f32 %v958, %v1314
      %v1389 = vadd.f32 %v963, %v1319
      %v1390 = vadd.f32 %v968, %v1324
      %v1391 = vadd.f32 %v973, %v1329
      %v1392 = vadd.f32 %v978, %v1334
      %v1393 = vadd.f32 %v983, %v1339
      %v1394 = vadd.f32 %v988, %v1344
      %v1395 = vadd.f32 %v993, %v1349
      %v1396 = vadd.f32 %v998, %v1354
      %v1397 = vadd.f32 %v1003, %v1359
      %v1398 = vadd.f32 %v1008, %v1364
      %s1399 = scalar_lea.vmem %s288, 24
      %v1400 = vld [vmem:[%s1399] sm:$0xff]
      %v1401 = vld [vmem:[%s1399 + $0x8] sm:$0xff]
      %v1402 = vld [vmem:[%s1399 + $0x18] sm:$0xff]
      %v1403 = vld [vmem:[%s1399 + $0x20] sm:$0xff]
      %v1404 = vld [vmem:[%s1399 + $0x30] sm:$0xff]
      %v1405 = vld [vmem:[%s1399 + $0x38] sm:$0xff]
      %v1406 = vld [vmem:[%s1399 + $0x48] sm:$0xff]
      %v1407 = vld [vmem:[%s1399 + $0x50] sm:$0xff]
      %v1408 = vld [vmem:[%s1399 + $0x60] sm:$0xff]
      %v1409 = vld [vmem:[%s1399 + $0x68] sm:$0xff]
      %v1410 = vld [vmem:[%s1399 + $0x78] sm:$0xff]
      %v1411 = vld [vmem:[%s1399 + $0x80] sm:$0xff]
      %v1412 = vld [vmem:[%s1399 + $0x90] sm:$0xff]
      %v1413 = vld [vmem:[%s1399 + $0x98] sm:$0xff]
      %v1414 = vld [vmem:[%s1399 + $0xa8] sm:$0xff]
      %v1415 = vld [vmem:[%s1399 + $0xb0] sm:$0xff]
      %v1416 = vld [vmem:[%s1399 + $0xc0] sm:$0xff]
      %v1417 = vld [vmem:[%s1399 + $0xc8] sm:$0xff]
      %v1418 = vld [vmem:[%s1399 + $0xd8] sm:$0xff]
      %v1419 = vld [vmem:[%s1399 + $0xe0] sm:$0xff]
      %v1420 = vld [vmem:[%s1399 + $0xf0] sm:$0xff]
      %v1421 = vld [vmem:[%s1399 + $0xf8] sm:$0xff]
      %v1422 = vld [vmem:[%s1399 + $0x108] sm:$0xff]
      %v1423 = vld [vmem:[%s1399 + $0x110] sm:$0xff]
      %v1424 = vld [vmem:[%s1399 + $0x120] sm:$0xff]
      %v1425 = vld [vmem:[%s1399 + $0x128] sm:$0xff]
      %v1426 = vld [vmem:[%s1399 + $0x138] sm:$0xff]
      %v1427 = vld [vmem:[%s1399 + $0x140] sm:$0xff]
      %v1428 = vld [vmem:[%s1399 + $0x150] sm:$0xff]
      %v1429 = vld [vmem:[%s1399 + $0x158] sm:$0xff]
      %v1430 = vld [vmem:[%s1399 + $0x168] sm:$0xff]
      %v1431 = vld [vmem:[%s1399 + $0x170] sm:$0xff]
      %s1432 = scalar_lea.vmem %s2, 48
      %v1433 = vld [vmem:[%s1432] sm:$0xff]
      %v1434 = vld [vmem:[%s1432 + $0x8] sm:$0xff]
      %v1436 = vsel %vm368, %v1400, 0
      %v1439 = vsel %vm368, %v1401, 0
      %v1442 = vsel %vm368, %v1402, 0
      %v1445 = vsel %vm368, %v1403, 0
      %v1448 = vsel %vm368, %v1404, 0
      %v1451 = vsel %vm368, %v1405, 0
      %v1454 = vsel %vm368, %v1406, 0
      %v1457 = vsel %vm368, %v1407, 0
      %v1460 = vsel %vm368, %v1408, 0
      %v1463 = vsel %vm368, %v1409, 0
      %v1466 = vsel %vm368, %v1410, 0
      %v1469 = vsel %vm368, %v1411, 0
      %v1472 = vsel %vm368, %v1412, 0
      %v1475 = vsel %vm368, %v1413, 0
      %v1478 = vsel %vm368, %v1414, 0
      %v1481 = vsel %vm368, %v1415, 0
      %v1484 = vsel %vm368, %v1416, 0
      %v1487 = vsel %vm368, %v1417, 0
      %v1490 = vsel %vm368, %v1418, 0
      %v1493 = vsel %vm368, %v1419, 0
      %v1496 = vsel %vm368, %v1420, 0
      %v1499 = vsel %vm368, %v1421, 0
      %v1502 = vsel %vm368, %v1422, 0
      %v1505 = vsel %vm368, %v1423, 0
      %v1508 = vsel %vm368, %v1424, 0
      %v1511 = vsel %vm368, %v1425, 0
      %v1514 = vsel %vm368, %v1426, 0
      %v1517 = vsel %vm368, %v1427, 0
      %v1520 = vsel %vm368, %v1428, 0
      %v1523 = vsel %vm368, %v1429, 0
      %v1526 = vsel %vm368, %v1430, 0
      %v1529 = vsel %vm368, %v1431, 0
      %1531 = vmatprep.subr.mxu0 0.0
      %1532 = vmatpush1.msra.mxu0 %v1433
      %1533 = vmatprep.subr.mxu0 0.0
      %1534 = vmatpush1.msra.mxu0 %v1434
      %1535 = vmatprep.subr.mxu0 0.0
      %1536 = vmatpush1.msra.mxu0 0.0
      %1537 = vmatprep.subr.mxu0 0.0
      %1538 = vmatpush1.msra.mxu0 0.0
      %1539 = vmatprep.subr.mxu0 0.0
      %1540 = vmatpush1.msra.mxu0 0.0
      %1541 = vmatprep.subr.mxu0 0.0
      %1542 = vmatpush1.msra.mxu0 0.0
      %1543 = vmatprep.subr.mxu0 0.0
      %1544 = vmatpush1.msra.mxu0 0.0
      %1545 = vmatprep.subr.mxu0 0.0
      %1546 = vmatpush1.msra.mxu0 0.0
      %1547 = vmatprep.subr.mxu0 0.0
      %1548 = vmatpush1.msra.mxu0 0.0
      %1549 = vmatprep.subr.mxu0 0.0
      %1550 = vmatpush1.msra.mxu0 0.0
      %1551 = vmatprep.subr.mxu0 0.0
      %1552 = vmatpush1.msra.mxu0 0.0
      %1553 = vmatprep.subr.mxu0 0.0
      %1554 = vmatpush1.msra.mxu0 0.0
      %1555 = vmatprep.subr.mxu0 0.0
      %1556 = vmatpush1.msra.mxu0 0.0
      %1557 = vmatprep.subr.mxu0 0.0
      %1558 = vmatpush1.msra.mxu0 0.0
      %1559 = vmatprep.subr.mxu0 0.0
      %1560 = vmatpush1.msra.mxu0 0.0
      %1561 = vmatprep.subr.mxu0 0.0
      %1562 = vmatpush1.msra.mxu0 0.0
      %1563 = vmatprep.subr.mxu0 0.0
      %1564 = vmatpush1.msra.mxu0 0.0
      %1565 = vmatprep.subr.mxu0 0.0
      %1566 = vmatpush1.msra.mxu0 0.0
      %1567 = vmatprep.subr.mxu0 0.0
      %1568 = vmatpush1.msra.mxu0 0.0
      %1569 = vmatprep.subr.mxu0 0.0
      %1570 = vmatpush1.msra.mxu0 0.0
      %1571 = vmatprep.subr.mxu0 0.0
      %1572 = vmatpush1.msra.mxu0 0.0
      %1573 = vmatprep.subr.mxu0 0.0
      %1574 = vmatpush1.msra.mxu0 0.0
      %1575 = vmatprep.subr.mxu0 0.0
      %1576 = vmatpush1.msra.mxu0 0.0
      %1577 = vmatprep.subr.mxu0 0.0
      %1578 = vmatpush1.msra.mxu0 0.0
      %1579 = vmatprep.subr.mxu0 0.0
      %1580 = vmatpush1.msra.mxu0 0.0
      %1581 = vmatprep.subr.mxu0 0.0
      %1582 = vmatpush1.msra.mxu0 0.0
      %1583 = vmatprep.subr.mxu0 0.0
      %1584 = vmatpush1.msra.mxu0 0.0
      %1585 = vmatprep.subr.mxu0 0.0
      %1586 = vmatpush1.msra.mxu0 0.0
      %1587 = vmatprep.subr.mxu0 0.0
      %1588 = vmatpush1.msra.mxu0 0.0
      %1589 = vmatprep.subr.mxu0 0.0
      %1590 = vmatpush1.msra.mxu0 0.0
      %1591 = vmatprep.subr.mxu0 0.0
      %1592 = vmatpush1.msra.mxu0 0.0
      %1593 = vmatprep.subr.mxu0 0.0
      %1594 = vmatpush1.msra.mxu0 0.0
      %1595 = vmatprep.mubr.f32.mxu0 0.0
      %1596 = vmatmul.mubr.f32.gmra.mrb[0].mxu0 %v1436
      %v1597 = vpop.f32.mrb[0].mxu0
      %v1598 = vadd.f32 0.0, %v1597
      %v1599 = vpop.f32.mrb[0].mxu0
      %1600 = vmatprep.mubr.f32.mxu0 0.0
      %1601 = vmatmul.mubr.f32.gmra.mrb[0].mxu0 %v1439
      %v1602 = vpop.f32.mrb[0].mxu0
      %v1603 = vadd.f32 0.0, %v1602
      %v1604 = vpop.f32.mrb[0].mxu0
      %1605 = vmatprep.mubr.f32.mxu0 0.0
      %1606 = vmatmul.mubr.f32.gmra.mrb[0].mxu0 %v1442
      %v1607 = vpop.f32.mrb[0].mxu0
      %v1608 = vadd.f32 0.0, %v1607
      %v1609 = vpop.f32.mrb[0].mxu0
      %1610 = vmatprep.mubr.f32.mxu0 0.0
      %1611 = vmatmul.mubr.f32.gmra.mrb[0].mxu0 %v1445
      %v1612 = vpop.f32.mrb[0].mxu0
      %v1613 = vadd.f32 0.0, %v1612
      %v1614 = vpop.f32.mrb[0].mxu0
      %1615 = vmatprep.mubr.f32.mxu0 0.0
      %1616 = vmatmul.mubr.f32.gmra.mrb[0].mxu0 %v1448
      %v1617 = vpop.f32.mrb[0].mxu0
      %v1618 = vadd.f32 0.0, %v1617
      %v1619 = vpop.f32.mrb[0].mxu0
      %1620 = vmatprep.mubr.f32.mxu0 0.0
      %1621 = vmatmul.mubr.f32.gmra.mrb[0].mxu0 %v1451
      %v1622 = vpop.f32.mrb[0].mxu0
      %v1623 = vadd.f32 0.0, %v1622
      %v1624 = vpop.f32.mrb[0].mxu0
      %1625 = vmatprep.mubr.f32.mxu0 0.0
      %1626 = vmatmul.mubr.f32.gmra.mrb[0].mxu0 %v1454
      %v1627 = vpop.f32.mrb[0].mxu0
      %v1628 = vadd.f32 0.0, %v1627
      %v1629 = vpop.f32.mrb[0].mxu0
      %1630 = vmatprep.mubr.f32.mxu0 0.0
      %1631 = vmatmul.mubr.f32.gmra.mrb[0].mxu0 %v1457
      %v1632 = vpop.f32.mrb[0].mxu0
      %v1633 = vadd.f32 0.0, %v1632
      %v1634 = vpop.f32.mrb[0].mxu0
      %1635 = vmatprep.mubr.f32.mxu0 0.0
      %1636 = vmatmul.mubr.f32.gmra.mrb[0].mxu0 %v1460
      %v1637 = vpop.f32.mrb[0].mxu0
      %v1638 = vadd.f32 0.0, %v1637
      %v1639 = vpop.f32.mrb[0].mxu0
      %1640 = vmatprep.mubr.f32.mxu0 0.0
      %1641 = vmatmul.mubr.f32.gmra.mrb[0].mxu0 %v1463
      %v1642 = vpop.f32.mrb[0].mxu0
      %v1643 = vadd.f32 0.0, %v1642
      %v1644 = vpop.f32.mrb[0].mxu0
      %1645 = vmatprep.mubr.f32.mxu0 0.0
      %1646 = vmatmul.mubr.f32.gmra.mrb[0].mxu0 %v1466
      %v1647 = vpop.f32.mrb[0].mxu0
      %v1648 = vadd.f32 0.0, %v1647
      %v1649 = vpop.f32.mrb[0].mxu0
      %1650 = vmatprep.mubr.f32.mxu0 0.0
      %1651 = vmatmul.mubr.f32.gmra.mrb[0].mxu0 %v1469
      %v1652 = vpop.f32.mrb[0].mxu0
      %v1653 = vadd.f32 0.0, %v1652
      %v1654 = vpop.f32.mrb[0].mxu0
      %1655 = vmatprep.mubr.f32.mxu0 0.0
      %1656 = vmatmul.mubr.f32.gmra.mrb[0].mxu0 %v1472
      %v1657 = vpop.f32.mrb[0].mxu0
      %v1658 = vadd.f32 0.0, %v1657
      %v1659 = vpop.f32.mrb[0].mxu0
      %1660 = vmatprep.mubr.f32.mxu0 0.0
      %1661 = vmatmul.mubr.f32.gmra.mrb[0].mxu0 %v1475
      %v1662 = vpop.f32.mrb[0].mxu0
      %v1663 = vadd.f32 0.0, %v1662
      %v1664 = vpop.f32.mrb[0].mxu0
      %1665 = vmatprep.mubr.f32.mxu0 0.0
      %1666 = vmatmul.mubr.f32.gmra.mrb[0].mxu0 %v1478
      %v1667 = vpop.f32.mrb[0].mxu0
      %v1668 = vadd.f32 0.0, %v1667
      %v1669 = vpop.f32.mrb[0].mxu0
      %1670 = vmatprep.mubr.f32.mxu0 0.0
      %1671 = vmatmul.mubr.f32.gmra.mrb[0].mxu0 %v1481
      %v1672 = vpop.f32.mrb[0].mxu0
      %v1673 = vadd.f32 0.0, %v1672
      %v1674 = vpop.f32.mrb[0].mxu0
      %1675 = vmatprep.mubr.f32.mxu0 0.0
      %1676 = vmatmul.mubr.f32.gmra.mrb[0].mxu0 %v1484
      %v1677 = vpop.f32.mrb[0].mxu0
      %v1678 = vadd.f32 0.0, %v1677
      %v1679 = vpop.f32.mrb[0].mxu0
      %1680 = vmatprep.mubr.f32.mxu0 0.0
      %1681 = vmatmul.mubr.f32.gmra.mrb[0].mxu0 %v1487
      %v1682 = vpop.f32.mrb[0].mxu0
      %v1683 = vadd.f32 0.0, %v1682
      %v1684 = vpop.f32.mrb[0].mxu0
      %1685 = vmatprep.mubr.f32.mxu0 0.0
      %1686 = vmatmul.mubr.f32.gmra.mrb[0].mxu0 %v1490
      %v1687 = vpop.f32.mrb[0].mxu0
      %v1688 = vadd.f32 0.0, %v1687
      %v1689 = vpop.f32.mrb[0].mxu0
      %1690 = vmatprep.mubr.f32.mxu0 0.0
      %1691 = vmatmul.mubr.f32.gmra.mrb[0].mxu0 %v1493
      %v1692 = vpop.f32.mrb[0].mxu0
      %v1693 = vadd.f32 0.0, %v1692
      %v1694 = vpop.f32.mrb[0].mxu0
      %1695 = vmatprep.mubr.f32.mxu0 0.0
      %1696 = vmatmul.mubr.f32.gmra.mrb[0].mxu0 %v1496
      %v1697 = vpop.f32.mrb[0].mxu0
      %v1698 = vadd.f32 0.0, %v1697
      %v1699 = vpop.f32.mrb[0].mxu0
      %1700 = vmatprep.mubr.f32.mxu0 0.0
      %1701 = vmatmul.mubr.f32.gmra.mrb[0].mxu0 %v1499
      %v1702 = vpop.f32.mrb[0].mxu0
      %v1703 = vadd.f32 0.0, %v1702
      %v1704 = vpop.f32.mrb[0].mxu0
      %1705 = vmatprep.mubr.f32.mxu0 0.0
      %1706 = vmatmul.mubr.f32.gmra.mrb[0].mxu0 %v1502
      %v1707 = vpop.f32.mrb[0].mxu0
      %v1708 = vadd.f32 0.0, %v1707
      %v1709 = vpop.f32.mrb[0].mxu0
      %1710 = vmatprep.mubr.f32.mxu0 0.0
      %1711 = vmatmul.mubr.f32.gmra.mrb[0].mxu0 %v1505
      %v1712 = vpop.f32.mrb[0].mxu0
      %v1713 = vadd.f32 0.0, %v1712
      %v1714 = vpop.f32.mrb[0].mxu0
      %1715 = vmatprep.mubr.f32.mxu0 0.0
      %1716 = vmatmul.mubr.f32.gmra.mrb[0].mxu0 %v1508
      %v1717 = vpop.f32.mrb[0].mxu0
      %v1718 = vadd.f32 0.0, %v1717
      %v1719 = vpop.f32.mrb[0].mxu0
      %1720 = vmatprep.mubr.f32.mxu0 0.0
      %1721 = vmatmul.mubr.f32.gmra.mrb[0].mxu0 %v1511
      %v1722 = vpop.f32.mrb[0].mxu0
      %v1723 = vadd.f32 0.0, %v1722
      %v1724 = vpop.f32.mrb[0].mxu0
      %1725 = vmatprep.mubr.f32.mxu0 0.0
      %1726 = vmatmul.mubr.f32.gmra.mrb[0].mxu0 %v1514
      %v1727 = vpop.f32.mrb[0].mxu0
      %v1728 = vadd.f32 0.0, %v1727
      %v1729 = vpop.f32.mrb[0].mxu0
      %1730 = vmatprep.mubr.f32.mxu0 0.0
      %1731 = vmatmul.mubr.f32.gmra.mrb[0].mxu0 %v1517
      %v1732 = vpop.f32.mrb[0].mxu0
      %v1733 = vadd.f32 0.0, %v1732
      %v1734 = vpop.f32.mrb[0].mxu0
      %1735 = vmatprep.mubr.f32.mxu0 0.0
      %1736 = vmatmul.mubr.f32.gmra.mrb[0].mxu0 %v1520
      %v1737 = vpop.f32.mrb[0].mxu0
      %v1738 = vadd.f32 0.0, %v1737
      %v1739 = vpop.f32.mrb[0].mxu0
      %1740 = vmatprep.mubr.f32.mxu0 0.0
      %1741 = vmatmul.mubr.f32.gmra.mrb[0].mxu0 %v1523
      %v1742 = vpop.f32.mrb[0].mxu0
      %v1743 = vadd.f32 0.0, %v1742
      %v1744 = vpop.f32.mrb[0].mxu0
      %1745 = vmatprep.mubr.f32.mxu0 0.0
      %1746 = vmatmul.mubr.f32.gmra.mrb[0].mxu0 %v1526
      %v1747 = vpop.f32.mrb[0].mxu0
      %v1748 = vadd.f32 0.0, %v1747
      %v1749 = vpop.f32.mrb[0].mxu0
      %1750 = vmatprep.mubr.f32.mxu0 0.0
      %1751 = vmatmul.mubr.f32.gmra.mrb[0].mxu0 %v1529
      %v1752 = vpop.f32.mrb[0].mxu0
      %v1753 = vadd.f32 0.0, %v1752
      %v1754 = vpop.f32.mrb[0].mxu0
      %1755 = vdwg.mxu0
      %v1756 = vadd.f32 %v1367, %v1598
      %v1757 = vadd.f32 %v1368, %v1603
      %v1758 = vadd.f32 %v1369, %v1608
      %v1759 = vadd.f32 %v1370, %v1613
      %v1760 = vadd.f32 %v1371, %v1618
      %v1761 = vadd.f32 %v1372, %v1623
      %v1762 = vadd.f32 %v1373, %v1628
      %v1763 = vadd.f32 %v1374, %v1633
      %v1764 = vadd.f32 %v1375, %v1638
      %v1765 = vadd.f32 %v1376, %v1643
      %v1766 = vadd.f32 %v1377, %v1648
      %v1767 = vadd.f32 %v1378, %v1653
      %v1768 = vadd.f32 %v1379, %v1658
      %v1769 = vadd.f32 %v1380, %v1663
      %v1770 = vadd.f32 %v1381, %v1668
      %v1771 = vadd.f32 %v1382, %v1673
      %v1772 = vadd.f32 %v1383, %v1678
      %v1773 = vadd.f32 %v1384, %v1683
      %v1774 = vadd.f32 %v1385, %v1688
      %v1775 = vadd.f32 %v1386, %v1693
      %v1776 = vadd.f32 %v1387, %v1698
      %v1777 = vadd.f32 %v1388, %v1703
      %v1778 = vadd.f32 %v1389, %v1708
      %v1779 = vadd.f32 %v1390, %v1713
      %v1780 = vadd.f32 %v1391, %v1718
      %v1781 = vadd.f32 %v1392, %v1723
      %v1782 = vadd.f32 %v1393, %v1728
      %v1783 = vadd.f32 %v1394, %v1733
      %v1784 = vadd.f32 %v1395, %v1738
      %v1785 = vadd.f32 %v1396, %v1743
      %v1786 = vadd.f32 %v1397, %v1748
      %v1787 = vadd.f32 %v1398, %v1753
      %v1788 = vld [vmem:[%s1399 + $0x1] sm:$0xff]
      %v1789 = vld [vmem:[%s1399 + $0x9] sm:$0xff]
      %v1790 = vld [vmem:[%s1399 + $0x19] sm:$0xff]
      %v1791 = vld [vmem:[%s1399 + $0x21] sm:$0xff]
      %v1792 = vld [vmem:[%s1399 + $0x31] sm:$0xff]
      %v1793 = vld [vmem:[%s1399 + $0x39] sm:$0xff]
      %v1794 = vld [vmem:[%s1399 + $0x49] sm:$0xff]
      %v1795 = vld [vmem:[%s1399 + $0x51] sm:$0xff]
      %v1796 = vld [vmem:[%s1399 + $0x61] sm:$0xff]
      %v1797 = vld [vmem:[%s1399 + $0x69] sm:$0xff]
      %v1798 = vld [vmem:[%s1399 + $0x79] sm:$0xff]
      %v1799 = vld [vmem:[%s1399 + $0x81] sm:$0xff]
      %v1800 = vld [vmem:[%s1399 + $0x91] sm:$0xff]
      %v1801 = vld [vmem:[%s1399 + $0x99] sm:$0xff]
      %v1802 = vld [vmem:[%s1399 + $0xa9] sm:$0xff]
      %v1803 = vld [vmem:[%s1399 + $0xb1] sm:$0xff]
      %v1804 = vld [vmem:[%s1399 + $0xc1] sm:$0xff]
      %v1805 = vld [vmem:[%s1399 + $0xc9] sm:$0xff]
      %v1806 = vld [vmem:[%s1399 + $0xd9] sm:$0xff]
      %v1807 = vld [vmem:[%s1399 + $0xe1] sm:$0xff]
      %v1808 = vld [vmem:[%s1399 + $0xf1] sm:$0xff]
      %v1809 = vld [vmem:[%s1399 + $0xf9] sm:$0xff]
      %v1810 = vld [vmem:[%s1399 + $0x109] sm:$0xff]
      %v1811 = vld [vmem:[%s1399 + $0x111] sm:$0xff]
      %v1812 = vld [vmem:[%s1399 + $0x121] sm:$0xff]
      %v1813 = vld [vmem:[%s1399 + $0x129] sm:$0xff]
      %v1814 = vld [vmem:[%s1399 + $0x139] sm:$0xff]
      %v1815 = vld [vmem:[%s1399 + $0x141] sm:$0xff]
      %v1816 = vld [vmem:[%s1399 + $0x151] sm:$0xff]
      %v1817 = vld [vmem:[%s1399 + $0x159] sm:$0xff]
      %v1818 = vld [vmem:[%s1399 + $0x169] sm:$0xff]
      %v1819 = vld [vmem:[%s1399 + $0x171] sm:$0xff]
      %s1820 = scalar_lea.vmem %s2, 64
      %v1821 = vld [vmem:[%s1820] sm:$0xff]
      %v1822 = vld [vmem:[%s1820 + $0x8] sm:$0xff]
      %v1824 = vsel %vm368, %v1788, 0
      %v1827 = vsel %vm368, %v1789, 0
      %v1830 = vsel %vm368, %v1790, 0
      %v1833 = vsel %vm368, %v1791, 0
      %v1836 = vsel %vm368, %v1792, 0
      %v1839 = vsel %vm368, %v1793, 0
      %v1842 = vsel %vm368, %v1794, 0
      %v1845 = vsel %vm368, %v1795, 0
      %v1848 = vsel %vm368, %v1796, 0
      %v1851 = vsel %vm368, %v1797, 0
      %v1854 = vsel %vm368, %v1798, 0
      %v1857 = vsel %vm368, %v1799, 0
      %v1860 = vsel %vm368, %v1800, 0
      %v1863 = vsel %vm368, %v1801, 0
      %v1866 = vsel %vm368, %v1802, 0
      %v1869 = vsel %vm368, %v1803, 0
      %v1872 = vsel %vm368, %v1804, 0
      %v1875 = vsel %vm368, %v1805, 0
      %v1878 = vsel %vm368, %v1806, 0
      %v1881 = vsel %vm368, %v1807, 0
      %v1884 = vsel %vm368, %v1808, 0
      %v1887 = vsel %vm368, %v1809, 0
      %v1890 = vsel %vm368, %v1810, 0
      %v1893 = vsel %vm368, %v1811, 0
      %v1896 = vsel %vm368, %v1812, 0
      %v1899 = vsel %vm368, %v1813, 0
      %v1902 = vsel %vm368, %v1814, 0
      %v1905 = vsel %vm368, %v1815, 0
      %v1908 = vsel %vm368, %v1816, 0
      %v1911 = vsel %vm368, %v1817, 0
      %v1914 = vsel %vm368, %v1818, 0
      %v1917 = vsel %vm368, %v1819, 0
      %1919 = vmatprep.subr.mxu0 0.0
      %1920 = vmatpush1.msra.mxu0 %v1821
      %1921 = vmatprep.subr.mxu0 0.0
      %1922 = vmatpush1.msra.mxu0 %v1822
      %1923 = vmatprep.subr.mxu0 0.0
      %1924 = vmatpush1.msra.mxu0 0.0
      %1925 = vmatprep.subr.mxu0 0.0
      %1926 = vmatpush1.msra.mxu0 0.0
      %1927 = vmatprep.subr.mxu0 0.0
      %1928 = vmatpush1.msra.mxu0 0.0
      %1929 = vmatprep.subr.mxu0 0.0
      %1930 = vmatpush1.msra.mxu0 0.0
      %1931 = vmatprep.subr.mxu0 0.0
      %1932 = vmatpush1.msra.mxu0 0.0
      %1933 = vmatprep.subr.mxu0 0.0
      %1934 = vmatpush1.msra.mxu0 0.0
      %1935 = vmatprep.subr.mxu0 0.0
      %1936 = vmatpush1.msra.mxu0 0.0
      %1937 = vmatprep.subr.mxu0 0.0
      %1938 = vmatpush1.msra.mxu0 0.0
      %1939 = vmatprep.subr.mxu0 0.0
      %1940 = vmatpush1.msra.mxu0 0.0
      %1941 = vmatprep.subr.mxu0 0.0
      %1942 = vmatpush1.msra.mxu0 0.0
      %1943 = vmatprep.subr.mxu0 0.0
      %1944 = vmatpush1.msra.mxu0 0.0
      %1945 = vmatprep.subr.mxu0 0.0
      %1946 = vmatpush1.msra.mxu0 0.0
      %1947 = vmatprep.subr.mxu0 0.0
      %1948 = vmatpush1.msra.mxu0 0.0
      %1949 = vmatprep.subr.mxu0 0.0
      %1950 = vmatpush1.msra.mxu0 0.0
      %1951 = vmatprep.subr.mxu0 0.0
      %1952 = vmatpush1.msra.mxu0 0.0
      %1953 = vmatprep.subr.mxu0 0.0
      %1954 = vmatpush1.msra.mxu0 0.0
      %1955 = vmatprep.subr.mxu0 0.0
      %1956 = vmatpush1.msra.mxu0 0.0
      %1957 = vmatprep.subr.mxu0 0.0
      %1958 = vmatpush1.msra.mxu0 0.0
      %1959 = vmatprep.subr.mxu0 0.0
      %1960 = vmatpush1.msra.mxu0 0.0
      %1961 = vmatprep.subr.mxu0 0.0
      %1962 = vmatpush1.msra.mxu0 0.0
      %1963 = vmatprep.subr.mxu0 0.0
      %1964 = vmatpush1.msra.mxu0 0.0
      %1965 = vmatprep.subr.mxu0 0.0
      %1966 = vmatpush1.msra.mxu0 0.0
      %1967 = vmatprep.subr.mxu0 0.0
      %1968 = vmatpush1.msra.mxu0 0.0
      %1969 = vmatprep.subr.mxu0 0.0
      %1970 = vmatpush1.msra.mxu0 0.0
      %1971 = vmatprep.subr.mxu0 0.0
      %1972 = vmatpush1.msra.mxu0 0.0
      %1973 = vmatprep.subr.mxu0 0.0
      %1974 = vmatpush1.msra.mxu0 0.0
      %1975 = vmatprep.subr.mxu0 0.0
      %1976 = vmatpush1.msra.mxu0 0.0
      %1977 = vmatprep.subr.mxu0 0.0
      %1978 = vmatpush1.msra.mxu0 0.0
      %1979 = vmatprep.subr.mxu0 0.0
      %1980 = vmatpush1.msra.mxu0 0.0
      %1981 = vmatprep.subr.mxu0 0.0
      %1982 = vmatpush1.msra.mxu0 0.0
      %1983 = vmatprep.mubr.f32.mxu0 0.0
      %1984 = vmatmul.mubr.f32.gmra.mrb[0].mxu0 %v1824
      %v1985 = vpop.f32.mrb[0].mxu0
      %v1986 = vadd.f32 0.0, %v1985
      %v1987 = vpop.f32.mrb[0].mxu0
      %1988 = vmatprep.mubr.f32.mxu0 0.0
      %1989 = vmatmul.mubr.f32.gmra.mrb[0].mxu0 %v1827
      %v1990 = vpop.f32.mrb[0].mxu0
      %v1991 = vadd.f32 0.0, %v1990
      %v1992 = vpop.f32.mrb[0].mxu0
      %1993 = vmatprep.mubr.f32.mxu0 0.0
      %1994 = vmatmul.mubr.f32.gmra.mrb[0].mxu0 %v1830
      %v1995 = vpop.f32.mrb[0].mxu0
      %v1996 = vadd.f32 0.0, %v1995
      %v1997 = vpop.f32.mrb[0].mxu0
      %1998 = vmatprep.mubr.f32.mxu0 0.0
      %1999 = vmatmul.mubr.f32.gmra.mrb[0].mxu0 %v1833
      %v2000 = vpop.f32.mrb[0].mxu0
      %v2001 = vadd.f32 0.0, %v2000
      %v2002 = vpop.f32.mrb[0].mxu0
      %2003 = vmatprep.mubr.f32.mxu0 0.0
      %2004 = vmatmul.mubr.f32.gmra.mrb[0].mxu0 %v1836
      %v2005 = vpop.f32.mrb[0].mxu0
      %v2006 = vadd.f32 0.0, %v2005
      %v2007 = vpop.f32.mrb[0].mxu0
      %2008 = vmatprep.mubr.f32.mxu0 0.0
      %2009 = vmatmul.mubr.f32.gmra.mrb[0].mxu0 %v1839
      %v2010 = vpop.f32.mrb[0].mxu0
      %v2011 = vadd.f32 0.0, %v2010
      %v2012 = vpop.f32.mrb[0].mxu0
      %2013 = vmatprep.mubr.f32.mxu0 0.0
      %2014 = vmatmul.mubr.f32.gmra.mrb[0].mxu0 %v1842
      %v2015 = vpop.f32.mrb[0].mxu0
      %v2016 = vadd.f32 0.0, %v2015
      %v2017 = vpop.f32.mrb[0].mxu0
      %2018 = vmatprep.mubr.f32.mxu0 0.0
      %2019 = vmatmul.mubr.f32.gmra.mrb[0].mxu0 %v1845
      %v2020 = vpop.f32.mrb[0].mxu0
      %v2021 = vadd.f32 0.0, %v2020
      %v2022 = vpop.f32.mrb[0].mxu0
      %2023 = vmatprep.mubr.f32.mxu0 0.0
      %2024 = vmatmul.mubr.f32.gmra.mrb[0].mxu0 %v1848
      %v2025 = vpop.f32.mrb[0].mxu0
      %v2026 = vadd.f32 0.0, %v2025
      %v2027 = vpop.f32.mrb[0].mxu0
      %2028 = vmatprep.mubr.f32.mxu0 0.0
      %2029 = vmatmul.mubr.f32.gmra.mrb[0].mxu0 %v1851
      %v2030 = vpop.f32.mrb[0].mxu0
      %v2031 = vadd.f32 0.0, %v2030
      %v2032 = vpop.f32.mrb[0].mxu0
      %2033 = vmatprep.mubr.f32.mxu0 0.0
      %2034 = vmatmul.mubr.f32.gmra.mrb[0].mxu0 %v1854
      %v2035 = vpop.f32.mrb[0].mxu0
      %v2036 = vadd.f32 0.0, %v2035
      %v2037 = vpop.f32.mrb[0].mxu0
      %2038 = vmatprep.mubr.f32.mxu0 0.0
      %2039 = vmatmul.mubr.f32.gmra.mrb[0].mxu0 %v1857
      %v2040 = vpop.f32.mrb[0].mxu0
      %v2041 = vadd.f32 0.0, %v2040
      %v2042 = vpop.f32.mrb[0].mxu0
      %2043 = vmatprep.mubr.f32.mxu0 0.0
      %2044 = vmatmul.mubr.f32.gmra.mrb[0].mxu0 %v1860
      %v2045 = vpop.f32.mrb[0].mxu0
      %v2046 = vadd.f32 0.0, %v2045
      %v2047 = vpop.f32.mrb[0].mxu0
      %2048 = vmatprep.mubr.f32.mxu0 0.0
      %2049 = vmatmul.mubr.f32.gmra.mrb[0].mxu0 %v1863
      %v2050 = vpop.f32.mrb[0].mxu0
      %v2051 = vadd.f32 0.0, %v2050
      %v2052 = vpop.f32.mrb[0].mxu0
      %2053 = vmatprep.mubr.f32.mxu0 0.0
      %2054 = vmatmul.mubr.f32.gmra.mrb[0].mxu0 %v1866
      %v2055 = vpop.f32.mrb[0].mxu0
      %v2056 = vadd.f32 0.0, %v2055
      %v2057 = vpop.f32.mrb[0].mxu0
      %2058 = vmatprep.mubr.f32.mxu0 0.0
      %2059 = vmatmul.mubr.f32.gmra.mrb[0].mxu0 %v1869
      %v2060 = vpop.f32.mrb[0].mxu0
      %v2061 = vadd.f32 0.0, %v2060
      %v2062 = vpop.f32.mrb[0].mxu0
      %2063 = vmatprep.mubr.f32.mxu0 0.0
      %2064 = vmatmul.mubr.f32.gmra.mrb[0].mxu0 %v1872
      %v2065 = vpop.f32.mrb[0].mxu0
      %v2066 = vadd.f32 0.0, %v2065
      %v2067 = vpop.f32.mrb[0].mxu0
      %2068 = vmatprep.mubr.f32.mxu0 0.0
      %2069 = vmatmul.mubr.f32.gmra.mrb[0].mxu0 %v1875
      %v2070 = vpop.f32.mrb[0].mxu0
      %v2071 = vadd.f32 0.0, %v2070
      %v2072 = vpop.f32.mrb[0].mxu0
      %2073 = vmatprep.mubr.f32.mxu0 0.0
      %2074 = vmatmul.mubr.f32.gmra.mrb[0].mxu0 %v1878
      %v2075 = vpop.f32.mrb[0].mxu0
      %v2076 = vadd.f32 0.0, %v2075
      %v2077 = vpop.f32.mrb[0].mxu0
      %2078 = vmatprep.mubr.f32.mxu0 0.0
      %2079 = vmatmul.mubr.f32.gmra.mrb[0].mxu0 %v1881
      %v2080 = vpop.f32.mrb[0].mxu0
      %v2081 = vadd.f32 0.0, %v2080
      %v2082 = vpop.f32.mrb[0].mxu0
      %2083 = vmatprep.mubr.f32.mxu0 0.0
      %2084 = vmatmul.mubr.f32.gmra.mrb[0].mxu0 %v1884
      %v2085 = vpop.f32.mrb[0].mxu0
      %v2086 = vadd.f32 0.0, %v2085
      %v2087 = vpop.f32.mrb[0].mxu0
      %2088 = vmatprep.mubr.f32.mxu0 0.0
      %2089 = vmatmul.mubr.f32.gmra.mrb[0].mxu0 %v1887
      %v2090 = vpop.f32.mrb[0].mxu0
      %v2091 = vadd.f32 0.0, %v2090
      %v2092 = vpop.f32.mrb[0].mxu0
      %2093 = vmatprep.mubr.f32.mxu0 0.0
      %2094 = vmatmul.mubr.f32.gmra.mrb[0].mxu0 %v1890
      %v2095 = vpop.f32.mrb[0].mxu0
      %v2096 = vadd.f32 0.0, %v2095
      %v2097 = vpop.f32.mrb[0].mxu0
      %2098 = vmatprep.mubr.f32.mxu0 0.0
      %2099 = vmatmul.mubr.f32.gmra.mrb[0].mxu0 %v1893
      %v2100 = vpop.f32.mrb[0].mxu0
      %v2101 = vadd.f32 0.0, %v2100
      %v2102 = vpop.f32.mrb[0].mxu0
      %2103 = vmatprep.mubr.f32.mxu0 0.0
      %2104 = vmatmul.mubr.f32.gmra.mrb[0].mxu0 %v1896
      %v2105 = vpop.f32.mrb[0].mxu0
      %v2106 = vadd.f32 0.0, %v2105
      %v2107 = vpop.f32.mrb[0].mxu0
      %2108 = vmatprep.mubr.f32.mxu0 0.0
      %2109 = vmatmul.mubr.f32.gmra.mrb[0].mxu0 %v1899
      %v2110 = vpop.f32.mrb[0].mxu0
      %v2111 = vadd.f32 0.0, %v2110
      %v2112 = vpop.f32.mrb[0].mxu0
      %2113 = vmatprep.mubr.f32.mxu0 0.0
      %2114 = vmatmul.mubr.f32.gmra.mrb[0].mxu0 %v1902
      %v2115 = vpop.f32.mrb[0].mxu0
      %v2116 = vadd.f32 0.0, %v2115
      %v2117 = vpop.f32.mrb[0].mxu0
      %2118 = vmatprep.mubr.f32.mxu0 0.0
      %2119 = vmatmul.mubr.f32.gmra.mrb[0].mxu0 %v1905
      %v2120 = vpop.f32.mrb[0].mxu0
      %v2121 = vadd.f32 0.0, %v2120
      %v2122 = vpop.f32.mrb[0].mxu0
      %2123 = vmatprep.mubr.f32.mxu0 0.0
      %2124 = vmatmul.mubr.f32.gmra.mrb[0].mxu0 %v1908
      %v2125 = vpop.f32.mrb[0].mxu0
      %v2126 = vadd.f32 0.0, %v2125
      %v2127 = vpop.f32.mrb[0].mxu0
      %2128 = vmatprep.mubr.f32.mxu0 0.0
      %2129 = vmatmul.mubr.f32.gmra.mrb[0].mxu0 %v1911
      %v2130 = vpop.f32.mrb[0].mxu0
      %v2131 = vadd.f32 0.0, %v2130
      %v2132 = vpop.f32.mrb[0].mxu0
      %2133 = vmatprep.mubr.f32.mxu0 0.0
      %2134 = vmatmul.mubr.f32.gmra.mrb[0].mxu0 %v1914
      %v2135 = vpop.f32.mrb[0].mxu0
      %v2136 = vadd.f32 0.0, %v2135
      %v2137 = vpop.f32.mrb[0].mxu0
      %2138 = vmatprep.mubr.f32.mxu0 0.0
      %2139 = vmatmul.mubr.f32.gmra.mrb[0].mxu0 %v1917
      %v2140 = vpop.f32.mrb[0].mxu0
      %v2141 = vadd.f32 0.0, %v2140
      %v2142 = vpop.f32.mrb[0].mxu0
      %2143 = vdwg.mxu0
      %v2144 = vadd.f32 %v1756, %v1986
      %v2145 = vadd.f32 %v1757, %v1991
      %v2146 = vadd.f32 %v1758, %v1996
      %v2147 = vadd.f32 %v1759, %v2001
      %v2148 = vadd.f32 %v1760, %v2006
      %v2149 = vadd.f32 %v1761, %v2011
      %v2150 = vadd.f32 %v1762, %v2016
      %v2151 = vadd.f32 %v1763, %v2021
      %v2152 = vadd.f32 %v1764, %v2026
      %v2153 = vadd.f32 %v1765, %v2031
      %v2154 = vadd.f32 %v1766, %v2036
      %v2155 = vadd.f32 %v1767, %v2041
      %v2156 = vadd.f32 %v1768, %v2046
      %v2157 = vadd.f32 %v1769, %v2051
      %v2158 = vadd.f32 %v1770, %v2056
      %v2159 = vadd.f32 %v1771, %v2061
      %v2160 = vadd.f32 %v1772, %v2066
      %v2161 = vadd.f32 %v1773, %v2071
      %v2162 = vadd.f32 %v1774, %v2076
      %v2163 = vadd.f32 %v1775, %v2081
      %v2164 = vadd.f32 %v1776, %v2086
      %v2165 = vadd.f32 %v1777, %v2091
      %v2166 = vadd.f32 %v1778, %v2096
      %v2167 = vadd.f32 %v1779, %v2101
      %v2168 = vadd.f32 %v1780, %v2106
      %v2169 = vadd.f32 %v1781, %v2111
      %v2170 = vadd.f32 %v1782, %v2116
      %v2171 = vadd.f32 %v1783, %v2121
      %v2172 = vadd.f32 %v1784, %v2126
      %v2173 = vadd.f32 %v1785, %v2131
      %v2174 = vadd.f32 %v1786, %v2136
      %v2175 = vadd.f32 %v1787, %v2141
      %v2176 = vld [vmem:[%s1399 + $0x2] sm:$0xff]
      %v2177 = vld [vmem:[%s1399 + $0xa] sm:$0xff]
      %v2178 = vld [vmem:[%s1399 + $0x1a] sm:$0xff]
      %v2179 = vld [vmem:[%s1399 + $0x22] sm:$0xff]
      %v2180 = vld [vmem:[%s1399 + $0x32] sm:$0xff]
      %v2181 = vld [vmem:[%s1399 + $0x3a] sm:$0xff]
      %v2182 = vld [vmem:[%s1399 + $0x4a] sm:$0xff]
      %v2183 = vld [vmem:[%s1399 + $0x52] sm:$0xff]
      %v2184 = vld [vmem:[%s1399 + $0x62] sm:$0xff]
      %v2185 = vld [vmem:[%s1399 + $0x6a] sm:$0xff]
      %v2186 = vld [vmem:[%s1399 + $0x7a] sm:$0xff]
      %v2187 = vld [vmem:[%s1399 + $0x82] sm:$0xff]
      %v2188 = vld [vmem:[%s1399 + $0x92] sm:$0xff]
      %v2189 = vld [vmem:[%s1399 + $0x9a] sm:$0xff]
      %v2190 = vld [vmem:[%s1399 + $0xaa] sm:$0xff]
      %v2191 = vld [vmem:[%s1399 + $0xb2] sm:$0xff]
      %v2192 = vld [vmem:[%s1399 + $0xc2] sm:$0xff]
      %v2193 = vld [vmem:[%s1399 + $0xca] sm:$0xff]
      %v2194 = vld [vmem:[%s1399 + $0xda] sm:$0xff]
      %v2195 = vld [vmem:[%s1399 + $0xe2] sm:$0xff]
      %v2196 = vld [vmem:[%s1399 + $0xf2] sm:$0xff]
      %v2197 = vld [vmem:[%s1399 + $0xfa] sm:$0xff]
      %v2198 = vld [vmem:[%s1399 + $0x10a] sm:$0xff]
      %v2199 = vld [vmem:[%s1399 + $0x112] sm:$0xff]
      %v2200 = vld [vmem:[%s1399 + $0x122] sm:$0xff]
      %v2201 = vld [vmem:[%s1399 + $0x12a] sm:$0xff]
      %v2202 = vld [vmem:[%s1399 + $0x13a] sm:$0xff]
      %v2203 = vld [vmem:[%s1399 + $0x142] sm:$0xff]
      %v2204 = vld [vmem:[%s1399 + $0x152] sm:$0xff]
      %v2205 = vld [vmem:[%s1399 + $0x15a] sm:$0xff]
      %v2206 = vld [vmem:[%s1399 + $0x16a] sm:$0xff]
      %v2207 = vld [vmem:[%s1399 + $0x172] sm:$0xff]
      %s2208 = scalar_lea.vmem %s2, 80
      %v2209 = vld [vmem:[%s2208] sm:$0xff]
      %v2210 = vld [vmem:[%s2208 + $0x8] sm:$0xff]
      %v2212 = vsel %vm368, %v2176, 0
      %v2215 = vsel %vm368, %v2177, 0
      %v2218 = vsel %vm368, %v2178, 0
      %v2221 = vsel %vm368, %v2179, 0
      %v2224 = vsel %vm368, %v2180, 0
      %v2227 = vsel %vm368, %v2181, 0
      %v2230 = vsel %vm368, %v2182, 0
      %v2233 = vsel %vm368, %v2183, 0
      %v2236 = vsel %vm368, %v2184, 0
      %v2239 = vsel %vm368, %v2185, 0
      %v2242 = vsel %vm368, %v2186, 0
      %v2245 = vsel %vm368, %v2187, 0
      %v2248 = vsel %vm368, %v2188, 0
      %v2251 = vsel %vm368, %v2189, 0
      %v2254 = vsel %vm368, %v2190, 0
      %v2257 = vsel %vm368, %v2191, 0
      %v2260 = vsel %vm368, %v2192, 0
      %v2263 = vsel %vm368, %v2193, 0
      %v2266 = vsel %vm368, %v2194, 0
      %v2269 = vsel %vm368, %v2195, 0
      %v2272 = vsel %vm368, %v2196, 0
      %v2275 = vsel %vm368, %v2197, 0
      %v2278 = vsel %vm368, %v2198, 0
      %v2281 = vsel %vm368, %v2199, 0
      %v2284 = vsel %vm368, %v2200, 0
      %v2287 = vsel %vm368, %v2201, 0
      %v2290 = vsel %vm368, %v2202, 0
      %v2293 = vsel %vm368, %v2203, 0
      %v2296 = vsel %vm368, %v2204, 0
      %v2299 = vsel %vm368, %v2205, 0
      %v2302 = vsel %vm368, %v2206, 0
      %v2305 = vsel %vm368, %v2207, 0
      %2307 = vmatprep.subr.mxu0 0.0
      %2308 = vmatpush1.msra.mxu0 %v2209
      %2309 = vmatprep.subr.mxu0 0.0
      %2310 = vmatpush1.msra.mxu0 %v2210
      %2311 = vmatprep.subr.mxu0 0.0
      %2312 = vmatpush1.msra.mxu0 0.0
      %2313 = vmatprep.subr.mxu0 0.0
      %2314 = vmatpush1.msra.mxu0 0.0
      %2315 = vmatprep.subr.mxu0 0.0
      %2316 = vmatpush1.msra.mxu0 0.0
      %2317 = vmatprep.subr.mxu0 0.0
      %2318 = vmatpush1.msra.mxu0 0.0
      %2319 = vmatprep.subr.mxu0 0.0
      %2320 = vmatpush1.msra.mxu0 0.0
      %2321 = vmatprep.subr.mxu0 0.0
      %2322 = vmatpush1.msra.mxu0 0.0
      %2323 = vmatprep.subr.mxu0 0.0
      %2324 = vmatpush1.msra.mxu0 0.0
      %2325 = vmatprep.subr.mxu0 0.0
      %2326 = vmatpush1.msra.mxu0 0.0
      %2327 = vmatprep.subr.mxu0 0.0
      %2328 = vmatpush1.msra.mxu0 0.0
      %2329 = vmatprep.subr.mxu0 0.0
      %2330 = vmatpush1.msra.mxu0 0.0
      %2331 = vmatprep.subr.mxu0 0.0
      %2332 = vmatpush1.msra.mxu0 0.0
      %2333 = vmatprep.subr.mxu0 0.0
      %2334 = vmatpush1.msra.mxu0 0.0
      %2335 = vmatprep.subr.mxu0 0.0
      %2336 = vmatpush1.msra.mxu0 0.0
      %2337 = vmatprep.subr.mxu0 0.0
      %2338 = vmatpush1.msra.mxu0 0.0
      %2339 = vmatprep.subr.mxu0 0.0
      %2340 = vmatpush1.msra.mxu0 0.0
      %2341 = vmatprep.subr.mxu0 0.0
      %2342 = vmatpush1.msra.mxu0 0.0
      %2343 = vmatprep.subr.mxu0 0.0
      %2344 = vmatpush1.msra.mxu0 0.0
      %2345 = vmatprep.subr.mxu0 0.0
      %2346 = vmatpush1.msra.mxu0 0.0
      %2347 = vmatprep.subr.mxu0 0.0
      %2348 = vmatpush1.msra.mxu0 0.0
      %2349 = vmatprep.subr.mxu0 0.0
      %2350 = vmatpush1.msra.mxu0 0.0
      %2351 = vmatprep.subr.mxu0 0.0
      %2352 = vmatpush1.msra.mxu0 0.0
      %2353 = vmatprep.subr.mxu0 0.0
      %2354 = vmatpush1.msra.mxu0 0.0
      %2355 = vmatprep.subr.mxu0 0.0
      %2356 = vmatpush1.msra.mxu0 0.0
      %2357 = vmatprep.subr.mxu0 0.0
      %2358 = vmatpush1.msra.mxu0 0.0
      %2359 = vmatprep.subr.mxu0 0.0
      %2360 = vmatpush1.msra.mxu0 0.0
      %2361 = vmatprep.subr.mxu0 0.0
      %2362 = vmatpush1.msra.mxu0 0.0
      %2363 = vmatprep.subr.mxu0 0.0
      %2364 = vmatpush1.msra.mxu0 0.0
      %2365 = vmatprep.subr.mxu0 0.0
      %2366 = vmatpush1.msra.mxu0 0.0
      %2367 = vmatprep.subr.mxu0 0.0
      %2368 = vmatpush1.msra.mxu0 0.0
      %2369 = vmatprep.subr.mxu0 0.0
      %2370 = vmatpush1.msra.mxu0 0.0
      %2371 = vmatprep.mubr.f32.mxu0 0.0
      %2372 = vmatmul.mubr.f32.gmra.mrb[0].mxu0 %v2212
      %v2373 = vpop.f32.mrb[0].mxu0
      %v2374 = vadd.f32 0.0, %v2373
      %v2375 = vpop.f32.mrb[0].mxu0
      %2376 = vmatprep.mubr.f32.mxu0 0.0
      %2377 = vmatmul.mubr.f32.gmra.mrb[0].mxu0 %v2215
      %v2378 = vpop.f32.mrb[0].mxu0
      %v2379 = vadd.f32 0.0, %v2378
      %v2380 = vpop.f32.mrb[0].mxu0
      %2381 = vmatprep.mubr.f32.mxu0 0.0
      %2382 = vmatmul.mubr.f32.gmra.mrb[0].mxu0 %v2218
      %v2383 = vpop.f32.mrb[0].mxu0
      %v2384 = vadd.f32 0.0, %v2383
      %v2385 = vpop.f32.mrb[0].mxu0
      %2386 = vmatprep.mubr.f32.mxu0 0.0
      %2387 = vmatmul.mubr.f32.gmra.mrb[0].mxu0 %v2221
      %v2388 = vpop.f32.mrb[0].mxu0
      %v2389 = vadd.f32 0.0, %v2388
      %v2390 = vpop.f32.mrb[0].mxu0
      %2391 = vmatprep.mubr.f32.mxu0 0.0
      %2392 = vmatmul.mubr.f32.gmra.mrb[0].mxu0 %v2224
      %v2393 = vpop.f32.mrb[0].mxu0
      %v2394 = vadd.f32 0.0, %v2393
      %v2395 = vpop.f32.mrb[0].mxu0
      %2396 = vmatprep.mubr.f32.mxu0 0.0
      %2397 = vmatmul.mubr.f32.gmra.mrb[0].mxu0 %v2227
      %v2398 = vpop.f32.mrb[0].mxu0
      %v2399 = vadd.f32 0.0, %v2398
      %v2400 = vpop.f32.mrb[0].mxu0
      %2401 = vmatprep.mubr.f32.mxu0 0.0
      %2402 = vmatmul.mubr.f32.gmra.mrb[0].mxu0 %v2230
      %v2403 = vpop.f32.mrb[0].mxu0
      %v2404 = vadd.f32 0.0, %v2403
      %v2405 = vpop.f32.mrb[0].mxu0
      %2406 = vmatprep.mubr.f32.mxu0 0.0
      %2407 = vmatmul.mubr.f32.gmra.mrb[0].mxu0 %v2233
      %v2408 = vpop.f32.mrb[0].mxu0
      %v2409 = vadd.f32 0.0, %v2408
      %v2410 = vpop.f32.mrb[0].mxu0
      %2411 = vmatprep.mubr.f32.mxu0 0.0
      %2412 = vmatmul.mubr.f32.gmra.mrb[0].mxu0 %v2236
      %v2413 = vpop.f32.mrb[0].mxu0
      %v2414 = vadd.f32 0.0, %v2413
      %v2415 = vpop.f32.mrb[0].mxu0
      %2416 = vmatprep.mubr.f32.mxu0 0.0
      %2417 = vmatmul.mubr.f32.gmra.mrb[0].mxu0 %v2239
      %v2418 = vpop.f32.mrb[0].mxu0
      %v2419 = vadd.f32 0.0, %v2418
      %v2420 = vpop.f32.mrb[0].mxu0
      %2421 = vmatprep.mubr.f32.mxu0 0.0
      %2422 = vmatmul.mubr.f32.gmra.mrb[0].mxu0 %v2242
      %v2423 = vpop.f32.mrb[0].mxu0
      %v2424 = vadd.f32 0.0, %v2423
      %v2425 = vpop.f32.mrb[0].mxu0
      %2426 = vmatprep.mubr.f32.mxu0 0.0
      %2427 = vmatmul.mubr.f32.gmra.mrb[0].mxu0 %v2245
      %v2428 = vpop.f32.mrb[0].mxu0
      %v2429 = vadd.f32 0.0, %v2428
      %v2430 = vpop.f32.mrb[0].mxu0
      %2431 = vmatprep.mubr.f32.mxu0 0.0
      %2432 = vmatmul.mubr.f32.gmra.mrb[0].mxu0 %v2248
      %v2433 = vpop.f32.mrb[0].mxu0
      %v2434 = vadd.f32 0.0, %v2433
      %v2435 = vpop.f32.mrb[0].mxu0
      %2436 = vmatprep.mubr.f32.mxu0 0.0
      %2437 = vmatmul.mubr.f32.gmra.mrb[0].mxu0 %v2251
      %v2438 = vpop.f32.mrb[0].mxu0
      %v2439 = vadd.f32 0.0, %v2438
      %v2440 = vpop.f32.mrb[0].mxu0
      %2441 = vmatprep.mubr.f32.mxu0 0.0
      %2442 = vmatmul.mubr.f32.gmra.mrb[0].mxu0 %v2254
      %v2443 = vpop.f32.mrb[0].mxu0
      %v2444 = vadd.f32 0.0, %v2443
      %v2445 = vpop.f32.mrb[0].mxu0
      %2446 = vmatprep.mubr.f32.mxu0 0.0
      %2447 = vmatmul.mubr.f32.gmra.mrb[0].mxu0 %v2257
      %v2448 = vpop.f32.mrb[0].mxu0
      %v2449 = vadd.f32 0.0, %v2448
      %v2450 = vpop.f32.mrb[0].mxu0
      %2451 = vmatprep.mubr.f32.mxu0 0.0
      %2452 = vmatmul.mubr.f32.gmra.mrb[0].mxu0 %v2260
      %v2453 = vpop.f32.mrb[0].mxu0
      %v2454 = vadd.f32 0.0, %v2453
      %v2455 = vpop.f32.mrb[0].mxu0
      %2456 = vmatprep.mubr.f32.mxu0 0.0
      %2457 = vmatmul.mubr.f32.gmra.mrb[0].mxu0 %v2263
      %v2458 = vpop.f32.mrb[0].mxu0
      %v2459 = vadd.f32 0.0, %v2458
      %v2460 = vpop.f32.mrb[0].mxu0
      %2461 = vmatprep.mubr.f32.mxu0 0.0
      %2462 = vmatmul.mubr.f32.gmra.mrb[0].mxu0 %v2266
      %v2463 = vpop.f32.mrb[0].mxu0
      %v2464 = vadd.f32 0.0, %v2463
      %v2465 = vpop.f32.mrb[0].mxu0
      %2466 = vmatprep.mubr.f32.mxu0 0.0
      %2467 = vmatmul.mubr.f32.gmra.mrb[0].mxu0 %v2269
      %v2468 = vpop.f32.mrb[0].mxu0
      %v2469 = vadd.f32 0.0, %v2468
      %v2470 = vpop.f32.mrb[0].mxu0
      %2471 = vmatprep.mubr.f32.mxu0 0.0
      %2472 = vmatmul.mubr.f32.gmra.mrb[0].mxu0 %v2272
      %v2473 = vpop.f32.mrb[0].mxu0
      %v2474 = vadd.f32 0.0, %v2473
      %v2475 = vpop.f32.mrb[0].mxu0
      %2476 = vmatprep.mubr.f32.mxu0 0.0
      %2477 = vmatmul.mubr.f32.gmra.mrb[0].mxu0 %v2275
      %v2478 = vpop.f32.mrb[0].mxu0
      %v2479 = vadd.f32 0.0, %v2478
      %v2480 = vpop.f32.mrb[0].mxu0
      %2481 = vmatprep.mubr.f32.mxu0 0.0
      %2482 = vmatmul.mubr.f32.gmra.mrb[0].mxu0 %v2278
      %v2483 = vpop.f32.mrb[0].mxu0
      %v2484 = vadd.f32 0.0, %v2483
      %v2485 = vpop.f32.mrb[0].mxu0
      %2486 = vmatprep.mubr.f32.mxu0 0.0
      %2487 = vmatmul.mubr.f32.gmra.mrb[0].mxu0 %v2281
      %v2488 = vpop.f32.mrb[0].mxu0
      %v2489 = vadd.f32 0.0, %v2488
      %v2490 = vpop.f32.mrb[0].mxu0
      %2491 = vmatprep.mubr.f32.mxu0 0.0
      %2492 = vmatmul.mubr.f32.gmra.mrb[0].mxu0 %v2284
      %v2493 = vpop.f32.mrb[0].mxu0
      %v2494 = vadd.f32 0.0, %v2493
      %v2495 = vpop.f32.mrb[0].mxu0
      %2496 = vmatprep.mubr.f32.mxu0 0.0
      %2497 = vmatmul.mubr.f32.gmra.mrb[0].mxu0 %v2287
      %v2498 = vpop.f32.mrb[0].mxu0
      %v2499 = vadd.f32 0.0, %v2498
      %v2500 = vpop.f32.mrb[0].mxu0
      %2501 = vmatprep.mubr.f32.mxu0 0.0
      %2502 = vmatmul.mubr.f32.gmra.mrb[0].mxu0 %v2290
      %v2503 = vpop.f32.mrb[0].mxu0
      %v2504 = vadd.f32 0.0, %v2503
      %v2505 = vpop.f32.mrb[0].mxu0
      %2506 = vmatprep.mubr.f32.mxu0 0.0
      %2507 = vmatmul.mubr.f32.gmra.mrb[0].mxu0 %v2293
      %v2508 = vpop.f32.mrb[0].mxu0
      %v2509 = vadd.f32 0.0, %v2508
      %v2510 = vpop.f32.mrb[0].mxu0
      %2511 = vmatprep.mubr.f32.mxu0 0.0
      %2512 = vmatmul.mubr.f32.gmra.mrb[0].mxu0 %v2296
      %v2513 = vpop.f32.mrb[0].mxu0
      %v2514 = vadd.f32 0.0, %v2513
      %v2515 = vpop.f32.mrb[0].mxu0
      %2516 = vmatprep.mubr.f32.mxu0 0.0
      %2517 = vmatmul.mubr.f32.gmra.mrb[0].mxu0 %v2299
      %v2518 = vpop.f32.mrb[0].mxu0
      %v2519 = vadd.f32 0.0, %v2518
      %v2520 = vpop.f32.mrb[0].mxu0
      %2521 = vmatprep.mubr.f32.mxu0 0.0
      %2522 = vmatmul.mubr.f32.gmra.mrb[0].mxu0 %v2302
      %v2523 = vpop.f32.mrb[0].mxu0
      %v2524 = vadd.f32 0.0, %v2523
      %v2525 = vpop.f32.mrb[0].mxu0
      %2526 = vmatprep.mubr.f32.mxu0 0.0
      %2527 = vmatmul.mubr.f32.gmra.mrb[0].mxu0 %v2305
      %v2528 = vpop.f32.mrb[0].mxu0
      %v2529 = vadd.f32 0.0, %v2528
      %v2530 = vpop.f32.mrb[0].mxu0
      %2531 = vdwg.mxu0
      %v2532 = vadd.f32 %v2144, %v2374
      %v2533 = vadd.f32 %v2145, %v2379
      %v2534 = vadd.f32 %v2146, %v2384
      %v2535 = vadd.f32 %v2147, %v2389
      %v2536 = vadd.f32 %v2148, %v2394
      %v2537 = vadd.f32 %v2149, %v2399
      %v2538 = vadd.f32 %v2150, %v2404
      %v2539 = vadd.f32 %v2151, %v2409
      %v2540 = vadd.f32 %v2152, %v2414
      %v2541 = vadd.f32 %v2153, %v2419
      %v2542 = vadd.f32 %v2154, %v2424
      %v2543 = vadd.f32 %v2155, %v2429
      %v2544 = vadd.f32 %v2156, %v2434
      %v2545 = vadd.f32 %v2157, %v2439
      %v2546 = vadd.f32 %v2158, %v2444
      %v2547 = vadd.f32 %v2159, %v2449
      %v2548 = vadd.f32 %v2160, %v2454
      %v2549 = vadd.f32 %v2161, %v2459
      %v2550 = vadd.f32 %v2162, %v2464
      %v2551 = vadd.f32 %v2163, %v2469
      %v2552 = vadd.f32 %v2164, %v2474
      %v2553 = vadd.f32 %v2165, %v2479
      %v2554 = vadd.f32 %v2166, %v2484
      %v2555 = vadd.f32 %v2167, %v2489
      %v2556 = vadd.f32 %v2168, %v2494
      %v2557 = vadd.f32 %v2169, %v2499
      %v2558 = vadd.f32 %v2170, %v2504
      %v2559 = vadd.f32 %v2171, %v2509
      %v2560 = vadd.f32 %v2172, %v2514
      %v2561 = vadd.f32 %v2173, %v2519
      %v2562 = vadd.f32 %v2174, %v2524
      %v2563 = vadd.f32 %v2175, %v2529
      %s2564 = scalar_lea.vmem %s288, 48
      %v2565 = vld [vmem:[%s2564] sm:$0xff]
      %v2566 = vld [vmem:[%s2564 + $0x8] sm:$0xff]
      %v2567 = vld [vmem:[%s2564 + $0x18] sm:$0xff]
      %v2568 = vld [vmem:[%s2564 + $0x20] sm:$0xff]
      %v2569 = vld [vmem:[%s2564 + $0x30] sm:$0xff]
      %v2570 = vld [vmem:[%s2564 + $0x38] sm:$0xff]
      %v2571 = vld [vmem:[%s2564 + $0x48] sm:$0xff]
      %v2572 = vld [vmem:[%s2564 + $0x50] sm:$0xff]
      %v2573 = vld [vmem:[%s2564 + $0x60] sm:$0xff]
      %v2574 = vld [vmem:[%s2564 + $0x68] sm:$0xff]
      %v2575 = vld [vmem:[%s2564 + $0x78] sm:$0xff]
      %v2576 = vld [vmem:[%s2564 + $0x80] sm:$0xff]
      %v2577 = vld [vmem:[%s2564 + $0x90] sm:$0xff]
      %v2578 = vld [vmem:[%s2564 + $0x98] sm:$0xff]
      %v2579 = vld [vmem:[%s2564 + $0xa8] sm:$0xff]
      %v2580 = vld [vmem:[%s2564 + $0xb0] sm:$0xff]
      %v2581 = vld [vmem:[%s2564 + $0xc0] sm:$0xff]
      %v2582 = vld [vmem:[%s2564 + $0xc8] sm:$0xff]
      %v2583 = vld [vmem:[%s2564 + $0xd8] sm:$0xff]
      %v2584 = vld [vmem:[%s2564 + $0xe0] sm:$0xff]
      %v2585 = vld [vmem:[%s2564 + $0xf0] sm:$0xff]
      %v2586 = vld [vmem:[%s2564 + $0xf8] sm:$0xff]
      %v2587 = vld [vmem:[%s2564 + $0x108] sm:$0xff]
      %v2588 = vld [vmem:[%s2564 + $0x110] sm:$0xff]
      %v2589 = vld [vmem:[%s2564 + $0x120] sm:$0xff]
      %v2590 = vld [vmem:[%s2564 + $0x128] sm:$0xff]
      %v2591 = vld [vmem:[%s2564 + $0x138] sm:$0xff]
      %v2592 = vld [vmem:[%s2564 + $0x140] sm:$0xff]
      %v2593 = vld [vmem:[%s2564 + $0x150] sm:$0xff]
      %v2594 = vld [vmem:[%s2564 + $0x158] sm:$0xff]
      %v2595 = vld [vmem:[%s2564 + $0x168] sm:$0xff]
      %v2596 = vld [vmem:[%s2564 + $0x170] sm:$0xff]
      %s2597 = scalar_lea.vmem %s2, 96
      %v2598 = vld [vmem:[%s2597] sm:$0xff]
      %v2599 = vld [vmem:[%s2597 + $0x8] sm:$0xff]
      %v2601 = vsel %vm368, %v2565, 0
      %v2604 = vsel %vm368, %v2566, 0
      %v2607 = vsel %vm368, %v2567, 0
      %v2610 = vsel %vm368, %v2568, 0
      %v2613 = vsel %vm368, %v2569, 0
      %v2616 = vsel %vm368, %v2570, 0
      %v2619 = vsel %vm368, %v2571, 0
      %v2622 = vsel %vm368, %v2572, 0
      %v2625 = vsel %vm368, %v2573, 0
      %v2628 = vsel %vm368, %v2574, 0
      %v2631 = vsel %vm368, %v2575, 0
      %v2634 = vsel %vm368, %v2576, 0
      %v2637 = vsel %vm368, %v2577, 0
      %v2640 = vsel %vm368, %v2578, 0
      %v2643 = vsel %vm368, %v2579, 0
      %v2646 = vsel %vm368, %v2580, 0
      %v2649 = vsel %vm368, %v2581, 0
      %v2652 = vsel %vm368, %v2582, 0
      %v2655 = vsel %vm368, %v2583, 0
      %v2658 = vsel %vm368, %v2584, 0
      %v2661 = vsel %vm368, %v2585, 0
      %v2664 = vsel %vm368, %v2586, 0
      %v2667 = vsel %vm368, %v2587, 0
      %v2670 = vsel %vm368, %v2588, 0
      %v2673 = vsel %vm368, %v2589, 0
      %v2676 = vsel %vm368, %v2590, 0
      %v2679 = vsel %vm368, %v2591, 0
      %v2682 = vsel %vm368, %v2592, 0
      %v2685 = vsel %vm368, %v2593, 0
      %v2688 = vsel %vm368, %v2594, 0
      %v2691 = vsel %vm368, %v2595, 0
      %v2694 = vsel %vm368, %v2596, 0
      %2696 = vmatprep.subr.mxu0 0.0
      %2697 = vmatpush1.msra.mxu0 %v2598
      %2698 = vmatprep.subr.mxu0 0.0
      %2699 = vmatpush1.msra.mxu0 %v2599
      %2700 = vmatprep.subr.mxu0 0.0
      %2701 = vmatpush1.msra.mxu0 0.0
      %2702 = vmatprep.subr.mxu0 0.0
      %2703 = vmatpush1.msra.mxu0 0.0
      %2704 = vmatprep.subr.mxu0 0.0
      %2705 = vmatpush1.msra.mxu0 0.0
      %2706 = vmatprep.subr.mxu0 0.0
      %2707 = vmatpush1.msra.mxu0 0.0
      %2708 = vmatprep.subr.mxu0 0.0
      %2709 = vmatpush1.msra.mxu0 0.0
      %2710 = vmatprep.subr.mxu0 0.0
      %2711 = vmatpush1.msra.mxu0 0.0
      %2712 = vmatprep.subr.mxu0 0.0
      %2713 = vmatpush1.msra.mxu0 0.0
      %2714 = vmatprep.subr.mxu0 0.0
      %2715 = vmatpush1.msra.mxu0 0.0
      %2716 = vmatprep.subr.mxu0 0.0
      %2717 = vmatpush1.msra.mxu0 0.0
      %2718 = vmatprep.subr.mxu0 0.0
      %2719 = vmatpush1.msra.mxu0 0.0
      %2720 = vmatprep.subr.mxu0 0.0
      %2721 = vmatpush1.msra.mxu0 0.0
      %2722 = vmatprep.subr.mxu0 0.0
      %2723 = vmatpush1.msra.mxu0 0.0
      %2724 = vmatprep.subr.mxu0 0.0
      %2725 = vmatpush1.msra.mxu0 0.0
      %2726 = vmatprep.subr.mxu0 0.0
      %2727 = vmatpush1.msra.mxu0 0.0
      %2728 = vmatprep.subr.mxu0 0.0
      %2729 = vmatpush1.msra.mxu0 0.0
      %2730 = vmatprep.subr.mxu0 0.0
      %2731 = vmatpush1.msra.mxu0 0.0
      %2732 = vmatprep.subr.mxu0 0.0
      %2733 = vmatpush1.msra.mxu0 0.0
      %2734 = vmatprep.subr.mxu0 0.0
      %2735 = vmatpush1.msra.mxu0 0.0
      %2736 = vmatprep.subr.mxu0 0.0
      %2737 = vmatpush1.msra.mxu0 0.0
      %2738 = vmatprep.subr.mxu0 0.0
      %2739 = vmatpush1.msra.mxu0 0.0
      %2740 = vmatprep.subr.mxu0 0.0
      %2741 = vmatpush1.msra.mxu0 0.0
      %2742 = vmatprep.subr.mxu0 0.0
      %2743 = vmatpush1.msra.mxu0 0.0
      %2744 = vmatprep.subr.mxu0 0.0
      %2745 = vmatpush1.msra.mxu0 0.0
      %2746 = vmatprep.subr.mxu0 0.0
      %2747 = vmatpush1.msra.mxu0 0.0
      %2748 = vmatprep.subr.mxu0 0.0
      %2749 = vmatpush1.msra.mxu0 0.0
      %2750 = vmatprep.subr.mxu0 0.0
      %2751 = vmatpush1.msra.mxu0 0.0
      %2752 = vmatprep.subr.mxu0 0.0
      %2753 = vmatpush1.msra.mxu0 0.0
      %2754 = vmatprep.subr.mxu0 0.0
      %2755 = vmatpush1.msra.mxu0 0.0
      %2756 = vmatprep.subr.mxu0 0.0
      %2757 = vmatpush1.msra.mxu0 0.0
      %2758 = vmatprep.subr.mxu0 0.0
      %2759 = vmatpush1.msra.mxu0 0.0
      %2760 = vmatprep.mubr.f32.mxu0 0.0
      %2761 = vmatmul.mubr.f32.gmra.mrb[0].mxu0 %v2601
      %v2762 = vpop.f32.mrb[0].mxu0
      %v2763 = vadd.f32 0.0, %v2762
      %v2764 = vpop.f32.mrb[0].mxu0
      %2765 = vmatprep.mubr.f32.mxu0 0.0
      %2766 = vmatmul.mubr.f32.gmra.mrb[0].mxu0 %v2604
      %v2767 = vpop.f32.mrb[0].mxu0
      %v2768 = vadd.f32 0.0, %v2767
      %v2769 = vpop.f32.mrb[0].mxu0
      %2770 = vmatprep.mubr.f32.mxu0 0.0
      %2771 = vmatmul.mubr.f32.gmra.mrb[0].mxu0 %v2607
      %v2772 = vpop.f32.mrb[0].mxu0
      %v2773 = vadd.f32 0.0, %v2772
      %v2774 = vpop.f32.mrb[0].mxu0
      %2775 = vmatprep.mubr.f32.mxu0 0.0
      %2776 = vmatmul.mubr.f32.gmra.mrb[0].mxu0 %v2610
      %v2777 = vpop.f32.mrb[0].mxu0
      %v2778 = vadd.f32 0.0, %v2777
      %v2779 = vpop.f32.mrb[0].mxu0
      %2780 = vmatprep.mubr.f32.mxu0 0.0
      %2781 = vmatmul.mubr.f32.gmra.mrb[0].mxu0 %v2613
      %v2782 = vpop.f32.mrb[0].mxu0
      %v2783 = vadd.f32 0.0, %v2782
      %v2784 = vpop.f32.mrb[0].mxu0
      %2785 = vmatprep.mubr.f32.mxu0 0.0
      %2786 = vmatmul.mubr.f32.gmra.mrb[0].mxu0 %v2616
      %v2787 = vpop.f32.mrb[0].mxu0
      %v2788 = vadd.f32 0.0, %v2787
      %v2789 = vpop.f32.mrb[0].mxu0
      %2790 = vmatprep.mubr.f32.mxu0 0.0
      %2791 = vmatmul.mubr.f32.gmra.mrb[0].mxu0 %v2619
      %v2792 = vpop.f32.mrb[0].mxu0
      %v2793 = vadd.f32 0.0, %v2792
      %v2794 = vpop.f32.mrb[0].mxu0
      %2795 = vmatprep.mubr.f32.mxu0 0.0
      %2796 = vmatmul.mubr.f32.gmra.mrb[0].mxu0 %v2622
      %v2797 = vpop.f32.mrb[0].mxu0
      %v2798 = vadd.f32 0.0, %v2797
      %v2799 = vpop.f32.mrb[0].mxu0
      %2800 = vmatprep.mubr.f32.mxu0 0.0
      %2801 = vmatmul.mubr.f32.gmra.mrb[0].mxu0 %v2625
      %v2802 = vpop.f32.mrb[0].mxu0
      %v2803 = vadd.f32 0.0, %v2802
      %v2804 = vpop.f32.mrb[0].mxu0
      %2805 = vmatprep.mubr.f32.mxu0 0.0
      %2806 = vmatmul.mubr.f32.gmra.mrb[0].mxu0 %v2628
      %v2807 = vpop.f32.mrb[0].mxu0
      %v2808 = vadd.f32 0.0, %v2807
      %v2809 = vpop.f32.mrb[0].mxu0
      %2810 = vmatprep.mubr.f32.mxu0 0.0
      %2811 = vmatmul.mubr.f32.gmra.mrb[0].mxu0 %v2631
      %v2812 = vpop.f32.mrb[0].mxu0
      %v2813 = vadd.f32 0.0, %v2812
      %v2814 = vpop.f32.mrb[0].mxu0
      %2815 = vmatprep.mubr.f32.mxu0 0.0
      %2816 = vmatmul.mubr.f32.gmra.mrb[0].mxu0 %v2634
      %v2817 = vpop.f32.mrb[0].mxu0
      %v2818 = vadd.f32 0.0, %v2817
      %v2819 = vpop.f32.mrb[0].mxu0
      %2820 = vmatprep.mubr.f32.mxu0 0.0
      %2821 = vmatmul.mubr.f32.gmra.mrb[0].mxu0 %v2637
      %v2822 = vpop.f32.mrb[0].mxu0
      %v2823 = vadd.f32 0.0, %v2822
      %v2824 = vpop.f32.mrb[0].mxu0
      %2825 = vmatprep.mubr.f32.mxu0 0.0
      %2826 = vmatmul.mubr.f32.gmra.mrb[0].mxu0 %v2640
      %v2827 = vpop.f32.mrb[0].mxu0
      %v2828 = vadd.f32 0.0, %v2827
      %v2829 = vpop.f32.mrb[0].mxu0
      %2830 = vmatprep.mubr.f32.mxu0 0.0
      %2831 = vmatmul.mubr.f32.gmra.mrb[0].mxu0 %v2643
      %v2832 = vpop.f32.mrb[0].mxu0
      %v2833 = vadd.f32 0.0, %v2832
      %v2834 = vpop.f32.mrb[0].mxu0
      %2835 = vmatprep.mubr.f32.mxu0 0.0
      %2836 = vmatmul.mubr.f32.gmra.mrb[0].mxu0 %v2646
      %v2837 = vpop.f32.mrb[0].mxu0
      %v2838 = vadd.f32 0.0, %v2837
      %v2839 = vpop.f32.mrb[0].mxu0
      %2840 = vmatprep.mubr.f32.mxu0 0.0
      %2841 = vmatmul.mubr.f32.gmra.mrb[0].mxu0 %v2649
      %v2842 = vpop.f32.mrb[0].mxu0
      %v2843 = vadd.f32 0.0, %v2842
      %v2844 = vpop.f32.mrb[0].mxu0
      %2845 = vmatprep.mubr.f32.mxu0 0.0
      %2846 = vmatmul.mubr.f32.gmra.mrb[0].mxu0 %v2652
      %v2847 = vpop.f32.mrb[0].mxu0
      %v2848 = vadd.f32 0.0, %v2847
      %v2849 = vpop.f32.mrb[0].mxu0
      %2850 = vmatprep.mubr.f32.mxu0 0.0
      %2851 = vmatmul.mubr.f32.gmra.mrb[0].mxu0 %v2655
      %v2852 = vpop.f32.mrb[0].mxu0
      %v2853 = vadd.f32 0.0, %v2852
      %v2854 = vpop.f32.mrb[0].mxu0
      %2855 = vmatprep.mubr.f32.mxu0 0.0
      %2856 = vmatmul.mubr.f32.gmra.mrb[0].mxu0 %v2658
      %v2857 = vpop.f32.mrb[0].mxu0
      %v2858 = vadd.f32 0.0, %v2857
      %v2859 = vpop.f32.mrb[0].mxu0
      %2860 = vmatprep.mubr.f32.mxu0 0.0
      %2861 = vmatmul.mubr.f32.gmra.mrb[0].mxu0 %v2661
      %v2862 = vpop.f32.mrb[0].mxu0
      %v2863 = vadd.f32 0.0, %v2862
      %v2864 = vpop.f32.mrb[0].mxu0
      %2865 = vmatprep.mubr.f32.mxu0 0.0
      %2866 = vmatmul.mubr.f32.gmra.mrb[0].mxu0 %v2664
      %v2867 = vpop.f32.mrb[0].mxu0
      %v2868 = vadd.f32 0.0, %v2867
      %v2869 = vpop.f32.mrb[0].mxu0
      %2870 = vmatprep.mubr.f32.mxu0 0.0
      %2871 = vmatmul.mubr.f32.gmra.mrb[0].mxu0 %v2667
      %v2872 = vpop.f32.mrb[0].mxu0
      %v2873 = vadd.f32 0.0, %v2872
      %v2874 = vpop.f32.mrb[0].mxu0
      %2875 = vmatprep.mubr.f32.mxu0 0.0
      %2876 = vmatmul.mubr.f32.gmra.mrb[0].mxu0 %v2670
      %v2877 = vpop.f32.mrb[0].mxu0
      %v2878 = vadd.f32 0.0, %v2877
      %v2879 = vpop.f32.mrb[0].mxu0
      %2880 = vmatprep.mubr.f32.mxu0 0.0
      %2881 = vmatmul.mubr.f32.gmra.mrb[0].mxu0 %v2673
      %v2882 = vpop.f32.mrb[0].mxu0
      %v2883 = vadd.f32 0.0, %v2882
      %v2884 = vpop.f32.mrb[0].mxu0
      %2885 = vmatprep.mubr.f32.mxu0 0.0
      %2886 = vmatmul.mubr.f32.gmra.mrb[0].mxu0 %v2676
      %v2887 = vpop.f32.mrb[0].mxu0
      %v2888 = vadd.f32 0.0, %v2887
      %v2889 = vpop.f32.mrb[0].mxu0
      %2890 = vmatprep.mubr.f32.mxu0 0.0
      %2891 = vmatmul.mubr.f32.gmra.mrb[0].mxu0 %v2679
      %v2892 = vpop.f32.mrb[0].mxu0
      %v2893 = vadd.f32 0.0, %v2892
      %v2894 = vpop.f32.mrb[0].mxu0
      %2895 = vmatprep.mubr.f32.mxu0 0.0
      %2896 = vmatmul.mubr.f32.gmra.mrb[0].mxu0 %v2682
      %v2897 = vpop.f32.mrb[0].mxu0
      %v2898 = vadd.f32 0.0, %v2897
      %v2899 = vpop.f32.mrb[0].mxu0
      %2900 = vmatprep.mubr.f32.mxu0 0.0
      %2901 = vmatmul.mubr.f32.gmra.mrb[0].mxu0 %v2685
      %v2902 = vpop.f32.mrb[0].mxu0
      %v2903 = vadd.f32 0.0, %v2902
      %v2904 = vpop.f32.mrb[0].mxu0
      %2905 = vmatprep.mubr.f32.mxu0 0.0
      %2906 = vmatmul.mubr.f32.gmra.mrb[0].mxu0 %v2688
      %v2907 = vpop.f32.mrb[0].mxu0
      %v2908 = vadd.f32 0.0, %v2907
      %v2909 = vpop.f32.mrb[0].mxu0
      %2910 = vmatprep.mubr.f32.mxu0 0.0
      %2911 = vmatmul.mubr.f32.gmra.mrb[0].mxu0 %v2691
      %v2912 = vpop.f32.mrb[0].mxu0
      %v2913 = vadd.f32 0.0, %v2912
      %v2914 = vpop.f32.mrb[0].mxu0
      %2915 = vmatprep.mubr.f32.mxu0 0.0
      %2916 = vmatmul.mubr.f32.gmra.mrb[0].mxu0 %v2694
      %v2917 = vpop.f32.mrb[0].mxu0
      %v2918 = vadd.f32 0.0, %v2917
      %v2919 = vpop.f32.mrb[0].mxu0
      %2920 = vdwg.mxu0
      %v2921 = vadd.f32 %v2532, %v2763
      %v2922 = vadd.f32 %v2533, %v2768
      %v2923 = vadd.f32 %v2534, %v2773
      %v2924 = vadd.f32 %v2535, %v2778
      %v2925 = vadd.f32 %v2536, %v2783
      %v2926 = vadd.f32 %v2537, %v2788
      %v2927 = vadd.f32 %v2538, %v2793
      %v2928 = vadd.f32 %v2539, %v2798
      %v2929 = vadd.f32 %v2540, %v2803
      %v2930 = vadd.f32 %v2541, %v2808
      %v2931 = vadd.f32 %v2542, %v2813
      %v2932 = vadd.f32 %v2543, %v2818
      %v2933 = vadd.f32 %v2544, %v2823
      %v2934 = vadd.f32 %v2545, %v2828
      %v2935 = vadd.f32 %v2546, %v2833
      %v2936 = vadd.f32 %v2547, %v2838
      %v2937 = vadd.f32 %v2548, %v2843
      %v2938 = vadd.f32 %v2549, %v2848
      %v2939 = vadd.f32 %v2550, %v2853
      %v2940 = vadd.f32 %v2551, %v2858
      %v2941 = vadd.f32 %v2552, %v2863
      %v2942 = vadd.f32 %v2553, %v2868
      %v2943 = vadd.f32 %v2554, %v2873
      %v2944 = vadd.f32 %v2555, %v2878
      %v2945 = vadd.f32 %v2556, %v2883
      %v2946 = vadd.f32 %v2557, %v2888
      %v2947 = vadd.f32 %v2558, %v2893
      %v2948 = vadd.f32 %v2559, %v2898
      %v2949 = vadd.f32 %v2560, %v2903
      %v2950 = vadd.f32 %v2561, %v2908
      %v2951 = vadd.f32 %v2562, %v2913
      %v2952 = vadd.f32 %v2563, %v2918
      %v2953 = vld [vmem:[%s2564 + $0x1] sm:$0xff]
      %v2954 = vld [vmem:[%s2564 + $0x9] sm:$0xff]
      %v2955 = vld [vmem:[%s2564 + $0x19] sm:$0xff]
      %v2956 = vld [vmem:[%s2564 + $0x21] sm:$0xff]
      %v2957 = vld [vmem:[%s2564 + $0x31] sm:$0xff]
      %v2958 = vld [vmem:[%s2564 + $0x39] sm:$0xff]
      %v2959 = vld [vmem:[%s2564 + $0x49] sm:$0xff]
      %v2960 = vld [vmem:[%s2564 + $0x51] sm:$0xff]
      %v2961 = vld [vmem:[%s2564 + $0x61] sm:$0xff]
      %v2962 = vld [vmem:[%s2564 + $0x69] sm:$0xff]
      %v2963 = vld [vmem:[%s2564 + $0x79] sm:$0xff]
      %v2964 = vld [vmem:[%s2564 + $0x81] sm:$0xff]
      %v2965 = vld [vmem:[%s2564 + $0x91] sm:$0xff]
      %v2966 = vld [vmem:[%s2564 + $0x99] sm:$0xff]
      %v2967 = vld [vmem:[%s2564 + $0xa9] sm:$0xff]
      %v2968 = vld [vmem:[%s2564 + $0xb1] sm:$0xff]
      %v2969 = vld [vmem:[%s2564 + $0xc1] sm:$0xff]
      %v2970 = vld [vmem:[%s2564 + $0xc9] sm:$0xff]
      %v2971 = vld [vmem:[%s2564 + $0xd9] sm:$0xff]
      %v2972 = vld [vmem:[%s2564 + $0xe1] sm:$0xff]
      %v2973 = vld [vmem:[%s2564 + $0xf1] sm:$0xff]
      %v2974 = vld [vmem:[%s2564 + $0xf9] sm:$0xff]
      %v2975 = vld [vmem:[%s2564 + $0x109] sm:$0xff]
      %v2976 = vld [vmem:[%s2564 + $0x111] sm:$0xff]
      %v2977 = vld [vmem:[%s2564 + $0x121] sm:$0xff]
      %v2978 = vld [vmem:[%s2564 + $0x129] sm:$0xff]
      %v2979 = vld [vmem:[%s2564 + $0x139] sm:$0xff]
      %v2980 = vld [vmem:[%s2564 + $0x141] sm:$0xff]
      %v2981 = vld [vmem:[%s2564 + $0x151] sm:$0xff]
      %v2982 = vld [vmem:[%s2564 + $0x159] sm:$0xff]
      %v2983 = vld [vmem:[%s2564 + $0x169] sm:$0xff]
      %v2984 = vld [vmem:[%s2564 + $0x171] sm:$0xff]
      %s2985 = scalar_lea.vmem %s2, 112
      %v2986 = vld [vmem:[%s2985] sm:$0xff]
      %v2987 = vld [vmem:[%s2985 + $0x8] sm:$0xff]
      %v2989 = vsel %vm368, %v2953, 0
      %v2992 = vsel %vm368, %v2954, 0
      %v2995 = vsel %vm368, %v2955, 0
      %v2998 = vsel %vm368, %v2956, 0
      %v3001 = vsel %vm368, %v2957, 0
      %v3004 = vsel %vm368, %v2958, 0
      %v3007 = vsel %vm368, %v2959, 0
      %v3010 = vsel %vm368, %v2960, 0
      %v3013 = vsel %vm368, %v2961, 0
      %v3016 = vsel %vm368, %v2962, 0
      %v3019 = vsel %vm368, %v2963, 0
      %v3022 = vsel %vm368, %v2964, 0
      %v3025 = vsel %vm368, %v2965, 0
      %v3028 = vsel %vm368, %v2966, 0
      %v3031 = vsel %vm368, %v2967, 0
      %v3034 = vsel %vm368, %v2968, 0
      %v3037 = vsel %vm368, %v2969, 0
      %v3040 = vsel %vm368, %v2970, 0
      %v3043 = vsel %vm368, %v2971, 0
      %v3046 = vsel %vm368, %v2972, 0
      %v3049 = vsel %vm368, %v2973, 0
      %v3052 = vsel %vm368, %v2974, 0
      %v3055 = vsel %vm368, %v2975, 0
      %v3058 = vsel %vm368, %v2976, 0
      %v3061 = vsel %vm368, %v2977, 0
      %v3064 = vsel %vm368, %v2978, 0
      %v3067 = vsel %vm368, %v2979, 0
      %v3070 = vsel %vm368, %v2980, 0
      %v3073 = vsel %vm368, %v2981, 0
      %v3076 = vsel %vm368, %v2982, 0
      %v3079 = vsel %vm368, %v2983, 0
      %v3082 = vsel %vm368, %v2984, 0
      %3084 = vmatprep.subr.mxu0 0.0
      %3085 = vmatpush1.msra.mxu0 %v2986
      %3086 = vmatprep.subr.mxu0 0.0
      %3087 = vmatpush1.msra.mxu0 %v2987
      %3088 = vmatprep.subr.mxu0 0.0
      %3089 = vmatpush1.msra.mxu0 0.0
      %3090 = vmatprep.subr.mxu0 0.0
      %3091 = vmatpush1.msra.mxu0 0.0
      %3092 = vmatprep.subr.mxu0 0.0
      %3093 = vmatpush1.msra.mxu0 0.0
      %3094 = vmatprep.subr.mxu0 0.0
      %3095 = vmatpush1.msra.mxu0 0.0
      %3096 = vmatprep.subr.mxu0 0.0
      %3097 = vmatpush1.msra.mxu0 0.0
      %3098 = vmatprep.subr.mxu0 0.0
      %3099 = vmatpush1.msra.mxu0 0.0
      %3100 = vmatprep.subr.mxu0 0.0
      %3101 = vmatpush1.msra.mxu0 0.0
      %3102 = vmatprep.subr.mxu0 0.0
      %3103 = vmatpush1.msra.mxu0 0.0
      %3104 = vmatprep.subr.mxu0 0.0
      %3105 = vmatpush1.msra.mxu0 0.0
      %3106 = vmatprep.subr.mxu0 0.0
      %3107 = vmatpush1.msra.mxu0 0.0
      %3108 = vmatprep.subr.mxu0 0.0
      %3109 = vmatpush1.msra.mxu0 0.0
      %3110 = vmatprep.subr.mxu0 0.0
      %3111 = vmatpush1.msra.mxu0 0.0
      %3112 = vmatprep.subr.mxu0 0.0
      %3113 = vmatpush1.msra.mxu0 0.0
      %3114 = vmatprep.subr.mxu0 0.0
      %3115 = vmatpush1.msra.mxu0 0.0
      %3116 = vmatprep.subr.mxu0 0.0
      %3117 = vmatpush1.msra.mxu0 0.0
      %3118 = vmatprep.subr.mxu0 0.0
      %3119 = vmatpush1.msra.mxu0 0.0
      %3120 = vmatprep.subr.mxu0 0.0
      %3121 = vmatpush1.msra.mxu0 0.0
      %3122 = vmatprep.subr.mxu0 0.0
      %3123 = vmatpush1.msra.mxu0 0.0
      %3124 = vmatprep.subr.mxu0 0.0
      %3125 = vmatpush1.msra.mxu0 0.0
      %3126 = vmatprep.subr.mxu0 0.0
      %3127 = vmatpush1.msra.mxu0 0.0
      %3128 = vmatprep.subr.mxu0 0.0
      %3129 = vmatpush1.msra.mxu0 0.0
      %3130 = vmatprep.subr.mxu0 0.0
      %3131 = vmatpush1.msra.mxu0 0.0
      %3132 = vmatprep.subr.mxu0 0.0
      %3133 = vmatpush1.msra.mxu0 0.0
      %3134 = vmatprep.subr.mxu0 0.0
      %3135 = vmatpush1.msra.mxu0 0.0
      %3136 = vmatprep.subr.mxu0 0.0
      %3137 = vmatpush1.msra.mxu0 0.0
      %3138 = vmatprep.subr.mxu0 0.0
      %3139 = vmatpush1.msra.mxu0 0.0
      %3140 = vmatprep.subr.mxu0 0.0
      %3141 = vmatpush1.msra.mxu0 0.0
      %3142 = vmatprep.subr.mxu0 0.0
      %3143 = vmatpush1.msra.mxu0 0.0
      %3144 = vmatprep.subr.mxu0 0.0
      %3145 = vmatpush1.msra.mxu0 0.0
      %3146 = vmatprep.subr.mxu0 0.0
      %3147 = vmatpush1.msra.mxu0 0.0
      %3148 = vmatprep.mubr.f32.mxu0 0.0
      %3149 = vmatmul.mubr.f32.gmra.mrb[0].mxu0 %v2989
      %v3150 = vpop.f32.mrb[0].mxu0
      %v3151 = vadd.f32 0.0, %v3150
      %v3152 = vpop.f32.mrb[0].mxu0
      %3153 = vmatprep.mubr.f32.mxu0 0.0
      %3154 = vmatmul.mubr.f32.gmra.mrb[0].mxu0 %v2992
      %v3155 = vpop.f32.mrb[0].mxu0
      %v3156 = vadd.f32 0.0, %v3155
      %v3157 = vpop.f32.mrb[0].mxu0
      %3158 = vmatprep.mubr.f32.mxu0 0.0
      %3159 = vmatmul.mubr.f32.gmra.mrb[0].mxu0 %v2995
      %v3160 = vpop.f32.mrb[0].mxu0
      %v3161 = vadd.f32 0.0, %v3160
      %v3162 = vpop.f32.mrb[0].mxu0
      %3163 = vmatprep.mubr.f32.mxu0 0.0
      %3164 = vmatmul.mubr.f32.gmra.mrb[0].mxu0 %v2998
      %v3165 = vpop.f32.mrb[0].mxu0
      %v3166 = vadd.f32 0.0, %v3165
      %v3167 = vpop.f32.mrb[0].mxu0
      %3168 = vmatprep.mubr.f32.mxu0 0.0
      %3169 = vmatmul.mubr.f32.gmra.mrb[0].mxu0 %v3001
      %v3170 = vpop.f32.mrb[0].mxu0
      %v3171 = vadd.f32 0.0, %v3170
      %v3172 = vpop.f32.mrb[0].mxu0
      %3173 = vmatprep.mubr.f32.mxu0 0.0
      %3174 = vmatmul.mubr.f32.gmra.mrb[0].mxu0 %v3004
      %v3175 = vpop.f32.mrb[0].mxu0
      %v3176 = vadd.f32 0.0, %v3175
      %v3177 = vpop.f32.mrb[0].mxu0
      %3178 = vmatprep.mubr.f32.mxu0 0.0
      %3179 = vmatmul.mubr.f32.gmra.mrb[0].mxu0 %v3007
      %v3180 = vpop.f32.mrb[0].mxu0
      %v3181 = vadd.f32 0.0, %v3180
      %v3182 = vpop.f32.mrb[0].mxu0
      %3183 = vmatprep.mubr.f32.mxu0 0.0
      %3184 = vmatmul.mubr.f32.gmra.mrb[0].mxu0 %v3010
      %v3185 = vpop.f32.mrb[0].mxu0
      %v3186 = vadd.f32 0.0, %v3185
      %v3187 = vpop.f32.mrb[0].mxu0
      %3188 = vmatprep.mubr.f32.mxu0 0.0
      %3189 = vmatmul.mubr.f32.gmra.mrb[0].mxu0 %v3013
      %v3190 = vpop.f32.mrb[0].mxu0
      %v3191 = vadd.f32 0.0, %v3190
      %v3192 = vpop.f32.mrb[0].mxu0
      %3193 = vmatprep.mubr.f32.mxu0 0.0
      %3194 = vmatmul.mubr.f32.gmra.mrb[0].mxu0 %v3016
      %v3195 = vpop.f32.mrb[0].mxu0
      %v3196 = vadd.f32 0.0, %v3195
      %v3197 = vpop.f32.mrb[0].mxu0
      %3198 = vmatprep.mubr.f32.mxu0 0.0
      %3199 = vmatmul.mubr.f32.gmra.mrb[0].mxu0 %v3019
      %v3200 = vpop.f32.mrb[0].mxu0
      %v3201 = vadd.f32 0.0, %v3200
      %v3202 = vpop.f32.mrb[0].mxu0
      %3203 = vmatprep.mubr.f32.mxu0 0.0
      %3204 = vmatmul.mubr.f32.gmra.mrb[0].mxu0 %v3022
      %v3205 = vpop.f32.mrb[0].mxu0
      %v3206 = vadd.f32 0.0, %v3205
      %v3207 = vpop.f32.mrb[0].mxu0
      %3208 = vmatprep.mubr.f32.mxu0 0.0
      %3209 = vmatmul.mubr.f32.gmra.mrb[0].mxu0 %v3025
      %v3210 = vpop.f32.mrb[0].mxu0
      %v3211 = vadd.f32 0.0, %v3210
      %v3212 = vpop.f32.mrb[0].mxu0
      %3213 = vmatprep.mubr.f32.mxu0 0.0
      %3214 = vmatmul.mubr.f32.gmra.mrb[0].mxu0 %v3028
      %v3215 = vpop.f32.mrb[0].mxu0
      %v3216 = vadd.f32 0.0, %v3215
      %v3217 = vpop.f32.mrb[0].mxu0
      %3218 = vmatprep.mubr.f32.mxu0 0.0
      %3219 = vmatmul.mubr.f32.gmra.mrb[0].mxu0 %v3031
      %v3220 = vpop.f32.mrb[0].mxu0
      %v3221 = vadd.f32 0.0, %v3220
      %v3222 = vpop.f32.mrb[0].mxu0
      %3223 = vmatprep.mubr.f32.mxu0 0.0
      %3224 = vmatmul.mubr.f32.gmra.mrb[0].mxu0 %v3034
      %v3225 = vpop.f32.mrb[0].mxu0
      %v3226 = vadd.f32 0.0, %v3225
      %v3227 = vpop.f32.mrb[0].mxu0
      %3228 = vmatprep.mubr.f32.mxu0 0.0
      %3229 = vmatmul.mubr.f32.gmra.mrb[0].mxu0 %v3037
      %v3230 = vpop.f32.mrb[0].mxu0
      %v3231 = vadd.f32 0.0, %v3230
      %v3232 = vpop.f32.mrb[0].mxu0
      %3233 = vmatprep.mubr.f32.mxu0 0.0
      %3234 = vmatmul.mubr.f32.gmra.mrb[0].mxu0 %v3040
      %v3235 = vpop.f32.mrb[0].mxu0
      %v3236 = vadd.f32 0.0, %v3235
      %v3237 = vpop.f32.mrb[0].mxu0
      %3238 = vmatprep.mubr.f32.mxu0 0.0
      %3239 = vmatmul.mubr.f32.gmra.mrb[0].mxu0 %v3043
      %v3240 = vpop.f32.mrb[0].mxu0
      %v3241 = vadd.f32 0.0, %v3240
      %v3242 = vpop.f32.mrb[0].mxu0
      %3243 = vmatprep.mubr.f32.mxu0 0.0
      %3244 = vmatmul.mubr.f32.gmra.mrb[0].mxu0 %v3046
      %v3245 = vpop.f32.mrb[0].mxu0
      %v3246 = vadd.f32 0.0, %v3245
      %v3247 = vpop.f32.mrb[0].mxu0
      %3248 = vmatprep.mubr.f32.mxu0 0.0
      %3249 = vmatmul.mubr.f32.gmra.mrb[0].mxu0 %v3049
      %v3250 = vpop.f32.mrb[0].mxu0
      %v3251 = vadd.f32 0.0, %v3250
      %v3252 = vpop.f32.mrb[0].mxu0
      %3253 = vmatprep.mubr.f32.mxu0 0.0
      %3254 = vmatmul.mubr.f32.gmra.mrb[0].mxu0 %v3052
      %v3255 = vpop.f32.mrb[0].mxu0
      %v3256 = vadd.f32 0.0, %v3255
      %v3257 = vpop.f32.mrb[0].mxu0
      %3258 = vmatprep.mubr.f32.mxu0 0.0
      %3259 = vmatmul.mubr.f32.gmra.mrb[0].mxu0 %v3055
      %v3260 = vpop.f32.mrb[0].mxu0
      %v3261 = vadd.f32 0.0, %v3260
      %v3262 = vpop.f32.mrb[0].mxu0
      %3263 = vmatprep.mubr.f32.mxu0 0.0
      %3264 = vmatmul.mubr.f32.gmra.mrb[0].mxu0 %v3058
      %v3265 = vpop.f32.mrb[0].mxu0
      %v3266 = vadd.f32 0.0, %v3265
      %v3267 = vpop.f32.mrb[0].mxu0
      %3268 = vmatprep.mubr.f32.mxu0 0.0
      %3269 = vmatmul.mubr.f32.gmra.mrb[0].mxu0 %v3061
      %v3270 = vpop.f32.mrb[0].mxu0
      %v3271 = vadd.f32 0.0, %v3270
      %v3272 = vpop.f32.mrb[0].mxu0
      %3273 = vmatprep.mubr.f32.mxu0 0.0
      %3274 = vmatmul.mubr.f32.gmra.mrb[0].mxu0 %v3064
      %v3275 = vpop.f32.mrb[0].mxu0
      %v3276 = vadd.f32 0.0, %v3275
      %v3277 = vpop.f32.mrb[0].mxu0
      %3278 = vmatprep.mubr.f32.mxu0 0.0
      %3279 = vmatmul.mubr.f32.gmra.mrb[0].mxu0 %v3067
      %v3280 = vpop.f32.mrb[0].mxu0
      %v3281 = vadd.f32 0.0, %v3280
      %v3282 = vpop.f32.mrb[0].mxu0
      %3283 = vmatprep.mubr.f32.mxu0 0.0
      %3284 = vmatmul.mubr.f32.gmra.mrb[0].mxu0 %v3070
      %v3285 = vpop.f32.mrb[0].mxu0
      %v3286 = vadd.f32 0.0, %v3285
      %v3287 = vpop.f32.mrb[0].mxu0
      %3288 = vmatprep.mubr.f32.mxu0 0.0
      %3289 = vmatmul.mubr.f32.gmra.mrb[0].mxu0 %v3073
      %v3290 = vpop.f32.mrb[0].mxu0
      %v3291 = vadd.f32 0.0, %v3290
      %v3292 = vpop.f32.mrb[0].mxu0
      %3293 = vmatprep.mubr.f32.mxu0 0.0
      %3294 = vmatmul.mubr.f32.gmra.mrb[0].mxu0 %v3076
      %v3295 = vpop.f32.mrb[0].mxu0
      %v3296 = vadd.f32 0.0, %v3295
      %v3297 = vpop.f32.mrb[0].mxu0
      %3298 = vmatprep.mubr.f32.mxu0 0.0
      %3299 = vmatmul.mubr.f32.gmra.mrb[0].mxu0 %v3079
      %v3300 = vpop.f32.mrb[0].mxu0
      %v3301 = vadd.f32 0.0, %v3300
      %v3302 = vpop.f32.mrb[0].mxu0
      %3303 = vmatprep.mubr.f32.mxu0 0.0
      %3304 = vmatmul.mubr.f32.gmra.mrb[0].mxu0 %v3082
      %v3305 = vpop.f32.mrb[0].mxu0
      %v3306 = vadd.f32 0.0, %v3305
      %v3307 = vpop.f32.mrb[0].mxu0
      %3308 = vdwg.mxu0
      %v3309 = vadd.f32 %v2921, %v3151
      %v3310 = vadd.f32 %v2922, %v3156
      %v3311 = vadd.f32 %v2923, %v3161
      %v3312 = vadd.f32 %v2924, %v3166
      %v3313 = vadd.f32 %v2925, %v3171
      %v3314 = vadd.f32 %v2926, %v3176
      %v3315 = vadd.f32 %v2927, %v3181
      %v3316 = vadd.f32 %v2928, %v3186
      %v3317 = vadd.f32 %v2929, %v3191
      %v3318 = vadd.f32 %v2930, %v3196
      %v3319 = vadd.f32 %v2931, %v3201
      %v3320 = vadd.f32 %v2932, %v3206
      %v3321 = vadd.f32 %v2933, %v3211
      %v3322 = vadd.f32 %v2934, %v3216
      %v3323 = vadd.f32 %v2935, %v3221
      %v3324 = vadd.f32 %v2936, %v3226
      %v3325 = vadd.f32 %v2937, %v3231
      %v3326 = vadd.f32 %v2938, %v3236
      %v3327 = vadd.f32 %v2939, %v3241
      %v3328 = vadd.f32 %v2940, %v3246
      %v3329 = vadd.f32 %v2941, %v3251
      %v3330 = vadd.f32 %v2942, %v3256
      %v3331 = vadd.f32 %v2943, %v3261
      %v3332 = vadd.f32 %v2944, %v3266
      %v3333 = vadd.f32 %v2945, %v3271
      %v3334 = vadd.f32 %v2946, %v3276
      %v3335 = vadd.f32 %v2947, %v3281
      %v3336 = vadd.f32 %v2948, %v3286
      %v3337 = vadd.f32 %v2949, %v3291
      %v3338 = vadd.f32 %v2950, %v3296
      %v3339 = vadd.f32 %v2951, %v3301
      %v3340 = vadd.f32 %v2952, %v3306
      %v3341 = vld [vmem:[%s2564 + $0x2] sm:$0xff]
      %v3342 = vld [vmem:[%s2564 + $0xa] sm:$0xff]
      %v3343 = vld [vmem:[%s2564 + $0x1a] sm:$0xff]
      %v3344 = vld [vmem:[%s2564 + $0x22] sm:$0xff]
      %v3345 = vld [vmem:[%s2564 + $0x32] sm:$0xff]
      %v3346 = vld [vmem:[%s2564 + $0x3a] sm:$0xff]
      %v3347 = vld [vmem:[%s2564 + $0x4a] sm:$0xff]
      %v3348 = vld [vmem:[%s2564 + $0x52] sm:$0xff]
      %v3349 = vld [vmem:[%s2564 + $0x62] sm:$0xff]
      %v3350 = vld [vmem:[%s2564 + $0x6a] sm:$0xff]
      %v3351 = vld [vmem:[%s2564 + $0x7a] sm:$0xff]
      %v3352 = vld [vmem:[%s2564 + $0x82] sm:$0xff]
      %v3353 = vld [vmem:[%s2564 + $0x92] sm:$0xff]
      %v3354 = vld [vmem:[%s2564 + $0x9a] sm:$0xff]
      %v3355 = vld [vmem:[%s2564 + $0xaa] sm:$0xff]
      %v3356 = vld [vmem:[%s2564 + $0xb2] sm:$0xff]
      %v3357 = vld [vmem:[%s2564 + $0xc2] sm:$0xff]
      %v3358 = vld [vmem:[%s2564 + $0xca] sm:$0xff]
      %v3359 = vld [vmem:[%s2564 + $0xda] sm:$0xff]
      %v3360 = vld [vmem:[%s2564 + $0xe2] sm:$0xff]
      %v3361 = vld [vmem:[%s2564 + $0xf2] sm:$0xff]
      %v3362 = vld [vmem:[%s2564 + $0xfa] sm:$0xff]
      %v3363 = vld [vmem:[%s2564 + $0x10a] sm:$0xff]
      %v3364 = vld [vmem:[%s2564 + $0x112] sm:$0xff]
      %v3365 = vld [vmem:[%s2564 + $0x122] sm:$0xff]
      %v3366 = vld [vmem:[%s2564 + $0x12a] sm:$0xff]
      %v3367 = vld [vmem:[%s2564 + $0x13a] sm:$0xff]
      %v3368 = vld [vmem:[%s2564 + $0x142] sm:$0xff]
      %v3369 = vld [vmem:[%s2564 + $0x152] sm:$0xff]
      %v3370 = vld [vmem:[%s2564 + $0x15a] sm:$0xff]
      %v3371 = vld [vmem:[%s2564 + $0x16a] sm:$0xff]
      %v3372 = vld [vmem:[%s2564 + $0x172] sm:$0xff]
      %s3373 = scalar_lea.vmem %s2, 128
      %v3374 = vld [vmem:[%s3373] sm:$0xff]
      %v3375 = vld [vmem:[%s3373 + $0x8] sm:$0xff]
      %v3377 = vsel %vm368, %v3341, 0
      %v3380 = vsel %vm368, %v3342, 0
      %v3383 = vsel %vm368, %v3343, 0
      %v3386 = vsel %vm368, %v3344, 0
      %v3389 = vsel %vm368, %v3345, 0
      %v3392 = vsel %vm368, %v3346, 0
      %v3395 = vsel %vm368, %v3347, 0
      %v3398 = vsel %vm368, %v3348, 0
      %v3401 = vsel %vm368, %v3349, 0
      %v3404 = vsel %vm368, %v3350, 0
      %v3407 = vsel %vm368, %v3351, 0
      %v3410 = vsel %vm368, %v3352, 0
      %v3413 = vsel %vm368, %v3353, 0
      %v3416 = vsel %vm368, %v3354, 0
      %v3419 = vsel %vm368, %v3355, 0
      %v3422 = vsel %vm368, %v3356, 0
      %v3425 = vsel %vm368, %v3357, 0
      %v3428 = vsel %vm368, %v3358, 0
      %v3431 = vsel %vm368, %v3359, 0
      %v3434 = vsel %vm368, %v3360, 0
      %v3437 = vsel %vm368, %v3361, 0
      %v3440 = vsel %vm368, %v3362, 0
      %v3443 = vsel %vm368, %v3363, 0
      %v3446 = vsel %vm368, %v3364, 0
      %v3449 = vsel %vm368, %v3365, 0
      %v3452 = vsel %vm368, %v3366, 0
      %v3455 = vsel %vm368, %v3367, 0
      %v3458 = vsel %vm368, %v3368, 0
      %v3461 = vsel %vm368, %v3369, 0
      %v3464 = vsel %vm368, %v3370, 0
      %v3467 = vsel %vm368, %v3371, 0
      %v3470 = vsel %vm368, %v3372, 0
      %3472 = vmatprep.subr.mxu0 0.0
      %3473 = vmatpush1.msra.mxu0 %v3374
      %3474 = vmatprep.subr.mxu0 0.0
      %3475 = vmatpush1.msra.mxu0 %v3375
      %3476 = vmatprep.subr.mxu0 0.0
      %3477 = vmatpush1.msra.mxu0 0.0
      %3478 = vmatprep.subr.mxu0 0.0
      %3479 = vmatpush1.msra.mxu0 0.0
      %3480 = vmatprep.subr.mxu0 0.0
      %3481 = vmatpush1.msra.mxu0 0.0
      %3482 = vmatprep.subr.mxu0 0.0
      %3483 = vmatpush1.msra.mxu0 0.0
      %3484 = vmatprep.subr.mxu0 0.0
      %3485 = vmatpush1.msra.mxu0 0.0
      %3486 = vmatprep.subr.mxu0 0.0
      %3487 = vmatpush1.msra.mxu0 0.0
      %3488 = vmatprep.subr.mxu0 0.0
      %3489 = vmatpush1.msra.mxu0 0.0
      %3490 = vmatprep.subr.mxu0 0.0
      %3491 = vmatpush1.msra.mxu0 0.0
      %3492 = vmatprep.subr.mxu0 0.0
      %3493 = vmatpush1.msra.mxu0 0.0
      %3494 = vmatprep.subr.mxu0 0.0
      %3495 = vmatpush1.msra.mxu0 0.0
      %3496 = vmatprep.subr.mxu0 0.0
      %3497 = vmatpush1.msra.mxu0 0.0
      %3498 = vmatprep.subr.mxu0 0.0
      %3499 = vmatpush1.msra.mxu0 0.0
      %3500 = vmatprep.subr.mxu0 0.0
      %3501 = vmatpush1.msra.mxu0 0.0
      %3502 = vmatprep.subr.mxu0 0.0
      %3503 = vmatpush1.msra.mxu0 0.0
      %3504 = vmatprep.subr.mxu0 0.0
      %3505 = vmatpush1.msra.mxu0 0.0
      %3506 = vmatprep.subr.mxu0 0.0
      %3507 = vmatpush1.msra.mxu0 0.0
      %3508 = vmatprep.subr.mxu0 0.0
      %3509 = vmatpush1.msra.mxu0 0.0
      %3510 = vmatprep.subr.mxu0 0.0
      %3511 = vmatpush1.msra.mxu0 0.0
      %3512 = vmatprep.subr.mxu0 0.0
      %3513 = vmatpush1.msra.mxu0 0.0
      %3514 = vmatprep.subr.mxu0 0.0
      %3515 = vmatpush1.msra.mxu0 0.0
      %3516 = vmatprep.subr.mxu0 0.0
      %3517 = vmatpush1.msra.mxu0 0.0
      %3518 = vmatprep.subr.mxu0 0.0
      %3519 = vmatpush1.msra.mxu0 0.0
      %3520 = vmatprep.subr.mxu0 0.0
      %3521 = vmatpush1.msra.mxu0 0.0
      %3522 = vmatprep.subr.mxu0 0.0
      %3523 = vmatpush1.msra.mxu0 0.0
      %3524 = vmatprep.subr.mxu0 0.0
      %3525 = vmatpush1.msra.mxu0 0.0
      %3526 = vmatprep.subr.mxu0 0.0
      %3527 = vmatpush1.msra.mxu0 0.0
      %3528 = vmatprep.subr.mxu0 0.0
      %3529 = vmatpush1.msra.mxu0 0.0
      %3530 = vmatprep.subr.mxu0 0.0
      %3531 = vmatpush1.msra.mxu0 0.0
      %3532 = vmatprep.subr.mxu0 0.0
      %3533 = vmatpush1.msra.mxu0 0.0
      %3534 = vmatprep.subr.mxu0 0.0
      %3535 = vmatpush1.msra.mxu0 0.0
      %3536 = vmatprep.mubr.f32.mxu0 0.0
      %3537 = vmatmul.mubr.f32.gmra.mrb[0].mxu0 %v3377
      %v3538 = vpop.f32.mrb[0].mxu0
      %v3539 = vadd.f32 0.0, %v3538
      %v3540 = vpop.f32.mrb[0].mxu0
      %3541 = vmatprep.mubr.f32.mxu0 0.0
      %3542 = vmatmul.mubr.f32.gmra.mrb[0].mxu0 %v3380
      %v3543 = vpop.f32.mrb[0].mxu0
      %v3544 = vadd.f32 0.0, %v3543
      %v3545 = vpop.f32.mrb[0].mxu0
      %3546 = vmatprep.mubr.f32.mxu0 0.0
      %3547 = vmatmul.mubr.f32.gmra.mrb[0].mxu0 %v3383
      %v3548 = vpop.f32.mrb[0].mxu0
      %v3549 = vadd.f32 0.0, %v3548
      %v3550 = vpop.f32.mrb[0].mxu0
      %3551 = vmatprep.mubr.f32.mxu0 0.0
      %3552 = vmatmul.mubr.f32.gmra.mrb[0].mxu0 %v3386
      %v3553 = vpop.f32.mrb[0].mxu0
      %v3554 = vadd.f32 0.0, %v3553
      %v3555 = vpop.f32.mrb[0].mxu0
      %3556 = vmatprep.mubr.f32.mxu0 0.0
      %3557 = vmatmul.mubr.f32.gmra.mrb[0].mxu0 %v3389
      %v3558 = vpop.f32.mrb[0].mxu0
      %v3559 = vadd.f32 0.0, %v3558
      %v3560 = vpop.f32.mrb[0].mxu0
      %3561 = vmatprep.mubr.f32.mxu0 0.0
      %3562 = vmatmul.mubr.f32.gmra.mrb[0].mxu0 %v3392
      %v3563 = vpop.f32.mrb[0].mxu0
      %v3564 = vadd.f32 0.0, %v3563
      %v3565 = vpop.f32.mrb[0].mxu0
      %3566 = vmatprep.mubr.f32.mxu0 0.0
      %3567 = vmatmul.mubr.f32.gmra.mrb[0].mxu0 %v3395
      %v3568 = vpop.f32.mrb[0].mxu0
      %v3569 = vadd.f32 0.0, %v3568
      %v3570 = vpop.f32.mrb[0].mxu0
      %3571 = vmatprep.mubr.f32.mxu0 0.0
      %3572 = vmatmul.mubr.f32.gmra.mrb[0].mxu0 %v3398
      %v3573 = vpop.f32.mrb[0].mxu0
      %v3574 = vadd.f32 0.0, %v3573
      %v3575 = vpop.f32.mrb[0].mxu0
      %3576 = vmatprep.mubr.f32.mxu0 0.0
      %3577 = vmatmul.mubr.f32.gmra.mrb[0].mxu0 %v3401
      %v3578 = vpop.f32.mrb[0].mxu0
      %v3579 = vadd.f32 0.0, %v3578
      %v3580 = vpop.f32.mrb[0].mxu0
      %3581 = vmatprep.mubr.f32.mxu0 0.0
      %3582 = vmatmul.mubr.f32.gmra.mrb[0].mxu0 %v3404
      %v3583 = vpop.f32.mrb[0].mxu0
      %v3584 = vadd.f32 0.0, %v3583
      %v3585 = vpop.f32.mrb[0].mxu0
      %3586 = vmatprep.mubr.f32.mxu0 0.0
      %3587 = vmatmul.mubr.f32.gmra.mrb[0].mxu0 %v3407
      %v3588 = vpop.f32.mrb[0].mxu0
      %v3589 = vadd.f32 0.0, %v3588
      %v3590 = vpop.f32.mrb[0].mxu0
      %3591 = vmatprep.mubr.f32.mxu0 0.0
      %3592 = vmatmul.mubr.f32.gmra.mrb[0].mxu0 %v3410
      %v3593 = vpop.f32.mrb[0].mxu0
      %v3594 = vadd.f32 0.0, %v3593
      %v3595 = vpop.f32.mrb[0].mxu0
      %3596 = vmatprep.mubr.f32.mxu0 0.0
      %3597 = vmatmul.mubr.f32.gmra.mrb[0].mxu0 %v3413
      %v3598 = vpop.f32.mrb[0].mxu0
      %v3599 = vadd.f32 0.0, %v3598
      %v3600 = vpop.f32.mrb[0].mxu0
      %3601 = vmatprep.mubr.f32.mxu0 0.0
      %3602 = vmatmul.mubr.f32.gmra.mrb[0].mxu0 %v3416
      %v3603 = vpop.f32.mrb[0].mxu0
      %v3604 = vadd.f32 0.0, %v3603
      %v3605 = vpop.f32.mrb[0].mxu0
      %3606 = vmatprep.mubr.f32.mxu0 0.0
      %3607 = vmatmul.mubr.f32.gmra.mrb[0].mxu0 %v3419
      %v3608 = vpop.f32.mrb[0].mxu0
      %v3609 = vadd.f32 0.0, %v3608
      %v3610 = vpop.f32.mrb[0].mxu0
      %3611 = vmatprep.mubr.f32.mxu0 0.0
      %3612 = vmatmul.mubr.f32.gmra.mrb[0].mxu0 %v3422
      %v3613 = vpop.f32.mrb[0].mxu0
      %v3614 = vadd.f32 0.0, %v3613
      %v3615 = vpop.f32.mrb[0].mxu0
      %3616 = vmatprep.mubr.f32.mxu0 0.0
      %3617 = vmatmul.mubr.f32.gmra.mrb[0].mxu0 %v3425
      %v3618 = vpop.f32.mrb[0].mxu0
      %v3619 = vadd.f32 0.0, %v3618
      %v3620 = vpop.f32.mrb[0].mxu0
      %3621 = vmatprep.mubr.f32.mxu0 0.0
      %3622 = vmatmul.mubr.f32.gmra.mrb[0].mxu0 %v3428
      %v3623 = vpop.f32.mrb[0].mxu0
      %v3624 = vadd.f32 0.0, %v3623
      %v3625 = vpop.f32.mrb[0].mxu0
      %3626 = vmatprep.mubr.f32.mxu0 0.0
      %3627 = vmatmul.mubr.f32.gmra.mrb[0].mxu0 %v3431
      %v3628 = vpop.f32.mrb[0].mxu0
      %v3629 = vadd.f32 0.0, %v3628
      %v3630 = vpop.f32.mrb[0].mxu0
      %3631 = vmatprep.mubr.f32.mxu0 0.0
      %3632 = vmatmul.mubr.f32.gmra.mrb[0].mxu0 %v3434
      %v3633 = vpop.f32.mrb[0].mxu0
      %v3634 = vadd.f32 0.0, %v3633
      %v3635 = vpop.f32.mrb[0].mxu0
      %3636 = vmatprep.mubr.f32.mxu0 0.0
      %3637 = vmatmul.mubr.f32.gmra.mrb[0].mxu0 %v3437
      %v3638 = vpop.f32.mrb[0].mxu0
      %v3639 = vadd.f32 0.0, %v3638
      %v3640 = vpop.f32.mrb[0].mxu0
      %3641 = vmatprep.mubr.f32.mxu0 0.0
      %3642 = vmatmul.mubr.f32.gmra.mrb[0].mxu0 %v3440
      %v3643 = vpop.f32.mrb[0].mxu0
      %v3644 = vadd.f32 0.0, %v3643
      %v3645 = vpop.f32.mrb[0].mxu0
      %3646 = vmatprep.mubr.f32.mxu0 0.0
      %3647 = vmatmul.mubr.f32.gmra.mrb[0].mxu0 %v3443
      %v3648 = vpop.f32.mrb[0].mxu0
      %v3649 = vadd.f32 0.0, %v3648
      %v3650 = vpop.f32.mrb[0].mxu0
      %3651 = vmatprep.mubr.f32.mxu0 0.0
      %3652 = vmatmul.mubr.f32.gmra.mrb[0].mxu0 %v3446
      %v3653 = vpop.f32.mrb[0].mxu0
      %v3654 = vadd.f32 0.0, %v3653
      %v3655 = vpop.f32.mrb[0].mxu0
      %3656 = vmatprep.mubr.f32.mxu0 0.0
      %3657 = vmatmul.mubr.f32.gmra.mrb[0].mxu0 %v3449
      %v3658 = vpop.f32.mrb[0].mxu0
      %v3659 = vadd.f32 0.0, %v3658
      %v3660 = vpop.f32.mrb[0].mxu0
      %3661 = vmatprep.mubr.f32.mxu0 0.0
      %3662 = vmatmul.mubr.f32.gmra.mrb[0].mxu0 %v3452
      %v3663 = vpop.f32.mrb[0].mxu0
      %v3664 = vadd.f32 0.0, %v3663
      %v3665 = vpop.f32.mrb[0].mxu0
      %3666 = vmatprep.mubr.f32.mxu0 0.0
      %3667 = vmatmul.mubr.f32.gmra.mrb[0].mxu0 %v3455
      %v3668 = vpop.f32.mrb[0].mxu0
      %v3669 = vadd.f32 0.0, %v3668
      %v3670 = vpop.f32.mrb[0].mxu0
      %3671 = vmatprep.mubr.f32.mxu0 0.0
      %3672 = vmatmul.mubr.f32.gmra.mrb[0].mxu0 %v3458
      %v3673 = vpop.f32.mrb[0].mxu0
      %v3674 = vadd.f32 0.0, %v3673
      %v3675 = vpop.f32.mrb[0].mxu0
      %3676 = vmatprep.mubr.f32.mxu0 0.0
      %3677 = vmatmul.mubr.f32.gmra.mrb[0].mxu0 %v3461
      %v3678 = vpop.f32.mrb[0].mxu0
      %v3679 = vadd.f32 0.0, %v3678
      %v3680 = vpop.f32.mrb[0].mxu0
      %3681 = vmatprep.mubr.f32.mxu0 0.0
      %3682 = vmatmul.mubr.f32.gmra.mrb[0].mxu0 %v3464
      %v3683 = vpop.f32.mrb[0].mxu0
      %v3684 = vadd.f32 0.0, %v3683
      %v3685 = vpop.f32.mrb[0].mxu0
      %3686 = vmatprep.mubr.f32.mxu0 0.0
      %3687 = vmatmul.mubr.f32.gmra.mrb[0].mxu0 %v3467
      %v3688 = vpop.f32.mrb[0].mxu0
      %v3689 = vadd.f32 0.0, %v3688
      %v3690 = vpop.f32.mrb[0].mxu0
      %3691 = vmatprep.mubr.f32.mxu0 0.0
      %3692 = vmatmul.mubr.f32.gmra.mrb[0].mxu0 %v3470
      %v3693 = vpop.f32.mrb[0].mxu0
      %v3694 = vadd.f32 0.0, %v3693
      %v3695 = vpop.f32.mrb[0].mxu0
      %3696 = vdwg.mxu0
      %v3697 = vadd.f32 %v3309, %v3539
      %v3698 = vadd.f32 %v3310, %v3544
      %v3699 = vadd.f32 %v3311, %v3549
      %v3700 = vadd.f32 %v3312, %v3554
      %v3701 = vadd.f32 %v3313, %v3559
      %v3702 = vadd.f32 %v3314, %v3564
      %v3703 = vadd.f32 %v3315, %v3569
      %v3704 = vadd.f32 %v3316, %v3574
      %v3705 = vadd.f32 %v3317, %v3579
      %v3706 = vadd.f32 %v3318, %v3584
      %v3707 = vadd.f32 %v3319, %v3589
      %v3708 = vadd.f32 %v3320, %v3594
      %v3709 = vadd.f32 %v3321, %v3599
      %v3710 = vadd.f32 %v3322, %v3604
      %v3711 = vadd.f32 %v3323, %v3609
      %v3712 = vadd.f32 %v3324, %v3614
      %v3713 = vadd.f32 %v3325, %v3619
      %v3714 = vadd.f32 %v3326, %v3624
      %v3715 = vadd.f32 %v3327, %v3629
      %v3716 = vadd.f32 %v3328, %v3634
      %v3717 = vadd.f32 %v3329, %v3639
      %v3718 = vadd.f32 %v3330, %v3644
      %v3719 = vadd.f32 %v3331, %v3649
      %v3720 = vadd.f32 %v3332, %v3654
      %v3721 = vadd.f32 %v3333, %v3659
      %v3722 = vadd.f32 %v3334, %v3664
      %v3723 = vadd.f32 %v3335, %v3669
      %v3724 = vadd.f32 %v3336, %v3674
      %v3725 = vadd.f32 %v3337, %v3679
      %v3726 = vadd.f32 %v3338, %v3684
      %v3727 = vadd.f32 %v3339, %v3689
      %v3728 = vadd.f32 %v3340, %v3694
      %v3729 = vld [vmem:[%s3] sm:$0x1]
      %v3731 = vlaneseq
      %v3732 = vshrl.u32 %v3731, 7
      %v3733 = vsub.s32 0, %v3732
      %v3734 = vrot.slane %v3729, %v3733
      %v3736 = vadd.f32 %v3697, %v3734
      %v3737 = vadd.f32 %v3698, %v3734
      %v3738 = vadd.f32 %v3699, %v3734
      %v3739 = vadd.f32 %v3700, %v3734
      %v3740 = vadd.f32 %v3701, %v3734
      %v3741 = vadd.f32 %v3702, %v3734
      %v3742 = vadd.f32 %v3703, %v3734
      %v3743 = vadd.f32 %v3704, %v3734
      %v3744 = vadd.f32 %v3705, %v3734
      %v3745 = vadd.f32 %v3706, %v3734
      %v3746 = vadd.f32 %v3707, %v3734
      %v3747 = vadd.f32 %v3708, %v3734
      %v3748 = vadd.f32 %v3709, %v3734
      %v3749 = vadd.f32 %v3710, %v3734
      %v3750 = vadd.f32 %v3711, %v3734
      %v3751 = vadd.f32 %v3712, %v3734
      %v3752 = vadd.f32 %v3713, %v3734
      %v3753 = vadd.f32 %v3714, %v3734
      %v3754 = vadd.f32 %v3715, %v3734
      %v3755 = vadd.f32 %v3716, %v3734
      %v3756 = vadd.f32 %v3717, %v3734
      %v3757 = vadd.f32 %v3718, %v3734
      %v3758 = vadd.f32 %v3719, %v3734
      %v3759 = vadd.f32 %v3720, %v3734
      %v3760 = vadd.f32 %v3721, %v3734
      %v3761 = vadd.f32 %v3722, %v3734
      %v3762 = vadd.f32 %v3723, %v3734
      %v3763 = vadd.f32 %v3724, %v3734
      %v3764 = vadd.f32 %v3725, %v3734
      %v3765 = vadd.f32 %v3726, %v3734
      %v3766 = vadd.f32 %v3727, %v3734
      %v3767 = vadd.f32 %v3728, %v3734
      %vm3768 = vcmask 64512
      %3769 = vst.msk [vmem:[#allocation2] sm:$0xff] %vm3768, 0.0
      %3770 = vst.msk [vmem:[#allocation2 + $0x8] sm:$0xff] %vm3768, 0.0
      %vm3771 = vcmask 58368
      %3772 = vst.msk [vmem:[#allocation2 + $0x10] sm:$0x3] %vm3771, 0.0
      %3773 = vst.msk [vmem:[#allocation2 + $0x18] sm:$0xff] %vm3768, 0.0
      %3774 = vst.msk [vmem:[#allocation2 + $0x20] sm:$0xff] %vm3768, 0.0
      %3775 = vst.msk [vmem:[#allocation2 + $0x28] sm:$0x3] %vm3771, 0.0
      %3776 = vst.msk [vmem:[#allocation2 + $0x30] sm:$0xff] %vm3768, 0.0
      %3777 = vst.msk [vmem:[#allocation2 + $0x38] sm:$0xff] %vm3768, 0.0
      %3778 = vst.msk [vmem:[#allocation2 + $0x40] sm:$0x3] %vm3771, 0.0
      %3779 = vst.msk [vmem:[#allocation2 + $0x48] sm:$0xff] %vm3768, 0.0
      %3780 = vst.msk [vmem:[#allocation2 + $0x50] sm:$0xff] %vm3768, 0.0
      %3781 = vst.msk [vmem:[#allocation2 + $0x58] sm:$0x3] %vm3771, 0.0
      %3782 = vst.msk [vmem:[#allocation2 + $0x60] sm:$0xff] %vm3768, 0.0
      %3783 = vst.msk [vmem:[#allocation2 + $0x68] sm:$0xff] %vm3768, 0.0
      %3784 = vst.msk [vmem:[#allocation2 + $0x70] sm:$0x3] %vm3771, 0.0
      %3785 = vst.msk [vmem:[#allocation2 + $0x78] sm:$0xff] %vm3768, 0.0
      %3786 = vst.msk [vmem:[#allocation2 + $0x80] sm:$0xff] %vm3768, 0.0
      %3787 = vst.msk [vmem:[#allocation2 + $0x88] sm:$0x3] %vm3771, 0.0
      %3788 = vst.msk [vmem:[#allocation2 + $0x90] sm:$0xff] %vm3768, 0.0
      %3789 = vst.msk [vmem:[#allocation2 + $0x98] sm:$0xff] %vm3768, 0.0
      %3790 = vst.msk [vmem:[#allocation2 + $0xa0] sm:$0x3] %vm3771, 0.0
      %3791 = vst.msk [vmem:[#allocation2 + $0xa8] sm:$0xff] %vm3768, 0.0
      %3792 = vst.msk [vmem:[#allocation2 + $0xb0] sm:$0xff] %vm3768, 0.0
      %3793 = vst.msk [vmem:[#allocation2 + $0xb8] sm:$0x3] %vm3771, 0.0
      %3794 = vst.msk [vmem:[#allocation2 + $0xc0] sm:$0xff] %vm3768, 0.0
      %3795 = vst.msk [vmem:[#allocation2 + $0xc8] sm:$0xff] %vm3768, 0.0
      %3796 = vst.msk [vmem:[#allocation2 + $0xd0] sm:$0x3] %vm3771, 0.0
      %3797 = vst.msk [vmem:[#allocation2 + $0xd8] sm:$0xff] %vm3768, 0.0
      %3798 = vst.msk [vmem:[#allocation2 + $0xe0] sm:$0xff] %vm3768, 0.0
      %3799 = vst.msk [vmem:[#allocation2 + $0xe8] sm:$0x3] %vm3771, 0.0
      %3800 = vst.msk [vmem:[#allocation2 + $0xf0] sm:$0xff] %vm3768, 0.0
      %3801 = vst.msk [vmem:[#allocation2 + $0xf8] sm:$0xff] %vm3768, 0.0
      %3802 = vst.msk [vmem:[#allocation2 + $0x100] sm:$0x3] %vm3771, 0.0
      %3803 = vst.msk [vmem:[#allocation2 + $0x108] sm:$0xff] %vm3768, 0.0
      %3804 = vst.msk [vmem:[#allocation2 + $0x110] sm:$0xff] %vm3768, 0.0
      %3805 = vst.msk [vmem:[#allocation2 + $0x118] sm:$0x3] %vm3771, 0.0
      %3806 = vst.msk [vmem:[#allocation2 + $0x120] sm:$0xff] %vm3768, 0.0
      %3807 = vst.msk [vmem:[#allocation2 + $0x128] sm:$0xff] %vm3768, 0.0
      %3808 = vst.msk [vmem:[#allocation2 + $0x130] sm:$0x3] %vm3771, 0.0
      %3809 = vst.msk [vmem:[#allocation2 + $0x138] sm:$0xff] %vm3768, 0.0
      %3810 = vst.msk [vmem:[#allocation2 + $0x140] sm:$0xff] %vm3768, 0.0
      %3811 = vst.msk [vmem:[#allocation2 + $0x148] sm:$0x3] %vm3771, 0.0
      %3812 = vst.msk [vmem:[#allocation2 + $0x150] sm:$0xff] %vm3768, 0.0
      %3813 = vst.msk [vmem:[#allocation2 + $0x158] sm:$0xff] %vm3768, 0.0
      %3814 = vst.msk [vmem:[#allocation2 + $0x160] sm:$0x3] %vm3771, 0.0
      %3815 = vst.msk [vmem:[#allocation2 + $0x168] sm:$0xff] %vm3768, 0.0
      %3816 = vst.msk [vmem:[#allocation2 + $0x170] sm:$0xff] %vm3768, 0.0
      %3817 = vst.msk [vmem:[#allocation2 + $0x178] sm:$0x3] %vm3771, 0.0
      %3818 = vst.msk [vmem:[#allocation2 + $0x180] sm:$0xff] %vm3768, 0.0
      %3819 = vst.msk [vmem:[#allocation2 + $0x188] sm:$0xff] %vm3768, 0.0
      %3820 = vst.msk [vmem:[#allocation2 + $0x190] sm:$0x3] %vm3771, 0.0
      %3821 = vst.msk [vmem:[#allocation2 + $0x198] sm:$0xff] %vm3768, 0.0
      %3822 = vst.msk [vmem:[#allocation2 + $0x1a0] sm:$0xff] %vm3768, 0.0
      %3823 = vst.msk [vmem:[#allocation2 + $0x1a8] sm:$0x3] %vm3771, 0.0
      %s3824 = scalar_lea.vmem [#allocation2], 24
      %3825 = vst.msk [vmem:[%s3824 + $0x1] sm:$0xff] %vm3768, %v3736
      %3826 = vst.msk [vmem:[%s3824 + $0x9] sm:$0xff] %vm3768, %v3737
      %3827 = vst.msk [vmem:[%s3824 + $0x19] sm:$0xff] %vm3768, %v3738
      %3828 = vst.msk [vmem:[%s3824 + $0x21] sm:$0xff] %vm3768, %v3739
      %3829 = vst.msk [vmem:[%s3824 + $0x31] sm:$0xff] %vm3768, %v3740
      %3830 = vst.msk [vmem:[%s3824 + $0x39] sm:$0xff] %vm3768, %v3741
      %3831 = vst.msk [vmem:[%s3824 + $0x49] sm:$0xff] %vm3768, %v3742
      %3832 = vst.msk [vmem:[%s3824 + $0x51] sm:$0xff] %vm3768, %v3743
      %3833 = vst.msk [vmem:[%s3824 + $0x61] sm:$0xff] %vm3768, %v3744
      %3834 = vst.msk [vmem:[%s3824 + $0x69] sm:$0xff] %vm3768, %v3745
      %3835 = vst.msk [vmem:[%s3824 + $0x79] sm:$0xff] %vm3768, %v3746
      %3836 = vst.msk [vmem:[%s3824 + $0x81] sm:$0xff] %vm3768, %v3747
      %3837 = vst.msk [vmem:[%s3824 + $0x91] sm:$0xff] %vm3768, %v3748
      %3838 = vst.msk [vmem:[%s3824 + $0x99] sm:$0xff] %vm3768, %v3749
      %3839 = vst.msk [vmem:[%s3824 + $0xa9] sm:$0xff] %vm3768, %v3750
      %3840 = vst.msk [vmem:[%s3824 + $0xb1] sm:$0xff] %vm3768, %v3751
      %3841 = vst.msk [vmem:[%s3824 + $0xc1] sm:$0xff] %vm3768, %v3752
      %3842 = vst.msk [vmem:[%s3824 + $0xc9] sm:$0xff] %vm3768, %v3753
      %3843 = vst.msk [vmem:[%s3824 + $0xd9] sm:$0xff] %vm3768, %v3754
      %3844 = vst.msk [vmem:[%s3824 + $0xe1] sm:$0xff] %vm3768, %v3755
      %3845 = vst.msk [vmem:[%s3824 + $0xf1] sm:$0xff] %vm3768, %v3756
      %3846 = vst.msk [vmem:[%s3824 + $0xf9] sm:$0xff] %vm3768, %v3757
      %3847 = vst.msk [vmem:[%s3824 + $0x109] sm:$0xff] %vm3768, %v3758
      %3848 = vst.msk [vmem:[%s3824 + $0x111] sm:$0xff] %vm3768, %v3759
      %3849 = vst.msk [vmem:[%s3824 + $0x121] sm:$0xff] %vm3768, %v3760
      %3850 = vst.msk [vmem:[%s3824 + $0x129] sm:$0xff] %vm3768, %v3761
      %3851 = vst.msk [vmem:[%s3824 + $0x139] sm:$0xff] %vm3768, %v3762
      %3852 = vst.msk [vmem:[%s3824 + $0x141] sm:$0xff] %vm3768, %v3763
      %3853 = vst.msk [vmem:[%s3824 + $0x151] sm:$0xff] %vm3768, %v3764
      %3854 = vst.msk [vmem:[%s3824 + $0x159] sm:$0xff] %vm3768, %v3765
      %3855 = vst.msk [vmem:[%s3824 + $0x169] sm:$0xff] %vm3768, %v3766
      %3856 = vst.msk [vmem:[%s3824 + $0x171] sm:$0xff] %vm3768, %v3767
      %v3857 = vld [vmem:[#allocation2] sm:$0xff]
      %v3858 = vld [vmem:[#allocation2 + $0x8] sm:$0xff]
      %v3859 = vld [vmem:[#allocation2 + $0x18] sm:$0xff]
      %v3860 = vld [vmem:[#allocation2 + $0x20] sm:$0xff]
      %v3861 = vld [vmem:[#allocation2 + $0x30] sm:$0xff]
      %v3862 = vld [vmem:[#allocation2 + $0x38] sm:$0xff]
      %v3863 = vld [vmem:[#allocation2 + $0x48] sm:$0xff]
      %v3864 = vld [vmem:[#allocation2 + $0x50] sm:$0xff]
      %v3865 = vld [vmem:[#allocation2 + $0x60] sm:$0xff]
      %v3866 = vld [vmem:[#allocation2 + $0x68] sm:$0xff]
      %v3867 = vld [vmem:[#allocation2 + $0x78] sm:$0xff]
      %v3868 = vld [vmem:[#allocation2 + $0x80] sm:$0xff]
      %v3869 = vld [vmem:[#allocation2 + $0x90] sm:$0xff]
      %v3870 = vld [vmem:[#allocation2 + $0x98] sm:$0xff]
      %v3871 = vld [vmem:[#allocation2 + $0xa8] sm:$0xff]
      %v3872 = vld [vmem:[#allocation2 + $0xb0] sm:$0xff]
      %v3873 = vld [vmem:[#allocation2 + $0xc0] sm:$0xff]
      %v3874 = vld [vmem:[#allocation2 + $0xc8] sm:$0xff]
      %v3875 = vld [vmem:[#allocation2 + $0xd8] sm:$0xff]
      %v3876 = vld [vmem:[#allocation2 + $0xe0] sm:$0xff]
      %v3877 = vld [vmem:[#allocation2 + $0xf0] sm:$0xff]
      %v3878 = vld [vmem:[#allocation2 + $0xf8] sm:$0xff]
      %v3879 = vld [vmem:[#allocation2 + $0x108] sm:$0xff]
      %v3880 = vld [vmem:[#allocation2 + $0x110] sm:$0xff]
      %v3881 = vld [vmem:[#allocation2 + $0x120] sm:$0xff]
      %v3882 = vld [vmem:[#allocation2 + $0x128] sm:$0xff]
      %v3883 = vld [vmem:[#allocation2 + $0x138] sm:$0xff]
      %v3884 = vld [vmem:[#allocation2 + $0x140] sm:$0xff]
      %v3885 = vld [vmem:[#allocation2 + $0x150] sm:$0xff]
      %v3886 = vld [vmem:[#allocation2 + $0x158] sm:$0xff]
      %v3887 = vld [vmem:[#allocation2 + $0x168] sm:$0xff]
      %v3888 = vld [vmem:[#allocation2 + $0x170] sm:$0xff]
      %v3889 = vld [vmem:[%s293] sm:$0xff]
      %v3890 = vld [vmem:[%s293 + $0x8] sm:$0xff]
      %v3891 = vld [vmem:[%s293 + $0x18] sm:$0xff]
      %v3892 = vld [vmem:[%s293 + $0x20] sm:$0xff]
      %v3893 = vld [vmem:[%s293 + $0x30] sm:$0xff]
      %v3894 = vld [vmem:[%s293 + $0x38] sm:$0xff]
      %v3895 = vld [vmem:[%s293 + $0x48] sm:$0xff]
      %v3896 = vld [vmem:[%s293 + $0x50] sm:$0xff]
      %v3897 = vld [vmem:[%s293 + $0x60] sm:$0xff]
      %v3898 = vld [vmem:[%s293 + $0x68] sm:$0xff]
      %v3899 = vld [vmem:[%s293 + $0x78] sm:$0xff]
      %v3900 = vld [vmem:[%s293 + $0x80] sm:$0xff]
      %v3901 = vld [vmem:[%s293 + $0x90] sm:$0xff]
      %v3902 = vld [vmem:[%s293 + $0x98] sm:$0xff]
      %v3903 = vld [vmem:[%s293 + $0xa8] sm:$0xff]
      %v3904 = vld [vmem:[%s293 + $0xb0] sm:$0xff]
      %v3905 = vld [vmem:[%s293 + $0xc0] sm:$0xff]
      %v3906 = vld [vmem:[%s293 + $0xc8] sm:$0xff]
      %v3907 = vld [vmem:[%s293 + $0xd8] sm:$0xff]
      %v3908 = vld [vmem:[%s293 + $0xe0] sm:$0xff]
      %v3909 = vld [vmem:[%s293 + $0xf0] sm:$0xff]
      %v3910 = vld [vmem:[%s293 + $0xf8] sm:$0xff]
      %v3911 = vld [vmem:[%s293 + $0x108] sm:$0xff]
      %v3912 = vld [vmem:[%s293 + $0x110] sm:$0xff]
      %v3913 = vld [vmem:[%s293 + $0x120] sm:$0xff]
      %v3914 = vld [vmem:[%s293 + $0x128] sm:$0xff]
      %v3915 = vld [vmem:[%s293 + $0x138] sm:$0xff]
      %v3916 = vld [vmem:[%s293 + $0x140] sm:$0xff]
      %v3917 = vld [vmem:[%s293 + $0x150] sm:$0xff]
      %v3918 = vld [vmem:[%s293 + $0x158] sm:$0xff]
      %v3919 = vld [vmem:[%s293 + $0x168] sm:$0xff]
      %v3920 = vld [vmem:[%s293 + $0x170] sm:$0xff]
      %v3921 = vld [vmem:[%s4] sm:$0xff]
      %v3922 = vld [vmem:[%s5] sm:$0xff]
      %v3924 = vsel %vm3768, %v3889, 0
      %v3927 = vsel %vm3768, %v3890, 0
      %v3930 = vsel %vm3768, %v3891, 0
      %v3933 = vsel %vm3768, %v3892, 0
      %v3936 = vsel %vm3768, %v3893, 0
      %v3939 = vsel %vm3768, %v3894, 0
      %v3942 = vsel %vm3768, %v3895, 0
      %v3945 = vsel %vm3768, %v3896, 0
      %v3948 = vsel %vm3768, %v3897, 0
      %v3951 = vsel %vm3768, %v3898, 0
      %v3954 = vsel %vm3768, %v3899, 0
      %v3957 = vsel %vm3768, %v3900, 0
      %v3960 = vsel %vm3768, %v3901, 0
      %v3963 = vsel %vm3768, %v3902, 0
      %v3966 = vsel %vm3768, %v3903, 0
      %v3969 = vsel %vm3768, %v3904, 0
      %v3972 = vsel %vm3768, %v3905, 0
      %v3975 = vsel %vm3768, %v3906, 0
      %v3978 = vsel %vm3768, %v3907, 0
      %v3981 = vsel %vm3768, %v3908, 0
      %v3984 = vsel %vm3768, %v3909, 0
      %v3987 = vsel %vm3768, %v3910, 0
      %v3990 = vsel %vm3768, %v3911, 0
      %v3993 = vsel %vm3768, %v3912, 0
      %v3996 = vsel %vm3768, %v3913, 0
      %v3999 = vsel %vm3768, %v3914, 0
      %v4002 = vsel %vm3768, %v3915, 0
      %v4005 = vsel %vm3768, %v3916, 0
      %v4008 = vsel %vm3768, %v3917, 0
      %v4011 = vsel %vm3768, %v3918, 0
      %v4014 = vsel %vm3768, %v3919, 0
      %v4017 = vsel %vm3768, %v3920, 0
      %4019 = vmatprep.subr.mxu0 0.0
      %4020 = vmatpush1.msra.mxu0 %v3922
      %4021 = vmatprep.subr.mxu0 0.0
      %4022 = vmatpush1.msra.mxu0 0.0
      %4023 = vmatprep.subr.mxu0 0.0
      %4024 = vmatpush1.msra.mxu0 0.0
      %4025 = vmatprep.subr.mxu0 0.0
      %4026 = vmatpush1.msra.mxu0 0.0
      %4027 = vmatprep.subr.mxu0 0.0
      %4028 = vmatpush1.msra.mxu0 0.0
      %4029 = vmatprep.subr.mxu0 0.0
      %4030 = vmatpush1.msra.mxu0 0.0
      %4031 = vmatprep.subr.mxu0 0.0
      %4032 = vmatpush1.msra.mxu0 0.0
      %4033 = vmatprep.subr.mxu0 0.0
      %4034 = vmatpush1.msra.mxu0 0.0
      %4035 = vmatprep.subr.mxu0 0.0
      %4036 = vmatpush1.msra.mxu0 0.0
      %4037 = vmatprep.subr.mxu0 0.0
      %4038 = vmatpush1.msra.mxu0 0.0
      %4039 = vmatprep.subr.mxu0 0.0
      %4040 = vmatpush1.msra.mxu0 0.0
      %4041 = vmatprep.subr.mxu0 0.0
      %4042 = vmatpush1.msra.mxu0 0.0
      %4043 = vmatprep.subr.mxu0 0.0
      %4044 = vmatpush1.msra.mxu0 0.0
      %4045 = vmatprep.subr.mxu0 0.0
      %4046 = vmatpush1.msra.mxu0 0.0
      %4047 = vmatprep.subr.mxu0 0.0
      %4048 = vmatpush1.msra.mxu0 0.0
      %4049 = vmatprep.subr.mxu0 0.0
      %4050 = vmatpush1.msra.mxu0 0.0
      %4051 = vmatprep.subr.mxu0 0.0
      %4052 = vmatpush1.msra.mxu0 0.0
      %4053 = vmatprep.subr.mxu0 0.0
      %4054 = vmatpush1.msra.mxu0 0.0
      %4055 = vmatprep.subr.mxu0 0.0
      %4056 = vmatpush1.msra.mxu0 0.0
      %4057 = vmatprep.subr.mxu0 0.0
      %4058 = vmatpush1.msra.mxu0 0.0
      %4059 = vmatprep.subr.mxu0 0.0
      %4060 = vmatpush1.msra.mxu0 0.0
      %4061 = vmatprep.subr.mxu0 0.0
      %4062 = vmatpush1.msra.mxu0 0.0
      %4063 = vmatprep.subr.mxu0 0.0
      %4064 = vmatpush1.msra.mxu0 0.0
      %4065 = vmatprep.subr.mxu0 0.0
      %4066 = vmatpush1.msra.mxu0 0.0
      %4067 = vmatprep.subr.mxu0 0.0
      %4068 = vmatpush1.msra.mxu0 0.0
      %4069 = vmatprep.subr.mxu0 0.0
      %4070 = vmatpush1.msra.mxu0 0.0
      %4071 = vmatprep.subr.mxu0 0.0
      %4072 = vmatpush1.msra.mxu0 0.0
      %4073 = vmatprep.subr.mxu0 0.0
      %4074 = vmatpush1.msra.mxu0 0.0
      %4075 = vmatprep.subr.mxu0 0.0
      %4076 = vmatpush1.msra.mxu0 0.0
      %4077 = vmatprep.subr.mxu0 0.0
      %4078 = vmatpush1.msra.mxu0 0.0
      %4079 = vmatprep.subr.mxu0 0.0
      %4080 = vmatpush1.msra.mxu0 0.0
      %4081 = vmatprep.subr.mxu0 0.0
      %4082 = vmatpush1.msra.mxu0 0.0
      %4083 = vmatprep.mubr.f32.mxu0 0.0
      %4084 = vmatmul.mubr.f32.gmra.mrb[0].mxu0 %v3924
      %v4085 = vpop.f32.mrb[0].mxu0
      %v4086 = vadd.f32 0.0, %v4085
      %v4087 = vpop.f32.mrb[0].mxu0
      %4088 = vmatprep.mubr.f32.mxu0 0.0
      %4089 = vmatmul.mubr.f32.gmra.mrb[0].mxu0 %v3927
      %v4090 = vpop.f32.mrb[0].mxu0
      %v4091 = vadd.f32 0.0, %v4090
      %v4092 = vpop.f32.mrb[0].mxu0
      %4093 = vmatprep.mubr.f32.mxu0 0.0
      %4094 = vmatmul.mubr.f32.gmra.mrb[0].mxu0 %v3930
      %v4095 = vpop.f32.mrb[0].mxu0
      %v4096 = vadd.f32 0.0, %v4095
      %v4097 = vpop.f32.mrb[0].mxu0
      %4098 = vmatprep.mubr.f32.mxu0 0.0
      %4099 = vmatmul.mubr.f32.gmra.mrb[0].mxu0 %v3933
      %v4100 = vpop.f32.mrb[0].mxu0
      %v4101 = vadd.f32 0.0, %v4100
      %v4102 = vpop.f32.mrb[0].mxu0
      %4103 = vmatprep.mubr.f32.mxu0 0.0
      %4104 = vmatmul.mubr.f32.gmra.mrb[0].mxu0 %v3936
      %v4105 = vpop.f32.mrb[0].mxu0
      %v4106 = vadd.f32 0.0, %v4105
      %v4107 = vpop.f32.mrb[0].mxu0
      %4108 = vmatprep.mubr.f32.mxu0 0.0
      %4109 = vmatmul.mubr.f32.gmra.mrb[0].mxu0 %v3939
      %v4110 = vpop.f32.mrb[0].mxu0
      %v4111 = vadd.f32 0.0, %v4110
      %v4112 = vpop.f32.mrb[0].mxu0
      %4113 = vmatprep.mubr.f32.mxu0 0.0
      %4114 = vmatmul.mubr.f32.gmra.mrb[0].mxu0 %v3942
      %v4115 = vpop.f32.mrb[0].mxu0
      %v4116 = vadd.f32 0.0, %v4115
      %v4117 = vpop.f32.mrb[0].mxu0
      %4118 = vmatprep.mubr.f32.mxu0 0.0
      %4119 = vmatmul.mubr.f32.gmra.mrb[0].mxu0 %v3945
      %v4120 = vpop.f32.mrb[0].mxu0
      %v4121 = vadd.f32 0.0, %v4120
      %v4122 = vpop.f32.mrb[0].mxu0
      %4123 = vmatprep.mubr.f32.mxu0 0.0
      %4124 = vmatmul.mubr.f32.gmra.mrb[0].mxu0 %v3948
      %v4125 = vpop.f32.mrb[0].mxu0
      %v4126 = vadd.f32 0.0, %v4125
      %v4127 = vpop.f32.mrb[0].mxu0
      %4128 = vmatprep.mubr.f32.mxu0 0.0
      %4129 = vmatmul.mubr.f32.gmra.mrb[0].mxu0 %v3951
      %v4130 = vpop.f32.mrb[0].mxu0
      %v4131 = vadd.f32 0.0, %v4130
      %v4132 = vpop.f32.mrb[0].mxu0
      %4133 = vmatprep.mubr.f32.mxu0 0.0
      %4134 = vmatmul.mubr.f32.gmra.mrb[0].mxu0 %v3954
      %v4135 = vpop.f32.mrb[0].mxu0
      %v4136 = vadd.f32 0.0, %v4135
      %v4137 = vpop.f32.mrb[0].mxu0
      %4138 = vmatprep.mubr.f32.mxu0 0.0
      %4139 = vmatmul.mubr.f32.gmra.mrb[0].mxu0 %v3957
      %v4140 = vpop.f32.mrb[0].mxu0
      %v4141 = vadd.f32 0.0, %v4140
      %v4142 = vpop.f32.mrb[0].mxu0
      %4143 = vmatprep.mubr.f32.mxu0 0.0
      %4144 = vmatmul.mubr.f32.gmra.mrb[0].mxu0 %v3960
      %v4145 = vpop.f32.mrb[0].mxu0
      %v4146 = vadd.f32 0.0, %v4145
      %v4147 = vpop.f32.mrb[0].mxu0
      %4148 = vmatprep.mubr.f32.mxu0 0.0
      %4149 = vmatmul.mubr.f32.gmra.mrb[0].mxu0 %v3963
      %v4150 = vpop.f32.mrb[0].mxu0
      %v4151 = vadd.f32 0.0, %v4150
      %v4152 = vpop.f32.mrb[0].mxu0
      %4153 = vmatprep.mubr.f32.mxu0 0.0
      %4154 = vmatmul.mubr.f32.gmra.mrb[0].mxu0 %v3966
      %v4155 = vpop.f32.mrb[0].mxu0
      %v4156 = vadd.f32 0.0, %v4155
      %v4157 = vpop.f32.mrb[0].mxu0
      %4158 = vmatprep.mubr.f32.mxu0 0.0
      %4159 = vmatmul.mubr.f32.gmra.mrb[0].mxu0 %v3969
      %v4160 = vpop.f32.mrb[0].mxu0
      %v4161 = vadd.f32 0.0, %v4160
      %v4162 = vpop.f32.mrb[0].mxu0
      %4163 = vmatprep.mubr.f32.mxu0 0.0
      %4164 = vmatmul.mubr.f32.gmra.mrb[0].mxu0 %v3972
      %v4165 = vpop.f32.mrb[0].mxu0
      %v4166 = vadd.f32 0.0, %v4165
      %v4167 = vpop.f32.mrb[0].mxu0
      %4168 = vmatprep.mubr.f32.mxu0 0.0
      %4169 = vmatmul.mubr.f32.gmra.mrb[0].mxu0 %v3975
      %v4170 = vpop.f32.mrb[0].mxu0
      %v4171 = vadd.f32 0.0, %v4170
      %v4172 = vpop.f32.mrb[0].mxu0
      %4173 = vmatprep.mubr.f32.mxu0 0.0
      %4174 = vmatmul.mubr.f32.gmra.mrb[0].mxu0 %v3978
      %v4175 = vpop.f32.mrb[0].mxu0
      %v4176 = vadd.f32 0.0, %v4175
      %v4177 = vpop.f32.mrb[0].mxu0
      %4178 = vmatprep.mubr.f32.mxu0 0.0
      %4179 = vmatmul.mubr.f32.gmra.mrb[0].mxu0 %v3981
      %v4180 = vpop.f32.mrb[0].mxu0
      %v4181 = vadd.f32 0.0, %v4180
      %v4182 = vpop.f32.mrb[0].mxu0
      %4183 = vmatprep.mubr.f32.mxu0 0.0
      %4184 = vmatmul.mubr.f32.gmra.mrb[0].mxu0 %v3984
      %v4185 = vpop.f32.mrb[0].mxu0
      %v4186 = vadd.f32 0.0, %v4185
      %v4187 = vpop.f32.mrb[0].mxu0
      %4188 = vmatprep.mubr.f32.mxu0 0.0
      %4189 = vmatmul.mubr.f32.gmra.mrb[0].mxu0 %v3987
      %v4190 = vpop.f32.mrb[0].mxu0
      %v4191 = vadd.f32 0.0, %v4190
      %v4192 = vpop.f32.mrb[0].mxu0
      %4193 = vmatprep.mubr.f32.mxu0 0.0
      %4194 = vmatmul.mubr.f32.gmra.mrb[0].mxu0 %v3990
      %v4195 = vpop.f32.mrb[0].mxu0
      %v4196 = vadd.f32 0.0, %v4195
      %v4197 = vpop.f32.mrb[0].mxu0
      %4198 = vmatprep.mubr.f32.mxu0 0.0
      %4199 = vmatmul.mubr.f32.gmra.mrb[0].mxu0 %v3993
      %v4200 = vpop.f32.mrb[0].mxu0
      %v4201 = vadd.f32 0.0, %v4200
      %v4202 = vpop.f32.mrb[0].mxu0
      %4203 = vmatprep.mubr.f32.mxu0 0.0
      %4204 = vmatmul.mubr.f32.gmra.mrb[0].mxu0 %v3996
      %v4205 = vpop.f32.mrb[0].mxu0
      %v4206 = vadd.f32 0.0, %v4205
      %v4207 = vpop.f32.mrb[0].mxu0
      %4208 = vmatprep.mubr.f32.mxu0 0.0
      %4209 = vmatmul.mubr.f32.gmra.mrb[0].mxu0 %v3999
      %v4210 = vpop.f32.mrb[0].mxu0
      %v4211 = vadd.f32 0.0, %v4210
      %v4212 = vpop.f32.mrb[0].mxu0
      %4213 = vmatprep.mubr.f32.mxu0 0.0
      %4214 = vmatmul.mubr.f32.gmra.mrb[0].mxu0 %v4002
      %v4215 = vpop.f32.mrb[0].mxu0
      %v4216 = vadd.f32 0.0, %v4215
      %v4217 = vpop.f32.mrb[0].mxu0
      %4218 = vmatprep.mubr.f32.mxu0 0.0
      %4219 = vmatmul.mubr.f32.gmra.mrb[0].mxu0 %v4005
      %v4220 = vpop.f32.mrb[0].mxu0
      %v4221 = vadd.f32 0.0, %v4220
      %v4222 = vpop.f32.mrb[0].mxu0
      %4223 = vmatprep.mubr.f32.mxu0 0.0
      %4224 = vmatmul.mubr.f32.gmra.mrb[0].mxu0 %v4008
      %v4225 = vpop.f32.mrb[0].mxu0
      %v4226 = vadd.f32 0.0, %v4225
      %v4227 = vpop.f32.mrb[0].mxu0
      %4228 = vmatprep.mubr.f32.mxu0 0.0
      %4229 = vmatmul.mubr.f32.gmra.mrb[0].mxu0 %v4011
      %v4230 = vpop.f32.mrb[0].mxu0
      %v4231 = vadd.f32 0.0, %v4230
      %v4232 = vpop.f32.mrb[0].mxu0
      %4233 = vmatprep.mubr.f32.mxu0 0.0
      %4234 = vmatmul.mubr.f32.gmra.mrb[0].mxu0 %v4014
      %v4235 = vpop.f32.mrb[0].mxu0
      %v4236 = vadd.f32 0.0, %v4235
      %v4237 = vpop.f32.mrb[0].mxu0
      %4238 = vmatprep.mubr.f32.mxu0 0.0
      %4239 = vmatmul.mubr.f32.gmra.mrb[0].mxu0 %v4017
      %v4240 = vpop.f32.mrb[0].mxu0
      %v4241 = vadd.f32 0.0, %v4240
      %v4242 = vpop.f32.mrb[0].mxu0
      %4243 = vdwg.mxu0
      %v4245 = vsel %vm3768, %v3857, 0
      %v4248 = vsel %vm3768, %v3858, 0
      %v4251 = vsel %vm3768, %v3859, 0
      %v4254 = vsel %vm3768, %v3860, 0
      %v4257 = vsel %vm3768, %v3861, 0
      %v4260 = vsel %vm3768, %v3862, 0
      %v4263 = vsel %vm3768, %v3863, 0
      %v4266 = vsel %vm3768, %v3864, 0
      %v4269 = vsel %vm3768, %v3865, 0
      %v4272 = vsel %vm3768, %v3866, 0
      %v4275 = vsel %vm3768, %v3867, 0
      %v4278 = vsel %vm3768, %v3868, 0
      %v4281 = vsel %vm3768, %v3869, 0
      %v4284 = vsel %vm3768, %v3870, 0
      %v4287 = vsel %vm3768, %v3871, 0
      %v4290 = vsel %vm3768, %v3872, 0
      %v4293 = vsel %vm3768, %v3873, 0
      %v4296 = vsel %vm3768, %v3874, 0
      %v4299 = vsel %vm3768, %v3875, 0
      %v4302 = vsel %vm3768, %v3876, 0
      %v4305 = vsel %vm3768, %v3877, 0
      %v4308 = vsel %vm3768, %v3878, 0
      %v4311 = vsel %vm3768, %v3879, 0
      %v4314 = vsel %vm3768, %v3880, 0
      %v4317 = vsel %vm3768, %v3881, 0
      %v4320 = vsel %vm3768, %v3882, 0
      %v4323 = vsel %vm3768, %v3883, 0
      %v4326 = vsel %vm3768, %v3884, 0
      %v4329 = vsel %vm3768, %v3885, 0
      %v4332 = vsel %vm3768, %v3886, 0
      %v4335 = vsel %vm3768, %v3887, 0
      %v4338 = vsel %vm3768, %v3888, 0
      %4340 = vmatprep.subr.mxu0 0.0
      %4341 = vmatpush1.msra.mxu0 %v3921
      %4342 = vmatprep.subr.mxu0 0.0
      %4343 = vmatpush1.msra.mxu0 0.0
      %4344 = vmatprep.subr.mxu0 0.0
      %4345 = vmatpush1.msra.mxu0 0.0
      %4346 = vmatprep.subr.mxu0 0.0
      %4347 = vmatpush1.msra.mxu0 0.0
      %4348 = vmatprep.subr.mxu0 0.0
      %4349 = vmatpush1.msra.mxu0 0.0
      %4350 = vmatprep.subr.mxu0 0.0
      %4351 = vmatpush1.msra.mxu0 0.0
      %4352 = vmatprep.subr.mxu0 0.0
      %4353 = vmatpush1.msra.mxu0 0.0
      %4354 = vmatprep.subr.mxu0 0.0
      %4355 = vmatpush1.msra.mxu0 0.0
      %4356 = vmatprep.subr.mxu0 0.0
      %4357 = vmatpush1.msra.mxu0 0.0
      %4358 = vmatprep.subr.mxu0 0.0
      %4359 = vmatpush1.msra.mxu0 0.0
      %4360 = vmatprep.subr.mxu0 0.0
      %4361 = vmatpush1.msra.mxu0 0.0
      %4362 = vmatprep.subr.mxu0 0.0
      %4363 = vmatpush1.msra.mxu0 0.0
      %4364 = vmatprep.subr.mxu0 0.0
      %4365 = vmatpush1.msra.mxu0 0.0
      %4366 = vmatprep.subr.mxu0 0.0
      %4367 = vmatpush1.msra.mxu0 0.0
      %4368 = vmatprep.subr.mxu0 0.0
      %4369 = vmatpush1.msra.mxu0 0.0
      %4370 = vmatprep.subr.mxu0 0.0
      %4371 = vmatpush1.msra.mxu0 0.0
      %4372 = vmatprep.subr.mxu0 0.0
      %4373 = vmatpush1.msra.mxu0 0.0
      %4374 = vmatprep.subr.mxu0 0.0
      %4375 = vmatpush1.msra.mxu0 0.0
      %4376 = vmatprep.subr.mxu0 0.0
      %4377 = vmatpush1.msra.mxu0 0.0
      %4378 = vmatprep.subr.mxu0 0.0
      %4379 = vmatpush1.msra.mxu0 0.0
      %4380 = vmatprep.subr.mxu0 0.0
      %4381 = vmatpush1.msra.mxu0 0.0
      %4382 = vmatprep.subr.mxu0 0.0
      %4383 = vmatpush1.msra.mxu0 0.0
      %4384 = vmatprep.subr.mxu0 0.0
      %4385 = vmatpush1.msra.mxu0 0.0
      %4386 = vmatprep.subr.mxu0 0.0
      %4387 = vmatpush1.msra.mxu0 0.0
      %4388 = vmatprep.subr.mxu0 0.0
      %4389 = vmatpush1.msra.mxu0 0.0
      %4390 = vmatprep.subr.mxu0 0.0
      %4391 = vmatpush1.msra.mxu0 0.0
      %4392 = vmatprep.subr.mxu0 0.0
      %4393 = vmatpush1.msra.mxu0 0.0
      %4394 = vmatprep.subr.mxu0 0.0
      %4395 = vmatpush1.msra.mxu0 0.0
      %4396 = vmatprep.subr.mxu0 0.0
      %4397 = vmatpush1.msra.mxu0 0.0
      %4398 = vmatprep.subr.mxu0 0.0
      %4399 = vmatpush1.msra.mxu0 0.0
      %4400 = vmatprep.subr.mxu0 0.0
      %4401 = vmatpush1.msra.mxu0 0.0
      %4402 = vmatprep.subr.mxu0 0.0
      %4403 = vmatpush1.msra.mxu0 0.0
      %4404 = vmatprep.mubr.f32.mxu0 0.0
      %4405 = vmatmul.mubr.f32.gmra.mrb[0].mxu0 %v4245
      %v4406 = vpop.f32.mrb[0].mxu0
      %v4407 = vadd.f32 %v4086, %v4406
      %v4408 = vpop.f32.mrb[0].mxu0
      %4409 = vmatprep.mubr.f32.mxu0 0.0
      %4410 = vmatmul.mubr.f32.gmra.mrb[0].mxu0 %v4248
      %v4411 = vpop.f32.mrb[0].mxu0
      %v4412 = vadd.f32 %v4091, %v4411
      %v4413 = vpop.f32.mrb[0].mxu0
      %4414 = vmatprep.mubr.f32.mxu0 0.0
      %4415 = vmatmul.mubr.f32.gmra.mrb[0].mxu0 %v4251
      %v4416 = vpop.f32.mrb[0].mxu0
      %v4417 = vadd.f32 %v4096, %v4416
      %v4418 = vpop.f32.mrb[0].mxu0
      %4419 = vmatprep.mubr.f32.mxu0 0.0
      %4420 = vmatmul.mubr.f32.gmra.mrb[0].mxu0 %v4254
      %v4421 = vpop.f32.mrb[0].mxu0
      %v4422 = vadd.f32 %v4101, %v4421
      %v4423 = vpop.f32.mrb[0].mxu0
      %4424 = vmatprep.mubr.f32.mxu0 0.0
      %4425 = vmatmul.mubr.f32.gmra.mrb[0].mxu0 %v4257
      %v4426 = vpop.f32.mrb[0].mxu0
      %v4427 = vadd.f32 %v4106, %v4426
      %v4428 = vpop.f32.mrb[0].mxu0
      %4429 = vmatprep.mubr.f32.mxu0 0.0
      %4430 = vmatmul.mubr.f32.gmra.mrb[0].mxu0 %v4260
      %v4431 = vpop.f32.mrb[0].mxu0
      %v4432 = vadd.f32 %v4111, %v4431
      %v4433 = vpop.f32.mrb[0].mxu0
      %4434 = vmatprep.mubr.f32.mxu0 0.0
      %4435 = vmatmul.mubr.f32.gmra.mrb[0].mxu0 %v4263
      %v4436 = vpop.f32.mrb[0].mxu0
      %v4437 = vadd.f32 %v4116, %v4436
      %v4438 = vpop.f32.mrb[0].mxu0
      %4439 = vmatprep.mubr.f32.mxu0 0.0
      %4440 = vmatmul.mubr.f32.gmra.mrb[0].mxu0 %v4266
      %v4441 = vpop.f32.mrb[0].mxu0
      %v4442 = vadd.f32 %v4121, %v4441
      %v4443 = vpop.f32.mrb[0].mxu0
      %4444 = vmatprep.mubr.f32.mxu0 0.0
      %4445 = vmatmul.mubr.f32.gmra.mrb[0].mxu0 %v4269
      %v4446 = vpop.f32.mrb[0].mxu0
      %v4447 = vadd.f32 %v4126, %v4446
      %v4448 = vpop.f32.mrb[0].mxu0
      %4449 = vmatprep.mubr.f32.mxu0 0.0
      %4450 = vmatmul.mubr.f32.gmra.mrb[0].mxu0 %v4272
      %v4451 = vpop.f32.mrb[0].mxu0
      %v4452 = vadd.f32 %v4131, %v4451
      %v4453 = vpop.f32.mrb[0].mxu0
      %4454 = vmatprep.mubr.f32.mxu0 0.0
      %4455 = vmatmul.mubr.f32.gmra.mrb[0].mxu0 %v4275
      %v4456 = vpop.f32.mrb[0].mxu0
      %v4457 = vadd.f32 %v4136, %v4456
      %v4458 = vpop.f32.mrb[0].mxu0
      %4459 = vmatprep.mubr.f32.mxu0 0.0
      %4460 = vmatmul.mubr.f32.gmra.mrb[0].mxu0 %v4278
      %v4461 = vpop.f32.mrb[0].mxu0
      %v4462 = vadd.f32 %v4141, %v4461
      %v4463 = vpop.f32.mrb[0].mxu0
      %4464 = vmatprep.mubr.f32.mxu0 0.0
      %4465 = vmatmul.mubr.f32.gmra.mrb[0].mxu0 %v4281
      %v4466 = vpop.f32.mrb[0].mxu0
      %v4467 = vadd.f32 %v4146, %v4466
      %v4468 = vpop.f32.mrb[0].mxu0
      %4469 = vmatprep.mubr.f32.mxu0 0.0
      %4470 = vmatmul.mubr.f32.gmra.mrb[0].mxu0 %v4284
      %v4471 = vpop.f32.mrb[0].mxu0
      %v4472 = vadd.f32 %v4151, %v4471
      %v4473 = vpop.f32.mrb[0].mxu0
      %4474 = vmatprep.mubr.f32.mxu0 0.0
      %4475 = vmatmul.mubr.f32.gmra.mrb[0].mxu0 %v4287
      %v4476 = vpop.f32.mrb[0].mxu0
      %v4477 = vadd.f32 %v4156, %v4476
      %v4478 = vpop.f32.mrb[0].mxu0
      %4479 = vmatprep.mubr.f32.mxu0 0.0
      %4480 = vmatmul.mubr.f32.gmra.mrb[0].mxu0 %v4290
      %v4481 = vpop.f32.mrb[0].mxu0
      %v4482 = vadd.f32 %v4161, %v4481
      %v4483 = vpop.f32.mrb[0].mxu0
      %4484 = vmatprep.mubr.f32.mxu0 0.0
      %4485 = vmatmul.mubr.f32.gmra.mrb[0].mxu0 %v4293
      %v4486 = vpop.f32.mrb[0].mxu0
      %v4487 = vadd.f32 %v4166, %v4486
      %v4488 = vpop.f32.mrb[0].mxu0
      %4489 = vmatprep.mubr.f32.mxu0 0.0
      %4490 = vmatmul.mubr.f32.gmra.mrb[0].mxu0 %v4296
      %v4491 = vpop.f32.mrb[0].mxu0
      %v4492 = vadd.f32 %v4171, %v4491
      %v4493 = vpop.f32.mrb[0].mxu0
      %4494 = vmatprep.mubr.f32.mxu0 0.0
      %4495 = vmatmul.mubr.f32.gmra.mrb[0].mxu0 %v4299
      %v4496 = vpop.f32.mrb[0].mxu0
      %v4497 = vadd.f32 %v4176, %v4496
      %v4498 = vpop.f32.mrb[0].mxu0
      %4499 = vmatprep.mubr.f32.mxu0 0.0
      %4500 = vmatmul.mubr.f32.gmra.mrb[0].mxu0 %v4302
      %v4501 = vpop.f32.mrb[0].mxu0
      %v4502 = vadd.f32 %v4181, %v4501
      %v4503 = vpop.f32.mrb[0].mxu0
      %4504 = vmatprep.mubr.f32.mxu0 0.0
      %4505 = vmatmul.mubr.f32.gmra.mrb[0].mxu0 %v4305
      %v4506 = vpop.f32.mrb[0].mxu0
      %v4507 = vadd.f32 %v4186, %v4506
      %v4508 = vpop.f32.mrb[0].mxu0
      %4509 = vmatprep.mubr.f32.mxu0 0.0
      %4510 = vmatmul.mubr.f32.gmra.mrb[0].mxu0 %v4308
      %v4511 = vpop.f32.mrb[0].mxu0
      %v4512 = vadd.f32 %v4191, %v4511
      %v4513 = vpop.f32.mrb[0].mxu0
      %4514 = vmatprep.mubr.f32.mxu0 0.0
      %4515 = vmatmul.mubr.f32.gmra.mrb[0].mxu0 %v4311
      %v4516 = vpop.f32.mrb[0].mxu0
      %v4517 = vadd.f32 %v4196, %v4516
      %v4518 = vpop.f32.mrb[0].mxu0
      %4519 = vmatprep.mubr.f32.mxu0 0.0
      %4520 = vmatmul.mubr.f32.gmra.mrb[0].mxu0 %v4314
      %v4521 = vpop.f32.mrb[0].mxu0
      %v4522 = vadd.f32 %v4201, %v4521
      %v4523 = vpop.f32.mrb[0].mxu0
      %4524 = vmatprep.mubr.f32.mxu0 0.0
      %4525 = vmatmul.mubr.f32.gmra.mrb[0].mxu0 %v4317
      %v4526 = vpop.f32.mrb[0].mxu0
      %v4527 = vadd.f32 %v4206, %v4526
      %v4528 = vpop.f32.mrb[0].mxu0
      %4529 = vmatprep.mubr.f32.mxu0 0.0
      %4530 = vmatmul.mubr.f32.gmra.mrb[0].mxu0 %v4320
      %v4531 = vpop.f32.mrb[0].mxu0
      %v4532 = vadd.f32 %v4211, %v4531
      %v4533 = vpop.f32.mrb[0].mxu0
      %4534 = vmatprep.mubr.f32.mxu0 0.0
      %4535 = vmatmul.mubr.f32.gmra.mrb[0].mxu0 %v4323
      %v4536 = vpop.f32.mrb[0].mxu0
      %v4537 = vadd.f32 %v4216, %v4536
      %v4538 = vpop.f32.mrb[0].mxu0
      %4539 = vmatprep.mubr.f32.mxu0 0.0
      %4540 = vmatmul.mubr.f32.gmra.mrb[0].mxu0 %v4326
      %v4541 = vpop.f32.mrb[0].mxu0
      %v4542 = vadd.f32 %v4221, %v4541
      %v4543 = vpop.f32.mrb[0].mxu0
      %4544 = vmatprep.mubr.f32.mxu0 0.0
      %4545 = vmatmul.mubr.f32.gmra.mrb[0].mxu0 %v4329
      %v4546 = vpop.f32.mrb[0].mxu0
      %v4547 = vadd.f32 %v4226, %v4546
      %v4548 = vpop.f32.mrb[0].mxu0
      %4549 = vmatprep.mubr.f32.mxu0 0.0
      %4550 = vmatmul.mubr.f32.gmra.mrb[0].mxu0 %v4332
      %v4551 = vpop.f32.mrb[0].mxu0
      %v4552 = vadd.f32 %v4231, %v4551
      %v4553 = vpop.f32.mrb[0].mxu0
      %4554 = vmatprep.mubr.f32.mxu0 0.0
      %4555 = vmatmul.mubr.f32.gmra.mrb[0].mxu0 %v4335
      %v4556 = vpop.f32.mrb[0].mxu0
      %v4557 = vadd.f32 %v4236, %v4556
      %v4558 = vpop.f32.mrb[0].mxu0
      %4559 = vmatprep.mubr.f32.mxu0 0.0
      %4560 = vmatmul.mubr.f32.gmra.mrb[0].mxu0 %v4338
      %v4561 = vpop.f32.mrb[0].mxu0
      %v4562 = vadd.f32 %v4241, %v4561
      %v4563 = vpop.f32.mrb[0].mxu0
      %4564 = vdwg.mxu0
      %v4565 = vld [vmem:[#allocation2 + $0x1] sm:$0xff]
      %v4566 = vld [vmem:[#allocation2 + $0x9] sm:$0xff]
      %v4567 = vld [vmem:[#allocation2 + $0x19] sm:$0xff]
      %v4568 = vld [vmem:[#allocation2 + $0x21] sm:$0xff]
      %v4569 = vld [vmem:[#allocation2 + $0x31] sm:$0xff]
      %v4570 = vld [vmem:[#allocation2 + $0x39] sm:$0xff]
      %v4571 = vld [vmem:[#allocation2 + $0x49] sm:$0xff]
      %v4572 = vld [vmem:[#allocation2 + $0x51] sm:$0xff]
      %v4573 = vld [vmem:[#allocation2 + $0x61] sm:$0xff]
      %v4574 = vld [vmem:[#allocation2 + $0x69] sm:$0xff]
      %v4575 = vld [vmem:[#allocation2 + $0x79] sm:$0xff]
      %v4576 = vld [vmem:[#allocation2 + $0x81] sm:$0xff]
      %v4577 = vld [vmem:[#allocation2 + $0x91] sm:$0xff]
      %v4578 = vld [vmem:[#allocation2 + $0x99] sm:$0xff]
      %v4579 = vld [vmem:[#allocation2 + $0xa9] sm:$0xff]
      %v4580 = vld [vmem:[#allocation2 + $0xb1] sm:$0xff]
      %v4581 = vld [vmem:[#allocation2 + $0xc1] sm:$0xff]
      %v4582 = vld [vmem:[#allocation2 + $0xc9] sm:$0xff]
      %v4583 = vld [vmem:[#allocation2 + $0xd9] sm:$0xff]
      %v4584 = vld [vmem:[#allocation2 + $0xe1] sm:$0xff]
      %v4585 = vld [vmem:[#allocation2 + $0xf1] sm:$0xff]
      %v4586 = vld [vmem:[#allocation2 + $0xf9] sm:$0xff]
      %v4587 = vld [vmem:[#allocation2 + $0x109] sm:$0xff]
      %v4588 = vld [vmem:[#allocation2 + $0x111] sm:$0xff]
      %v4589 = vld [vmem:[#allocation2 + $0x121] sm:$0xff]
      %v4590 = vld [vmem:[#allocation2 + $0x129] sm:$0xff]
      %v4591 = vld [vmem:[#allocation2 + $0x139] sm:$0xff]
      %v4592 = vld [vmem:[#allocation2 + $0x141] sm:$0xff]
      %v4593 = vld [vmem:[#allocation2 + $0x151] sm:$0xff]
      %v4594 = vld [vmem:[#allocation2 + $0x159] sm:$0xff]
      %v4595 = vld [vmem:[#allocation2 + $0x169] sm:$0xff]
      %v4596 = vld [vmem:[#allocation2 + $0x171] sm:$0xff]
      %v4597 = vld [vmem:[%s293 + $0x1] sm:$0xff]
      %v4598 = vld [vmem:[%s293 + $0x9] sm:$0xff]
      %v4599 = vld [vmem:[%s293 + $0x19] sm:$0xff]
      %v4600 = vld [vmem:[%s293 + $0x21] sm:$0xff]
      %v4601 = vld [vmem:[%s293 + $0x31] sm:$0xff]
      %v4602 = vld [vmem:[%s293 + $0x39] sm:$0xff]
      %v4603 = vld [vmem:[%s293 + $0x49] sm:$0xff]
      %v4604 = vld [vmem:[%s293 + $0x51] sm:$0xff]
      %v4605 = vld [vmem:[%s293 + $0x61] sm:$0xff]
      %v4606 = vld [vmem:[%s293 + $0x69] sm:$0xff]
      %v4607 = vld [vmem:[%s293 + $0x79] sm:$0xff]
      %v4608 = vld [vmem:[%s293 + $0x81] sm:$0xff]
      %v4609 = vld [vmem:[%s293 + $0x91] sm:$0xff]
      %v4610 = vld [vmem:[%s293 + $0x99] sm:$0xff]
      %v4611 = vld [vmem:[%s293 + $0xa9] sm:$0xff]
      %v4612 = vld [vmem:[%s293 + $0xb1] sm:$0xff]
      %v4613 = vld [vmem:[%s293 + $0xc1] sm:$0xff]
      %v4614 = vld [vmem:[%s293 + $0xc9] sm:$0xff]
      %v4615 = vld [vmem:[%s293 + $0xd9] sm:$0xff]
      %v4616 = vld [vmem:[%s293 + $0xe1] sm:$0xff]
      %v4617 = vld [vmem:[%s293 + $0xf1] sm:$0xff]
      %v4618 = vld [vmem:[%s293 + $0xf9] sm:$0xff]
      %v4619 = vld [vmem:[%s293 + $0x109] sm:$0xff]
      %v4620 = vld [vmem:[%s293 + $0x111] sm:$0xff]
      %v4621 = vld [vmem:[%s293 + $0x121] sm:$0xff]
      %v4622 = vld [vmem:[%s293 + $0x129] sm:$0xff]
      %v4623 = vld [vmem:[%s293 + $0x139] sm:$0xff]
      %v4624 = vld [vmem:[%s293 + $0x141] sm:$0xff]
      %v4625 = vld [vmem:[%s293 + $0x151] sm:$0xff]
      %v4626 = vld [vmem:[%s293 + $0x159] sm:$0xff]
      %v4627 = vld [vmem:[%s293 + $0x169] sm:$0xff]
      %v4628 = vld [vmem:[%s293 + $0x171] sm:$0xff]
      %s4629 = scalar_lea.vmem %s4, 8
      %v4630 = vld [vmem:[%s4629] sm:$0xff]
      %v4632 = vsel %vm3768, %v4565, 0
      %v4635 = vsel %vm3768, %v4566, 0
      %v4638 = vsel %vm3768, %v4567, 0
      %v4641 = vsel %vm3768, %v4568, 0
      %v4644 = vsel %vm3768, %v4569, 0
      %v4647 = vsel %vm3768, %v4570, 0
      %v4650 = vsel %vm3768, %v4571, 0
      %v4653 = vsel %vm3768, %v4572, 0
      %v4656 = vsel %vm3768, %v4573, 0
      %v4659 = vsel %vm3768, %v4574, 0
      %v4662 = vsel %vm3768, %v4575, 0
      %v4665 = vsel %vm3768, %v4576, 0
      %v4668 = vsel %vm3768, %v4577, 0
      %v4671 = vsel %vm3768, %v4578, 0
      %v4674 = vsel %vm3768, %v4579, 0
      %v4677 = vsel %vm3768, %v4580, 0
      %v4680 = vsel %vm3768, %v4581, 0
      %v4683 = vsel %vm3768, %v4582, 0
      %v4686 = vsel %vm3768, %v4583, 0
      %v4689 = vsel %vm3768, %v4584, 0
      %v4692 = vsel %vm3768, %v4585, 0
      %v4695 = vsel %vm3768, %v4586, 0
      %v4698 = vsel %vm3768, %v4587, 0
      %v4701 = vsel %vm3768, %v4588, 0
      %v4704 = vsel %vm3768, %v4589, 0
      %v4707 = vsel %vm3768, %v4590, 0
      %v4710 = vsel %vm3768, %v4591, 0
      %v4713 = vsel %vm3768, %v4592, 0
      %v4716 = vsel %vm3768, %v4593, 0
      %v4719 = vsel %vm3768, %v4594, 0
      %v4722 = vsel %vm3768, %v4595, 0
      %v4725 = vsel %vm3768, %v4596, 0
      %4727 = vmatprep.subr.mxu0 0.0
      %4728 = vmatpush1.msra.mxu0 %v4630
      %4729 = vmatprep.subr.mxu0 0.0
      %4730 = vmatpush1.msra.mxu0 0.0
      %4731 = vmatprep.subr.mxu0 0.0
      %4732 = vmatpush1.msra.mxu0 0.0
      %4733 = vmatprep.subr.mxu0 0.0
      %4734 = vmatpush1.msra.mxu0 0.0
      %4735 = vmatprep.subr.mxu0 0.0
      %4736 = vmatpush1.msra.mxu0 0.0
      %4737 = vmatprep.subr.mxu0 0.0
      %4738 = vmatpush1.msra.mxu0 0.0
      %4739 = vmatprep.subr.mxu0 0.0
      %4740 = vmatpush1.msra.mxu0 0.0
      %4741 = vmatprep.subr.mxu0 0.0
      %4742 = vmatpush1.msra.mxu0 0.0
      %4743 = vmatprep.subr.mxu0 0.0
      %4744 = vmatpush1.msra.mxu0 0.0
      %4745 = vmatprep.subr.mxu0 0.0
      %4746 = vmatpush1.msra.mxu0 0.0
      %4747 = vmatprep.subr.mxu0 0.0
      %4748 = vmatpush1.msra.mxu0 0.0
      %4749 = vmatprep.subr.mxu0 0.0
      %4750 = vmatpush1.msra.mxu0 0.0
      %4751 = vmatprep.subr.mxu0 0.0
      %4752 = vmatpush1.msra.mxu0 0.0
      %4753 = vmatprep.subr.mxu0 0.0
      %4754 = vmatpush1.msra.mxu0 0.0
      %4755 = vmatprep.subr.mxu0 0.0
      %4756 = vmatpush1.msra.mxu0 0.0
      %4757 = vmatprep.subr.mxu0 0.0
      %4758 = vmatpush1.msra.mxu0 0.0
      %4759 = vmatprep.subr.mxu0 0.0
      %4760 = vmatpush1.msra.mxu0 0.0
      %4761 = vmatprep.subr.mxu0 0.0
      %4762 = vmatpush1.msra.mxu0 0.0
      %4763 = vmatprep.subr.mxu0 0.0
      %4764 = vmatpush1.msra.mxu0 0.0
      %4765 = vmatprep.subr.mxu0 0.0
      %4766 = vmatpush1.msra.mxu0 0.0
      %4767 = vmatprep.subr.mxu0 0.0
      %4768 = vmatpush1.msra.mxu0 0.0
      %4769 = vmatprep.subr.mxu0 0.0
      %4770 = vmatpush1.msra.mxu0 0.0
      %4771 = vmatprep.subr.mxu0 0.0
      %4772 = vmatpush1.msra.mxu0 0.0
      %4773 = vmatprep.subr.mxu0 0.0
      %4774 = vmatpush1.msra.mxu0 0.0
      %4775 = vmatprep.subr.mxu0 0.0
      %4776 = vmatpush1.msra.mxu0 0.0
      %4777 = vmatprep.subr.mxu0 0.0
      %4778 = vmatpush1.msra.mxu0 0.0
      %4779 = vmatprep.subr.mxu0 0.0
      %4780 = vmatpush1.msra.mxu0 0.0
      %4781 = vmatprep.subr.mxu0 0.0
      %4782 = vmatpush1.msra.mxu0 0.0
      %4783 = vmatprep.subr.mxu0 0.0
      %4784 = vmatpush1.msra.mxu0 0.0
      %4785 = vmatprep.subr.mxu0 0.0
      %4786 = vmatpush1.msra.mxu0 0.0
      %4787 = vmatprep.subr.mxu0 0.0
      %4788 = vmatpush1.msra.mxu0 0.0
      %4789 = vmatprep.subr.mxu0 0.0
      %4790 = vmatpush1.msra.mxu0 0.0
      %4791 = vmatprep.mubr.f32.mxu0 0.0
      %4792 = vmatmul.mubr.f32.gmra.mrb[0].mxu0 %v4632
      %v4793 = vpop.f32.mrb[0].mxu0
      %v4794 = vadd.f32 0.0, %v4793
      %v4795 = vpop.f32.mrb[0].mxu0
      %4796 = vmatprep.mubr.f32.mxu0 0.0
      %4797 = vmatmul.mubr.f32.gmra.mrb[0].mxu0 %v4635
      %v4798 = vpop.f32.mrb[0].mxu0
      %v4799 = vadd.f32 0.0, %v4798
      %v4800 = vpop.f32.mrb[0].mxu0
      %4801 = vmatprep.mubr.f32.mxu0 0.0
      %4802 = vmatmul.mubr.f32.gmra.mrb[0].mxu0 %v4638
      %v4803 = vpop.f32.mrb[0].mxu0
      %v4804 = vadd.f32 0.0, %v4803
      %v4805 = vpop.f32.mrb[0].mxu0
      %4806 = vmatprep.mubr.f32.mxu0 0.0
      %4807 = vmatmul.mubr.f32.gmra.mrb[0].mxu0 %v4641
      %v4808 = vpop.f32.mrb[0].mxu0
      %v4809 = vadd.f32 0.0, %v4808
      %v4810 = vpop.f32.mrb[0].mxu0
      %4811 = vmatprep.mubr.f32.mxu0 0.0
      %4812 = vmatmul.mubr.f32.gmra.mrb[0].mxu0 %v4644
      %v4813 = vpop.f32.mrb[0].mxu0
      %v4814 = vadd.f32 0.0, %v4813
      %v4815 = vpop.f32.mrb[0].mxu0
      %4816 = vmatprep.mubr.f32.mxu0 0.0
      %4817 = vmatmul.mubr.f32.gmra.mrb[0].mxu0 %v4647
      %v4818 = vpop.f32.mrb[0].mxu0
      %v4819 = vadd.f32 0.0, %v4818
      %v4820 = vpop.f32.mrb[0].mxu0
      %4821 = vmatprep.mubr.f32.mxu0 0.0
      %4822 = vmatmul.mubr.f32.gmra.mrb[0].mxu0 %v4650
      %v4823 = vpop.f32.mrb[0].mxu0
      %v4824 = vadd.f32 0.0, %v4823
      %v4825 = vpop.f32.mrb[0].mxu0
      %4826 = vmatprep.mubr.f32.mxu0 0.0
      %4827 = vmatmul.mubr.f32.gmra.mrb[0].mxu0 %v4653
      %v4828 = vpop.f32.mrb[0].mxu0
      %v4829 = vadd.f32 0.0, %v4828
      %v4830 = vpop.f32.mrb[0].mxu0
      %4831 = vmatprep.mubr.f32.mxu0 0.0
      %4832 = vmatmul.mubr.f32.gmra.mrb[0].mxu0 %v4656
      %v4833 = vpop.f32.mrb[0].mxu0
      %v4834 = vadd.f32 0.0, %v4833
      %v4835 = vpop.f32.mrb[0].mxu0
      %4836 = vmatprep.mubr.f32.mxu0 0.0
      %4837 = vmatmul.mubr.f32.gmra.mrb[0].mxu0 %v4659
      %v4838 = vpop.f32.mrb[0].mxu0
      %v4839 = vadd.f32 0.0, %v4838
      %v4840 = vpop.f32.mrb[0].mxu0
      %4841 = vmatprep.mubr.f32.mxu0 0.0
      %4842 = vmatmul.mubr.f32.gmra.mrb[0].mxu0 %v4662
      %v4843 = vpop.f32.mrb[0].mxu0
      %v4844 = vadd.f32 0.0, %v4843
      %v4845 = vpop.f32.mrb[0].mxu0
      %4846 = vmatprep.mubr.f32.mxu0 0.0
      %4847 = vmatmul.mubr.f32.gmra.mrb[0].mxu0 %v4665
      %v4848 = vpop.f32.mrb[0].mxu0
      %v4849 = vadd.f32 0.0, %v4848
      %v4850 = vpop.f32.mrb[0].mxu0
      %4851 = vmatprep.mubr.f32.mxu0 0.0
      %4852 = vmatmul.mubr.f32.gmra.mrb[0].mxu0 %v4668
      %v4853 = vpop.f32.mrb[0].mxu0
      %v4854 = vadd.f32 0.0, %v4853
      %v4855 = vpop.f32.mrb[0].mxu0
      %4856 = vmatprep.mubr.f32.mxu0 0.0
      %4857 = vmatmul.mubr.f32.gmra.mrb[0].mxu0 %v4671
      %v4858 = vpop.f32.mrb[0].mxu0
      %v4859 = vadd.f32 0.0, %v4858
      %v4860 = vpop.f32.mrb[0].mxu0
      %4861 = vmatprep.mubr.f32.mxu0 0.0
      %4862 = vmatmul.mubr.f32.gmra.mrb[0].mxu0 %v4674
      %v4863 = vpop.f32.mrb[0].mxu0
      %v4864 = vadd.f32 0.0, %v4863
      %v4865 = vpop.f32.mrb[0].mxu0
      %4866 = vmatprep.mubr.f32.mxu0 0.0
      %4867 = vmatmul.mubr.f32.gmra.mrb[0].mxu0 %v4677
      %v4868 = vpop.f32.mrb[0].mxu0
      %v4869 = vadd.f32 0.0, %v4868
      %v4870 = vpop.f32.mrb[0].mxu0
      %4871 = vmatprep.mubr.f32.mxu0 0.0
      %4872 = vmatmul.mubr.f32.gmra.mrb[0].mxu0 %v4680
      %v4873 = vpop.f32.mrb[0].mxu0
      %v4874 = vadd.f32 0.0, %v4873
      %v4875 = vpop.f32.mrb[0].mxu0
      %4876 = vmatprep.mubr.f32.mxu0 0.0
      %4877 = vmatmul.mubr.f32.gmra.mrb[0].mxu0 %v4683
      %v4878 = vpop.f32.mrb[0].mxu0
      %v4879 = vadd.f32 0.0, %v4878
      %v4880 = vpop.f32.mrb[0].mxu0
      %4881 = vmatprep.mubr.f32.mxu0 0.0
      %4882 = vmatmul.mubr.f32.gmra.mrb[0].mxu0 %v4686
      %v4883 = vpop.f32.mrb[0].mxu0
      %v4884 = vadd.f32 0.0, %v4883
      %v4885 = vpop.f32.mrb[0].mxu0
      %4886 = vmatprep.mubr.f32.mxu0 0.0
      %4887 = vmatmul.mubr.f32.gmra.mrb[0].mxu0 %v4689
      %v4888 = vpop.f32.mrb[0].mxu0
      %v4889 = vadd.f32 0.0, %v4888
      %v4890 = vpop.f32.mrb[0].mxu0
      %4891 = vmatprep.mubr.f32.mxu0 0.0
      %4892 = vmatmul.mubr.f32.gmra.mrb[0].mxu0 %v4692
      %v4893 = vpop.f32.mrb[0].mxu0
      %v4894 = vadd.f32 0.0, %v4893
      %v4895 = vpop.f32.mrb[0].mxu0
      %4896 = vmatprep.mubr.f32.mxu0 0.0
      %4897 = vmatmul.mubr.f32.gmra.mrb[0].mxu0 %v4695
      %v4898 = vpop.f32.mrb[0].mxu0
      %v4899 = vadd.f32 0.0, %v4898
      %v4900 = vpop.f32.mrb[0].mxu0
      %4901 = vmatprep.mubr.f32.mxu0 0.0
      %4902 = vmatmul.mubr.f32.gmra.mrb[0].mxu0 %v4698
      %v4903 = vpop.f32.mrb[0].mxu0
      %v4904 = vadd.f32 0.0, %v4903
      %v4905 = vpop.f32.mrb[0].mxu0
      %4906 = vmatprep.mubr.f32.mxu0 0.0
      %4907 = vmatmul.mubr.f32.gmra.mrb[0].mxu0 %v4701
      %v4908 = vpop.f32.mrb[0].mxu0
      %v4909 = vadd.f32 0.0, %v4908
      %v4910 = vpop.f32.mrb[0].mxu0
      %4911 = vmatprep.mubr.f32.mxu0 0.0
      %4912 = vmatmul.mubr.f32.gmra.mrb[0].mxu0 %v4704
      %v4913 = vpop.f32.mrb[0].mxu0
      %v4914 = vadd.f32 0.0, %v4913
      %v4915 = vpop.f32.mrb[0].mxu0
      %4916 = vmatprep.mubr.f32.mxu0 0.0
      %4917 = vmatmul.mubr.f32.gmra.mrb[0].mxu0 %v4707
      %v4918 = vpop.f32.mrb[0].mxu0
      %v4919 = vadd.f32 0.0, %v4918
      %v4920 = vpop.f32.mrb[0].mxu0
      %4921 = vmatprep.mubr.f32.mxu0 0.0
      %4922 = vmatmul.mubr.f32.gmra.mrb[0].mxu0 %v4710
      %v4923 = vpop.f32.mrb[0].mxu0
      %v4924 = vadd.f32 0.0, %v4923
      %v4925 = vpop.f32.mrb[0].mxu0
      %4926 = vmatprep.mubr.f32.mxu0 0.0
      %4927 = vmatmul.mubr.f32.gmra.mrb[0].mxu0 %v4713
      %v4928 = vpop.f32.mrb[0].mxu0
      %v4929 = vadd.f32 0.0, %v4928
      %v4930 = vpop.f32.mrb[0].mxu0
      %4931 = vmatprep.mubr.f32.mxu0 0.0
      %4932 = vmatmul.mubr.f32.gmra.mrb[0].mxu0 %v4716
      %v4933 = vpop.f32.mrb[0].mxu0
      %v4934 = vadd.f32 0.0, %v4933
      %v4935 = vpop.f32.mrb[0].mxu0
      %4936 = vmatprep.mubr.f32.mxu0 0.0
      %4937 = vmatmul.mubr.f32.gmra.mrb[0].mxu0 %v4719
      %v4938 = vpop.f32.mrb[0].mxu0
      %v4939 = vadd.f32 0.0, %v4938
      %v4940 = vpop.f32.mrb[0].mxu0
      %4941 = vmatprep.mubr.f32.mxu0 0.0
      %4942 = vmatmul.mubr.f32.gmra.mrb[0].mxu0 %v4722
      %v4943 = vpop.f32.mrb[0].mxu0
      %v4944 = vadd.f32 0.0, %v4943
      %v4945 = vpop.f32.mrb[0].mxu0
      %4946 = vmatprep.mubr.f32.mxu0 0.0
      %4947 = vmatmul.mubr.f32.gmra.mrb[0].mxu0 %v4725
      %v4948 = vpop.f32.mrb[0].mxu0
      %v4949 = vadd.f32 0.0, %v4948
      %v4950 = vpop.f32.mrb[0].mxu0
      %4951 = vdwg.mxu0
      %v4952 = vadd.f32 %v4407, %v4794
      %v4953 = vadd.f32 %v4412, %v4799
      %v4954 = vadd.f32 %v4417, %v4804
      %v4955 = vadd.f32 %v4422, %v4809
      %v4956 = vadd.f32 %v4427, %v4814
      %v4957 = vadd.f32 %v4432, %v4819
      %v4958 = vadd.f32 %v4437, %v4824
      %v4959 = vadd.f32 %v4442, %v4829
      %v4960 = vadd.f32 %v4447, %v4834
      %v4961 = vadd.f32 %v4452, %v4839
      %v4962 = vadd.f32 %v4457, %v4844
      %v4963 = vadd.f32 %v4462, %v4849
      %v4964 = vadd.f32 %v4467, %v4854
      %v4965 = vadd.f32 %v4472, %v4859
      %v4966 = vadd.f32 %v4477, %v4864
      %v4967 = vadd.f32 %v4482, %v4869
      %v4968 = vadd.f32 %v4487, %v4874
      %v4969 = vadd.f32 %v4492, %v4879
      %v4970 = vadd.f32 %v4497, %v4884
      %v4971 = vadd.f32 %v4502, %v4889
      %v4972 = vadd.f32 %v4507, %v4894
      %v4973 = vadd.f32 %v4512, %v4899
      %v4974 = vadd.f32 %v4517, %v4904
      %v4975 = vadd.f32 %v4522, %v4909
      %v4976 = vadd.f32 %v4527, %v4914
      %v4977 = vadd.f32 %v4532, %v4919
      %v4978 = vadd.f32 %v4537, %v4924
      %v4979 = vadd.f32 %v4542, %v4929
      %v4980 = vadd.f32 %v4547, %v4934
      %v4981 = vadd.f32 %v4552, %v4939
      %v4982 = vadd.f32 %v4557, %v4944
      %v4983 = vadd.f32 %v4562, %v4949
      %s4984 = scalar_lea.vmem %s5, 8
      %v4985 = vld [vmem:[%s4984] sm:$0xff]
      %v4987 = vsel %vm3768, %v4597, 0
      %v4990 = vsel %vm3768, %v4598, 0
      %v4993 = vsel %vm3768, %v4599, 0
      %v4996 = vsel %vm3768, %v4600, 0
      %v4999 = vsel %vm3768, %v4601, 0
      %v5002 = vsel %vm3768, %v4602, 0
      %v5005 = vsel %vm3768, %v4603, 0
      %v5008 = vsel %vm3768, %v4604, 0
      %v5011 = vsel %vm3768, %v4605, 0
      %v5014 = vsel %vm3768, %v4606, 0
      %v5017 = vsel %vm3768, %v4607, 0
      %v5020 = vsel %vm3768, %v4608, 0
      %v5023 = vsel %vm3768, %v4609, 0
      %v5026 = vsel %vm3768, %v4610, 0
      %v5029 = vsel %vm3768, %v4611, 0
      %v5032 = vsel %vm3768, %v4612, 0
      %v5035 = vsel %vm3768, %v4613, 0
      %v5038 = vsel %vm3768, %v4614, 0
      %v5041 = vsel %vm3768, %v4615, 0
      %v5044 = vsel %vm3768, %v4616, 0
      %v5047 = vsel %vm3768, %v4617, 0
      %v5050 = vsel %vm3768, %v4618, 0
      %v5053 = vsel %vm3768, %v4619, 0
      %v5056 = vsel %vm3768, %v4620, 0
      %v5059 = vsel %vm3768, %v4621, 0
      %v5062 = vsel %vm3768, %v4622, 0
      %v5065 = vsel %vm3768, %v4623, 0
      %v5068 = vsel %vm3768, %v4624, 0
      %v5071 = vsel %vm3768, %v4625, 0
      %v5074 = vsel %vm3768, %v4626, 0
      %v5077 = vsel %vm3768, %v4627, 0
      %v5080 = vsel %vm3768, %v4628, 0
      %5082 = vmatprep.subr.mxu0 0.0
      %5083 = vmatpush1.msra.mxu0 %v4985
      %5084 = vmatprep.subr.mxu0 0.0
      %5085 = vmatpush1.msra.mxu0 0.0
      %5086 = vmatprep.subr.mxu0 0.0
      %5087 = vmatpush1.msra.mxu0 0.0
      %5088 = vmatprep.subr.mxu0 0.0
      %5089 = vmatpush1.msra.mxu0 0.0
      %5090 = vmatprep.subr.mxu0 0.0
      %5091 = vmatpush1.msra.mxu0 0.0
      %5092 = vmatprep.subr.mxu0 0.0
      %5093 = vmatpush1.msra.mxu0 0.0
      %5094 = vmatprep.subr.mxu0 0.0
      %5095 = vmatpush1.msra.mxu0 0.0
      %5096 = vmatprep.subr.mxu0 0.0
      %5097 = vmatpush1.msra.mxu0 0.0
      %5098 = vmatprep.subr.mxu0 0.0
      %5099 = vmatpush1.msra.mxu0 0.0
      %5100 = vmatprep.subr.mxu0 0.0
      %5101 = vmatpush1.msra.mxu0 0.0
      %5102 = vmatprep.subr.mxu0 0.0
      %5103 = vmatpush1.msra.mxu0 0.0
      %5104 = vmatprep.subr.mxu0 0.0
      %5105 = vmatpush1.msra.mxu0 0.0
      %5106 = vmatprep.subr.mxu0 0.0
      %5107 = vmatpush1.msra.mxu0 0.0
      %5108 = vmatprep.subr.mxu0 0.0
      %5109 = vmatpush1.msra.mxu0 0.0
      %5110 = vmatprep.subr.mxu0 0.0
      %5111 = vmatpush1.msra.mxu0 0.0
      %5112 = vmatprep.subr.mxu0 0.0
      %5113 = vmatpush1.msra.mxu0 0.0
      %5114 = vmatprep.subr.mxu0 0.0
      %5115 = vmatpush1.msra.mxu0 0.0
      %5116 = vmatprep.subr.mxu0 0.0
      %5117 = vmatpush1.msra.mxu0 0.0
      %5118 = vmatprep.subr.mxu0 0.0
      %5119 = vmatpush1.msra.mxu0 0.0
      %5120 = vmatprep.subr.mxu0 0.0
      %5121 = vmatpush1.msra.mxu0 0.0
      %5122 = vmatprep.subr.mxu0 0.0
      %5123 = vmatpush1.msra.mxu0 0.0
      %5124 = vmatprep.subr.mxu0 0.0
      %5125 = vmatpush1.msra.mxu0 0.0
      %5126 = vmatprep.subr.mxu0 0.0
      %5127 = vmatpush1.msra.mxu0 0.0
      %5128 = vmatprep.subr.mxu0 0.0
      %5129 = vmatpush1.msra.mxu0 0.0
      %5130 = vmatprep.subr.mxu0 0.0
      %5131 = vmatpush1.msra.mxu0 0.0
      %5132 = vmatprep.subr.mxu0 0.0
      %5133 = vmatpush1.msra.mxu0 0.0
      %5134 = vmatprep.subr.mxu0 0.0
      %5135 = vmatpush1.msra.mxu0 0.0
      %5136 = vmatprep.subr.mxu0 0.0
      %5137 = vmatpush1.msra.mxu0 0.0
      %5138 = vmatprep.subr.mxu0 0.0
      %5139 = vmatpush1.msra.mxu0 0.0
      %5140 = vmatprep.subr.mxu0 0.0
      %5141 = vmatpush1.msra.mxu0 0.0
      %5142 = vmatprep.subr.mxu0 0.0
      %5143 = vmatpush1.msra.mxu0 0.0
      %5144 = vmatprep.subr.mxu0 0.0
      %5145 = vmatpush1.msra.mxu0 0.0
      %5146 = vmatprep.mubr.f32.mxu0 0.0
      %5147 = vmatmul.mubr.f32.gmra.mrb[0].mxu0 %v4987
      %v5148 = vpop.f32.mrb[0].mxu0
      %v5149 = vadd.f32 0.0, %v5148
      %v5150 = vpop.f32.mrb[0].mxu0
      %5151 = vmatprep.mubr.f32.mxu0 0.0
      %5152 = vmatmul.mubr.f32.gmra.mrb[0].mxu0 %v4990
      %v5153 = vpop.f32.mrb[0].mxu0
      %v5154 = vadd.f32 0.0, %v5153
      %v5155 = vpop.f32.mrb[0].mxu0
      %5156 = vmatprep.mubr.f32.mxu0 0.0
      %5157 = vmatmul.mubr.f32.gmra.mrb[0].mxu0 %v4993
      %v5158 = vpop.f32.mrb[0].mxu0
      %v5159 = vadd.f32 0.0, %v5158
      %v5160 = vpop.f32.mrb[0].mxu0
      %5161 = vmatprep.mubr.f32.mxu0 0.0
      %5162 = vmatmul.mubr.f32.gmra.mrb[0].mxu0 %v4996
      %v5163 = vpop.f32.mrb[0].mxu0
      %v5164 = vadd.f32 0.0, %v5163
      %v5165 = vpop.f32.mrb[0].mxu0
      %5166 = vmatprep.mubr.f32.mxu0 0.0
      %5167 = vmatmul.mubr.f32.gmra.mrb[0].mxu0 %v4999
      %v5168 = vpop.f32.mrb[0].mxu0
      %v5169 = vadd.f32 0.0, %v5168
      %v5170 = vpop.f32.mrb[0].mxu0
      %5171 = vmatprep.mubr.f32.mxu0 0.0
      %5172 = vmatmul.mubr.f32.gmra.mrb[0].mxu0 %v5002
      %v5173 = vpop.f32.mrb[0].mxu0
      %v5174 = vadd.f32 0.0, %v5173
      %v5175 = vpop.f32.mrb[0].mxu0
      %5176 = vmatprep.mubr.f32.mxu0 0.0
      %5177 = vmatmul.mubr.f32.gmra.mrb[0].mxu0 %v5005
      %v5178 = vpop.f32.mrb[0].mxu0
      %v5179 = vadd.f32 0.0, %v5178
      %v5180 = vpop.f32.mrb[0].mxu0
      %5181 = vmatprep.mubr.f32.mxu0 0.0
      %5182 = vmatmul.mubr.f32.gmra.mrb[0].mxu0 %v5008
      %v5183 = vpop.f32.mrb[0].mxu0
      %v5184 = vadd.f32 0.0, %v5183
      %v5185 = vpop.f32.mrb[0].mxu0
      %5186 = vmatprep.mubr.f32.mxu0 0.0
      %5187 = vmatmul.mubr.f32.gmra.mrb[0].mxu0 %v5011
      %v5188 = vpop.f32.mrb[0].mxu0
      %v5189 = vadd.f32 0.0, %v5188
      %v5190 = vpop.f32.mrb[0].mxu0
      %5191 = vmatprep.mubr.f32.mxu0 0.0
      %5192 = vmatmul.mubr.f32.gmra.mrb[0].mxu0 %v5014
      %v5193 = vpop.f32.mrb[0].mxu0
      %v5194 = vadd.f32 0.0, %v5193
      %v5195 = vpop.f32.mrb[0].mxu0
      %5196 = vmatprep.mubr.f32.mxu0 0.0
      %5197 = vmatmul.mubr.f32.gmra.mrb[0].mxu0 %v5017
      %v5198 = vpop.f32.mrb[0].mxu0
      %v5199 = vadd.f32 0.0, %v5198
      %v5200 = vpop.f32.mrb[0].mxu0
      %5201 = vmatprep.mubr.f32.mxu0 0.0
      %5202 = vmatmul.mubr.f32.gmra.mrb[0].mxu0 %v5020
      %v5203 = vpop.f32.mrb[0].mxu0
      %v5204 = vadd.f32 0.0, %v5203
      %v5205 = vpop.f32.mrb[0].mxu0
      %5206 = vmatprep.mubr.f32.mxu0 0.0
      %5207 = vmatmul.mubr.f32.gmra.mrb[0].mxu0 %v5023
      %v5208 = vpop.f32.mrb[0].mxu0
      %v5209 = vadd.f32 0.0, %v5208
      %v5210 = vpop.f32.mrb[0].mxu0
      %5211 = vmatprep.mubr.f32.mxu0 0.0
      %5212 = vmatmul.mubr.f32.gmra.mrb[0].mxu0 %v5026
      %v5213 = vpop.f32.mrb[0].mxu0
      %v5214 = vadd.f32 0.0, %v5213
      %v5215 = vpop.f32.mrb[0].mxu0
      %5216 = vmatprep.mubr.f32.mxu0 0.0
      %5217 = vmatmul.mubr.f32.gmra.mrb[0].mxu0 %v5029
      %v5218 = vpop.f32.mrb[0].mxu0
      %v5219 = vadd.f32 0.0, %v5218
      %v5220 = vpop.f32.mrb[0].mxu0
      %5221 = vmatprep.mubr.f32.mxu0 0.0
      %5222 = vmatmul.mubr.f32.gmra.mrb[0].mxu0 %v5032
      %v5223 = vpop.f32.mrb[0].mxu0
      %v5224 = vadd.f32 0.0, %v5223
      %v5225 = vpop.f32.mrb[0].mxu0
      %5226 = vmatprep.mubr.f32.mxu0 0.0
      %5227 = vmatmul.mubr.f32.gmra.mrb[0].mxu0 %v5035
      %v5228 = vpop.f32.mrb[0].mxu0
      %v5229 = vadd.f32 0.0, %v5228
      %v5230 = vpop.f32.mrb[0].mxu0
      %5231 = vmatprep.mubr.f32.mxu0 0.0
      %5232 = vmatmul.mubr.f32.gmra.mrb[0].mxu0 %v5038
      %v5233 = vpop.f32.mrb[0].mxu0
      %v5234 = vadd.f32 0.0, %v5233
      %v5235 = vpop.f32.mrb[0].mxu0
      %5236 = vmatprep.mubr.f32.mxu0 0.0
      %5237 = vmatmul.mubr.f32.gmra.mrb[0].mxu0 %v5041
      %v5238 = vpop.f32.mrb[0].mxu0
      %v5239 = vadd.f32 0.0, %v5238
      %v5240 = vpop.f32.mrb[0].mxu0
      %5241 = vmatprep.mubr.f32.mxu0 0.0
      %5242 = vmatmul.mubr.f32.gmra.mrb[0].mxu0 %v5044
      %v5243 = vpop.f32.mrb[0].mxu0
      %v5244 = vadd.f32 0.0, %v5243
      %v5245 = vpop.f32.mrb[0].mxu0
      %5246 = vmatprep.mubr.f32.mxu0 0.0
      %5247 = vmatmul.mubr.f32.gmra.mrb[0].mxu0 %v5047
      %v5248 = vpop.f32.mrb[0].mxu0
      %v5249 = vadd.f32 0.0, %v5248
      %v5250 = vpop.f32.mrb[0].mxu0
      %5251 = vmatprep.mubr.f32.mxu0 0.0
      %5252 = vmatmul.mubr.f32.gmra.mrb[0].mxu0 %v5050
      %v5253 = vpop.f32.mrb[0].mxu0
      %v5254 = vadd.f32 0.0, %v5253
      %v5255 = vpop.f32.mrb[0].mxu0
      %5256 = vmatprep.mubr.f32.mxu0 0.0
      %5257 = vmatmul.mubr.f32.gmra.mrb[0].mxu0 %v5053
      %v5258 = vpop.f32.mrb[0].mxu0
      %v5259 = vadd.f32 0.0, %v5258
      %v5260 = vpop.f32.mrb[0].mxu0
      %5261 = vmatprep.mubr.f32.mxu0 0.0
      %5262 = vmatmul.mubr.f32.gmra.mrb[0].mxu0 %v5056
      %v5263 = vpop.f32.mrb[0].mxu0
      %v5264 = vadd.f32 0.0, %v5263
      %v5265 = vpop.f32.mrb[0].mxu0
      %5266 = vmatprep.mubr.f32.mxu0 0.0
      %5267 = vmatmul.mubr.f32.gmra.mrb[0].mxu0 %v5059
      %v5268 = vpop.f32.mrb[0].mxu0
      %v5269 = vadd.f32 0.0, %v5268
      %v5270 = vpop.f32.mrb[0].mxu0
      %5271 = vmatprep.mubr.f32.mxu0 0.0
      %5272 = vmatmul.mubr.f32.gmra.mrb[0].mxu0 %v5062
      %v5273 = vpop.f32.mrb[0].mxu0
      %v5274 = vadd.f32 0.0, %v5273
      %v5275 = vpop.f32.mrb[0].mxu0
      %5276 = vmatprep.mubr.f32.mxu0 0.0
      %5277 = vmatmul.mubr.f32.gmra.mrb[0].mxu0 %v5065
      %v5278 = vpop.f32.mrb[0].mxu0
      %v5279 = vadd.f32 0.0, %v5278
      %v5280 = vpop.f32.mrb[0].mxu0
      %5281 = vmatprep.mubr.f32.mxu0 0.0
      %5282 = vmatmul.mubr.f32.gmra.mrb[0].mxu0 %v5068
      %v5283 = vpop.f32.mrb[0].mxu0
      %v5284 = vadd.f32 0.0, %v5283
      %v5285 = vpop.f32.mrb[0].mxu0
      %5286 = vmatprep.mubr.f32.mxu0 0.0
      %5287 = vmatmul.mubr.f32.gmra.mrb[0].mxu0 %v5071
      %v5288 = vpop.f32.mrb[0].mxu0
      %v5289 = vadd.f32 0.0, %v5288
      %v5290 = vpop.f32.mrb[0].mxu0
      %5291 = vmatprep.mubr.f32.mxu0 0.0
      %5292 = vmatmul.mubr.f32.gmra.mrb[0].mxu0 %v5074
      %v5293 = vpop.f32.mrb[0].mxu0
      %v5294 = vadd.f32 0.0, %v5293
      %v5295 = vpop.f32.mrb[0].mxu0
      %5296 = vmatprep.mubr.f32.mxu0 0.0
      %5297 = vmatmul.mubr.f32.gmra.mrb[0].mxu0 %v5077
      %v5298 = vpop.f32.mrb[0].mxu0
      %v5299 = vadd.f32 0.0, %v5298
      %v5300 = vpop.f32.mrb[0].mxu0
      %5301 = vmatprep.mubr.f32.mxu0 0.0
      %5302 = vmatmul.mubr.f32.gmra.mrb[0].mxu0 %v5080
      %v5303 = vpop.f32.mrb[0].mxu0
      %v5304 = vadd.f32 0.0, %v5303
      %v5305 = vpop.f32.mrb[0].mxu0
      %5306 = vdwg.mxu0
      %v5307 = vadd.f32 %v4952, %v5149
      %v5308 = vadd.f32 %v4953, %v5154
      %v5309 = vadd.f32 %v4954, %v5159
      %v5310 = vadd.f32 %v4955, %v5164
      %v5311 = vadd.f32 %v4956, %v5169
      %v5312 = vadd.f32 %v4957, %v5174
      %v5313 = vadd.f32 %v4958, %v5179
      %v5314 = vadd.f32 %v4959, %v5184
      %v5315 = vadd.f32 %v4960, %v5189
      %v5316 = vadd.f32 %v4961, %v5194
      %v5317 = vadd.f32 %v4962, %v5199
      %v5318 = vadd.f32 %v4963, %v5204
      %v5319 = vadd.f32 %v4964, %v5209
      %v5320 = vadd.f32 %v4965, %v5214
      %v5321 = vadd.f32 %v4966, %v5219
      %v5322 = vadd.f32 %v4967, %v5224
      %v5323 = vadd.f32 %v4968, %v5229
      %v5324 = vadd.f32 %v4969, %v5234
      %v5325 = vadd.f32 %v4970, %v5239
      %v5326 = vadd.f32 %v4971, %v5244
      %v5327 = vadd.f32 %v4972, %v5249
      %v5328 = vadd.f32 %v4973, %v5254
      %v5329 = vadd.f32 %v4974, %v5259
      %v5330 = vadd.f32 %v4975, %v5264
      %v5331 = vadd.f32 %v4976, %v5269
      %v5332 = vadd.f32 %v4977, %v5274
      %v5333 = vadd.f32 %v4978, %v5279
      %v5334 = vadd.f32 %v4979, %v5284
      %v5335 = vadd.f32 %v4980, %v5289
      %v5336 = vadd.f32 %v4981, %v5294
      %v5337 = vadd.f32 %v4982, %v5299
      %v5338 = vadd.f32 %v4983, %v5304
      %v5339 = vld [vmem:[#allocation2 + $0x2] sm:$0xff]
      %v5340 = vld [vmem:[#allocation2 + $0xa] sm:$0xff]
      %v5341 = vld [vmem:[#allocation2 + $0x1a] sm:$0xff]
      %v5342 = vld [vmem:[#allocation2 + $0x22] sm:$0xff]
      %v5343 = vld [vmem:[#allocation2 + $0x32] sm:$0xff]
      %v5344 = vld [vmem:[#allocation2 + $0x3a] sm:$0xff]
      %v5345 = vld [vmem:[#allocation2 + $0x4a] sm:$0xff]
      %v5346 = vld [vmem:[#allocation2 + $0x52] sm:$0xff]
      %v5347 = vld [vmem:[#allocation2 + $0x62] sm:$0xff]
      %v5348 = vld [vmem:[#allocation2 + $0x6a] sm:$0xff]
      %v5349 = vld [vmem:[#allocation2 + $0x7a] sm:$0xff]
      %v5350 = vld [vmem:[#allocation2 + $0x82] sm:$0xff]
      %v5351 = vld [vmem:[#allocation2 + $0x92] sm:$0xff]
      %v5352 = vld [vmem:[#allocation2 + $0x9a] sm:$0xff]
      %v5353 = vld [vmem:[#allocation2 + $0xaa] sm:$0xff]
      %v5354 = vld [vmem:[#allocation2 + $0xb2] sm:$0xff]
      %v5355 = vld [vmem:[#allocation2 + $0xc2] sm:$0xff]
      %v5356 = vld [vmem:[#allocation2 + $0xca] sm:$0xff]
      %v5357 = vld [vmem:[#allocation2 + $0xda] sm:$0xff]
      %v5358 = vld [vmem:[#allocation2 + $0xe2] sm:$0xff]
      %v5359 = vld [vmem:[#allocation2 + $0xf2] sm:$0xff]
      %v5360 = vld [vmem:[#allocation2 + $0xfa] sm:$0xff]
      %v5361 = vld [vmem:[#allocation2 + $0x10a] sm:$0xff]
      %v5362 = vld [vmem:[#allocation2 + $0x112] sm:$0xff]
      %v5363 = vld [vmem:[#allocation2 + $0x122] sm:$0xff]
      %v5364 = vld [vmem:[#allocation2 + $0x12a] sm:$0xff]
      %v5365 = vld [vmem:[#allocation2 + $0x13a] sm:$0xff]
      %v5366 = vld [vmem:[#allocation2 + $0x142] sm:$0xff]
      %v5367 = vld [vmem:[#allocation2 + $0x152] sm:$0xff]
      %v5368 = vld [vmem:[#allocation2 + $0x15a] sm:$0xff]
      %v5369 = vld [vmem:[#allocation2 + $0x16a] sm:$0xff]
      %v5370 = vld [vmem:[#allocation2 + $0x172] sm:$0xff]
      %v5371 = vld [vmem:[%s293 + $0x2] sm:$0xff]
      %v5372 = vld [vmem:[%s293 + $0xa] sm:$0xff]
      %v5373 = vld [vmem:[%s293 + $0x1a] sm:$0xff]
      %v5374 = vld [vmem:[%s293 + $0x22] sm:$0xff]
      %v5375 = vld [vmem:[%s293 + $0x32] sm:$0xff]
      %v5376 = vld [vmem:[%s293 + $0x3a] sm:$0xff]
      %v5377 = vld [vmem:[%s293 + $0x4a] sm:$0xff]
      %v5378 = vld [vmem:[%s293 + $0x52] sm:$0xff]
      %v5379 = vld [vmem:[%s293 + $0x62] sm:$0xff]
      %v5380 = vld [vmem:[%s293 + $0x6a] sm:$0xff]
      %v5381 = vld [vmem:[%s293 + $0x7a] sm:$0xff]
      %v5382 = vld [vmem:[%s293 + $0x82] sm:$0xff]
      %v5383 = vld [vmem:[%s293 + $0x92] sm:$0xff]
      %v5384 = vld [vmem:[%s293 + $0x9a] sm:$0xff]
      %v5385 = vld [vmem:[%s293 + $0xaa] sm:$0xff]
      %v5386 = vld [vmem:[%s293 + $0xb2] sm:$0xff]
      %v5387 = vld [vmem:[%s293 + $0xc2] sm:$0xff]
      %v5388 = vld [vmem:[%s293 + $0xca] sm:$0xff]
      %v5389 = vld [vmem:[%s293 + $0xda] sm:$0xff]
      %v5390 = vld [vmem:[%s293 + $0xe2] sm:$0xff]
      %v5391 = vld [vmem:[%s293 + $0xf2] sm:$0xff]
      %v5392 = vld [vmem:[%s293 + $0xfa] sm:$0xff]
      %v5393 = vld [vmem:[%s293 + $0x10a] sm:$0xff]
      %v5394 = vld [vmem:[%s293 + $0x112] sm:$0xff]
      %v5395 = vld [vmem:[%s293 + $0x122] sm:$0xff]
      %v5396 = vld [vmem:[%s293 + $0x12a] sm:$0xff]
      %v5397 = vld [vmem:[%s293 + $0x13a] sm:$0xff]
      %v5398 = vld [vmem:[%s293 + $0x142] sm:$0xff]
      %v5399 = vld [vmem:[%s293 + $0x152] sm:$0xff]
      %v5400 = vld [vmem:[%s293 + $0x15a] sm:$0xff]
      %v5401 = vld [vmem:[%s293 + $0x16a] sm:$0xff]
      %v5402 = vld [vmem:[%s293 + $0x172] sm:$0xff]
      %s5403 = scalar_lea.vmem %s4, 16
      %v5404 = vld [vmem:[%s5403] sm:$0xff]
      %v5406 = vsel %vm3768, %v5339, 0
      %v5409 = vsel %vm3768, %v5340, 0
      %v5412 = vsel %vm3768, %v5341, 0
      %v5415 = vsel %vm3768, %v5342, 0
      %v5418 = vsel %vm3768, %v5343, 0
      %v5421 = vsel %vm3768, %v5344, 0
      %v5424 = vsel %vm3768, %v5345, 0
      %v5427 = vsel %vm3768, %v5346, 0
      %v5430 = vsel %vm3768, %v5347, 0
      %v5433 = vsel %vm3768, %v5348, 0
      %v5436 = vsel %vm3768, %v5349, 0
      %v5439 = vsel %vm3768, %v5350, 0
      %v5442 = vsel %vm3768, %v5351, 0
      %v5445 = vsel %vm3768, %v5352, 0
      %v5448 = vsel %vm3768, %v5353, 0
      %v5451 = vsel %vm3768, %v5354, 0
      %v5454 = vsel %vm3768, %v5355, 0
      %v5457 = vsel %vm3768, %v5356, 0
      %v5460 = vsel %vm3768, %v5357, 0
      %v5463 = vsel %vm3768, %v5358, 0
      %v5466 = vsel %vm3768, %v5359, 0
      %v5469 = vsel %vm3768, %v5360, 0
      %v5472 = vsel %vm3768, %v5361, 0
      %v5475 = vsel %vm3768, %v5362, 0
      %v5478 = vsel %vm3768, %v5363, 0
      %v5481 = vsel %vm3768, %v5364, 0
      %v5484 = vsel %vm3768, %v5365, 0
      %v5487 = vsel %vm3768, %v5366, 0
      %v5490 = vsel %vm3768, %v5367, 0
      %v5493 = vsel %vm3768, %v5368, 0
      %v5496 = vsel %vm3768, %v5369, 0
      %v5499 = vsel %vm3768, %v5370, 0
      %5501 = vmatprep.subr.mxu0 0.0
      %5502 = vmatpush1.msra.mxu0 %v5404
      %5503 = vmatprep.subr.mxu0 0.0
      %5504 = vmatpush1.msra.mxu0 0.0
      %5505 = vmatprep.subr.mxu0 0.0
      %5506 = vmatpush1.msra.mxu0 0.0
      %5507 = vmatprep.subr.mxu0 0.0
      %5508 = vmatpush1.msra.mxu0 0.0
      %5509 = vmatprep.subr.mxu0 0.0
      %5510 = vmatpush1.msra.mxu0 0.0
      %5511 = vmatprep.subr.mxu0 0.0
      %5512 = vmatpush1.msra.mxu0 0.0
      %5513 = vmatprep.subr.mxu0 0.0
      %5514 = vmatpush1.msra.mxu0 0.0
      %5515 = vmatprep.subr.mxu0 0.0
      %5516 = vmatpush1.msra.mxu0 0.0
      %5517 = vmatprep.subr.mxu0 0.0
      %5518 = vmatpush1.msra.mxu0 0.0
      %5519 = vmatprep.subr.mxu0 0.0
      %5520 = vmatpush1.msra.mxu0 0.0
      %5521 = vmatprep.subr.mxu0 0.0
      %5522 = vmatpush1.msra.mxu0 0.0
      %5523 = vmatprep.subr.mxu0 0.0
      %5524 = vmatpush1.msra.mxu0 0.0
      %5525 = vmatprep.subr.mxu0 0.0
      %5526 = vmatpush1.msra.mxu0 0.0
      %5527 = vmatprep.subr.mxu0 0.0
      %5528 = vmatpush1.msra.mxu0 0.0
      %5529 = vmatprep.subr.mxu0 0.0
      %5530 = vmatpush1.msra.mxu0 0.0
      %5531 = vmatprep.subr.mxu0 0.0
      %5532 = vmatpush1.msra.mxu0 0.0
      %5533 = vmatprep.subr.mxu0 0.0
      %5534 = vmatpush1.msra.mxu0 0.0
      %5535 = vmatprep.subr.mxu0 0.0
      %5536 = vmatpush1.msra.mxu0 0.0
      %5537 = vmatprep.subr.mxu0 0.0
      %5538 = vmatpush1.msra.mxu0 0.0
      %5539 = vmatprep.subr.mxu0 0.0
      %5540 = vmatpush1.msra.mxu0 0.0
      %5541 = vmatprep.subr.mxu0 0.0
      %5542 = vmatpush1.msra.mxu0 0.0
      %5543 = vmatprep.subr.mxu0 0.0
      %5544 = vmatpush1.msra.mxu0 0.0
      %5545 = vmatprep.subr.mxu0 0.0
      %5546 = vmatpush1.msra.mxu0 0.0
      %5547 = vmatprep.subr.mxu0 0.0
      %5548 = vmatpush1.msra.mxu0 0.0
      %5549 = vmatprep.subr.mxu0 0.0
      %5550 = vmatpush1.msra.mxu0 0.0
      %5551 = vmatprep.subr.mxu0 0.0
      %5552 = vmatpush1.msra.mxu0 0.0
      %5553 = vmatprep.subr.mxu0 0.0
      %5554 = vmatpush1.msra.mxu0 0.0
      %5555 = vmatprep.subr.mxu0 0.0
      %5556 = vmatpush1.msra.mxu0 0.0
      %5557 = vmatprep.subr.mxu0 0.0
      %5558 = vmatpush1.msra.mxu0 0.0
      %5559 = vmatprep.subr.mxu0 0.0
      %5560 = vmatpush1.msra.mxu0 0.0
      %5561 = vmatprep.subr.mxu0 0.0
      %5562 = vmatpush1.msra.mxu0 0.0
      %5563 = vmatprep.subr.mxu0 0.0
      %5564 = vmatpush1.msra.mxu0 0.0
      %5565 = vmatprep.mubr.f32.mxu0 0.0
      %5566 = vmatmul.mubr.f32.gmra.mrb[0].mxu0 %v5406
      %v5567 = vpop.f32.mrb[0].mxu0
      %v5568 = vadd.f32 0.0, %v5567
      %v5569 = vpop.f32.mrb[0].mxu0
      %5570 = vmatprep.mubr.f32.mxu0 0.0
      %5571 = vmatmul.mubr.f32.gmra.mrb[0].mxu0 %v5409
      %v5572 = vpop.f32.mrb[0].mxu0
      %v5573 = vadd.f32 0.0, %v5572
      %v5574 = vpop.f32.mrb[0].mxu0
      %5575 = vmatprep.mubr.f32.mxu0 0.0
      %5576 = vmatmul.mubr.f32.gmra.mrb[0].mxu0 %v5412
      %v5577 = vpop.f32.mrb[0].mxu0
      %v5578 = vadd.f32 0.0, %v5577
      %v5579 = vpop.f32.mrb[0].mxu0
      %5580 = vmatprep.mubr.f32.mxu0 0.0
      %5581 = vmatmul.mubr.f32.gmra.mrb[0].mxu0 %v5415
      %v5582 = vpop.f32.mrb[0].mxu0
      %v5583 = vadd.f32 0.0, %v5582
      %v5584 = vpop.f32.mrb[0].mxu0
      %5585 = vmatprep.mubr.f32.mxu0 0.0
      %5586 = vmatmul.mubr.f32.gmra.mrb[0].mxu0 %v5418
      %v5587 = vpop.f32.mrb[0].mxu0
      %v5588 = vadd.f32 0.0, %v5587
      %v5589 = vpop.f32.mrb[0].mxu0
      %5590 = vmatprep.mubr.f32.mxu0 0.0
      %5591 = vmatmul.mubr.f32.gmra.mrb[0].mxu0 %v5421
      %v5592 = vpop.f32.mrb[0].mxu0
      %v5593 = vadd.f32 0.0, %v5592
      %v5594 = vpop.f32.mrb[0].mxu0
      %5595 = vmatprep.mubr.f32.mxu0 0.0
      %5596 = vmatmul.mubr.f32.gmra.mrb[0].mxu0 %v5424
      %v5597 = vpop.f32.mrb[0].mxu0
      %v5598 = vadd.f32 0.0, %v5597
      %v5599 = vpop.f32.mrb[0].mxu0
      %5600 = vmatprep.mubr.f32.mxu0 0.0
      %5601 = vmatmul.mubr.f32.gmra.mrb[0].mxu0 %v5427
      %v5602 = vpop.f32.mrb[0].mxu0
      %v5603 = vadd.f32 0.0, %v5602
      %v5604 = vpop.f32.mrb[0].mxu0
      %5605 = vmatprep.mubr.f32.mxu0 0.0
      %5606 = vmatmul.mubr.f32.gmra.mrb[0].mxu0 %v5430
      %v5607 = vpop.f32.mrb[0].mxu0
      %v5608 = vadd.f32 0.0, %v5607
      %v5609 = vpop.f32.mrb[0].mxu0
      %5610 = vmatprep.mubr.f32.mxu0 0.0
      %5611 = vmatmul.mubr.f32.gmra.mrb[0].mxu0 %v5433
      %v5612 = vpop.f32.mrb[0].mxu0
      %v5613 = vadd.f32 0.0, %v5612
      %v5614 = vpop.f32.mrb[0].mxu0
      %5615 = vmatprep.mubr.f32.mxu0 0.0
      %5616 = vmatmul.mubr.f32.gmra.mrb[0].mxu0 %v5436
      %v5617 = vpop.f32.mrb[0].mxu0
      %v5618 = vadd.f32 0.0, %v5617
      %v5619 = vpop.f32.mrb[0].mxu0
      %5620 = vmatprep.mubr.f32.mxu0 0.0
      %5621 = vmatmul.mubr.f32.gmra.mrb[0].mxu0 %v5439
      %v5622 = vpop.f32.mrb[0].mxu0
      %v5623 = vadd.f32 0.0, %v5622
      %v5624 = vpop.f32.mrb[0].mxu0
      %5625 = vmatprep.mubr.f32.mxu0 0.0
      %5626 = vmatmul.mubr.f32.gmra.mrb[0].mxu0 %v5442
      %v5627 = vpop.f32.mrb[0].mxu0
      %v5628 = vadd.f32 0.0, %v5627
      %v5629 = vpop.f32.mrb[0].mxu0
      %5630 = vmatprep.mubr.f32.mxu0 0.0
      %5631 = vmatmul.mubr.f32.gmra.mrb[0].mxu0 %v5445
      %v5632 = vpop.f32.mrb[0].mxu0
      %v5633 = vadd.f32 0.0, %v5632
      %v5634 = vpop.f32.mrb[0].mxu0
      %5635 = vmatprep.mubr.f32.mxu0 0.0
      %5636 = vmatmul.mubr.f32.gmra.mrb[0].mxu0 %v5448
      %v5637 = vpop.f32.mrb[0].mxu0
      %v5638 = vadd.f32 0.0, %v5637
      %v5639 = vpop.f32.mrb[0].mxu0
      %5640 = vmatprep.mubr.f32.mxu0 0.0
      %5641 = vmatmul.mubr.f32.gmra.mrb[0].mxu0 %v5451
      %v5642 = vpop.f32.mrb[0].mxu0
      %v5643 = vadd.f32 0.0, %v5642
      %v5644 = vpop.f32.mrb[0].mxu0
      %5645 = vmatprep.mubr.f32.mxu0 0.0
      %5646 = vmatmul.mubr.f32.gmra.mrb[0].mxu0 %v5454
      %v5647 = vpop.f32.mrb[0].mxu0
      %v5648 = vadd.f32 0.0, %v5647
      %v5649 = vpop.f32.mrb[0].mxu0
      %5650 = vmatprep.mubr.f32.mxu0 0.0
      %5651 = vmatmul.mubr.f32.gmra.mrb[0].mxu0 %v5457
      %v5652 = vpop.f32.mrb[0].mxu0
      %v5653 = vadd.f32 0.0, %v5652
      %v5654 = vpop.f32.mrb[0].mxu0
      %5655 = vmatprep.mubr.f32.mxu0 0.0
      %5656 = vmatmul.mubr.f32.gmra.mrb[0].mxu0 %v5460
      %v5657 = vpop.f32.mrb[0].mxu0
      %v5658 = vadd.f32 0.0, %v5657
      %v5659 = vpop.f32.mrb[0].mxu0
      %5660 = vmatprep.mubr.f32.mxu0 0.0
      %5661 = vmatmul.mubr.f32.gmra.mrb[0].mxu0 %v5463
      %v5662 = vpop.f32.mrb[0].mxu0
      %v5663 = vadd.f32 0.0, %v5662
      %v5664 = vpop.f32.mrb[0].mxu0
      %5665 = vmatprep.mubr.f32.mxu0 0.0
      %5666 = vmatmul.mubr.f32.gmra.mrb[0].mxu0 %v5466
      %v5667 = vpop.f32.mrb[0].mxu0
      %v5668 = vadd.f32 0.0, %v5667
      %v5669 = vpop.f32.mrb[0].mxu0
      %5670 = vmatprep.mubr.f32.mxu0 0.0
      %5671 = vmatmul.mubr.f32.gmra.mrb[0].mxu0 %v5469
      %v5672 = vpop.f32.mrb[0].mxu0
      %v5673 = vadd.f32 0.0, %v5672
      %v5674 = vpop.f32.mrb[0].mxu0
      %5675 = vmatprep.mubr.f32.mxu0 0.0
      %5676 = vmatmul.mubr.f32.gmra.mrb[0].mxu0 %v5472
      %v5677 = vpop.f32.mrb[0].mxu0
      %v5678 = vadd.f32 0.0, %v5677
      %v5679 = vpop.f32.mrb[0].mxu0
      %5680 = vmatprep.mubr.f32.mxu0 0.0
      %5681 = vmatmul.mubr.f32.gmra.mrb[0].mxu0 %v5475
      %v5682 = vpop.f32.mrb[0].mxu0
      %v5683 = vadd.f32 0.0, %v5682
      %v5684 = vpop.f32.mrb[0].mxu0
      %5685 = vmatprep.mubr.f32.mxu0 0.0
      %5686 = vmatmul.mubr.f32.gmra.mrb[0].mxu0 %v5478
      %v5687 = vpop.f32.mrb[0].mxu0
      %v5688 = vadd.f32 0.0, %v5687
      %v5689 = vpop.f32.mrb[0].mxu0
      %5690 = vmatprep.mubr.f32.mxu0 0.0
      %5691 = vmatmul.mubr.f32.gmra.mrb[0].mxu0 %v5481
      %v5692 = vpop.f32.mrb[0].mxu0
      %v5693 = vadd.f32 0.0, %v5692
      %v5694 = vpop.f32.mrb[0].mxu0
      %5695 = vmatprep.mubr.f32.mxu0 0.0
      %5696 = vmatmul.mubr.f32.gmra.mrb[0].mxu0 %v5484
      %v5697 = vpop.f32.mrb[0].mxu0
      %v5698 = vadd.f32 0.0, %v5697
      %v5699 = vpop.f32.mrb[0].mxu0
      %5700 = vmatprep.mubr.f32.mxu0 0.0
      %5701 = vmatmul.mubr.f32.gmra.mrb[0].mxu0 %v5487
      %v5702 = vpop.f32.mrb[0].mxu0
      %v5703 = vadd.f32 0.0, %v5702
      %v5704 = vpop.f32.mrb[0].mxu0
      %5705 = vmatprep.mubr.f32.mxu0 0.0
      %5706 = vmatmul.mubr.f32.gmra.mrb[0].mxu0 %v5490
      %v5707 = vpop.f32.mrb[0].mxu0
      %v5708 = vadd.f32 0.0, %v5707
      %v5709 = vpop.f32.mrb[0].mxu0
      %5710 = vmatprep.mubr.f32.mxu0 0.0
      %5711 = vmatmul.mubr.f32.gmra.mrb[0].mxu0 %v5493
      %v5712 = vpop.f32.mrb[0].mxu0
      %v5713 = vadd.f32 0.0, %v5712
      %v5714 = vpop.f32.mrb[0].mxu0
      %5715 = vmatprep.mubr.f32.mxu0 0.0
      %5716 = vmatmul.mubr.f32.gmra.mrb[0].mxu0 %v5496
      %v5717 = vpop.f32.mrb[0].mxu0
      %v5718 = vadd.f32 0.0, %v5717
      %v5719 = vpop.f32.mrb[0].mxu0
      %5720 = vmatprep.mubr.f32.mxu0 0.0
      %5721 = vmatmul.mubr.f32.gmra.mrb[0].mxu0 %v5499
      %v5722 = vpop.f32.mrb[0].mxu0
      %v5723 = vadd.f32 0.0, %v5722
      %v5724 = vpop.f32.mrb[0].mxu0
      %5725 = vdwg.mxu0
      %v5726 = vadd.f32 %v5307, %v5568
      %v5727 = vadd.f32 %v5308, %v5573
      %v5728 = vadd.f32 %v5309, %v5578
      %v5729 = vadd.f32 %v5310, %v5583
      %v5730 = vadd.f32 %v5311, %v5588
      %v5731 = vadd.f32 %v5312, %v5593
      %v5732 = vadd.f32 %v5313, %v5598
      %v5733 = vadd.f32 %v5314, %v5603
      %v5734 = vadd.f32 %v5315, %v5608
      %v5735 = vadd.f32 %v5316, %v5613
      %v5736 = vadd.f32 %v5317, %v5618
      %v5737 = vadd.f32 %v5318, %v5623
      %v5738 = vadd.f32 %v5319, %v5628
      %v5739 = vadd.f32 %v5320, %v5633
      %v5740 = vadd.f32 %v5321, %v5638
      %v5741 = vadd.f32 %v5322, %v5643
      %v5742 = vadd.f32 %v5323, %v5648
      %v5743 = vadd.f32 %v5324, %v5653
      %v5744 = vadd.f32 %v5325, %v5658
      %v5745 = vadd.f32 %v5326, %v5663
      %v5746 = vadd.f32 %v5327, %v5668
      %v5747 = vadd.f32 %v5328, %v5673
      %v5748 = vadd.f32 %v5329, %v5678
      %v5749 = vadd.f32 %v5330, %v5683
      %v5750 = vadd.f32 %v5331, %v5688
      %v5751 = vadd.f32 %v5332, %v5693
      %v5752 = vadd.f32 %v5333, %v5698
      %v5753 = vadd.f32 %v5334, %v5703
      %v5754 = vadd.f32 %v5335, %v5708
      %v5755 = vadd.f32 %v5336, %v5713
      %v5756 = vadd.f32 %v5337, %v5718
      %v5757 = vadd.f32 %v5338, %v5723
      %s5758 = scalar_lea.vmem %s5, 16
      %v5759 = vld [vmem:[%s5758] sm:$0xff]
      %v5761 = vsel %vm3768, %v5371, 0
      %v5764 = vsel %vm3768, %v5372, 0
      %v5767 = vsel %vm3768, %v5373, 0
      %v5770 = vsel %vm3768, %v5374, 0
      %v5773 = vsel %vm3768, %v5375, 0
      %v5776 = vsel %vm3768, %v5376, 0
      %v5779 = vsel %vm3768, %v5377, 0
      %v5782 = vsel %vm3768, %v5378, 0
      %v5785 = vsel %vm3768, %v5379, 0
      %v5788 = vsel %vm3768, %v5380, 0
      %v5791 = vsel %vm3768, %v5381, 0
      %v5794 = vsel %vm3768, %v5382, 0
      %v5797 = vsel %vm3768, %v5383, 0
      %v5800 = vsel %vm3768, %v5384, 0
      %v5803 = vsel %vm3768, %v5385, 0
      %v5806 = vsel %vm3768, %v5386, 0
      %v5809 = vsel %vm3768, %v5387, 0
      %v5812 = vsel %vm3768, %v5388, 0
      %v5815 = vsel %vm3768, %v5389, 0
      %v5818 = vsel %vm3768, %v5390, 0
      %v5821 = vsel %vm3768, %v5391, 0
      %v5824 = vsel %vm3768, %v5392, 0
      %v5827 = vsel %vm3768, %v5393, 0
      %v5830 = vsel %vm3768, %v5394, 0
      %v5833 = vsel %vm3768, %v5395, 0
      %v5836 = vsel %vm3768, %v5396, 0
      %v5839 = vsel %vm3768, %v5397, 0
      %v5842 = vsel %vm3768, %v5398, 0
      %v5845 = vsel %vm3768, %v5399, 0
      %v5848 = vsel %vm3768, %v5400, 0
      %v5851 = vsel %vm3768, %v5401, 0
      %v5854 = vsel %vm3768, %v5402, 0
      %5856 = vmatprep.subr.mxu0 0.0
      %5857 = vmatpush1.msra.mxu0 %v5759
      %5858 = vmatprep.subr.mxu0 0.0
      %5859 = vmatpush1.msra.mxu0 0.0
      %5860 = vmatprep.subr.mxu0 0.0
      %5861 = vmatpush1.msra.mxu0 0.0
      %5862 = vmatprep.subr.mxu0 0.0
      %5863 = vmatpush1.msra.mxu0 0.0
      %5864 = vmatprep.subr.mxu0 0.0
      %5865 = vmatpush1.msra.mxu0 0.0
      %5866 = vmatprep.subr.mxu0 0.0
      %5867 = vmatpush1.msra.mxu0 0.0
      %5868 = vmatprep.subr.mxu0 0.0
      %5869 = vmatpush1.msra.mxu0 0.0
      %5870 = vmatprep.subr.mxu0 0.0
      %5871 = vmatpush1.msra.mxu0 0.0
      %5872 = vmatprep.subr.mxu0 0.0
      %5873 = vmatpush1.msra.mxu0 0.0
      %5874 = vmatprep.subr.mxu0 0.0
      %5875 = vmatpush1.msra.mxu0 0.0
      %5876 = vmatprep.subr.mxu0 0.0
      %5877 = vmatpush1.msra.mxu0 0.0
      %5878 = vmatprep.subr.mxu0 0.0
      %5879 = vmatpush1.msra.mxu0 0.0
      %5880 = vmatprep.subr.mxu0 0.0
      %5881 = vmatpush1.msra.mxu0 0.0
      %5882 = vmatprep.subr.mxu0 0.0
      %5883 = vmatpush1.msra.mxu0 0.0
      %5884 = vmatprep.subr.mxu0 0.0
      %5885 = vmatpush1.msra.mxu0 0.0
      %5886 = vmatprep.subr.mxu0 0.0
      %5887 = vmatpush1.msra.mxu0 0.0
      %5888 = vmatprep.subr.mxu0 0.0
      %5889 = vmatpush1.msra.mxu0 0.0
      %5890 = vmatprep.subr.mxu0 0.0
      %5891 = vmatpush1.msra.mxu0 0.0
      %5892 = vmatprep.subr.mxu0 0.0
      %5893 = vmatpush1.msra.mxu0 0.0
      %5894 = vmatprep.subr.mxu0 0.0
      %5895 = vmatpush1.msra.mxu0 0.0
      %5896 = vmatprep.subr.mxu0 0.0
      %5897 = vmatpush1.msra.mxu0 0.0
      %5898 = vmatprep.subr.mxu0 0.0
      %5899 = vmatpush1.msra.mxu0 0.0
      %5900 = vmatprep.subr.mxu0 0.0
      %5901 = vmatpush1.msra.mxu0 0.0
      %5902 = vmatprep.subr.mxu0 0.0
      %5903 = vmatpush1.msra.mxu0 0.0
      %5904 = vmatprep.subr.mxu0 0.0
      %5905 = vmatpush1.msra.mxu0 0.0
      %5906 = vmatprep.subr.mxu0 0.0
      %5907 = vmatpush1.msra.mxu0 0.0
      %5908 = vmatprep.subr.mxu0 0.0
      %5909 = vmatpush1.msra.mxu0 0.0
      %5910 = vmatprep.subr.mxu0 0.0
      %5911 = vmatpush1.msra.mxu0 0.0
      %5912 = vmatprep.subr.mxu0 0.0
      %5913 = vmatpush1.msra.mxu0 0.0
      %5914 = vmatprep.subr.mxu0 0.0
      %5915 = vmatpush1.msra.mxu0 0.0
      %5916 = vmatprep.subr.mxu0 0.0
      %5917 = vmatpush1.msra.mxu0 0.0
      %5918 = vmatprep.subr.mxu0 0.0
      %5919 = vmatpush1.msra.mxu0 0.0
      %5920 = vmatprep.mubr.f32.mxu0 0.0
      %5921 = vmatmul.mubr.f32.gmra.mrb[0].mxu0 %v5761
      %v5922 = vpop.f32.mrb[0].mxu0
      %v5923 = vadd.f32 0.0, %v5922
      %v5924 = vpop.f32.mrb[0].mxu0
      %5925 = vmatprep.mubr.f32.mxu0 0.0
      %5926 = vmatmul.mubr.f32.gmra.mrb[0].mxu0 %v5764
      %v5927 = vpop.f32.mrb[0].mxu0
      %v5928 = vadd.f32 0.0, %v5927
      %v5929 = vpop.f32.mrb[0].mxu0
      %5930 = vmatprep.mubr.f32.mxu0 0.0
      %5931 = vmatmul.mubr.f32.gmra.mrb[0].mxu0 %v5767
      %v5932 = vpop.f32.mrb[0].mxu0
      %v5933 = vadd.f32 0.0, %v5932
      %v5934 = vpop.f32.mrb[0].mxu0
      %5935 = vmatprep.mubr.f32.mxu0 0.0
      %5936 = vmatmul.mubr.f32.gmra.mrb[0].mxu0 %v5770
      %v5937 = vpop.f32.mrb[0].mxu0
      %v5938 = vadd.f32 0.0, %v5937
      %v5939 = vpop.f32.mrb[0].mxu0
      %5940 = vmatprep.mubr.f32.mxu0 0.0
      %5941 = vmatmul.mubr.f32.gmra.mrb[0].mxu0 %v5773
      %v5942 = vpop.f32.mrb[0].mxu0
      %v5943 = vadd.f32 0.0, %v5942
      %v5944 = vpop.f32.mrb[0].mxu0
      %5945 = vmatprep.mubr.f32.mxu0 0.0
      %5946 = vmatmul.mubr.f32.gmra.mrb[0].mxu0 %v5776
      %v5947 = vpop.f32.mrb[0].mxu0
      %v5948 = vadd.f32 0.0, %v5947
      %v5949 = vpop.f32.mrb[0].mxu0
      %5950 = vmatprep.mubr.f32.mxu0 0.0
      %5951 = vmatmul.mubr.f32.gmra.mrb[0].mxu0 %v5779
      %v5952 = vpop.f32.mrb[0].mxu0
      %v5953 = vadd.f32 0.0, %v5952
      %v5954 = vpop.f32.mrb[0].mxu0
      %5955 = vmatprep.mubr.f32.mxu0 0.0
      %5956 = vmatmul.mubr.f32.gmra.mrb[0].mxu0 %v5782
      %v5957 = vpop.f32.mrb[0].mxu0
      %v5958 = vadd.f32 0.0, %v5957
      %v5959 = vpop.f32.mrb[0].mxu0
      %5960 = vmatprep.mubr.f32.mxu0 0.0
      %5961 = vmatmul.mubr.f32.gmra.mrb[0].mxu0 %v5785
      %v5962 = vpop.f32.mrb[0].mxu0
      %v5963 = vadd.f32 0.0, %v5962
      %v5964 = vpop.f32.mrb[0].mxu0
      %5965 = vmatprep.mubr.f32.mxu0 0.0
      %5966 = vmatmul.mubr.f32.gmra.mrb[0].mxu0 %v5788
      %v5967 = vpop.f32.mrb[0].mxu0
      %v5968 = vadd.f32 0.0, %v5967
      %v5969 = vpop.f32.mrb[0].mxu0
      %5970 = vmatprep.mubr.f32.mxu0 0.0
      %5971 = vmatmul.mubr.f32.gmra.mrb[0].mxu0 %v5791
      %v5972 = vpop.f32.mrb[0].mxu0
      %v5973 = vadd.f32 0.0, %v5972
      %v5974 = vpop.f32.mrb[0].mxu0
      %5975 = vmatprep.mubr.f32.mxu0 0.0
      %5976 = vmatmul.mubr.f32.gmra.mrb[0].mxu0 %v5794
      %v5977 = vpop.f32.mrb[0].mxu0
      %v5978 = vadd.f32 0.0, %v5977
      %v5979 = vpop.f32.mrb[0].mxu0
      %5980 = vmatprep.mubr.f32.mxu0 0.0
      %5981 = vmatmul.mubr.f32.gmra.mrb[0].mxu0 %v5797
      %v5982 = vpop.f32.mrb[0].mxu0
      %v5983 = vadd.f32 0.0, %v5982
      %v5984 = vpop.f32.mrb[0].mxu0
      %5985 = vmatprep.mubr.f32.mxu0 0.0
      %5986 = vmatmul.mubr.f32.gmra.mrb[0].mxu0 %v5800
      %v5987 = vpop.f32.mrb[0].mxu0
      %v5988 = vadd.f32 0.0, %v5987
      %v5989 = vpop.f32.mrb[0].mxu0
      %5990 = vmatprep.mubr.f32.mxu0 0.0
      %5991 = vmatmul.mubr.f32.gmra.mrb[0].mxu0 %v5803
      %v5992 = vpop.f32.mrb[0].mxu0
      %v5993 = vadd.f32 0.0, %v5992
      %v5994 = vpop.f32.mrb[0].mxu0
      %5995 = vmatprep.mubr.f32.mxu0 0.0
      %5996 = vmatmul.mubr.f32.gmra.mrb[0].mxu0 %v5806
      %v5997 = vpop.f32.mrb[0].mxu0
      %v5998 = vadd.f32 0.0, %v5997
      %v5999 = vpop.f32.mrb[0].mxu0
      %6000 = vmatprep.mubr.f32.mxu0 0.0
      %6001 = vmatmul.mubr.f32.gmra.mrb[0].mxu0 %v5809
      %v6002 = vpop.f32.mrb[0].mxu0
      %v6003 = vadd.f32 0.0, %v6002
      %v6004 = vpop.f32.mrb[0].mxu0
      %6005 = vmatprep.mubr.f32.mxu0 0.0
      %6006 = vmatmul.mubr.f32.gmra.mrb[0].mxu0 %v5812
      %v6007 = vpop.f32.mrb[0].mxu0
      %v6008 = vadd.f32 0.0, %v6007
      %v6009 = vpop.f32.mrb[0].mxu0
      %6010 = vmatprep.mubr.f32.mxu0 0.0
      %6011 = vmatmul.mubr.f32.gmra.mrb[0].mxu0 %v5815
      %v6012 = vpop.f32.mrb[0].mxu0
      %v6013 = vadd.f32 0.0, %v6012
      %v6014 = vpop.f32.mrb[0].mxu0
      %6015 = vmatprep.mubr.f32.mxu0 0.0
      %6016 = vmatmul.mubr.f32.gmra.mrb[0].mxu0 %v5818
      %v6017 = vpop.f32.mrb[0].mxu0
      %v6018 = vadd.f32 0.0, %v6017
      %v6019 = vpop.f32.mrb[0].mxu0
      %6020 = vmatprep.mubr.f32.mxu0 0.0
      %6021 = vmatmul.mubr.f32.gmra.mrb[0].mxu0 %v5821
      %v6022 = vpop.f32.mrb[0].mxu0
      %v6023 = vadd.f32 0.0, %v6022
      %v6024 = vpop.f32.mrb[0].mxu0
      %6025 = vmatprep.mubr.f32.mxu0 0.0
      %6026 = vmatmul.mubr.f32.gmra.mrb[0].mxu0 %v5824
      %v6027 = vpop.f32.mrb[0].mxu0
      %v6028 = vadd.f32 0.0, %v6027
      %v6029 = vpop.f32.mrb[0].mxu0
      %6030 = vmatprep.mubr.f32.mxu0 0.0
      %6031 = vmatmul.mubr.f32.gmra.mrb[0].mxu0 %v5827
      %v6032 = vpop.f32.mrb[0].mxu0
      %v6033 = vadd.f32 0.0, %v6032
      %v6034 = vpop.f32.mrb[0].mxu0
      %6035 = vmatprep.mubr.f32.mxu0 0.0
      %6036 = vmatmul.mubr.f32.gmra.mrb[0].mxu0 %v5830
      %v6037 = vpop.f32.mrb[0].mxu0
      %v6038 = vadd.f32 0.0, %v6037
      %v6039 = vpop.f32.mrb[0].mxu0
      %6040 = vmatprep.mubr.f32.mxu0 0.0
      %6041 = vmatmul.mubr.f32.gmra.mrb[0].mxu0 %v5833
      %v6042 = vpop.f32.mrb[0].mxu0
      %v6043 = vadd.f32 0.0, %v6042
      %v6044 = vpop.f32.mrb[0].mxu0
      %6045 = vmatprep.mubr.f32.mxu0 0.0
      %6046 = vmatmul.mubr.f32.gmra.mrb[0].mxu0 %v5836
      %v6047 = vpop.f32.mrb[0].mxu0
      %v6048 = vadd.f32 0.0, %v6047
      %v6049 = vpop.f32.mrb[0].mxu0
      %6050 = vmatprep.mubr.f32.mxu0 0.0
      %6051 = vmatmul.mubr.f32.gmra.mrb[0].mxu0 %v5839
      %v6052 = vpop.f32.mrb[0].mxu0
      %v6053 = vadd.f32 0.0, %v6052
      %v6054 = vpop.f32.mrb[0].mxu0
      %6055 = vmatprep.mubr.f32.mxu0 0.0
      %6056 = vmatmul.mubr.f32.gmra.mrb[0].mxu0 %v5842
      %v6057 = vpop.f32.mrb[0].mxu0
      %v6058 = vadd.f32 0.0, %v6057
      %v6059 = vpop.f32.mrb[0].mxu0
      %6060 = vmatprep.mubr.f32.mxu0 0.0
      %6061 = vmatmul.mubr.f32.gmra.mrb[0].mxu0 %v5845
      %v6062 = vpop.f32.mrb[0].mxu0
      %v6063 = vadd.f32 0.0, %v6062
      %v6064 = vpop.f32.mrb[0].mxu0
      %6065 = vmatprep.mubr.f32.mxu0 0.0
      %6066 = vmatmul.mubr.f32.gmra.mrb[0].mxu0 %v5848
      %v6067 = vpop.f32.mrb[0].mxu0
      %v6068 = vadd.f32 0.0, %v6067
      %v6069 = vpop.f32.mrb[0].mxu0
      %6070 = vmatprep.mubr.f32.mxu0 0.0
      %6071 = vmatmul.mubr.f32.gmra.mrb[0].mxu0 %v5851
      %v6072 = vpop.f32.mrb[0].mxu0
      %v6073 = vadd.f32 0.0, %v6072
      %v6074 = vpop.f32.mrb[0].mxu0
      %6075 = vmatprep.mubr.f32.mxu0 0.0
      %6076 = vmatmul.mubr.f32.gmra.mrb[0].mxu0 %v5854
      %v6077 = vpop.f32.mrb[0].mxu0
      %v6078 = vadd.f32 0.0, %v6077
      %v6079 = vpop.f32.mrb[0].mxu0
      %6080 = vdwg.mxu0
      %v6081 = vadd.f32 %v5726, %v5923
      %v6082 = vadd.f32 %v5727, %v5928
      %v6083 = vadd.f32 %v5728, %v5933
      %v6084 = vadd.f32 %v5729, %v5938
      %v6085 = vadd.f32 %v5730, %v5943
      %v6086 = vadd.f32 %v5731, %v5948
      %v6087 = vadd.f32 %v5732, %v5953
      %v6088 = vadd.f32 %v5733, %v5958
      %v6089 = vadd.f32 %v5734, %v5963
      %v6090 = vadd.f32 %v5735, %v5968
      %v6091 = vadd.f32 %v5736, %v5973
      %v6092 = vadd.f32 %v5737, %v5978
      %v6093 = vadd.f32 %v5738, %v5983
      %v6094 = vadd.f32 %v5739, %v5988
      %v6095 = vadd.f32 %v5740, %v5993
      %v6096 = vadd.f32 %v5741, %v5998
      %v6097 = vadd.f32 %v5742, %v6003
      %v6098 = vadd.f32 %v5743, %v6008
      %v6099 = vadd.f32 %v5744, %v6013
      %v6100 = vadd.f32 %v5745, %v6018
      %v6101 = vadd.f32 %v5746, %v6023
      %v6102 = vadd.f32 %v5747, %v6028
      %v6103 = vadd.f32 %v5748, %v6033
      %v6104 = vadd.f32 %v5749, %v6038
      %v6105 = vadd.f32 %v5750, %v6043
      %v6106 = vadd.f32 %v5751, %v6048
      %v6107 = vadd.f32 %v5752, %v6053
      %v6108 = vadd.f32 %v5753, %v6058
      %v6109 = vadd.f32 %v5754, %v6063
      %v6110 = vadd.f32 %v5755, %v6068
      %v6111 = vadd.f32 %v5756, %v6073
      %v6112 = vadd.f32 %v5757, %v6078
      %v6113 = vld [vmem:[%s3824] sm:$0xff]
      %v6114 = vld [vmem:[%s3824 + $0x8] sm:$0xff]
      %v6115 = vld [vmem:[%s3824 + $0x18] sm:$0xff]
      %v6116 = vld [vmem:[%s3824 + $0x20] sm:$0xff]
      %v6117 = vld [vmem:[%s3824 + $0x30] sm:$0xff]
      %v6118 = vld [vmem:[%s3824 + $0x38] sm:$0xff]
      %v6119 = vld [vmem:[%s3824 + $0x48] sm:$0xff]
      %v6120 = vld [vmem:[%s3824 + $0x50] sm:$0xff]
      %v6121 = vld [vmem:[%s3824 + $0x60] sm:$0xff]
      %v6122 = vld [vmem:[%s3824 + $0x68] sm:$0xff]
      %v6123 = vld [vmem:[%s3824 + $0x78] sm:$0xff]
      %v6124 = vld [vmem:[%s3824 + $0x80] sm:$0xff]
      %v6125 = vld [vmem:[%s3824 + $0x90] sm:$0xff]
      %v6126 = vld [vmem:[%s3824 + $0x98] sm:$0xff]
      %v6127 = vld [vmem:[%s3824 + $0xa8] sm:$0xff]
      %v6128 = vld [vmem:[%s3824 + $0xb0] sm:$0xff]
      %v6129 = vld [vmem:[%s3824 + $0xc0] sm:$0xff]
      %v6130 = vld [vmem:[%s3824 + $0xc8] sm:$0xff]
      %v6131 = vld [vmem:[%s3824 + $0xd8] sm:$0xff]
      %v6132 = vld [vmem:[%s3824 + $0xe0] sm:$0xff]
      %v6133 = vld [vmem:[%s3824 + $0xf0] sm:$0xff]
      %v6134 = vld [vmem:[%s3824 + $0xf8] sm:$0xff]
      %v6135 = vld [vmem:[%s3824 + $0x108] sm:$0xff]
      %v6136 = vld [vmem:[%s3824 + $0x110] sm:$0xff]
      %v6137 = vld [vmem:[%s3824 + $0x120] sm:$0xff]
      %v6138 = vld [vmem:[%s3824 + $0x128] sm:$0xff]
      %v6139 = vld [vmem:[%s3824 + $0x138] sm:$0xff]
      %v6140 = vld [vmem:[%s3824 + $0x140] sm:$0xff]
      %v6141 = vld [vmem:[%s3824 + $0x150] sm:$0xff]
      %v6142 = vld [vmem:[%s3824 + $0x158] sm:$0xff]
      %v6143 = vld [vmem:[%s3824 + $0x168] sm:$0xff]
      %v6144 = vld [vmem:[%s3824 + $0x170] sm:$0xff]
      %s6145 = scalar_lea.vmem %s293, 24
      %v6146 = vld [vmem:[%s6145] sm:$0xff]
      %v6147 = vld [vmem:[%s6145 + $0x8] sm:$0xff]
      %v6148 = vld [vmem:[%s6145 + $0x18] sm:$0xff]
      %v6149 = vld [vmem:[%s6145 + $0x20] sm:$0xff]
      %v6150 = vld [vmem:[%s6145 + $0x30] sm:$0xff]
      %v6151 = vld [vmem:[%s6145 + $0x38] sm:$0xff]
      %v6152 = vld [vmem:[%s6145 + $0x48] sm:$0xff]
      %v6153 = vld [vmem:[%s6145 + $0x50] sm:$0xff]
      %v6154 = vld [vmem:[%s6145 + $0x60] sm:$0xff]
      %v6155 = vld [vmem:[%s6145 + $0x68] sm:$0xff]
      %v6156 = vld [vmem:[%s6145 + $0x78] sm:$0xff]
      %v6157 = vld [vmem:[%s6145 + $0x80] sm:$0xff]
      %v6158 = vld [vmem:[%s6145 + $0x90] sm:$0xff]
      %v6159 = vld [vmem:[%s6145 + $0x98] sm:$0xff]
      %v6160 = vld [vmem:[%s6145 + $0xa8] sm:$0xff]
      %v6161 = vld [vmem:[%s6145 + $0xb0] sm:$0xff]
      %v6162 = vld [vmem:[%s6145 + $0xc0] sm:$0xff]
      %v6163 = vld [vmem:[%s6145 + $0xc8] sm:$0xff]
      %v6164 = vld [vmem:[%s6145 + $0xd8] sm:$0xff]
      %v6165 = vld [vmem:[%s6145 + $0xe0] sm:$0xff]
      %v6166 = vld [vmem:[%s6145 + $0xf0] sm:$0xff]
      %v6167 = vld [vmem:[%s6145 + $0xf8] sm:$0xff]
      %v6168 = vld [vmem:[%s6145 + $0x108] sm:$0xff]
      %v6169 = vld [vmem:[%s6145 + $0x110] sm:$0xff]
      %v6170 = vld [vmem:[%s6145 + $0x120] sm:$0xff]
      %v6171 = vld [vmem:[%s6145 + $0x128] sm:$0xff]
      %v6172 = vld [vmem:[%s6145 + $0x138] sm:$0xff]
      %v6173 = vld [vmem:[%s6145 + $0x140] sm:$0xff]
      %v6174 = vld [vmem:[%s6145 + $0x150] sm:$0xff]
      %v6175 = vld [vmem:[%s6145 + $0x158] sm:$0xff]
      %v6176 = vld [vmem:[%s6145 + $0x168] sm:$0xff]
      %v6177 = vld [vmem:[%s6145 + $0x170] sm:$0xff]
      %s6178 = scalar_lea.vmem %s4, 24
      %v6179 = vld [vmem:[%s6178] sm:$0xff]
      %v6181 = vsel %vm3768, %v6113, 0
      %v6184 = vsel %vm3768, %v6114, 0
      %v6187 = vsel %vm3768, %v6115, 0
      %v6190 = vsel %vm3768, %v6116, 0
      %v6193 = vsel %vm3768, %v6117, 0
      %v6196 = vsel %vm3768, %v6118, 0
      %v6199 = vsel %vm3768, %v6119, 0
      %v6202 = vsel %vm3768, %v6120, 0
      %v6205 = vsel %vm3768, %v6121, 0
      %v6208 = vsel %vm3768, %v6122, 0
      %v6211 = vsel %vm3768, %v6123, 0
      %v6214 = vsel %vm3768, %v6124, 0
      %v6217 = vsel %vm3768, %v6125, 0
      %v6220 = vsel %vm3768, %v6126, 0
      %v6223 = vsel %vm3768, %v6127, 0
      %v6226 = vsel %vm3768, %v6128, 0
      %v6229 = vsel %vm3768, %v6129, 0
      %v6232 = vsel %vm3768, %v6130, 0
      %v6235 = vsel %vm3768, %v6131, 0
      %v6238 = vsel %vm3768, %v6132, 0
      %v6241 = vsel %vm3768, %v6133, 0
      %v6244 = vsel %vm3768, %v6134, 0
      %v6247 = vsel %vm3768, %v6135, 0
      %v6250 = vsel %vm3768, %v6136, 0
      %v6253 = vsel %vm3768, %v6137, 0
      %v6256 = vsel %vm3768, %v6138, 0
      %v6259 = vsel %vm3768, %v6139, 0
      %v6262 = vsel %vm3768, %v6140, 0
      %v6265 = vsel %vm3768, %v6141, 0
      %v6268 = vsel %vm3768, %v6142, 0
      %v6271 = vsel %vm3768, %v6143, 0
      %v6274 = vsel %vm3768, %v6144, 0
      %6276 = vmatprep.subr.mxu0 0.0
      %6277 = vmatpush1.msra.mxu0 %v6179
      %6278 = vmatprep.subr.mxu0 0.0
      %6279 = vmatpush1.msra.mxu0 0.0
      %6280 = vmatprep.subr.mxu0 0.0
      %6281 = vmatpush1.msra.mxu0 0.0
      %6282 = vmatprep.subr.mxu0 0.0
      %6283 = vmatpush1.msra.mxu0 0.0
      %6284 = vmatprep.subr.mxu0 0.0
      %6285 = vmatpush1.msra.mxu0 0.0
      %6286 = vmatprep.subr.mxu0 0.0
      %6287 = vmatpush1.msra.mxu0 0.0
      %6288 = vmatprep.subr.mxu0 0.0
      %6289 = vmatpush1.msra.mxu0 0.0
      %6290 = vmatprep.subr.mxu0 0.0
      %6291 = vmatpush1.msra.mxu0 0.0
      %6292 = vmatprep.subr.mxu0 0.0
      %6293 = vmatpush1.msra.mxu0 0.0
      %6294 = vmatprep.subr.mxu0 0.0
      %6295 = vmatpush1.msra.mxu0 0.0
      %6296 = vmatprep.subr.mxu0 0.0
      %6297 = vmatpush1.msra.mxu0 0.0
      %6298 = vmatprep.subr.mxu0 0.0
      %6299 = vmatpush1.msra.mxu0 0.0
      %6300 = vmatprep.subr.mxu0 0.0
      %6301 = vmatpush1.msra.mxu0 0.0
      %6302 = vmatprep.subr.mxu0 0.0
      %6303 = vmatpush1.msra.mxu0 0.0
      %6304 = vmatprep.subr.mxu0 0.0
      %6305 = vmatpush1.msra.mxu0 0.0
      %6306 = vmatprep.subr.mxu0 0.0
      %6307 = vmatpush1.msra.mxu0 0.0
      %6308 = vmatprep.subr.mxu0 0.0
      %6309 = vmatpush1.msra.mxu0 0.0
      %6310 = vmatprep.subr.mxu0 0.0
      %6311 = vmatpush1.msra.mxu0 0.0
      %6312 = vmatprep.subr.mxu0 0.0
      %6313 = vmatpush1.msra.mxu0 0.0
      %6314 = vmatprep.subr.mxu0 0.0
      %6315 = vmatpush1.msra.mxu0 0.0
      %6316 = vmatprep.subr.mxu0 0.0
      %6317 = vmatpush1.msra.mxu0 0.0
      %6318 = vmatprep.subr.mxu0 0.0
      %6319 = vmatpush1.msra.mxu0 0.0
      %6320 = vmatprep.subr.mxu0 0.0
      %6321 = vmatpush1.msra.mxu0 0.0
      %6322 = vmatprep.subr.mxu0 0.0
      %6323 = vmatpush1.msra.mxu0 0.0
      %6324 = vmatprep.subr.mxu0 0.0
      %6325 = vmatpush1.msra.mxu0 0.0
      %6326 = vmatprep.subr.mxu0 0.0
      %6327 = vmatpush1.msra.mxu0 0.0
      %6328 = vmatprep.subr.mxu0 0.0
      %6329 = vmatpush1.msra.mxu0 0.0
      %6330 = vmatprep.subr.mxu0 0.0
      %6331 = vmatpush1.msra.mxu0 0.0
      %6332 = vmatprep.subr.mxu0 0.0
      %6333 = vmatpush1.msra.mxu0 0.0
      %6334 = vmatprep.subr.mxu0 0.0
      %6335 = vmatpush1.msra.mxu0 0.0
      %6336 = vmatprep.subr.mxu0 0.0
      %6337 = vmatpush1.msra.mxu0 0.0
      %6338 = vmatprep.subr.mxu0 0.0
      %6339 = vmatpush1.msra.mxu0 0.0
      %6340 = vmatprep.mubr.f32.mxu0 0.0
      %6341 = vmatmul.mubr.f32.gmra.mrb[0].mxu0 %v6181
      %v6342 = vpop.f32.mrb[0].mxu0
      %v6343 = vadd.f32 0.0, %v6342
      %v6344 = vpop.f32.mrb[0].mxu0
      %6345 = vmatprep.mubr.f32.mxu0 0.0
      %6346 = vmatmul.mubr.f32.gmra.mrb[0].mxu0 %v6184
      %v6347 = vpop.f32.mrb[0].mxu0
      %v6348 = vadd.f32 0.0, %v6347
      %v6349 = vpop.f32.mrb[0].mxu0
      %6350 = vmatprep.mubr.f32.mxu0 0.0
      %6351 = vmatmul.mubr.f32.gmra.mrb[0].mxu0 %v6187
      %v6352 = vpop.f32.mrb[0].mxu0
      %v6353 = vadd.f32 0.0, %v6352
      %v6354 = vpop.f32.mrb[0].mxu0
      %6355 = vmatprep.mubr.f32.mxu0 0.0
      %6356 = vmatmul.mubr.f32.gmra.mrb[0].mxu0 %v6190
      %v6357 = vpop.f32.mrb[0].mxu0
      %v6358 = vadd.f32 0.0, %v6357
      %v6359 = vpop.f32.mrb[0].mxu0
      %6360 = vmatprep.mubr.f32.mxu0 0.0
      %6361 = vmatmul.mubr.f32.gmra.mrb[0].mxu0 %v6193
      %v6362 = vpop.f32.mrb[0].mxu0
      %v6363 = vadd.f32 0.0, %v6362
      %v6364 = vpop.f32.mrb[0].mxu0
      %6365 = vmatprep.mubr.f32.mxu0 0.0
      %6366 = vmatmul.mubr.f32.gmra.mrb[0].mxu0 %v6196
      %v6367 = vpop.f32.mrb[0].mxu0
      %v6368 = vadd.f32 0.0, %v6367
      %v6369 = vpop.f32.mrb[0].mxu0
      %6370 = vmatprep.mubr.f32.mxu0 0.0
      %6371 = vmatmul.mubr.f32.gmra.mrb[0].mxu0 %v6199
      %v6372 = vpop.f32.mrb[0].mxu0
      %v6373 = vadd.f32 0.0, %v6372
      %v6374 = vpop.f32.mrb[0].mxu0
      %6375 = vmatprep.mubr.f32.mxu0 0.0
      %6376 = vmatmul.mubr.f32.gmra.mrb[0].mxu0 %v6202
      %v6377 = vpop.f32.mrb[0].mxu0
      %v6378 = vadd.f32 0.0, %v6377
      %v6379 = vpop.f32.mrb[0].mxu0
      %6380 = vmatprep.mubr.f32.mxu0 0.0
      %6381 = vmatmul.mubr.f32.gmra.mrb[0].mxu0 %v6205
      %v6382 = vpop.f32.mrb[0].mxu0
      %v6383 = vadd.f32 0.0, %v6382
      %v6384 = vpop.f32.mrb[0].mxu0
      %6385 = vmatprep.mubr.f32.mxu0 0.0
      %6386 = vmatmul.mubr.f32.gmra.mrb[0].mxu0 %v6208
      %v6387 = vpop.f32.mrb[0].mxu0
      %v6388 = vadd.f32 0.0, %v6387
      %v6389 = vpop.f32.mrb[0].mxu0
      %6390 = vmatprep.mubr.f32.mxu0 0.0
      %6391 = vmatmul.mubr.f32.gmra.mrb[0].mxu0 %v6211
      %v6392 = vpop.f32.mrb[0].mxu0
      %v6393 = vadd.f32 0.0, %v6392
      %v6394 = vpop.f32.mrb[0].mxu0
      %6395 = vmatprep.mubr.f32.mxu0 0.0
      %6396 = vmatmul.mubr.f32.gmra.mrb[0].mxu0 %v6214
      %v6397 = vpop.f32.mrb[0].mxu0
      %v6398 = vadd.f32 0.0, %v6397
      %v6399 = vpop.f32.mrb[0].mxu0
      %6400 = vmatprep.mubr.f32.mxu0 0.0
      %6401 = vmatmul.mubr.f32.gmra.mrb[0].mxu0 %v6217
      %v6402 = vpop.f32.mrb[0].mxu0
      %v6403 = vadd.f32 0.0, %v6402
      %v6404 = vpop.f32.mrb[0].mxu0
      %6405 = vmatprep.mubr.f32.mxu0 0.0
      %6406 = vmatmul.mubr.f32.gmra.mrb[0].mxu0 %v6220
      %v6407 = vpop.f32.mrb[0].mxu0
      %v6408 = vadd.f32 0.0, %v6407
      %v6409 = vpop.f32.mrb[0].mxu0
      %6410 = vmatprep.mubr.f32.mxu0 0.0
      %6411 = vmatmul.mubr.f32.gmra.mrb[0].mxu0 %v6223
      %v6412 = vpop.f32.mrb[0].mxu0
      %v6413 = vadd.f32 0.0, %v6412
      %v6414 = vpop.f32.mrb[0].mxu0
      %6415 = vmatprep.mubr.f32.mxu0 0.0
      %6416 = vmatmul.mubr.f32.gmra.mrb[0].mxu0 %v6226
      %v6417 = vpop.f32.mrb[0].mxu0
      %v6418 = vadd.f32 0.0, %v6417
      %v6419 = vpop.f32.mrb[0].mxu0
      %6420 = vmatprep.mubr.f32.mxu0 0.0
      %6421 = vmatmul.mubr.f32.gmra.mrb[0].mxu0 %v6229
      %v6422 = vpop.f32.mrb[0].mxu0
      %v6423 = vadd.f32 0.0, %v6422
      %v6424 = vpop.f32.mrb[0].mxu0
      %6425 = vmatprep.mubr.f32.mxu0 0.0
      %6426 = vmatmul.mubr.f32.gmra.mrb[0].mxu0 %v6232
      %v6427 = vpop.f32.mrb[0].mxu0
      %v6428 = vadd.f32 0.0, %v6427
      %v6429 = vpop.f32.mrb[0].mxu0
      %6430 = vmatprep.mubr.f32.mxu0 0.0
      %6431 = vmatmul.mubr.f32.gmra.mrb[0].mxu0 %v6235
      %v6432 = vpop.f32.mrb[0].mxu0
      %v6433 = vadd.f32 0.0, %v6432
      %v6434 = vpop.f32.mrb[0].mxu0
      %6435 = vmatprep.mubr.f32.mxu0 0.0
      %6436 = vmatmul.mubr.f32.gmra.mrb[0].mxu0 %v6238
      %v6437 = vpop.f32.mrb[0].mxu0
      %v6438 = vadd.f32 0.0, %v6437
      %v6439 = vpop.f32.mrb[0].mxu0
      %6440 = vmatprep.mubr.f32.mxu0 0.0
      %6441 = vmatmul.mubr.f32.gmra.mrb[0].mxu0 %v6241
      %v6442 = vpop.f32.mrb[0].mxu0
      %v6443 = vadd.f32 0.0, %v6442
      %v6444 = vpop.f32.mrb[0].mxu0
      %6445 = vmatprep.mubr.f32.mxu0 0.0
      %6446 = vmatmul.mubr.f32.gmra.mrb[0].mxu0 %v6244
      %v6447 = vpop.f32.mrb[0].mxu0
      %v6448 = vadd.f32 0.0, %v6447
      %v6449 = vpop.f32.mrb[0].mxu0
      %6450 = vmatprep.mubr.f32.mxu0 0.0
      %6451 = vmatmul.mubr.f32.gmra.mrb[0].mxu0 %v6247
      %v6452 = vpop.f32.mrb[0].mxu0
      %v6453 = vadd.f32 0.0, %v6452
      %v6454 = vpop.f32.mrb[0].mxu0
      %6455 = vmatprep.mubr.f32.mxu0 0.0
      %6456 = vmatmul.mubr.f32.gmra.mrb[0].mxu0 %v6250
      %v6457 = vpop.f32.mrb[0].mxu0
      %v6458 = vadd.f32 0.0, %v6457
      %v6459 = vpop.f32.mrb[0].mxu0
      %6460 = vmatprep.mubr.f32.mxu0 0.0
      %6461 = vmatmul.mubr.f32.gmra.mrb[0].mxu0 %v6253
      %v6462 = vpop.f32.mrb[0].mxu0
      %v6463 = vadd.f32 0.0, %v6462
      %v6464 = vpop.f32.mrb[0].mxu0
      %6465 = vmatprep.mubr.f32.mxu0 0.0
      %6466 = vmatmul.mubr.f32.gmra.mrb[0].mxu0 %v6256
      %v6467 = vpop.f32.mrb[0].mxu0
      %v6468 = vadd.f32 0.0, %v6467
      %v6469 = vpop.f32.mrb[0].mxu0
      %6470 = vmatprep.mubr.f32.mxu0 0.0
      %6471 = vmatmul.mubr.f32.gmra.mrb[0].mxu0 %v6259
      %v6472 = vpop.f32.mrb[0].mxu0
      %v6473 = vadd.f32 0.0, %v6472
      %v6474 = vpop.f32.mrb[0].mxu0
      %6475 = vmatprep.mubr.f32.mxu0 0.0
      %6476 = vmatmul.mubr.f32.gmra.mrb[0].mxu0 %v6262
      %v6477 = vpop.f32.mrb[0].mxu0
      %v6478 = vadd.f32 0.0, %v6477
      %v6479 = vpop.f32.mrb[0].mxu0
      %6480 = vmatprep.mubr.f32.mxu0 0.0
      %6481 = vmatmul.mubr.f32.gmra.mrb[0].mxu0 %v6265
      %v6482 = vpop.f32.mrb[0].mxu0
      %v6483 = vadd.f32 0.0, %v6482
      %v6484 = vpop.f32.mrb[0].mxu0
      %6485 = vmatprep.mubr.f32.mxu0 0.0
      %6486 = vmatmul.mubr.f32.gmra.mrb[0].mxu0 %v6268
      %v6487 = vpop.f32.mrb[0].mxu0
      %v6488 = vadd.f32 0.0, %v6487
      %v6489 = vpop.f32.mrb[0].mxu0
      %6490 = vmatprep.mubr.f32.mxu0 0.0
      %6491 = vmatmul.mubr.f32.gmra.mrb[0].mxu0 %v6271
      %v6492 = vpop.f32.mrb[0].mxu0
      %v6493 = vadd.f32 0.0, %v6492
      %v6494 = vpop.f32.mrb[0].mxu0
      %6495 = vmatprep.mubr.f32.mxu0 0.0
      %6496 = vmatmul.mubr.f32.gmra.mrb[0].mxu0 %v6274
      %v6497 = vpop.f32.mrb[0].mxu0
      %v6498 = vadd.f32 0.0, %v6497
      %v6499 = vpop.f32.mrb[0].mxu0
      %6500 = vdwg.mxu0
      %v6501 = vadd.f32 %v6081, %v6343
      %v6502 = vadd.f32 %v6082, %v6348
      %v6503 = vadd.f32 %v6083, %v6353
      %v6504 = vadd.f32 %v6084, %v6358
      %v6505 = vadd.f32 %v6085, %v6363
      %v6506 = vadd.f32 %v6086, %v6368
      %v6507 = vadd.f32 %v6087, %v6373
      %v6508 = vadd.f32 %v6088, %v6378
      %v6509 = vadd.f32 %v6089, %v6383
      %v6510 = vadd.f32 %v6090, %v6388
      %v6511 = vadd.f32 %v6091, %v6393
      %v6512 = vadd.f32 %v6092, %v6398
      %v6513 = vadd.f32 %v6093, %v6403
      %v6514 = vadd.f32 %v6094, %v6408
      %v6515 = vadd.f32 %v6095, %v6413
      %v6516 = vadd.f32 %v6096, %v6418
      %v6517 = vadd.f32 %v6097, %v6423
      %v6518 = vadd.f32 %v6098, %v6428
      %v6519 = vadd.f32 %v6099, %v6433
      %v6520 = vadd.f32 %v6100, %v6438
      %v6521 = vadd.f32 %v6101, %v6443
      %v6522 = vadd.f32 %v6102, %v6448
      %v6523 = vadd.f32 %v6103, %v6453
      %v6524 = vadd.f32 %v6104, %v6458
      %v6525 = vadd.f32 %v6105, %v6463
      %v6526 = vadd.f32 %v6106, %v6468
      %v6527 = vadd.f32 %v6107, %v6473
      %v6528 = vadd.f32 %v6108, %v6478
      %v6529 = vadd.f32 %v6109, %v6483
      %v6530 = vadd.f32 %v6110, %v6488
      %v6531 = vadd.f32 %v6111, %v6493
      %v6532 = vadd.f32 %v6112, %v6498
      %s6533 = scalar_lea.vmem %s5, 24
      %v6534 = vld [vmem:[%s6533] sm:$0xff]
      %v6536 = vsel %vm3768, %v6146, 0
      %v6539 = vsel %vm3768, %v6147, 0
      %v6542 = vsel %vm3768, %v6148, 0
      %v6545 = vsel %vm3768, %v6149, 0
      %v6548 = vsel %vm3768, %v6150, 0
      %v6551 = vsel %vm3768, %v6151, 0
      %v6554 = vsel %vm3768, %v6152, 0
      %v6557 = vsel %vm3768, %v6153, 0
      %v6560 = vsel %vm3768, %v6154, 0
      %v6563 = vsel %vm3768, %v6155, 0
      %v6566 = vsel %vm3768, %v6156, 0
      %v6569 = vsel %vm3768, %v6157, 0
      %v6572 = vsel %vm3768, %v6158, 0
      %v6575 = vsel %vm3768, %v6159, 0
      %v6578 = vsel %vm3768, %v6160, 0
      %v6581 = vsel %vm3768, %v6161, 0
      %v6584 = vsel %vm3768, %v6162, 0
      %v6587 = vsel %vm3768, %v6163, 0
      %v6590 = vsel %vm3768, %v6164, 0
      %v6593 = vsel %vm3768, %v6165, 0
      %v6596 = vsel %vm3768, %v6166, 0
      %v6599 = vsel %vm3768, %v6167, 0
      %v6602 = vsel %vm3768, %v6168, 0
      %v6605 = vsel %vm3768, %v6169, 0
      %v6608 = vsel %vm3768, %v6170, 0
      %v6611 = vsel %vm3768, %v6171, 0
      %v6614 = vsel %vm3768, %v6172, 0
      %v6617 = vsel %vm3768, %v6173, 0
      %v6620 = vsel %vm3768, %v6174, 0
      %v6623 = vsel %vm3768, %v6175, 0
      %v6626 = vsel %vm3768, %v6176, 0
      %v6629 = vsel %vm3768, %v6177, 0
      %6631 = vmatprep.subr.mxu0 0.0
      %6632 = vmatpush1.msra.mxu0 %v6534
      %6633 = vmatprep.subr.mxu0 0.0
      %6634 = vmatpush1.msra.mxu0 0.0
      %6635 = vmatprep.subr.mxu0 0.0
      %6636 = vmatpush1.msra.mxu0 0.0
      %6637 = vmatprep.subr.mxu0 0.0
      %6638 = vmatpush1.msra.mxu0 0.0
      %6639 = vmatprep.subr.mxu0 0.0
      %6640 = vmatpush1.msra.mxu0 0.0
      %6641 = vmatprep.subr.mxu0 0.0
      %6642 = vmatpush1.msra.mxu0 0.0
      %6643 = vmatprep.subr.mxu0 0.0
      %6644 = vmatpush1.msra.mxu0 0.0
      %6645 = vmatprep.subr.mxu0 0.0
      %6646 = vmatpush1.msra.mxu0 0.0
      %6647 = vmatprep.subr.mxu0 0.0
      %6648 = vmatpush1.msra.mxu0 0.0
      %6649 = vmatprep.subr.mxu0 0.0
      %6650 = vmatpush1.msra.mxu0 0.0
      %6651 = vmatprep.subr.mxu0 0.0
      %6652 = vmatpush1.msra.mxu0 0.0
      %6653 = vmatprep.subr.mxu0 0.0
      %6654 = vmatpush1.msra.mxu0 0.0
      %6655 = vmatprep.subr.mxu0 0.0
      %6656 = vmatpush1.msra.mxu0 0.0
      %6657 = vmatprep.subr.mxu0 0.0
      %6658 = vmatpush1.msra.mxu0 0.0
      %6659 = vmatprep.subr.mxu0 0.0
      %6660 = vmatpush1.msra.mxu0 0.0
      %6661 = vmatprep.subr.mxu0 0.0
      %6662 = vmatpush1.msra.mxu0 0.0
      %6663 = vmatprep.subr.mxu0 0.0
      %6664 = vmatpush1.msra.mxu0 0.0
      %6665 = vmatprep.subr.mxu0 0.0
      %6666 = vmatpush1.msra.mxu0 0.0
      %6667 = vmatprep.subr.mxu0 0.0
      %6668 = vmatpush1.msra.mxu0 0.0
      %6669 = vmatprep.subr.mxu0 0.0
      %6670 = vmatpush1.msra.mxu0 0.0
      %6671 = vmatprep.subr.mxu0 0.0
      %6672 = vmatpush1.msra.mxu0 0.0
      %6673 = vmatprep.subr.mxu0 0.0
      %6674 = vmatpush1.msra.mxu0 0.0
      %6675 = vmatprep.subr.mxu0 0.0
      %6676 = vmatpush1.msra.mxu0 0.0
      %6677 = vmatprep.subr.mxu0 0.0
      %6678 = vmatpush1.msra.mxu0 0.0
      %6679 = vmatprep.subr.mxu0 0.0
      %6680 = vmatpush1.msra.mxu0 0.0
      %6681 = vmatprep.subr.mxu0 0.0
      %6682 = vmatpush1.msra.mxu0 0.0
      %6683 = vmatprep.subr.mxu0 0.0
      %6684 = vmatpush1.msra.mxu0 0.0
      %6685 = vmatprep.subr.mxu0 0.0
      %6686 = vmatpush1.msra.mxu0 0.0
      %6687 = vmatprep.subr.mxu0 0.0
      %6688 = vmatpush1.msra.mxu0 0.0
      %6689 = vmatprep.subr.mxu0 0.0
      %6690 = vmatpush1.msra.mxu0 0.0
      %6691 = vmatprep.subr.mxu0 0.0
      %6692 = vmatpush1.msra.mxu0 0.0
      %6693 = vmatprep.subr.mxu0 0.0
      %6694 = vmatpush1.msra.mxu0 0.0
      %6695 = vmatprep.mubr.f32.mxu0 0.0
      %6696 = vmatmul.mubr.f32.gmra.mrb[0].mxu0 %v6536
      %v6697 = vpop.f32.mrb[0].mxu0
      %v6698 = vadd.f32 0.0, %v6697
      %v6699 = vpop.f32.mrb[0].mxu0
      %6700 = vmatprep.mubr.f32.mxu0 0.0
      %6701 = vmatmul.mubr.f32.gmra.mrb[0].mxu0 %v6539
      %v6702 = vpop.f32.mrb[0].mxu0
      %v6703 = vadd.f32 0.0, %v6702
      %v6704 = vpop.f32.mrb[0].mxu0
      %6705 = vmatprep.mubr.f32.mxu0 0.0
      %6706 = vmatmul.mubr.f32.gmra.mrb[0].mxu0 %v6542
      %v6707 = vpop.f32.mrb[0].mxu0
      %v6708 = vadd.f32 0.0, %v6707
      %v6709 = vpop.f32.mrb[0].mxu0
      %6710 = vmatprep.mubr.f32.mxu0 0.0
      %6711 = vmatmul.mubr.f32.gmra.mrb[0].mxu0 %v6545
      %v6712 = vpop.f32.mrb[0].mxu0
      %v6713 = vadd.f32 0.0, %v6712
      %v6714 = vpop.f32.mrb[0].mxu0
      %6715 = vmatprep.mubr.f32.mxu0 0.0
      %6716 = vmatmul.mubr.f32.gmra.mrb[0].mxu0 %v6548
      %v6717 = vpop.f32.mrb[0].mxu0
      %v6718 = vadd.f32 0.0, %v6717
      %v6719 = vpop.f32.mrb[0].mxu0
      %6720 = vmatprep.mubr.f32.mxu0 0.0
      %6721 = vmatmul.mubr.f32.gmra.mrb[0].mxu0 %v6551
      %v6722 = vpop.f32.mrb[0].mxu0
      %v6723 = vadd.f32 0.0, %v6722
      %v6724 = vpop.f32.mrb[0].mxu0
      %6725 = vmatprep.mubr.f32.mxu0 0.0
      %6726 = vmatmul.mubr.f32.gmra.mrb[0].mxu0 %v6554
      %v6727 = vpop.f32.mrb[0].mxu0
      %v6728 = vadd.f32 0.0, %v6727
      %v6729 = vpop.f32.mrb[0].mxu0
      %6730 = vmatprep.mubr.f32.mxu0 0.0
      %6731 = vmatmul.mubr.f32.gmra.mrb[0].mxu0 %v6557
      %v6732 = vpop.f32.mrb[0].mxu0
      %v6733 = vadd.f32 0.0, %v6732
      %v6734 = vpop.f32.mrb[0].mxu0
      %6735 = vmatprep.mubr.f32.mxu0 0.0
      %6736 = vmatmul.mubr.f32.gmra.mrb[0].mxu0 %v6560
      %v6737 = vpop.f32.mrb[0].mxu0
      %v6738 = vadd.f32 0.0, %v6737
      %v6739 = vpop.f32.mrb[0].mxu0
      %6740 = vmatprep.mubr.f32.mxu0 0.0
      %6741 = vmatmul.mubr.f32.gmra.mrb[0].mxu0 %v6563
      %v6742 = vpop.f32.mrb[0].mxu0
      %v6743 = vadd.f32 0.0, %v6742
      %v6744 = vpop.f32.mrb[0].mxu0
      %6745 = vmatprep.mubr.f32.mxu0 0.0
      %6746 = vmatmul.mubr.f32.gmra.mrb[0].mxu0 %v6566
      %v6747 = vpop.f32.mrb[0].mxu0
      %v6748 = vadd.f32 0.0, %v6747
      %v6749 = vpop.f32.mrb[0].mxu0
      %6750 = vmatprep.mubr.f32.mxu0 0.0
      %6751 = vmatmul.mubr.f32.gmra.mrb[0].mxu0 %v6569
      %v6752 = vpop.f32.mrb[0].mxu0
      %v6753 = vadd.f32 0.0, %v6752
      %v6754 = vpop.f32.mrb[0].mxu0
      %6755 = vmatprep.mubr.f32.mxu0 0.0
      %6756 = vmatmul.mubr.f32.gmra.mrb[0].mxu0 %v6572
      %v6757 = vpop.f32.mrb[0].mxu0
      %v6758 = vadd.f32 0.0, %v6757
      %v6759 = vpop.f32.mrb[0].mxu0
      %6760 = vmatprep.mubr.f32.mxu0 0.0
      %6761 = vmatmul.mubr.f32.gmra.mrb[0].mxu0 %v6575
      %v6762 = vpop.f32.mrb[0].mxu0
      %v6763 = vadd.f32 0.0, %v6762
      %v6764 = vpop.f32.mrb[0].mxu0
      %6765 = vmatprep.mubr.f32.mxu0 0.0
      %6766 = vmatmul.mubr.f32.gmra.mrb[0].mxu0 %v6578
      %v6767 = vpop.f32.mrb[0].mxu0
      %v6768 = vadd.f32 0.0, %v6767
      %v6769 = vpop.f32.mrb[0].mxu0
      %6770 = vmatprep.mubr.f32.mxu0 0.0
      %6771 = vmatmul.mubr.f32.gmra.mrb[0].mxu0 %v6581
      %v6772 = vpop.f32.mrb[0].mxu0
      %v6773 = vadd.f32 0.0, %v6772
      %v6774 = vpop.f32.mrb[0].mxu0
      %6775 = vmatprep.mubr.f32.mxu0 0.0
      %6776 = vmatmul.mubr.f32.gmra.mrb[0].mxu0 %v6584
      %v6777 = vpop.f32.mrb[0].mxu0
      %v6778 = vadd.f32 0.0, %v6777
      %v6779 = vpop.f32.mrb[0].mxu0
      %6780 = vmatprep.mubr.f32.mxu0 0.0
      %6781 = vmatmul.mubr.f32.gmra.mrb[0].mxu0 %v6587
      %v6782 = vpop.f32.mrb[0].mxu0
      %v6783 = vadd.f32 0.0, %v6782
      %v6784 = vpop.f32.mrb[0].mxu0
      %6785 = vmatprep.mubr.f32.mxu0 0.0
      %6786 = vmatmul.mubr.f32.gmra.mrb[0].mxu0 %v6590
      %v6787 = vpop.f32.mrb[0].mxu0
      %v6788 = vadd.f32 0.0, %v6787
      %v6789 = vpop.f32.mrb[0].mxu0
      %6790 = vmatprep.mubr.f32.mxu0 0.0
      %6791 = vmatmul.mubr.f32.gmra.mrb[0].mxu0 %v6593
      %v6792 = vpop.f32.mrb[0].mxu0
      %v6793 = vadd.f32 0.0, %v6792
      %v6794 = vpop.f32.mrb[0].mxu0
      %6795 = vmatprep.mubr.f32.mxu0 0.0
      %6796 = vmatmul.mubr.f32.gmra.mrb[0].mxu0 %v6596
      %v6797 = vpop.f32.mrb[0].mxu0
      %v6798 = vadd.f32 0.0, %v6797
      %v6799 = vpop.f32.mrb[0].mxu0
      %6800 = vmatprep.mubr.f32.mxu0 0.0
      %6801 = vmatmul.mubr.f32.gmra.mrb[0].mxu0 %v6599
      %v6802 = vpop.f32.mrb[0].mxu0
      %v6803 = vadd.f32 0.0, %v6802
      %v6804 = vpop.f32.mrb[0].mxu0
      %6805 = vmatprep.mubr.f32.mxu0 0.0
      %6806 = vmatmul.mubr.f32.gmra.mrb[0].mxu0 %v6602
      %v6807 = vpop.f32.mrb[0].mxu0
      %v6808 = vadd.f32 0.0, %v6807
      %v6809 = vpop.f32.mrb[0].mxu0
      %6810 = vmatprep.mubr.f32.mxu0 0.0
      %6811 = vmatmul.mubr.f32.gmra.mrb[0].mxu0 %v6605
      %v6812 = vpop.f32.mrb[0].mxu0
      %v6813 = vadd.f32 0.0, %v6812
      %v6814 = vpop.f32.mrb[0].mxu0
      %6815 = vmatprep.mubr.f32.mxu0 0.0
      %6816 = vmatmul.mubr.f32.gmra.mrb[0].mxu0 %v6608
      %v6817 = vpop.f32.mrb[0].mxu0
      %v6818 = vadd.f32 0.0, %v6817
      %v6819 = vpop.f32.mrb[0].mxu0
      %6820 = vmatprep.mubr.f32.mxu0 0.0
      %6821 = vmatmul.mubr.f32.gmra.mrb[0].mxu0 %v6611
      %v6822 = vpop.f32.mrb[0].mxu0
      %v6823 = vadd.f32 0.0, %v6822
      %v6824 = vpop.f32.mrb[0].mxu0
      %6825 = vmatprep.mubr.f32.mxu0 0.0
      %6826 = vmatmul.mubr.f32.gmra.mrb[0].mxu0 %v6614
      %v6827 = vpop.f32.mrb[0].mxu0
      %v6828 = vadd.f32 0.0, %v6827
      %v6829 = vpop.f32.mrb[0].mxu0
      %6830 = vmatprep.mubr.f32.mxu0 0.0
      %6831 = vmatmul.mubr.f32.gmra.mrb[0].mxu0 %v6617
      %v6832 = vpop.f32.mrb[0].mxu0
      %v6833 = vadd.f32 0.0, %v6832
      %v6834 = vpop.f32.mrb[0].mxu0
      %6835 = vmatprep.mubr.f32.mxu0 0.0
      %6836 = vmatmul.mubr.f32.gmra.mrb[0].mxu0 %v6620
      %v6837 = vpop.f32.mrb[0].mxu0
      %v6838 = vadd.f32 0.0, %v6837
      %v6839 = vpop.f32.mrb[0].mxu0
      %6840 = vmatprep.mubr.f32.mxu0 0.0
      %6841 = vmatmul.mubr.f32.gmra.mrb[0].mxu0 %v6623
      %v6842 = vpop.f32.mrb[0].mxu0
      %v6843 = vadd.f32 0.0, %v6842
      %v6844 = vpop.f32.mrb[0].mxu0
      %6845 = vmatprep.mubr.f32.mxu0 0.0
      %6846 = vmatmul.mubr.f32.gmra.mrb[0].mxu0 %v6626
      %v6847 = vpop.f32.mrb[0].mxu0
      %v6848 = vadd.f32 0.0, %v6847
      %v6849 = vpop.f32.mrb[0].mxu0
      %6850 = vmatprep.mubr.f32.mxu0 0.0
      %6851 = vmatmul.mubr.f32.gmra.mrb[0].mxu0 %v6629
      %v6852 = vpop.f32.mrb[0].mxu0
      %v6853 = vadd.f32 0.0, %v6852
      %v6854 = vpop.f32.mrb[0].mxu0
      %6855 = vdwg.mxu0
      %v6856 = vadd.f32 %v6501, %v6698
      %v6857 = vadd.f32 %v6502, %v6703
      %v6858 = vadd.f32 %v6503, %v6708
      %v6859 = vadd.f32 %v6504, %v6713
      %v6860 = vadd.f32 %v6505, %v6718
      %v6861 = vadd.f32 %v6506, %v6723
      %v6862 = vadd.f32 %v6507, %v6728
      %v6863 = vadd.f32 %v6508, %v6733
      %v6864 = vadd.f32 %v6509, %v6738
      %v6865 = vadd.f32 %v6510, %v6743
      %v6866 = vadd.f32 %v6511, %v6748
      %v6867 = vadd.f32 %v6512, %v6753
      %v6868 = vadd.f32 %v6513, %v6758
      %v6869 = vadd.f32 %v6514, %v6763
      %v6870 = vadd.f32 %v6515, %v6768
      %v6871 = vadd.f32 %v6516, %v6773
      %v6872 = vadd.f32 %v6517, %v6778
      %v6873 = vadd.f32 %v6518, %v6783
      %v6874 = vadd.f32 %v6519, %v6788
      %v6875 = vadd.f32 %v6520, %v6793
      %v6876 = vadd.f32 %v6521, %v6798
      %v6877 = vadd.f32 %v6522, %v6803
      %v6878 = vadd.f32 %v6523, %v6808
      %v6879 = vadd.f32 %v6524, %v6813
      %v6880 = vadd.f32 %v6525, %v6818
      %v6881 = vadd.f32 %v6526, %v6823
      %v6882 = vadd.f32 %v6527, %v6828
      %v6883 = vadd.f32 %v6528, %v6833
      %v6884 = vadd.f32 %v6529, %v6838
      %v6885 = vadd.f32 %v6530, %v6843
      %v6886 = vadd.f32 %v6531, %v6848
      %v6887 = vadd.f32 %v6532, %v6853
      %v6888 = vld [vmem:[%s3824 + $0x1] sm:$0xff]
      %v6889 = vld [vmem:[%s3824 + $0x9] sm:$0xff]
      %v6890 = vld [vmem:[%s3824 + $0x19] sm:$0xff]
      %v6891 = vld [vmem:[%s3824 + $0x21] sm:$0xff]
      %v6892 = vld [vmem:[%s3824 + $0x31] sm:$0xff]
      %v6893 = vld [vmem:[%s3824 + $0x39] sm:$0xff]
      %v6894 = vld [vmem:[%s3824 + $0x49] sm:$0xff]
      %v6895 = vld [vmem:[%s3824 + $0x51] sm:$0xff]
      %v6896 = vld [vmem:[%s3824 + $0x61] sm:$0xff]
      %v6897 = vld [vmem:[%s3824 + $0x69] sm:$0xff]
      %v6898 = vld [vmem:[%s3824 + $0x79] sm:$0xff]
      %v6899 = vld [vmem:[%s3824 + $0x81] sm:$0xff]
      %v6900 = vld [vmem:[%s3824 + $0x91] sm:$0xff]
      %v6901 = vld [vmem:[%s3824 + $0x99] sm:$0xff]
      %v6902 = vld [vmem:[%s3824 + $0xa9] sm:$0xff]
      %v6903 = vld [vmem:[%s3824 + $0xb1] sm:$0xff]
      %v6904 = vld [vmem:[%s3824 + $0xc1] sm:$0xff]
      %v6905 = vld [vmem:[%s3824 + $0xc9] sm:$0xff]
      %v6906 = vld [vmem:[%s3824 + $0xd9] sm:$0xff]
      %v6907 = vld [vmem:[%s3824 + $0xe1] sm:$0xff]
      %v6908 = vld [vmem:[%s3824 + $0xf1] sm:$0xff]
      %v6909 = vld [vmem:[%s3824 + $0xf9] sm:$0xff]
      %v6910 = vld [vmem:[%s3824 + $0x109] sm:$0xff]
      %v6911 = vld [vmem:[%s3824 + $0x111] sm:$0xff]
      %v6912 = vld [vmem:[%s3824 + $0x121] sm:$0xff]
      %v6913 = vld [vmem:[%s3824 + $0x129] sm:$0xff]
      %v6914 = vld [vmem:[%s3824 + $0x139] sm:$0xff]
      %v6915 = vld [vmem:[%s3824 + $0x141] sm:$0xff]
      %v6916 = vld [vmem:[%s3824 + $0x151] sm:$0xff]
      %v6917 = vld [vmem:[%s3824 + $0x159] sm:$0xff]
      %v6918 = vld [vmem:[%s3824 + $0x169] sm:$0xff]
      %v6919 = vld [vmem:[%s3824 + $0x171] sm:$0xff]
      %v6920 = vld [vmem:[%s6145 + $0x1] sm:$0xff]
      %v6921 = vld [vmem:[%s6145 + $0x9] sm:$0xff]
      %v6922 = vld [vmem:[%s6145 + $0x19] sm:$0xff]
      %v6923 = vld [vmem:[%s6145 + $0x21] sm:$0xff]
      %v6924 = vld [vmem:[%s6145 + $0x31] sm:$0xff]
      %v6925 = vld [vmem:[%s6145 + $0x39] sm:$0xff]
      %v6926 = vld [vmem:[%s6145 + $0x49] sm:$0xff]
      %v6927 = vld [vmem:[%s6145 + $0x51] sm:$0xff]
      %v6928 = vld [vmem:[%s6145 + $0x61] sm:$0xff]
      %v6929 = vld [vmem:[%s6145 + $0x69] sm:$0xff]
      %v6930 = vld [vmem:[%s6145 + $0x79] sm:$0xff]
      %v6931 = vld [vmem:[%s6145 + $0x81] sm:$0xff]
      %v6932 = vld [vmem:[%s6145 + $0x91] sm:$0xff]
      %v6933 = vld [vmem:[%s6145 + $0x99] sm:$0xff]
      %v6934 = vld [vmem:[%s6145 + $0xa9] sm:$0xff]
      %v6935 = vld [vmem:[%s6145 + $0xb1] sm:$0xff]
      %v6936 = vld [vmem:[%s6145 + $0xc1] sm:$0xff]
      %v6937 = vld [vmem:[%s6145 + $0xc9] sm:$0xff]
      %v6938 = vld [vmem:[%s6145 + $0xd9] sm:$0xff]
      %v6939 = vld [vmem:[%s6145 + $0xe1] sm:$0xff]
      %v6940 = vld [vmem:[%s6145 + $0xf1] sm:$0xff]
      %v6941 = vld [vmem:[%s6145 + $0xf9] sm:$0xff]
      %v6942 = vld [vmem:[%s6145 + $0x109] sm:$0xff]
      %v6943 = vld [vmem:[%s6145 + $0x111] sm:$0xff]
      %v6944 = vld [vmem:[%s6145 + $0x121] sm:$0xff]
      %v6945 = vld [vmem:[%s6145 + $0x129] sm:$0xff]
      %v6946 = vld [vmem:[%s6145 + $0x139] sm:$0xff]
      %v6947 = vld [vmem:[%s6145 + $0x141] sm:$0xff]
      %v6948 = vld [vmem:[%s6145 + $0x151] sm:$0xff]
      %v6949 = vld [vmem:[%s6145 + $0x159] sm:$0xff]
      %v6950 = vld [vmem:[%s6145 + $0x169] sm:$0xff]
      %v6951 = vld [vmem:[%s6145 + $0x171] sm:$0xff]
      %s6952 = scalar_lea.vmem %s4, 32
      %v6953 = vld [vmem:[%s6952] sm:$0xff]
      %v6955 = vsel %vm3768, %v6888, 0
      %v6958 = vsel %vm3768, %v6889, 0
      %v6961 = vsel %vm3768, %v6890, 0
      %v6964 = vsel %vm3768, %v6891, 0
      %v6967 = vsel %vm3768, %v6892, 0
      %v6970 = vsel %vm3768, %v6893, 0
      %v6973 = vsel %vm3768, %v6894, 0
      %v6976 = vsel %vm3768, %v6895, 0
      %v6979 = vsel %vm3768, %v6896, 0
      %v6982 = vsel %vm3768, %v6897, 0
      %v6985 = vsel %vm3768, %v6898, 0
      %v6988 = vsel %vm3768, %v6899, 0
      %v6991 = vsel %vm3768, %v6900, 0
      %v6994 = vsel %vm3768, %v6901, 0
      %v6997 = vsel %vm3768, %v6902, 0
      %v7000 = vsel %vm3768, %v6903, 0
      %v7003 = vsel %vm3768, %v6904, 0
      %v7006 = vsel %vm3768, %v6905, 0
      %v7009 = vsel %vm3768, %v6906, 0
      %v7012 = vsel %vm3768, %v6907, 0
      %v7015 = vsel %vm3768, %v6908, 0
      %v7018 = vsel %vm3768, %v6909, 0
      %v7021 = vsel %vm3768, %v6910, 0
      %v7024 = vsel %vm3768, %v6911, 0
      %v7027 = vsel %vm3768, %v6912, 0
      %v7030 = vsel %vm3768, %v6913, 0
      %v7033 = vsel %vm3768, %v6914, 0
      %v7036 = vsel %vm3768, %v6915, 0
      %v7039 = vsel %vm3768, %v6916, 0
      %v7042 = vsel %vm3768, %v6917, 0
      %v7045 = vsel %vm3768, %v6918, 0
      %v7048 = vsel %vm3768, %v6919, 0
      %7050 = vmatprep.subr.mxu0 0.0
      %7051 = vmatpush1.msra.mxu0 %v6953
      %7052 = vmatprep.subr.mxu0 0.0
      %7053 = vmatpush1.msra.mxu0 0.0
      %7054 = vmatprep.subr.mxu0 0.0
      %7055 = vmatpush1.msra.mxu0 0.0
      %7056 = vmatprep.subr.mxu0 0.0
      %7057 = vmatpush1.msra.mxu0 0.0
      %7058 = vmatprep.subr.mxu0 0.0
      %7059 = vmatpush1.msra.mxu0 0.0
      %7060 = vmatprep.subr.mxu0 0.0
      %7061 = vmatpush1.msra.mxu0 0.0
      %7062 = vmatprep.subr.mxu0 0.0
      %7063 = vmatpush1.msra.mxu0 0.0
      %7064 = vmatprep.subr.mxu0 0.0
      %7065 = vmatpush1.msra.mxu0 0.0
      %7066 = vmatprep.subr.mxu0 0.0
      %7067 = vmatpush1.msra.mxu0 0.0
      %7068 = vmatprep.subr.mxu0 0.0
      %7069 = vmatpush1.msra.mxu0 0.0
      %7070 = vmatprep.subr.mxu0 0.0
      %7071 = vmatpush1.msra.mxu0 0.0
      %7072 = vmatprep.subr.mxu0 0.0
      %7073 = vmatpush1.msra.mxu0 0.0
      %7074 = vmatprep.subr.mxu0 0.0
      %7075 = vmatpush1.msra.mxu0 0.0
      %7076 = vmatprep.subr.mxu0 0.0
      %7077 = vmatpush1.msra.mxu0 0.0
      %7078 = vmatprep.subr.mxu0 0.0
      %7079 = vmatpush1.msra.mxu0 0.0
      %7080 = vmatprep.subr.mxu0 0.0
      %7081 = vmatpush1.msra.mxu0 0.0
      %7082 = vmatprep.subr.mxu0 0.0
      %7083 = vmatpush1.msra.mxu0 0.0
      %7084 = vmatprep.subr.mxu0 0.0
      %7085 = vmatpush1.msra.mxu0 0.0
      %7086 = vmatprep.subr.mxu0 0.0
      %7087 = vmatpush1.msra.mxu0 0.0
      %7088 = vmatprep.subr.mxu0 0.0
      %7089 = vmatpush1.msra.mxu0 0.0
      %7090 = vmatprep.subr.mxu0 0.0
      %7091 = vmatpush1.msra.mxu0 0.0
      %7092 = vmatprep.subr.mxu0 0.0
      %7093 = vmatpush1.msra.mxu0 0.0
      %7094 = vmatprep.subr.mxu0 0.0
      %7095 = vmatpush1.msra.mxu0 0.0
      %7096 = vmatprep.subr.mxu0 0.0
      %7097 = vmatpush1.msra.mxu0 0.0
      %7098 = vmatprep.subr.mxu0 0.0
      %7099 = vmatpush1.msra.mxu0 0.0
      %7100 = vmatprep.subr.mxu0 0.0
      %7101 = vmatpush1.msra.mxu0 0.0
      %7102 = vmatprep.subr.mxu0 0.0
      %7103 = vmatpush1.msra.mxu0 0.0
      %7104 = vmatprep.subr.mxu0 0.0
      %7105 = vmatpush1.msra.mxu0 0.0
      %7106 = vmatprep.subr.mxu0 0.0
      %7107 = vmatpush1.msra.mxu0 0.0
      %7108 = vmatprep.subr.mxu0 0.0
      %7109 = vmatpush1.msra.mxu0 0.0
      %7110 = vmatprep.subr.mxu0 0.0
      %7111 = vmatpush1.msra.mxu0 0.0
      %7112 = vmatprep.subr.mxu0 0.0
      %7113 = vmatpush1.msra.mxu0 0.0
      %7114 = vmatprep.mubr.f32.mxu0 0.0
      %7115 = vmatmul.mubr.f32.gmra.mrb[0].mxu0 %v6955
      %v7116 = vpop.f32.mrb[0].mxu0
      %v7117 = vadd.f32 0.0, %v7116
      %v7118 = vpop.f32.mrb[0].mxu0
      %7119 = vmatprep.mubr.f32.mxu0 0.0
      %7120 = vmatmul.mubr.f32.gmra.mrb[0].mxu0 %v6958
      %v7121 = vpop.f32.mrb[0].mxu0
      %v7122 = vadd.f32 0.0, %v7121
      %v7123 = vpop.f32.mrb[0].mxu0
      %7124 = vmatprep.mubr.f32.mxu0 0.0
      %7125 = vmatmul.mubr.f32.gmra.mrb[0].mxu0 %v6961
      %v7126 = vpop.f32.mrb[0].mxu0
      %v7127 = vadd.f32 0.0, %v7126
      %v7128 = vpop.f32.mrb[0].mxu0
      %7129 = vmatprep.mubr.f32.mxu0 0.0
      %7130 = vmatmul.mubr.f32.gmra.mrb[0].mxu0 %v6964
      %v7131 = vpop.f32.mrb[0].mxu0
      %v7132 = vadd.f32 0.0, %v7131
      %v7133 = vpop.f32.mrb[0].mxu0
      %7134 = vmatprep.mubr.f32.mxu0 0.0
      %7135 = vmatmul.mubr.f32.gmra.mrb[0].mxu0 %v6967
      %v7136 = vpop.f32.mrb[0].mxu0
      %v7137 = vadd.f32 0.0, %v7136
      %v7138 = vpop.f32.mrb[0].mxu0
      %7139 = vmatprep.mubr.f32.mxu0 0.0
      %7140 = vmatmul.mubr.f32.gmra.mrb[0].mxu0 %v6970
      %v7141 = vpop.f32.mrb[0].mxu0
      %v7142 = vadd.f32 0.0, %v7141
      %v7143 = vpop.f32.mrb[0].mxu0
      %7144 = vmatprep.mubr.f32.mxu0 0.0
      %7145 = vmatmul.mubr.f32.gmra.mrb[0].mxu0 %v6973
      %v7146 = vpop.f32.mrb[0].mxu0
      %v7147 = vadd.f32 0.0, %v7146
      %v7148 = vpop.f32.mrb[0].mxu0
      %7149 = vmatprep.mubr.f32.mxu0 0.0
      %7150 = vmatmul.mubr.f32.gmra.mrb[0].mxu0 %v6976
      %v7151 = vpop.f32.mrb[0].mxu0
      %v7152 = vadd.f32 0.0, %v7151
      %v7153 = vpop.f32.mrb[0].mxu0
      %7154 = vmatprep.mubr.f32.mxu0 0.0
      %7155 = vmatmul.mubr.f32.gmra.mrb[0].mxu0 %v6979
      %v7156 = vpop.f32.mrb[0].mxu0
      %v7157 = vadd.f32 0.0, %v7156
      %v7158 = vpop.f32.mrb[0].mxu0
      %7159 = vmatprep.mubr.f32.mxu0 0.0
      %7160 = vmatmul.mubr.f32.gmra.mrb[0].mxu0 %v6982
      %v7161 = vpop.f32.mrb[0].mxu0
      %v7162 = vadd.f32 0.0, %v7161
      %v7163 = vpop.f32.mrb[0].mxu0
      %7164 = vmatprep.mubr.f32.mxu0 0.0
      %7165 = vmatmul.mubr.f32.gmra.mrb[0].mxu0 %v6985
      %v7166 = vpop.f32.mrb[0].mxu0
      %v7167 = vadd.f32 0.0, %v7166
      %v7168 = vpop.f32.mrb[0].mxu0
      %7169 = vmatprep.mubr.f32.mxu0 0.0
      %7170 = vmatmul.mubr.f32.gmra.mrb[0].mxu0 %v6988
      %v7171 = vpop.f32.mrb[0].mxu0
      %v7172 = vadd.f32 0.0, %v7171
      %v7173 = vpop.f32.mrb[0].mxu0
      %7174 = vmatprep.mubr.f32.mxu0 0.0
      %7175 = vmatmul.mubr.f32.gmra.mrb[0].mxu0 %v6991
      %v7176 = vpop.f32.mrb[0].mxu0
      %v7177 = vadd.f32 0.0, %v7176
      %v7178 = vpop.f32.mrb[0].mxu0
      %7179 = vmatprep.mubr.f32.mxu0 0.0
      %7180 = vmatmul.mubr.f32.gmra.mrb[0].mxu0 %v6994
      %v7181 = vpop.f32.mrb[0].mxu0
      %v7182 = vadd.f32 0.0, %v7181
      %v7183 = vpop.f32.mrb[0].mxu0
      %7184 = vmatprep.mubr.f32.mxu0 0.0
      %7185 = vmatmul.mubr.f32.gmra.mrb[0].mxu0 %v6997
      %v7186 = vpop.f32.mrb[0].mxu0
      %v7187 = vadd.f32 0.0, %v7186
      %v7188 = vpop.f32.mrb[0].mxu0
      %7189 = vmatprep.mubr.f32.mxu0 0.0
      %7190 = vmatmul.mubr.f32.gmra.mrb[0].mxu0 %v7000
      %v7191 = vpop.f32.mrb[0].mxu0
      %v7192 = vadd.f32 0.0, %v7191
      %v7193 = vpop.f32.mrb[0].mxu0
      %7194 = vmatprep.mubr.f32.mxu0 0.0
      %7195 = vmatmul.mubr.f32.gmra.mrb[0].mxu0 %v7003
      %v7196 = vpop.f32.mrb[0].mxu0
      %v7197 = vadd.f32 0.0, %v7196
      %v7198 = vpop.f32.mrb[0].mxu0
      %7199 = vmatprep.mubr.f32.mxu0 0.0
      %7200 = vmatmul.mubr.f32.gmra.mrb[0].mxu0 %v7006
      %v7201 = vpop.f32.mrb[0].mxu0
      %v7202 = vadd.f32 0.0, %v7201
      %v7203 = vpop.f32.mrb[0].mxu0
      %7204 = vmatprep.mubr.f32.mxu0 0.0
      %7205 = vmatmul.mubr.f32.gmra.mrb[0].mxu0 %v7009
      %v7206 = vpop.f32.mrb[0].mxu0
      %v7207 = vadd.f32 0.0, %v7206
      %v7208 = vpop.f32.mrb[0].mxu0
      %7209 = vmatprep.mubr.f32.mxu0 0.0
      %7210 = vmatmul.mubr.f32.gmra.mrb[0].mxu0 %v7012
      %v7211 = vpop.f32.mrb[0].mxu0
      %v7212 = vadd.f32 0.0, %v7211
      %v7213 = vpop.f32.mrb[0].mxu0
      %7214 = vmatprep.mubr.f32.mxu0 0.0
      %7215 = vmatmul.mubr.f32.gmra.mrb[0].mxu0 %v7015
      %v7216 = vpop.f32.mrb[0].mxu0
      %v7217 = vadd.f32 0.0, %v7216
      %v7218 = vpop.f32.mrb[0].mxu0
      %7219 = vmatprep.mubr.f32.mxu0 0.0
      %7220 = vmatmul.mubr.f32.gmra.mrb[0].mxu0 %v7018
      %v7221 = vpop.f32.mrb[0].mxu0
      %v7222 = vadd.f32 0.0, %v7221
      %v7223 = vpop.f32.mrb[0].mxu0
      %7224 = vmatprep.mubr.f32.mxu0 0.0
      %7225 = vmatmul.mubr.f32.gmra.mrb[0].mxu0 %v7021
      %v7226 = vpop.f32.mrb[0].mxu0
      %v7227 = vadd.f32 0.0, %v7226
      %v7228 = vpop.f32.mrb[0].mxu0
      %7229 = vmatprep.mubr.f32.mxu0 0.0
      %7230 = vmatmul.mubr.f32.gmra.mrb[0].mxu0 %v7024
      %v7231 = vpop.f32.mrb[0].mxu0
      %v7232 = vadd.f32 0.0, %v7231
      %v7233 = vpop.f32.mrb[0].mxu0
      %7234 = vmatprep.mubr.f32.mxu0 0.0
      %7235 = vmatmul.mubr.f32.gmra.mrb[0].mxu0 %v7027
      %v7236 = vpop.f32.mrb[0].mxu0
      %v7237 = vadd.f32 0.0, %v7236
      %v7238 = vpop.f32.mrb[0].mxu0
      %7239 = vmatprep.mubr.f32.mxu0 0.0
      %7240 = vmatmul.mubr.f32.gmra.mrb[0].mxu0 %v7030
      %v7241 = vpop.f32.mrb[0].mxu0
      %v7242 = vadd.f32 0.0, %v7241
      %v7243 = vpop.f32.mrb[0].mxu0
      %7244 = vmatprep.mubr.f32.mxu0 0.0
      %7245 = vmatmul.mubr.f32.gmra.mrb[0].mxu0 %v7033
      %v7246 = vpop.f32.mrb[0].mxu0
      %v7247 = vadd.f32 0.0, %v7246
      %v7248 = vpop.f32.mrb[0].mxu0
      %7249 = vmatprep.mubr.f32.mxu0 0.0
      %7250 = vmatmul.mubr.f32.gmra.mrb[0].mxu0 %v7036
      %v7251 = vpop.f32.mrb[0].mxu0
      %v7252 = vadd.f32 0.0, %v7251
      %v7253 = vpop.f32.mrb[0].mxu0
      %7254 = vmatprep.mubr.f32.mxu0 0.0
      %7255 = vmatmul.mubr.f32.gmra.mrb[0].mxu0 %v7039
      %v7256 = vpop.f32.mrb[0].mxu0
      %v7257 = vadd.f32 0.0, %v7256
      %v7258 = vpop.f32.mrb[0].mxu0
      %7259 = vmatprep.mubr.f32.mxu0 0.0
      %7260 = vmatmul.mubr.f32.gmra.mrb[0].mxu0 %v7042
      %v7261 = vpop.f32.mrb[0].mxu0
      %v7262 = vadd.f32 0.0, %v7261
      %v7263 = vpop.f32.mrb[0].mxu0
      %7264 = vmatprep.mubr.f32.mxu0 0.0
      %7265 = vmatmul.mubr.f32.gmra.mrb[0].mxu0 %v7045
      %v7266 = vpop.f32.mrb[0].mxu0
      %v7267 = vadd.f32 0.0, %v7266
      %v7268 = vpop.f32.mrb[0].mxu0
      %7269 = vmatprep.mubr.f32.mxu0 0.0
      %7270 = vmatmul.mubr.f32.gmra.mrb[0].mxu0 %v7048
      %v7271 = vpop.f32.mrb[0].mxu0
      %v7272 = vadd.f32 0.0, %v7271
      %v7273 = vpop.f32.mrb[0].mxu0
      %7274 = vdwg.mxu0
      %v7275 = vadd.f32 %v6856, %v7117
      %v7276 = vadd.f32 %v6857, %v7122
      %v7277 = vadd.f32 %v6858, %v7127
      %v7278 = vadd.f32 %v6859, %v7132
      %v7279 = vadd.f32 %v6860, %v7137
      %v7280 = vadd.f32 %v6861, %v7142
      %v7281 = vadd.f32 %v6862, %v7147
      %v7282 = vadd.f32 %v6863, %v7152
      %v7283 = vadd.f32 %v6864, %v7157
      %v7284 = vadd.f32 %v6865, %v7162
      %v7285 = vadd.f32 %v6866, %v7167
      %v7286 = vadd.f32 %v6867, %v7172
      %v7287 = vadd.f32 %v6868, %v7177
      %v7288 = vadd.f32 %v6869, %v7182
      %v7289 = vadd.f32 %v6870, %v7187
      %v7290 = vadd.f32 %v6871, %v7192
      %v7291 = vadd.f32 %v6872, %v7197
      %v7292 = vadd.f32 %v6873, %v7202
      %v7293 = vadd.f32 %v6874, %v7207
      %v7294 = vadd.f32 %v6875, %v7212
      %v7295 = vadd.f32 %v6876, %v7217
      %v7296 = vadd.f32 %v6877, %v7222
      %v7297 = vadd.f32 %v6878, %v7227
      %v7298 = vadd.f32 %v6879, %v7232
      %v7299 = vadd.f32 %v6880, %v7237
      %v7300 = vadd.f32 %v6881, %v7242
      %v7301 = vadd.f32 %v6882, %v7247
      %v7302 = vadd.f32 %v6883, %v7252
      %v7303 = vadd.f32 %v6884, %v7257
      %v7304 = vadd.f32 %v6885, %v7262
      %v7305 = vadd.f32 %v6886, %v7267
      %v7306 = vadd.f32 %v6887, %v7272
      %s7307 = scalar_lea.vmem %s5, 32
      %v7308 = vld [vmem:[%s7307] sm:$0xff]
      %v7310 = vsel %vm3768, %v6920, 0
      %v7313 = vsel %vm3768, %v6921, 0
      %v7316 = vsel %vm3768, %v6922, 0
      %v7319 = vsel %vm3768, %v6923, 0
      %v7322 = vsel %vm3768, %v6924, 0
      %v7325 = vsel %vm3768, %v6925, 0
      %v7328 = vsel %vm3768, %v6926, 0
      %v7331 = vsel %vm3768, %v6927, 0
      %v7334 = vsel %vm3768, %v6928, 0
      %v7337 = vsel %vm3768, %v6929, 0
      %v7340 = vsel %vm3768, %v6930, 0
      %v7343 = vsel %vm3768, %v6931, 0
      %v7346 = vsel %vm3768, %v6932, 0
      %v7349 = vsel %vm3768, %v6933, 0
      %v7352 = vsel %vm3768, %v6934, 0
      %v7355 = vsel %vm3768, %v6935, 0
      %v7358 = vsel %vm3768, %v6936, 0
      %v7361 = vsel %vm3768, %v6937, 0
      %v7364 = vsel %vm3768, %v6938, 0
      %v7367 = vsel %vm3768, %v6939, 0
      %v7370 = vsel %vm3768, %v6940, 0
      %v7373 = vsel %vm3768, %v6941, 0
      %v7376 = vsel %vm3768, %v6942, 0
      %v7379 = vsel %vm3768, %v6943, 0
      %v7382 = vsel %vm3768, %v6944, 0
      %v7385 = vsel %vm3768, %v6945, 0
      %v7388 = vsel %vm3768, %v6946, 0
      %v7391 = vsel %vm3768, %v6947, 0
      %v7394 = vsel %vm3768, %v6948, 0
      %v7397 = vsel %vm3768, %v6949, 0
      %v7400 = vsel %vm3768, %v6950, 0
      %v7403 = vsel %vm3768, %v6951, 0
      %7405 = vmatprep.subr.mxu0 0.0
      %7406 = vmatpush1.msra.mxu0 %v7308
      %7407 = vmatprep.subr.mxu0 0.0
      %7408 = vmatpush1.msra.mxu0 0.0
      %7409 = vmatprep.subr.mxu0 0.0
      %7410 = vmatpush1.msra.mxu0 0.0
      %7411 = vmatprep.subr.mxu0 0.0
      %7412 = vmatpush1.msra.mxu0 0.0
      %7413 = vmatprep.subr.mxu0 0.0
      %7414 = vmatpush1.msra.mxu0 0.0
      %7415 = vmatprep.subr.mxu0 0.0
      %7416 = vmatpush1.msra.mxu0 0.0
      %7417 = vmatprep.subr.mxu0 0.0
      %7418 = vmatpush1.msra.mxu0 0.0
      %7419 = vmatprep.subr.mxu0 0.0
      %7420 = vmatpush1.msra.mxu0 0.0
      %7421 = vmatprep.subr.mxu0 0.0
      %7422 = vmatpush1.msra.mxu0 0.0
      %7423 = vmatprep.subr.mxu0 0.0
      %7424 = vmatpush1.msra.mxu0 0.0
      %7425 = vmatprep.subr.mxu0 0.0
      %7426 = vmatpush1.msra.mxu0 0.0
      %7427 = vmatprep.subr.mxu0 0.0
      %7428 = vmatpush1.msra.mxu0 0.0
      %7429 = vmatprep.subr.mxu0 0.0
      %7430 = vmatpush1.msra.mxu0 0.0
      %7431 = vmatprep.subr.mxu0 0.0
      %7432 = vmatpush1.msra.mxu0 0.0
      %7433 = vmatprep.subr.mxu0 0.0
      %7434 = vmatpush1.msra.mxu0 0.0
      %7435 = vmatprep.subr.mxu0 0.0
      %7436 = vmatpush1.msra.mxu0 0.0
      %7437 = vmatprep.subr.mxu0 0.0
      %7438 = vmatpush1.msra.mxu0 0.0
      %7439 = vmatprep.subr.mxu0 0.0
      %7440 = vmatpush1.msra.mxu0 0.0
      %7441 = vmatprep.subr.mxu0 0.0
      %7442 = vmatpush1.msra.mxu0 0.0
      %7443 = vmatprep.subr.mxu0 0.0
      %7444 = vmatpush1.msra.mxu0 0.0
      %7445 = vmatprep.subr.mxu0 0.0
      %7446 = vmatpush1.msra.mxu0 0.0
      %7447 = vmatprep.subr.mxu0 0.0
      %7448 = vmatpush1.msra.mxu0 0.0
      %7449 = vmatprep.subr.mxu0 0.0
      %7450 = vmatpush1.msra.mxu0 0.0
      %7451 = vmatprep.subr.mxu0 0.0
      %7452 = vmatpush1.msra.mxu0 0.0
      %7453 = vmatprep.subr.mxu0 0.0
      %7454 = vmatpush1.msra.mxu0 0.0
      %7455 = vmatprep.subr.mxu0 0.0
      %7456 = vmatpush1.msra.mxu0 0.0
      %7457 = vmatprep.subr.mxu0 0.0
      %7458 = vmatpush1.msra.mxu0 0.0
      %7459 = vmatprep.subr.mxu0 0.0
      %7460 = vmatpush1.msra.mxu0 0.0
      %7461 = vmatprep.subr.mxu0 0.0
      %7462 = vmatpush1.msra.mxu0 0.0
      %7463 = vmatprep.subr.mxu0 0.0
      %7464 = vmatpush1.msra.mxu0 0.0
      %7465 = vmatprep.subr.mxu0 0.0
      %7466 = vmatpush1.msra.mxu0 0.0
      %7467 = vmatprep.subr.mxu0 0.0
      %7468 = vmatpush1.msra.mxu0 0.0
      %7469 = vmatprep.mubr.f32.mxu0 0.0
      %7470 = vmatmul.mubr.f32.gmra.mrb[0].mxu0 %v7310
      %v7471 = vpop.f32.mrb[0].mxu0
      %v7472 = vadd.f32 0.0, %v7471
      %v7473 = vpop.f32.mrb[0].mxu0
      %7474 = vmatprep.mubr.f32.mxu0 0.0
      %7475 = vmatmul.mubr.f32.gmra.mrb[0].mxu0 %v7313
      %v7476 = vpop.f32.mrb[0].mxu0
      %v7477 = vadd.f32 0.0, %v7476
      %v7478 = vpop.f32.mrb[0].mxu0
      %7479 = vmatprep.mubr.f32.mxu0 0.0
      %7480 = vmatmul.mubr.f32.gmra.mrb[0].mxu0 %v7316
      %v7481 = vpop.f32.mrb[0].mxu0
      %v7482 = vadd.f32 0.0, %v7481
      %v7483 = vpop.f32.mrb[0].mxu0
      %7484 = vmatprep.mubr.f32.mxu0 0.0
      %7485 = vmatmul.mubr.f32.gmra.mrb[0].mxu0 %v7319
      %v7486 = vpop.f32.mrb[0].mxu0
      %v7487 = vadd.f32 0.0, %v7486
      %v7488 = vpop.f32.mrb[0].mxu0
      %7489 = vmatprep.mubr.f32.mxu0 0.0
      %7490 = vmatmul.mubr.f32.gmra.mrb[0].mxu0 %v7322
      %v7491 = vpop.f32.mrb[0].mxu0
      %v7492 = vadd.f32 0.0, %v7491
      %v7493 = vpop.f32.mrb[0].mxu0
      %7494 = vmatprep.mubr.f32.mxu0 0.0
      %7495 = vmatmul.mubr.f32.gmra.mrb[0].mxu0 %v7325
      %v7496 = vpop.f32.mrb[0].mxu0
      %v7497 = vadd.f32 0.0, %v7496
      %v7498 = vpop.f32.mrb[0].mxu0
      %7499 = vmatprep.mubr.f32.mxu0 0.0
      %7500 = vmatmul.mubr.f32.gmra.mrb[0].mxu0 %v7328
      %v7501 = vpop.f32.mrb[0].mxu0
      %v7502 = vadd.f32 0.0, %v7501
      %v7503 = vpop.f32.mrb[0].mxu0
      %7504 = vmatprep.mubr.f32.mxu0 0.0
      %7505 = vmatmul.mubr.f32.gmra.mrb[0].mxu0 %v7331
      %v7506 = vpop.f32.mrb[0].mxu0
      %v7507 = vadd.f32 0.0, %v7506
      %v7508 = vpop.f32.mrb[0].mxu0
      %7509 = vmatprep.mubr.f32.mxu0 0.0
      %7510 = vmatmul.mubr.f32.gmra.mrb[0].mxu0 %v7334
      %v7511 = vpop.f32.mrb[0].mxu0
      %v7512 = vadd.f32 0.0, %v7511
      %v7513 = vpop.f32.mrb[0].mxu0
      %7514 = vmatprep.mubr.f32.mxu0 0.0
      %7515 = vmatmul.mubr.f32.gmra.mrb[0].mxu0 %v7337
      %v7516 = vpop.f32.mrb[0].mxu0
      %v7517 = vadd.f32 0.0, %v7516
      %v7518 = vpop.f32.mrb[0].mxu0
      %7519 = vmatprep.mubr.f32.mxu0 0.0
      %7520 = vmatmul.mubr.f32.gmra.mrb[0].mxu0 %v7340
      %v7521 = vpop.f32.mrb[0].mxu0
      %v7522 = vadd.f32 0.0, %v7521
      %v7523 = vpop.f32.mrb[0].mxu0
      %7524 = vmatprep.mubr.f32.mxu0 0.0
      %7525 = vmatmul.mubr.f32.gmra.mrb[0].mxu0 %v7343
      %v7526 = vpop.f32.mrb[0].mxu0
      %v7527 = vadd.f32 0.0, %v7526
      %v7528 = vpop.f32.mrb[0].mxu0
      %7529 = vmatprep.mubr.f32.mxu0 0.0
      %7530 = vmatmul.mubr.f32.gmra.mrb[0].mxu0 %v7346
      %v7531 = vpop.f32.mrb[0].mxu0
      %v7532 = vadd.f32 0.0, %v7531
      %v7533 = vpop.f32.mrb[0].mxu0
      %7534 = vmatprep.mubr.f32.mxu0 0.0
      %7535 = vmatmul.mubr.f32.gmra.mrb[0].mxu0 %v7349
      %v7536 = vpop.f32.mrb[0].mxu0
      %v7537 = vadd.f32 0.0, %v7536
      %v7538 = vpop.f32.mrb[0].mxu0
      %7539 = vmatprep.mubr.f32.mxu0 0.0
      %7540 = vmatmul.mubr.f32.gmra.mrb[0].mxu0 %v7352
      %v7541 = vpop.f32.mrb[0].mxu0
      %v7542 = vadd.f32 0.0, %v7541
      %v7543 = vpop.f32.mrb[0].mxu0
      %7544 = vmatprep.mubr.f32.mxu0 0.0
      %7545 = vmatmul.mubr.f32.gmra.mrb[0].mxu0 %v7355
      %v7546 = vpop.f32.mrb[0].mxu0
      %v7547 = vadd.f32 0.0, %v7546
      %v7548 = vpop.f32.mrb[0].mxu0
      %7549 = vmatprep.mubr.f32.mxu0 0.0
      %7550 = vmatmul.mubr.f32.gmra.mrb[0].mxu0 %v7358
      %v7551 = vpop.f32.mrb[0].mxu0
      %v7552 = vadd.f32 0.0, %v7551
      %v7553 = vpop.f32.mrb[0].mxu0
      %7554 = vmatprep.mubr.f32.mxu0 0.0
      %7555 = vmatmul.mubr.f32.gmra.mrb[0].mxu0 %v7361
      %v7556 = vpop.f32.mrb[0].mxu0
      %v7557 = vadd.f32 0.0, %v7556
      %v7558 = vpop.f32.mrb[0].mxu0
      %7559 = vmatprep.mubr.f32.mxu0 0.0
      %7560 = vmatmul.mubr.f32.gmra.mrb[0].mxu0 %v7364
      %v7561 = vpop.f32.mrb[0].mxu0
      %v7562 = vadd.f32 0.0, %v7561
      %v7563 = vpop.f32.mrb[0].mxu0
      %7564 = vmatprep.mubr.f32.mxu0 0.0
      %7565 = vmatmul.mubr.f32.gmra.mrb[0].mxu0 %v7367
      %v7566 = vpop.f32.mrb[0].mxu0
      %v7567 = vadd.f32 0.0, %v7566
      %v7568 = vpop.f32.mrb[0].mxu0
      %7569 = vmatprep.mubr.f32.mxu0 0.0
      %7570 = vmatmul.mubr.f32.gmra.mrb[0].mxu0 %v7370
      %v7571 = vpop.f32.mrb[0].mxu0
      %v7572 = vadd.f32 0.0, %v7571
      %v7573 = vpop.f32.mrb[0].mxu0
      %7574 = vmatprep.mubr.f32.mxu0 0.0
      %7575 = vmatmul.mubr.f32.gmra.mrb[0].mxu0 %v7373
      %v7576 = vpop.f32.mrb[0].mxu0
      %v7577 = vadd.f32 0.0, %v7576
      %v7578 = vpop.f32.mrb[0].mxu0
      %7579 = vmatprep.mubr.f32.mxu0 0.0
      %7580 = vmatmul.mubr.f32.gmra.mrb[0].mxu0 %v7376
      %v7581 = vpop.f32.mrb[0].mxu0
      %v7582 = vadd.f32 0.0, %v7581
      %v7583 = vpop.f32.mrb[0].mxu0
      %7584 = vmatprep.mubr.f32.mxu0 0.0
      %7585 = vmatmul.mubr.f32.gmra.mrb[0].mxu0 %v7379
      %v7586 = vpop.f32.mrb[0].mxu0
      %v7587 = vadd.f32 0.0, %v7586
      %v7588 = vpop.f32.mrb[0].mxu0
      %7589 = vmatprep.mubr.f32.mxu0 0.0
      %7590 = vmatmul.mubr.f32.gmra.mrb[0].mxu0 %v7382
      %v7591 = vpop.f32.mrb[0].mxu0
      %v7592 = vadd.f32 0.0, %v7591
      %v7593 = vpop.f32.mrb[0].mxu0
      %7594 = vmatprep.mubr.f32.mxu0 0.0
      %7595 = vmatmul.mubr.f32.gmra.mrb[0].mxu0 %v7385
      %v7596 = vpop.f32.mrb[0].mxu0
      %v7597 = vadd.f32 0.0, %v7596
      %v7598 = vpop.f32.mrb[0].mxu0
      %7599 = vmatprep.mubr.f32.mxu0 0.0
      %7600 = vmatmul.mubr.f32.gmra.mrb[0].mxu0 %v7388
      %v7601 = vpop.f32.mrb[0].mxu0
      %v7602 = vadd.f32 0.0, %v7601
      %v7603 = vpop.f32.mrb[0].mxu0
      %7604 = vmatprep.mubr.f32.mxu0 0.0
      %7605 = vmatmul.mubr.f32.gmra.mrb[0].mxu0 %v7391
      %v7606 = vpop.f32.mrb[0].mxu0
      %v7607 = vadd.f32 0.0, %v7606
      %v7608 = vpop.f32.mrb[0].mxu0
      %7609 = vmatprep.mubr.f32.mxu0 0.0
      %7610 = vmatmul.mubr.f32.gmra.mrb[0].mxu0 %v7394
      %v7611 = vpop.f32.mrb[0].mxu0
      %v7612 = vadd.f32 0.0, %v7611
      %v7613 = vpop.f32.mrb[0].mxu0
      %7614 = vmatprep.mubr.f32.mxu0 0.0
      %7615 = vmatmul.mubr.f32.gmra.mrb[0].mxu0 %v7397
      %v7616 = vpop.f32.mrb[0].mxu0
      %v7617 = vadd.f32 0.0, %v7616
      %v7618 = vpop.f32.mrb[0].mxu0
      %7619 = vmatprep.mubr.f32.mxu0 0.0
      %7620 = vmatmul.mubr.f32.gmra.mrb[0].mxu0 %v7400
      %v7621 = vpop.f32.mrb[0].mxu0
      %v7622 = vadd.f32 0.0, %v7621
      %v7623 = vpop.f32.mrb[0].mxu0
      %7624 = vmatprep.mubr.f32.mxu0 0.0
      %7625 = vmatmul.mubr.f32.gmra.mrb[0].mxu0 %v7403
      %v7626 = vpop.f32.mrb[0].mxu0
      %v7627 = vadd.f32 0.0, %v7626
      %v7628 = vpop.f32.mrb[0].mxu0
      %7629 = vdwg.mxu0
      %v7630 = vadd.f32 %v7275, %v7472
      %v7631 = vadd.f32 %v7276, %v7477
      %v7632 = vadd.f32 %v7277, %v7482
      %v7633 = vadd.f32 %v7278, %v7487
      %v7634 = vadd.f32 %v7279, %v7492
      %v7635 = vadd.f32 %v7280, %v7497
      %v7636 = vadd.f32 %v7281, %v7502
      %v7637 = vadd.f32 %v7282, %v7507
      %v7638 = vadd.f32 %v7283, %v7512
      %v7639 = vadd.f32 %v7284, %v7517
      %v7640 = vadd.f32 %v7285, %v7522
      %v7641 = vadd.f32 %v7286, %v7527
      %v7642 = vadd.f32 %v7287, %v7532
      %v7643 = vadd.f32 %v7288, %v7537
      %v7644 = vadd.f32 %v7289, %v7542
      %v7645 = vadd.f32 %v7290, %v7547
      %v7646 = vadd.f32 %v7291, %v7552
      %v7647 = vadd.f32 %v7292, %v7557
      %v7648 = vadd.f32 %v7293, %v7562
      %v7649 = vadd.f32 %v7294, %v7567
      %v7650 = vadd.f32 %v7295, %v7572
      %v7651 = vadd.f32 %v7296, %v7577
      %v7652 = vadd.f32 %v7297, %v7582
      %v7653 = vadd.f32 %v7298, %v7587
      %v7654 = vadd.f32 %v7299, %v7592
      %v7655 = vadd.f32 %v7300, %v7597
      %v7656 = vadd.f32 %v7301, %v7602
      %v7657 = vadd.f32 %v7302, %v7607
      %v7658 = vadd.f32 %v7303, %v7612
      %v7659 = vadd.f32 %v7304, %v7617
      %v7660 = vadd.f32 %v7305, %v7622
      %v7661 = vadd.f32 %v7306, %v7627
      %v7662 = vld [vmem:[%s3824 + $0x2] sm:$0xff]
      %v7663 = vld [vmem:[%s3824 + $0xa] sm:$0xff]
      %v7664 = vld [vmem:[%s3824 + $0x1a] sm:$0xff]
      %v7665 = vld [vmem:[%s3824 + $0x22] sm:$0xff]
      %v7666 = vld [vmem:[%s3824 + $0x32] sm:$0xff]
      %v7667 = vld [vmem:[%s3824 + $0x3a] sm:$0xff]
      %v7668 = vld [vmem:[%s3824 + $0x4a] sm:$0xff]
      %v7669 = vld [vmem:[%s3824 + $0x52] sm:$0xff]
      %v7670 = vld [vmem:[%s3824 + $0x62] sm:$0xff]
      %v7671 = vld [vmem:[%s3824 + $0x6a] sm:$0xff]
      %v7672 = vld [vmem:[%s3824 + $0x7a] sm:$0xff]
      %v7673 = vld [vmem:[%s3824 + $0x82] sm:$0xff]
      %v7674 = vld [vmem:[%s3824 + $0x92] sm:$0xff]
      %v7675 = vld [vmem:[%s3824 + $0x9a] sm:$0xff]
      %v7676 = vld [vmem:[%s3824 + $0xaa] sm:$0xff]
      %v7677 = vld [vmem:[%s3824 + $0xb2] sm:$0xff]
      %v7678 = vld [vmem:[%s3824 + $0xc2] sm:$0xff]
      %v7679 = vld [vmem:[%s3824 + $0xca] sm:$0xff]
      %v7680 = vld [vmem:[%s3824 + $0xda] sm:$0xff]
      %v7681 = vld [vmem:[%s3824 + $0xe2] sm:$0xff]
      %v7682 = vld [vmem:[%s3824 + $0xf2] sm:$0xff]
      %v7683 = vld [vmem:[%s3824 + $0xfa] sm:$0xff]
      %v7684 = vld [vmem:[%s3824 + $0x10a] sm:$0xff]
      %v7685 = vld [vmem:[%s3824 + $0x112] sm:$0xff]
      %v7686 = vld [vmem:[%s3824 + $0x122] sm:$0xff]
      %v7687 = vld [vmem:[%s3824 + $0x12a] sm:$0xff]
      %v7688 = vld [vmem:[%s3824 + $0x13a] sm:$0xff]
      %v7689 = vld [vmem:[%s3824 + $0x142] sm:$0xff]
      %v7690 = vld [vmem:[%s3824 + $0x152] sm:$0xff]
      %v7691 = vld [vmem:[%s3824 + $0x15a] sm:$0xff]
      %v7692 = vld [vmem:[%s3824 + $0x16a] sm:$0xff]
      %v7693 = vld [vmem:[%s3824 + $0x172] sm:$0xff]
      %v7694 = vld [vmem:[%s6145 + $0x2] sm:$0xff]
      %v7695 = vld [vmem:[%s6145 + $0xa] sm:$0xff]
      %v7696 = vld [vmem:[%s6145 + $0x1a] sm:$0xff]
      %v7697 = vld [vmem:[%s6145 + $0x22] sm:$0xff]
      %v7698 = vld [vmem:[%s6145 + $0x32] sm:$0xff]
      %v7699 = vld [vmem:[%s6145 + $0x3a] sm:$0xff]
      %v7700 = vld [vmem:[%s6145 + $0x4a] sm:$0xff]
      %v7701 = vld [vmem:[%s6145 + $0x52] sm:$0xff]
      %v7702 = vld [vmem:[%s6145 + $0x62] sm:$0xff]
      %v7703 = vld [vmem:[%s6145 + $0x6a] sm:$0xff]
      %v7704 = vld [vmem:[%s6145 + $0x7a] sm:$0xff]
      %v7705 = vld [vmem:[%s6145 + $0x82] sm:$0xff]
      %v7706 = vld [vmem:[%s6145 + $0x92] sm:$0xff]
      %v7707 = vld [vmem:[%s6145 + $0x9a] sm:$0xff]
      %v7708 = vld [vmem:[%s6145 + $0xaa] sm:$0xff]
      %v7709 = vld [vmem:[%s6145 + $0xb2] sm:$0xff]
      %v7710 = vld [vmem:[%s6145 + $0xc2] sm:$0xff]
      %v7711 = vld [vmem:[%s6145 + $0xca] sm:$0xff]
      %v7712 = vld [vmem:[%s6145 + $0xda] sm:$0xff]
      %v7713 = vld [vmem:[%s6145 + $0xe2] sm:$0xff]
      %v7714 = vld [vmem:[%s6145 + $0xf2] sm:$0xff]
      %v7715 = vld [vmem:[%s6145 + $0xfa] sm:$0xff]
      %v7716 = vld [vmem:[%s6145 + $0x10a] sm:$0xff]
      %v7717 = vld [vmem:[%s6145 + $0x112] sm:$0xff]
      %v7718 = vld [vmem:[%s6145 + $0x122] sm:$0xff]
      %v7719 = vld [vmem:[%s6145 + $0x12a] sm:$0xff]
      %v7720 = vld [vmem:[%s6145 + $0x13a] sm:$0xff]
      %v7721 = vld [vmem:[%s6145 + $0x142] sm:$0xff]
      %v7722 = vld [vmem:[%s6145 + $0x152] sm:$0xff]
      %v7723 = vld [vmem:[%s6145 + $0x15a] sm:$0xff]
      %v7724 = vld [vmem:[%s6145 + $0x16a] sm:$0xff]
      %v7725 = vld [vmem:[%s6145 + $0x172] sm:$0xff]
      %s7726 = scalar_lea.vmem %s4, 40
      %v7727 = vld [vmem:[%s7726] sm:$0xff]
      %v7729 = vsel %vm3768, %v7662, 0
      %v7732 = vsel %vm3768, %v7663, 0
      %v7735 = vsel %vm3768, %v7664, 0
      %v7738 = vsel %vm3768, %v7665, 0
      %v7741 = vsel %vm3768, %v7666, 0
      %v7744 = vsel %vm3768, %v7667, 0
      %v7747 = vsel %vm3768, %v7668, 0
      %v7750 = vsel %vm3768, %v7669, 0
      %v7753 = vsel %vm3768, %v7670, 0
      %v7756 = vsel %vm3768, %v7671, 0
      %v7759 = vsel %vm3768, %v7672, 0
      %v7762 = vsel %vm3768, %v7673, 0
      %v7765 = vsel %vm3768, %v7674, 0
      %v7768 = vsel %vm3768, %v7675, 0
      %v7771 = vsel %vm3768, %v7676, 0
      %v7774 = vsel %vm3768, %v7677, 0
      %v7777 = vsel %vm3768, %v7678, 0
      %v7780 = vsel %vm3768, %v7679, 0
      %v7783 = vsel %vm3768, %v7680, 0
      %v7786 = vsel %vm3768, %v7681, 0
      %v7789 = vsel %vm3768, %v7682, 0
      %v7792 = vsel %vm3768, %v7683, 0
      %v7795 = vsel %vm3768, %v7684, 0
      %v7798 = vsel %vm3768, %v7685, 0
      %v7801 = vsel %vm3768, %v7686, 0
      %v7804 = vsel %vm3768, %v7687, 0
      %v7807 = vsel %vm3768, %v7688, 0
      %v7810 = vsel %vm3768, %v7689, 0
      %v7813 = vsel %vm3768, %v7690, 0
      %v7816 = vsel %vm3768, %v7691, 0
      %v7819 = vsel %vm3768, %v7692, 0
      %v7822 = vsel %vm3768, %v7693, 0
      %7824 = vmatprep.subr.mxu0 0.0
      %7825 = vmatpush1.msra.mxu0 %v7727
      %7826 = vmatprep.subr.mxu0 0.0
      %7827 = vmatpush1.msra.mxu0 0.0
      %7828 = vmatprep.subr.mxu0 0.0
      %7829 = vmatpush1.msra.mxu0 0.0
      %7830 = vmatprep.subr.mxu0 0.0
      %7831 = vmatpush1.msra.mxu0 0.0
      %7832 = vmatprep.subr.mxu0 0.0
      %7833 = vmatpush1.msra.mxu0 0.0
      %7834 = vmatprep.subr.mxu0 0.0
      %7835 = vmatpush1.msra.mxu0 0.0
      %7836 = vmatprep.subr.mxu0 0.0
      %7837 = vmatpush1.msra.mxu0 0.0
      %7838 = vmatprep.subr.mxu0 0.0
      %7839 = vmatpush1.msra.mxu0 0.0
      %7840 = vmatprep.subr.mxu0 0.0
      %7841 = vmatpush1.msra.mxu0 0.0
      %7842 = vmatprep.subr.mxu0 0.0
      %7843 = vmatpush1.msra.mxu0 0.0
      %7844 = vmatprep.subr.mxu0 0.0
      %7845 = vmatpush1.msra.mxu0 0.0
      %7846 = vmatprep.subr.mxu0 0.0
      %7847 = vmatpush1.msra.mxu0 0.0
      %7848 = vmatprep.subr.mxu0 0.0
      %7849 = vmatpush1.msra.mxu0 0.0
      %7850 = vmatprep.subr.mxu0 0.0
      %7851 = vmatpush1.msra.mxu0 0.0
      %7852 = vmatprep.subr.mxu0 0.0
      %7853 = vmatpush1.msra.mxu0 0.0
      %7854 = vmatprep.subr.mxu0 0.0
      %7855 = vmatpush1.msra.mxu0 0.0
      %7856 = vmatprep.subr.mxu0 0.0
      %7857 = vmatpush1.msra.mxu0 0.0
      %7858 = vmatprep.subr.mxu0 0.0
      %7859 = vmatpush1.msra.mxu0 0.0
      %7860 = vmatprep.subr.mxu0 0.0
      %7861 = vmatpush1.msra.mxu0 0.0
      %7862 = vmatprep.subr.mxu0 0.0
      %7863 = vmatpush1.msra.mxu0 0.0
      %7864 = vmatprep.subr.mxu0 0.0
      %7865 = vmatpush1.msra.mxu0 0.0
      %7866 = vmatprep.subr.mxu0 0.0
      %7867 = vmatpush1.msra.mxu0 0.0
      %7868 = vmatprep.subr.mxu0 0.0
      %7869 = vmatpush1.msra.mxu0 0.0
      %7870 = vmatprep.subr.mxu0 0.0
      %7871 = vmatpush1.msra.mxu0 0.0
      %7872 = vmatprep.subr.mxu0 0.0
      %7873 = vmatpush1.msra.mxu0 0.0
      %7874 = vmatprep.subr.mxu0 0.0
      %7875 = vmatpush1.msra.mxu0 0.0
      %7876 = vmatprep.subr.mxu0 0.0
      %7877 = vmatpush1.msra.mxu0 0.0
      %7878 = vmatprep.subr.mxu0 0.0
      %7879 = vmatpush1.msra.mxu0 0.0
      %7880 = vmatprep.subr.mxu0 0.0
      %7881 = vmatpush1.msra.mxu0 0.0
      %7882 = vmatprep.subr.mxu0 0.0
      %7883 = vmatpush1.msra.mxu0 0.0
      %7884 = vmatprep.subr.mxu0 0.0
      %7885 = vmatpush1.msra.mxu0 0.0
      %7886 = vmatprep.subr.mxu0 0.0
      %7887 = vmatpush1.msra.mxu0 0.0
      %7888 = vmatprep.mubr.f32.mxu0 0.0
      %7889 = vmatmul.mubr.f32.gmra.mrb[0].mxu0 %v7729
      %v7890 = vpop.f32.mrb[0].mxu0
      %v7891 = vadd.f32 0.0, %v7890
      %v7892 = vpop.f32.mrb[0].mxu0
      %7893 = vmatprep.mubr.f32.mxu0 0.0
      %7894 = vmatmul.mubr.f32.gmra.mrb[0].mxu0 %v7732
      %v7895 = vpop.f32.mrb[0].mxu0
      %v7896 = vadd.f32 0.0, %v7895
      %v7897 = vpop.f32.mrb[0].mxu0
      %7898 = vmatprep.mubr.f32.mxu0 0.0
      %7899 = vmatmul.mubr.f32.gmra.mrb[0].mxu0 %v7735
      %v7900 = vpop.f32.mrb[0].mxu0
      %v7901 = vadd.f32 0.0, %v7900
      %v7902 = vpop.f32.mrb[0].mxu0
      %7903 = vmatprep.mubr.f32.mxu0 0.0
      %7904 = vmatmul.mubr.f32.gmra.mrb[0].mxu0 %v7738
      %v7905 = vpop.f32.mrb[0].mxu0
      %v7906 = vadd.f32 0.0, %v7905
      %v7907 = vpop.f32.mrb[0].mxu0
      %7908 = vmatprep.mubr.f32.mxu0 0.0
      %7909 = vmatmul.mubr.f32.gmra.mrb[0].mxu0 %v7741
      %v7910 = vpop.f32.mrb[0].mxu0
      %v7911 = vadd.f32 0.0, %v7910
      %v7912 = vpop.f32.mrb[0].mxu0
      %7913 = vmatprep.mubr.f32.mxu0 0.0
      %7914 = vmatmul.mubr.f32.gmra.mrb[0].mxu0 %v7744
      %v7915 = vpop.f32.mrb[0].mxu0
      %v7916 = vadd.f32 0.0, %v7915
      %v7917 = vpop.f32.mrb[0].mxu0
      %7918 = vmatprep.mubr.f32.mxu0 0.0
      %7919 = vmatmul.mubr.f32.gmra.mrb[0].mxu0 %v7747
      %v7920 = vpop.f32.mrb[0].mxu0
      %v7921 = vadd.f32 0.0, %v7920
      %v7922 = vpop.f32.mrb[0].mxu0
      %7923 = vmatprep.mubr.f32.mxu0 0.0
      %7924 = vmatmul.mubr.f32.gmra.mrb[0].mxu0 %v7750
      %v7925 = vpop.f32.mrb[0].mxu0
      %v7926 = vadd.f32 0.0, %v7925
      %v7927 = vpop.f32.mrb[0].mxu0
      %7928 = vmatprep.mubr.f32.mxu0 0.0
      %7929 = vmatmul.mubr.f32.gmra.mrb[0].mxu0 %v7753
      %v7930 = vpop.f32.mrb[0].mxu0
      %v7931 = vadd.f32 0.0, %v7930
      %v7932 = vpop.f32.mrb[0].mxu0
      %7933 = vmatprep.mubr.f32.mxu0 0.0
      %7934 = vmatmul.mubr.f32.gmra.mrb[0].mxu0 %v7756
      %v7935 = vpop.f32.mrb[0].mxu0
      %v7936 = vadd.f32 0.0, %v7935
      %v7937 = vpop.f32.mrb[0].mxu0
      %7938 = vmatprep.mubr.f32.mxu0 0.0
      %7939 = vmatmul.mubr.f32.gmra.mrb[0].mxu0 %v7759
      %v7940 = vpop.f32.mrb[0].mxu0
      %v7941 = vadd.f32 0.0, %v7940
      %v7942 = vpop.f32.mrb[0].mxu0
      %7943 = vmatprep.mubr.f32.mxu0 0.0
      %7944 = vmatmul.mubr.f32.gmra.mrb[0].mxu0 %v7762
      %v7945 = vpop.f32.mrb[0].mxu0
      %v7946 = vadd.f32 0.0, %v7945
      %v7947 = vpop.f32.mrb[0].mxu0
      %7948 = vmatprep.mubr.f32.mxu0 0.0
      %7949 = vmatmul.mubr.f32.gmra.mrb[0].mxu0 %v7765
      %v7950 = vpop.f32.mrb[0].mxu0
      %v7951 = vadd.f32 0.0, %v7950
      %v7952 = vpop.f32.mrb[0].mxu0
      %7953 = vmatprep.mubr.f32.mxu0 0.0
      %7954 = vmatmul.mubr.f32.gmra.mrb[0].mxu0 %v7768
      %v7955 = vpop.f32.mrb[0].mxu0
      %v7956 = vadd.f32 0.0, %v7955
      %v7957 = vpop.f32.mrb[0].mxu0
      %7958 = vmatprep.mubr.f32.mxu0 0.0
      %7959 = vmatmul.mubr.f32.gmra.mrb[0].mxu0 %v7771
      %v7960 = vpop.f32.mrb[0].mxu0
      %v7961 = vadd.f32 0.0, %v7960
      %v7962 = vpop.f32.mrb[0].mxu0
      %7963 = vmatprep.mubr.f32.mxu0 0.0
      %7964 = vmatmul.mubr.f32.gmra.mrb[0].mxu0 %v7774
      %v7965 = vpop.f32.mrb[0].mxu0
      %v7966 = vadd.f32 0.0, %v7965
      %v7967 = vpop.f32.mrb[0].mxu0
      %7968 = vmatprep.mubr.f32.mxu0 0.0
      %7969 = vmatmul.mubr.f32.gmra.mrb[0].mxu0 %v7777
      %v7970 = vpop.f32.mrb[0].mxu0
      %v7971 = vadd.f32 0.0, %v7970
      %v7972 = vpop.f32.mrb[0].mxu0
      %7973 = vmatprep.mubr.f32.mxu0 0.0
      %7974 = vmatmul.mubr.f32.gmra.mrb[0].mxu0 %v7780
      %v7975 = vpop.f32.mrb[0].mxu0
      %v7976 = vadd.f32 0.0, %v7975
      %v7977 = vpop.f32.mrb[0].mxu0
      %7978 = vmatprep.mubr.f32.mxu0 0.0
      %7979 = vmatmul.mubr.f32.gmra.mrb[0].mxu0 %v7783
      %v7980 = vpop.f32.mrb[0].mxu0
      %v7981 = vadd.f32 0.0, %v7980
      %v7982 = vpop.f32.mrb[0].mxu0
      %7983 = vmatprep.mubr.f32.mxu0 0.0
      %7984 = vmatmul.mubr.f32.gmra.mrb[0].mxu0 %v7786
      %v7985 = vpop.f32.mrb[0].mxu0
      %v7986 = vadd.f32 0.0, %v7985
      %v7987 = vpop.f32.mrb[0].mxu0
      %7988 = vmatprep.mubr.f32.mxu0 0.0
      %7989 = vmatmul.mubr.f32.gmra.mrb[0].mxu0 %v7789
      %v7990 = vpop.f32.mrb[0].mxu0
      %v7991 = vadd.f32 0.0, %v7990
      %v7992 = vpop.f32.mrb[0].mxu0
      %7993 = vmatprep.mubr.f32.mxu0 0.0
      %7994 = vmatmul.mubr.f32.gmra.mrb[0].mxu0 %v7792
      %v7995 = vpop.f32.mrb[0].mxu0
      %v7996 = vadd.f32 0.0, %v7995
      %v7997 = vpop.f32.mrb[0].mxu0
      %7998 = vmatprep.mubr.f32.mxu0 0.0
      %7999 = vmatmul.mubr.f32.gmra.mrb[0].mxu0 %v7795
      %v8000 = vpop.f32.mrb[0].mxu0
      %v8001 = vadd.f32 0.0, %v8000
      %v8002 = vpop.f32.mrb[0].mxu0
      %8003 = vmatprep.mubr.f32.mxu0 0.0
      %8004 = vmatmul.mubr.f32.gmra.mrb[0].mxu0 %v7798
      %v8005 = vpop.f32.mrb[0].mxu0
      %v8006 = vadd.f32 0.0, %v8005
      %v8007 = vpop.f32.mrb[0].mxu0
      %8008 = vmatprep.mubr.f32.mxu0 0.0
      %8009 = vmatmul.mubr.f32.gmra.mrb[0].mxu0 %v7801
      %v8010 = vpop.f32.mrb[0].mxu0
      %v8011 = vadd.f32 0.0, %v8010
      %v8012 = vpop.f32.mrb[0].mxu0
      %8013 = vmatprep.mubr.f32.mxu0 0.0
      %8014 = vmatmul.mubr.f32.gmra.mrb[0].mxu0 %v7804
      %v8015 = vpop.f32.mrb[0].mxu0
      %v8016 = vadd.f32 0.0, %v8015
      %v8017 = vpop.f32.mrb[0].mxu0
      %8018 = vmatprep.mubr.f32.mxu0 0.0
      %8019 = vmatmul.mubr.f32.gmra.mrb[0].mxu0 %v7807
      %v8020 = vpop.f32.mrb[0].mxu0
      %v8021 = vadd.f32 0.0, %v8020
      %v8022 = vpop.f32.mrb[0].mxu0
      %8023 = vmatprep.mubr.f32.mxu0 0.0
      %8024 = vmatmul.mubr.f32.gmra.mrb[0].mxu0 %v7810
      %v8025 = vpop.f32.mrb[0].mxu0
      %v8026 = vadd.f32 0.0, %v8025
      %v8027 = vpop.f32.mrb[0].mxu0
      %8028 = vmatprep.mubr.f32.mxu0 0.0
      %8029 = vmatmul.mubr.f32.gmra.mrb[0].mxu0 %v7813
      %v8030 = vpop.f32.mrb[0].mxu0
      %v8031 = vadd.f32 0.0, %v8030
      %v8032 = vpop.f32.mrb[0].mxu0
      %8033 = vmatprep.mubr.f32.mxu0 0.0
      %8034 = vmatmul.mubr.f32.gmra.mrb[0].mxu0 %v7816
      %v8035 = vpop.f32.mrb[0].mxu0
      %v8036 = vadd.f32 0.0, %v8035
      %v8037 = vpop.f32.mrb[0].mxu0
      %8038 = vmatprep.mubr.f32.mxu0 0.0
      %8039 = vmatmul.mubr.f32.gmra.mrb[0].mxu0 %v7819
      %v8040 = vpop.f32.mrb[0].mxu0
      %v8041 = vadd.f32 0.0, %v8040
      %v8042 = vpop.f32.mrb[0].mxu0
      %8043 = vmatprep.mubr.f32.mxu0 0.0
      %8044 = vmatmul.mubr.f32.gmra.mrb[0].mxu0 %v7822
      %v8045 = vpop.f32.mrb[0].mxu0
      %v8046 = vadd.f32 0.0, %v8045
      %v8047 = vpop.f32.mrb[0].mxu0
      %8048 = vdwg.mxu0
      %v8049 = vadd.f32 %v7630, %v7891
      %v8050 = vadd.f32 %v7631, %v7896
      %v8051 = vadd.f32 %v7632, %v7901
      %v8052 = vadd.f32 %v7633, %v7906
      %v8053 = vadd.f32 %v7634, %v7911
      %v8054 = vadd.f32 %v7635, %v7916
      %v8055 = vadd.f32 %v7636, %v7921
      %v8056 = vadd.f32 %v7637, %v7926
      %v8057 = vadd.f32 %v7638, %v7931
      %v8058 = vadd.f32 %v7639, %v7936
      %v8059 = vadd.f32 %v7640, %v7941
      %v8060 = vadd.f32 %v7641, %v7946
      %v8061 = vadd.f32 %v7642, %v7951
      %v8062 = vadd.f32 %v7643, %v7956
      %v8063 = vadd.f32 %v7644, %v7961
      %v8064 = vadd.f32 %v7645, %v7966
      %v8065 = vadd.f32 %v7646, %v7971
      %v8066 = vadd.f32 %v7647, %v7976
      %v8067 = vadd.f32 %v7648, %v7981
      %v8068 = vadd.f32 %v7649, %v7986
      %v8069 = vadd.f32 %v7650, %v7991
      %v8070 = vadd.f32 %v7651, %v7996
      %v8071 = vadd.f32 %v7652, %v8001
      %v8072 = vadd.f32 %v7653, %v8006
      %v8073 = vadd.f32 %v7654, %v8011
      %v8074 = vadd.f32 %v7655, %v8016
      %v8075 = vadd.f32 %v7656, %v8021
      %v8076 = vadd.f32 %v7657, %v8026
      %v8077 = vadd.f32 %v7658, %v8031
      %v8078 = vadd.f32 %v7659, %v8036
      %v8079 = vadd.f32 %v7660, %v8041
      %v8080 = vadd.f32 %v7661, %v8046
      %s8081 = scalar_lea.vmem %s5, 40
      %v8082 = vld [vmem:[%s8081] sm:$0xff]
      %v8084 = vsel %vm3768, %v7694, 0
      %v8087 = vsel %vm3768, %v7695, 0
      %v8090 = vsel %vm3768, %v7696, 0
      %v8093 = vsel %vm3768, %v7697, 0
      %v8096 = vsel %vm3768, %v7698, 0
      %v8099 = vsel %vm3768, %v7699, 0
      %v8102 = vsel %vm3768, %v7700, 0
      %v8105 = vsel %vm3768, %v7701, 0
      %v8108 = vsel %vm3768, %v7702, 0
      %v8111 = vsel %vm3768, %v7703, 0
      %v8114 = vsel %vm3768, %v7704, 0
      %v8117 = vsel %vm3768, %v7705, 0
      %v8120 = vsel %vm3768, %v7706, 0
      %v8123 = vsel %vm3768, %v7707, 0
      %v8126 = vsel %vm3768, %v7708, 0
      %v8129 = vsel %vm3768, %v7709, 0
      %v8132 = vsel %vm3768, %v7710, 0
      %v8135 = vsel %vm3768, %v7711, 0
      %v8138 = vsel %vm3768, %v7712, 0
      %v8141 = vsel %vm3768, %v7713, 0
      %v8144 = vsel %vm3768, %v7714, 0
      %v8147 = vsel %vm3768, %v7715, 0
      %v8150 = vsel %vm3768, %v7716, 0
      %v8153 = vsel %vm3768, %v7717, 0
      %v8156 = vsel %vm3768, %v7718, 0
      %v8159 = vsel %vm3768, %v7719, 0
      %v8162 = vsel %vm3768, %v7720, 0
      %v8165 = vsel %vm3768, %v7721, 0
      %v8168 = vsel %vm3768, %v7722, 0
      %v8171 = vsel %vm3768, %v7723, 0
      %v8174 = vsel %vm3768, %v7724, 0
      %v8177 = vsel %vm3768, %v7725, 0
      %8179 = vmatprep.subr.mxu0 0.0
      %8180 = vmatpush1.msra.mxu0 %v8082
      %8181 = vmatprep.subr.mxu0 0.0
      %8182 = vmatpush1.msra.mxu0 0.0
      %8183 = vmatprep.subr.mxu0 0.0
      %8184 = vmatpush1.msra.mxu0 0.0
      %8185 = vmatprep.subr.mxu0 0.0
      %8186 = vmatpush1.msra.mxu0 0.0
      %8187 = vmatprep.subr.mxu0 0.0
      %8188 = vmatpush1.msra.mxu0 0.0
      %8189 = vmatprep.subr.mxu0 0.0
      %8190 = vmatpush1.msra.mxu0 0.0
      %8191 = vmatprep.subr.mxu0 0.0
      %8192 = vmatpush1.msra.mxu0 0.0
      %8193 = vmatprep.subr.mxu0 0.0
      %8194 = vmatpush1.msra.mxu0 0.0
      %8195 = vmatprep.subr.mxu0 0.0
      %8196 = vmatpush1.msra.mxu0 0.0
      %8197 = vmatprep.subr.mxu0 0.0
      %8198 = vmatpush1.msra.mxu0 0.0
      %8199 = vmatprep.subr.mxu0 0.0
      %8200 = vmatpush1.msra.mxu0 0.0
      %8201 = vmatprep.subr.mxu0 0.0
      %8202 = vmatpush1.msra.mxu0 0.0
      %8203 = vmatprep.subr.mxu0 0.0
      %8204 = vmatpush1.msra.mxu0 0.0
      %8205 = vmatprep.subr.mxu0 0.0
      %8206 = vmatpush1.msra.mxu0 0.0
      %8207 = vmatprep.subr.mxu0 0.0
      %8208 = vmatpush1.msra.mxu0 0.0
      %8209 = vmatprep.subr.mxu0 0.0
      %8210 = vmatpush1.msra.mxu0 0.0
      %8211 = vmatprep.subr.mxu0 0.0
      %8212 = vmatpush1.msra.mxu0 0.0
      %8213 = vmatprep.subr.mxu0 0.0
      %8214 = vmatpush1.msra.mxu0 0.0
      %8215 = vmatprep.subr.mxu0 0.0
      %8216 = vmatpush1.msra.mxu0 0.0
      %8217 = vmatprep.subr.mxu0 0.0
      %8218 = vmatpush1.msra.mxu0 0.0
      %8219 = vmatprep.subr.mxu0 0.0
      %8220 = vmatpush1.msra.mxu0 0.0
      %8221 = vmatprep.subr.mxu0 0.0
      %8222 = vmatpush1.msra.mxu0 0.0
      %8223 = vmatprep.subr.mxu0 0.0
      %8224 = vmatpush1.msra.mxu0 0.0
      %8225 = vmatprep.subr.mxu0 0.0
      %8226 = vmatpush1.msra.mxu0 0.0
      %8227 = vmatprep.subr.mxu0 0.0
      %8228 = vmatpush1.msra.mxu0 0.0
      %8229 = vmatprep.subr.mxu0 0.0
      %8230 = vmatpush1.msra.mxu0 0.0
      %8231 = vmatprep.subr.mxu0 0.0
      %8232 = vmatpush1.msra.mxu0 0.0
      %8233 = vmatprep.subr.mxu0 0.0
      %8234 = vmatpush1.msra.mxu0 0.0
      %8235 = vmatprep.subr.mxu0 0.0
      %8236 = vmatpush1.msra.mxu0 0.0
      %8237 = vmatprep.subr.mxu0 0.0
      %8238 = vmatpush1.msra.mxu0 0.0
      %8239 = vmatprep.subr.mxu0 0.0
      %8240 = vmatpush1.msra.mxu0 0.0
      %8241 = vmatprep.subr.mxu0 0.0
      %8242 = vmatpush1.msra.mxu0 0.0
      %8243 = vmatprep.mubr.f32.mxu0 0.0
      %8244 = vmatmul.mubr.f32.gmra.mrb[0].mxu0 %v8084
      %v8245 = vpop.f32.mrb[0].mxu0
      %v8246 = vadd.f32 0.0, %v8245
      %v8247 = vpop.f32.mrb[0].mxu0
      %8248 = vmatprep.mubr.f32.mxu0 0.0
      %8249 = vmatmul.mubr.f32.gmra.mrb[0].mxu0 %v8087
      %v8250 = vpop.f32.mrb[0].mxu0
      %v8251 = vadd.f32 0.0, %v8250
      %v8252 = vpop.f32.mrb[0].mxu0
      %8253 = vmatprep.mubr.f32.mxu0 0.0
      %8254 = vmatmul.mubr.f32.gmra.mrb[0].mxu0 %v8090
      %v8255 = vpop.f32.mrb[0].mxu0
      %v8256 = vadd.f32 0.0, %v8255
      %v8257 = vpop.f32.mrb[0].mxu0
      %8258 = vmatprep.mubr.f32.mxu0 0.0
      %8259 = vmatmul.mubr.f32.gmra.mrb[0].mxu0 %v8093
      %v8260 = vpop.f32.mrb[0].mxu0
      %v8261 = vadd.f32 0.0, %v8260
      %v8262 = vpop.f32.mrb[0].mxu0
      %8263 = vmatprep.mubr.f32.mxu0 0.0
      %8264 = vmatmul.mubr.f32.gmra.mrb[0].mxu0 %v8096
      %v8265 = vpop.f32.mrb[0].mxu0
      %v8266 = vadd.f32 0.0, %v8265
      %v8267 = vpop.f32.mrb[0].mxu0
      %8268 = vmatprep.mubr.f32.mxu0 0.0
      %8269 = vmatmul.mubr.f32.gmra.mrb[0].mxu0 %v8099
      %v8270 = vpop.f32.mrb[0].mxu0
      %v8271 = vadd.f32 0.0, %v8270
      %v8272 = vpop.f32.mrb[0].mxu0
      %8273 = vmatprep.mubr.f32.mxu0 0.0
      %8274 = vmatmul.mubr.f32.gmra.mrb[0].mxu0 %v8102
      %v8275 = vpop.f32.mrb[0].mxu0
      %v8276 = vadd.f32 0.0, %v8275
      %v8277 = vpop.f32.mrb[0].mxu0
      %8278 = vmatprep.mubr.f32.mxu0 0.0
      %8279 = vmatmul.mubr.f32.gmra.mrb[0].mxu0 %v8105
      %v8280 = vpop.f32.mrb[0].mxu0
      %v8281 = vadd.f32 0.0, %v8280
      %v8282 = vpop.f32.mrb[0].mxu0
      %8283 = vmatprep.mubr.f32.mxu0 0.0
      %8284 = vmatmul.mubr.f32.gmra.mrb[0].mxu0 %v8108
      %v8285 = vpop.f32.mrb[0].mxu0
      %v8286 = vadd.f32 0.0, %v8285
      %v8287 = vpop.f32.mrb[0].mxu0
      %8288 = vmatprep.mubr.f32.mxu0 0.0
      %8289 = vmatmul.mubr.f32.gmra.mrb[0].mxu0 %v8111
      %v8290 = vpop.f32.mrb[0].mxu0
      %v8291 = vadd.f32 0.0, %v8290
      %v8292 = vpop.f32.mrb[0].mxu0
      %8293 = vmatprep.mubr.f32.mxu0 0.0
      %8294 = vmatmul.mubr.f32.gmra.mrb[0].mxu0 %v8114
      %v8295 = vpop.f32.mrb[0].mxu0
      %v8296 = vadd.f32 0.0, %v8295
      %v8297 = vpop.f32.mrb[0].mxu0
      %8298 = vmatprep.mubr.f32.mxu0 0.0
      %8299 = vmatmul.mubr.f32.gmra.mrb[0].mxu0 %v8117
      %v8300 = vpop.f32.mrb[0].mxu0
      %v8301 = vadd.f32 0.0, %v8300
      %v8302 = vpop.f32.mrb[0].mxu0
      %8303 = vmatprep.mubr.f32.mxu0 0.0
      %8304 = vmatmul.mubr.f32.gmra.mrb[0].mxu0 %v8120
      %v8305 = vpop.f32.mrb[0].mxu0
      %v8306 = vadd.f32 0.0, %v8305
      %v8307 = vpop.f32.mrb[0].mxu0
      %8308 = vmatprep.mubr.f32.mxu0 0.0
      %8309 = vmatmul.mubr.f32.gmra.mrb[0].mxu0 %v8123
      %v8310 = vpop.f32.mrb[0].mxu0
      %v8311 = vadd.f32 0.0, %v8310
      %v8312 = vpop.f32.mrb[0].mxu0
      %8313 = vmatprep.mubr.f32.mxu0 0.0
      %8314 = vmatmul.mubr.f32.gmra.mrb[0].mxu0 %v8126
      %v8315 = vpop.f32.mrb[0].mxu0
      %v8316 = vadd.f32 0.0, %v8315
      %v8317 = vpop.f32.mrb[0].mxu0
      %8318 = vmatprep.mubr.f32.mxu0 0.0
      %8319 = vmatmul.mubr.f32.gmra.mrb[0].mxu0 %v8129
      %v8320 = vpop.f32.mrb[0].mxu0
      %v8321 = vadd.f32 0.0, %v8320
      %v8322 = vpop.f32.mrb[0].mxu0
      %8323 = vmatprep.mubr.f32.mxu0 0.0
      %8324 = vmatmul.mubr.f32.gmra.mrb[0].mxu0 %v8132
      %v8325 = vpop.f32.mrb[0].mxu0
      %v8326 = vadd.f32 0.0, %v8325
      %v8327 = vpop.f32.mrb[0].mxu0
      %8328 = vmatprep.mubr.f32.mxu0 0.0
      %8329 = vmatmul.mubr.f32.gmra.mrb[0].mxu0 %v8135
      %v8330 = vpop.f32.mrb[0].mxu0
      %v8331 = vadd.f32 0.0, %v8330
      %v8332 = vpop.f32.mrb[0].mxu0
      %8333 = vmatprep.mubr.f32.mxu0 0.0
      %8334 = vmatmul.mubr.f32.gmra.mrb[0].mxu0 %v8138
      %v8335 = vpop.f32.mrb[0].mxu0
      %v8336 = vadd.f32 0.0, %v8335
      %v8337 = vpop.f32.mrb[0].mxu0
      %8338 = vmatprep.mubr.f32.mxu0 0.0
      %8339 = vmatmul.mubr.f32.gmra.mrb[0].mxu0 %v8141
      %v8340 = vpop.f32.mrb[0].mxu0
      %v8341 = vadd.f32 0.0, %v8340
      %v8342 = vpop.f32.mrb[0].mxu0
      %8343 = vmatprep.mubr.f32.mxu0 0.0
      %8344 = vmatmul.mubr.f32.gmra.mrb[0].mxu0 %v8144
      %v8345 = vpop.f32.mrb[0].mxu0
      %v8346 = vadd.f32 0.0, %v8345
      %v8347 = vpop.f32.mrb[0].mxu0
      %8348 = vmatprep.mubr.f32.mxu0 0.0
      %8349 = vmatmul.mubr.f32.gmra.mrb[0].mxu0 %v8147
      %v8350 = vpop.f32.mrb[0].mxu0
      %v8351 = vadd.f32 0.0, %v8350
      %v8352 = vpop.f32.mrb[0].mxu0
      %8353 = vmatprep.mubr.f32.mxu0 0.0
      %8354 = vmatmul.mubr.f32.gmra.mrb[0].mxu0 %v8150
      %v8355 = vpop.f32.mrb[0].mxu0
      %v8356 = vadd.f32 0.0, %v8355
      %v8357 = vpop.f32.mrb[0].mxu0
      %8358 = vmatprep.mubr.f32.mxu0 0.0
      %8359 = vmatmul.mubr.f32.gmra.mrb[0].mxu0 %v8153
      %v8360 = vpop.f32.mrb[0].mxu0
      %v8361 = vadd.f32 0.0, %v8360
      %v8362 = vpop.f32.mrb[0].mxu0
      %8363 = vmatprep.mubr.f32.mxu0 0.0
      %8364 = vmatmul.mubr.f32.gmra.mrb[0].mxu0 %v8156
      %v8365 = vpop.f32.mrb[0].mxu0
      %v8366 = vadd.f32 0.0, %v8365
      %v8367 = vpop.f32.mrb[0].mxu0
      %8368 = vmatprep.mubr.f32.mxu0 0.0
      %8369 = vmatmul.mubr.f32.gmra.mrb[0].mxu0 %v8159
      %v8370 = vpop.f32.mrb[0].mxu0
      %v8371 = vadd.f32 0.0, %v8370
      %v8372 = vpop.f32.mrb[0].mxu0
      %8373 = vmatprep.mubr.f32.mxu0 0.0
      %8374 = vmatmul.mubr.f32.gmra.mrb[0].mxu0 %v8162
      %v8375 = vpop.f32.mrb[0].mxu0
      %v8376 = vadd.f32 0.0, %v8375
      %v8377 = vpop.f32.mrb[0].mxu0
      %8378 = vmatprep.mubr.f32.mxu0 0.0
      %8379 = vmatmul.mubr.f32.gmra.mrb[0].mxu0 %v8165
      %v8380 = vpop.f32.mrb[0].mxu0
      %v8381 = vadd.f32 0.0, %v8380
      %v8382 = vpop.f32.mrb[0].mxu0
      %8383 = vmatprep.mubr.f32.mxu0 0.0
      %8384 = vmatmul.mubr.f32.gmra.mrb[0].mxu0 %v8168
      %v8385 = vpop.f32.mrb[0].mxu0
      %v8386 = vadd.f32 0.0, %v8385
      %v8387 = vpop.f32.mrb[0].mxu0
      %8388 = vmatprep.mubr.f32.mxu0 0.0
      %8389 = vmatmul.mubr.f32.gmra.mrb[0].mxu0 %v8171
      %v8390 = vpop.f32.mrb[0].mxu0
      %v8391 = vadd.f32 0.0, %v8390
      %v8392 = vpop.f32.mrb[0].mxu0
      %8393 = vmatprep.mubr.f32.mxu0 0.0
      %8394 = vmatmul.mubr.f32.gmra.mrb[0].mxu0 %v8174
      %v8395 = vpop.f32.mrb[0].mxu0
      %v8396 = vadd.f32 0.0, %v8395
      %v8397 = vpop.f32.mrb[0].mxu0
      %8398 = vmatprep.mubr.f32.mxu0 0.0
      %8399 = vmatmul.mubr.f32.gmra.mrb[0].mxu0 %v8177
      %v8400 = vpop.f32.mrb[0].mxu0
      %v8401 = vadd.f32 0.0, %v8400
      %v8402 = vpop.f32.mrb[0].mxu0
      %8403 = vdwg.mxu0
      %v8404 = vadd.f32 %v8049, %v8246
      %v8405 = vadd.f32 %v8050, %v8251
      %v8406 = vadd.f32 %v8051, %v8256
      %v8407 = vadd.f32 %v8052, %v8261
      %v8408 = vadd.f32 %v8053, %v8266
      %v8409 = vadd.f32 %v8054, %v8271
      %v8410 = vadd.f32 %v8055, %v8276
      %v8411 = vadd.f32 %v8056, %v8281
      %v8412 = vadd.f32 %v8057, %v8286
      %v8413 = vadd.f32 %v8058, %v8291
      %v8414 = vadd.f32 %v8059, %v8296
      %v8415 = vadd.f32 %v8060, %v8301
      %v8416 = vadd.f32 %v8061, %v8306
      %v8417 = vadd.f32 %v8062, %v8311
      %v8418 = vadd.f32 %v8063, %v8316
      %v8419 = vadd.f32 %v8064, %v8321
      %v8420 = vadd.f32 %v8065, %v8326
      %v8421 = vadd.f32 %v8066, %v8331
      %v8422 = vadd.f32 %v8067, %v8336
      %v8423 = vadd.f32 %v8068, %v8341
      %v8424 = vadd.f32 %v8069, %v8346
      %v8425 = vadd.f32 %v8070, %v8351
      %v8426 = vadd.f32 %v8071, %v8356
      %v8427 = vadd.f32 %v8072, %v8361
      %v8428 = vadd.f32 %v8073, %v8366
      %v8429 = vadd.f32 %v8074, %v8371
      %v8430 = vadd.f32 %v8075, %v8376
      %v8431 = vadd.f32 %v8076, %v8381
      %v8432 = vadd.f32 %v8077, %v8386
      %v8433 = vadd.f32 %v8078, %v8391
      %v8434 = vadd.f32 %v8079, %v8396
      %v8435 = vadd.f32 %v8080, %v8401
      %s8436 = scalar_lea.vmem [#allocation2], 48
      %v8437 = vld [vmem:[%s8436] sm:$0xff]
      %v8438 = vld [vmem:[%s8436 + $0x8] sm:$0xff]
      %v8439 = vld [vmem:[%s8436 + $0x18] sm:$0xff]
      %v8440 = vld [vmem:[%s8436 + $0x20] sm:$0xff]
      %v8441 = vld [vmem:[%s8436 + $0x30] sm:$0xff]
      %v8442 = vld [vmem:[%s8436 + $0x38] sm:$0xff]
      %v8443 = vld [vmem:[%s8436 + $0x48] sm:$0xff]
      %v8444 = vld [vmem:[%s8436 + $0x50] sm:$0xff]
      %v8445 = vld [vmem:[%s8436 + $0x60] sm:$0xff]
      %v8446 = vld [vmem:[%s8436 + $0x68] sm:$0xff]
      %v8447 = vld [vmem:[%s8436 + $0x78] sm:$0xff]
      %v8448 = vld [vmem:[%s8436 + $0x80] sm:$0xff]
      %v8449 = vld [vmem:[%s8436 + $0x90] sm:$0xff]
      %v8450 = vld [vmem:[%s8436 + $0x98] sm:$0xff]
      %v8451 = vld [vmem:[%s8436 + $0xa8] sm:$0xff]
      %v8452 = vld [vmem:[%s8436 + $0xb0] sm:$0xff]
      %v8453 = vld [vmem:[%s8436 + $0xc0] sm:$0xff]
      %v8454 = vld [vmem:[%s8436 + $0xc8] sm:$0xff]
      %v8455 = vld [vmem:[%s8436 + $0xd8] sm:$0xff]
      %v8456 = vld [vmem:[%s8436 + $0xe0] sm:$0xff]
      %v8457 = vld [vmem:[%s8436 + $0xf0] sm:$0xff]
      %v8458 = vld [vmem:[%s8436 + $0xf8] sm:$0xff]
      %v8459 = vld [vmem:[%s8436 + $0x108] sm:$0xff]
      %v8460 = vld [vmem:[%s8436 + $0x110] sm:$0xff]
      %v8461 = vld [vmem:[%s8436 + $0x120] sm:$0xff]
      %v8462 = vld [vmem:[%s8436 + $0x128] sm:$0xff]
      %v8463 = vld [vmem:[%s8436 + $0x138] sm:$0xff]
      %v8464 = vld [vmem:[%s8436 + $0x140] sm:$0xff]
      %v8465 = vld [vmem:[%s8436 + $0x150] sm:$0xff]
      %v8466 = vld [vmem:[%s8436 + $0x158] sm:$0xff]
      %v8467 = vld [vmem:[%s8436 + $0x168] sm:$0xff]
      %v8468 = vld [vmem:[%s8436 + $0x170] sm:$0xff]
      %s8469 = scalar_lea.vmem %s293, 48
      %v8470 = vld [vmem:[%s8469] sm:$0xff]
      %v8471 = vld [vmem:[%s8469 + $0x8] sm:$0xff]
      %v8472 = vld [vmem:[%s8469 + $0x18] sm:$0xff]
      %v8473 = vld [vmem:[%s8469 + $0x20] sm:$0xff]
      %v8474 = vld [vmem:[%s8469 + $0x30] sm:$0xff]
      %v8475 = vld [vmem:[%s8469 + $0x38] sm:$0xff]
      %v8476 = vld [vmem:[%s8469 + $0x48] sm:$0xff]
      %v8477 = vld [vmem:[%s8469 + $0x50] sm:$0xff]
      %v8478 = vld [vmem:[%s8469 + $0x60] sm:$0xff]
      %v8479 = vld [vmem:[%s8469 + $0x68] sm:$0xff]
      %v8480 = vld [vmem:[%s8469 + $0x78] sm:$0xff]
      %v8481 = vld [vmem:[%s8469 + $0x80] sm:$0xff]
      %v8482 = vld [vmem:[%s8469 + $0x90] sm:$0xff]
      %v8483 = vld [vmem:[%s8469 + $0x98] sm:$0xff]
      %v8484 = vld [vmem:[%s8469 + $0xa8] sm:$0xff]
      %v8485 = vld [vmem:[%s8469 + $0xb0] sm:$0xff]
      %v8486 = vld [vmem:[%s8469 + $0xc0] sm:$0xff]
      %v8487 = vld [vmem:[%s8469 + $0xc8] sm:$0xff]
      %v8488 = vld [vmem:[%s8469 + $0xd8] sm:$0xff]
      %v8489 = vld [vmem:[%s8469 + $0xe0] sm:$0xff]
      %v8490 = vld [vmem:[%s8469 + $0xf0] sm:$0xff]
      %v8491 = vld [vmem:[%s8469 + $0xf8] sm:$0xff]
      %v8492 = vld [vmem:[%s8469 + $0x108] sm:$0xff]
      %v8493 = vld [vmem:[%s8469 + $0x110] sm:$0xff]
      %v8494 = vld [vmem:[%s8469 + $0x120] sm:$0xff]
      %v8495 = vld [vmem:[%s8469 + $0x128] sm:$0xff]
      %v8496 = vld [vmem:[%s8469 + $0x138] sm:$0xff]
      %v8497 = vld [vmem:[%s8469 + $0x140] sm:$0xff]
      %v8498 = vld [vmem:[%s8469 + $0x150] sm:$0xff]
      %v8499 = vld [vmem:[%s8469 + $0x158] sm:$0xff]
      %v8500 = vld [vmem:[%s8469 + $0x168] sm:$0xff]
      %v8501 = vld [vmem:[%s8469 + $0x170] sm:$0xff]
      %s8502 = scalar_lea.vmem %s4, 48
      %v8503 = vld [vmem:[%s8502] sm:$0xff]
      %v8505 = vsel %vm3768, %v8437, 0
      %v8508 = vsel %vm3768, %v8438, 0
      %v8511 = vsel %vm3768, %v8439, 0
      %v8514 = vsel %vm3768, %v8440, 0
      %v8517 = vsel %vm3768, %v8441, 0
      %v8520 = vsel %vm3768, %v8442, 0
      %v8523 = vsel %vm3768, %v8443, 0
      %v8526 = vsel %vm3768, %v8444, 0
      %v8529 = vsel %vm3768, %v8445, 0
      %v8532 = vsel %vm3768, %v8446, 0
      %v8535 = vsel %vm3768, %v8447, 0
      %v8538 = vsel %vm3768, %v8448, 0
      %v8541 = vsel %vm3768, %v8449, 0
      %v8544 = vsel %vm3768, %v8450, 0
      %v8547 = vsel %vm3768, %v8451, 0
      %v8550 = vsel %vm3768, %v8452, 0
      %v8553 = vsel %vm3768, %v8453, 0
      %v8556 = vsel %vm3768, %v8454, 0
      %v8559 = vsel %vm3768, %v8455, 0
      %v8562 = vsel %vm3768, %v8456, 0
      %v8565 = vsel %vm3768, %v8457, 0
      %v8568 = vsel %vm3768, %v8458, 0
      %v8571 = vsel %vm3768, %v8459, 0
      %v8574 = vsel %vm3768, %v8460, 0
      %v8577 = vsel %vm3768, %v8461, 0
      %v8580 = vsel %vm3768, %v8462, 0
      %v8583 = vsel %vm3768, %v8463, 0
      %v8586 = vsel %vm3768, %v8464, 0
      %v8589 = vsel %vm3768, %v8465, 0
      %v8592 = vsel %vm3768, %v8466, 0
      %v8595 = vsel %vm3768, %v8467, 0
      %v8598 = vsel %vm3768, %v8468, 0
      %8600 = vmatprep.subr.mxu0 0.0
      %8601 = vmatpush1.msra.mxu0 %v8503
      %8602 = vmatprep.subr.mxu0 0.0
      %8603 = vmatpush1.msra.mxu0 0.0
      %8604 = vmatprep.subr.mxu0 0.0
      %8605 = vmatpush1.msra.mxu0 0.0
      %8606 = vmatprep.subr.mxu0 0.0
      %8607 = vmatpush1.msra.mxu0 0.0
      %8608 = vmatprep.subr.mxu0 0.0
      %8609 = vmatpush1.msra.mxu0 0.0
      %8610 = vmatprep.subr.mxu0 0.0
      %8611 = vmatpush1.msra.mxu0 0.0
      %8612 = vmatprep.subr.mxu0 0.0
      %8613 = vmatpush1.msra.mxu0 0.0
      %8614 = vmatprep.subr.mxu0 0.0
      %8615 = vmatpush1.msra.mxu0 0.0
      %8616 = vmatprep.subr.mxu0 0.0
      %8617 = vmatpush1.msra.mxu0 0.0
      %8618 = vmatprep.subr.mxu0 0.0
      %8619 = vmatpush1.msra.mxu0 0.0
      %8620 = vmatprep.subr.mxu0 0.0
      %8621 = vmatpush1.msra.mxu0 0.0
      %8622 = vmatprep.subr.mxu0 0.0
      %8623 = vmatpush1.msra.mxu0 0.0
      %8624 = vmatprep.subr.mxu0 0.0
      %8625 = vmatpush1.msra.mxu0 0.0
      %8626 = vmatprep.subr.mxu0 0.0
      %8627 = vmatpush1.msra.mxu0 0.0
      %8628 = vmatprep.subr.mxu0 0.0
      %8629 = vmatpush1.msra.mxu0 0.0
      %8630 = vmatprep.subr.mxu0 0.0
      %8631 = vmatpush1.msra.mxu0 0.0
      %8632 = vmatprep.subr.mxu0 0.0
      %8633 = vmatpush1.msra.mxu0 0.0
      %8634 = vmatprep.subr.mxu0 0.0
      %8635 = vmatpush1.msra.mxu0 0.0
      %8636 = vmatprep.subr.mxu0 0.0
      %8637 = vmatpush1.msra.mxu0 0.0
      %8638 = vmatprep.subr.mxu0 0.0
      %8639 = vmatpush1.msra.mxu0 0.0
      %8640 = vmatprep.subr.mxu0 0.0
      %8641 = vmatpush1.msra.mxu0 0.0
      %8642 = vmatprep.subr.mxu0 0.0
      %8643 = vmatpush1.msra.mxu0 0.0
      %8644 = vmatprep.subr.mxu0 0.0
      %8645 = vmatpush1.msra.mxu0 0.0
      %8646 = vmatprep.subr.mxu0 0.0
      %8647 = vmatpush1.msra.mxu0 0.0
      %8648 = vmatprep.subr.mxu0 0.0
      %8649 = vmatpush1.msra.mxu0 0.0
      %8650 = vmatprep.subr.mxu0 0.0
      %8651 = vmatpush1.msra.mxu0 0.0
      %8652 = vmatprep.subr.mxu0 0.0
      %8653 = vmatpush1.msra.mxu0 0.0
      %8654 = vmatprep.subr.mxu0 0.0
      %8655 = vmatpush1.msra.mxu0 0.0
      %8656 = vmatprep.subr.mxu0 0.0
      %8657 = vmatpush1.msra.mxu0 0.0
      %8658 = vmatprep.subr.mxu0 0.0
      %8659 = vmatpush1.msra.mxu0 0.0
      %8660 = vmatprep.subr.mxu0 0.0
      %8661 = vmatpush1.msra.mxu0 0.0
      %8662 = vmatprep.subr.mxu0 0.0
      %8663 = vmatpush1.msra.mxu0 0.0
      %8664 = vmatprep.mubr.f32.mxu0 0.0
      %8665 = vmatmul.mubr.f32.gmra.mrb[0].mxu0 %v8505
      %v8666 = vpop.f32.mrb[0].mxu0
      %v8667 = vadd.f32 0.0, %v8666
      %v8668 = vpop.f32.mrb[0].mxu0
      %8669 = vmatprep.mubr.f32.mxu0 0.0
      %8670 = vmatmul.mubr.f32.gmra.mrb[0].mxu0 %v8508
      %v8671 = vpop.f32.mrb[0].mxu0
      %v8672 = vadd.f32 0.0, %v8671
      %v8673 = vpop.f32.mrb[0].mxu0
      %8674 = vmatprep.mubr.f32.mxu0 0.0
      %8675 = vmatmul.mubr.f32.gmra.mrb[0].mxu0 %v8511
      %v8676 = vpop.f32.mrb[0].mxu0
      %v8677 = vadd.f32 0.0, %v8676
      %v8678 = vpop.f32.mrb[0].mxu0
      %8679 = vmatprep.mubr.f32.mxu0 0.0
      %8680 = vmatmul.mubr.f32.gmra.mrb[0].mxu0 %v8514
      %v8681 = vpop.f32.mrb[0].mxu0
      %v8682 = vadd.f32 0.0, %v8681
      %v8683 = vpop.f32.mrb[0].mxu0
      %8684 = vmatprep.mubr.f32.mxu0 0.0
      %8685 = vmatmul.mubr.f32.gmra.mrb[0].mxu0 %v8517
      %v8686 = vpop.f32.mrb[0].mxu0
      %v8687 = vadd.f32 0.0, %v8686
      %v8688 = vpop.f32.mrb[0].mxu0
      %8689 = vmatprep.mubr.f32.mxu0 0.0
      %8690 = vmatmul.mubr.f32.gmra.mrb[0].mxu0 %v8520
      %v8691 = vpop.f32.mrb[0].mxu0
      %v8692 = vadd.f32 0.0, %v8691
      %v8693 = vpop.f32.mrb[0].mxu0
      %8694 = vmatprep.mubr.f32.mxu0 0.0
      %8695 = vmatmul.mubr.f32.gmra.mrb[0].mxu0 %v8523
      %v8696 = vpop.f32.mrb[0].mxu0
      %v8697 = vadd.f32 0.0, %v8696
      %v8698 = vpop.f32.mrb[0].mxu0
      %8699 = vmatprep.mubr.f32.mxu0 0.0
      %8700 = vmatmul.mubr.f32.gmra.mrb[0].mxu0 %v8526
      %v8701 = vpop.f32.mrb[0].mxu0
      %v8702 = vadd.f32 0.0, %v8701
      %v8703 = vpop.f32.mrb[0].mxu0
      %8704 = vmatprep.mubr.f32.mxu0 0.0
      %8705 = vmatmul.mubr.f32.gmra.mrb[0].mxu0 %v8529
      %v8706 = vpop.f32.mrb[0].mxu0
      %v8707 = vadd.f32 0.0, %v8706
      %v8708 = vpop.f32.mrb[0].mxu0
      %8709 = vmatprep.mubr.f32.mxu0 0.0
      %8710 = vmatmul.mubr.f32.gmra.mrb[0].mxu0 %v8532
      %v8711 = vpop.f32.mrb[0].mxu0
      %v8712 = vadd.f32 0.0, %v8711
      %v8713 = vpop.f32.mrb[0].mxu0
      %8714 = vmatprep.mubr.f32.mxu0 0.0
      %8715 = vmatmul.mubr.f32.gmra.mrb[0].mxu0 %v8535
      %v8716 = vpop.f32.mrb[0].mxu0
      %v8717 = vadd.f32 0.0, %v8716
      %v8718 = vpop.f32.mrb[0].mxu0
      %8719 = vmatprep.mubr.f32.mxu0 0.0
      %8720 = vmatmul.mubr.f32.gmra.mrb[0].mxu0 %v8538
      %v8721 = vpop.f32.mrb[0].mxu0
      %v8722 = vadd.f32 0.0, %v8721
      %v8723 = vpop.f32.mrb[0].mxu0
      %8724 = vmatprep.mubr.f32.mxu0 0.0
      %8725 = vmatmul.mubr.f32.gmra.mrb[0].mxu0 %v8541
      %v8726 = vpop.f32.mrb[0].mxu0
      %v8727 = vadd.f32 0.0, %v8726
      %v8728 = vpop.f32.mrb[0].mxu0
      %8729 = vmatprep.mubr.f32.mxu0 0.0
      %8730 = vmatmul.mubr.f32.gmra.mrb[0].mxu0 %v8544
      %v8731 = vpop.f32.mrb[0].mxu0
      %v8732 = vadd.f32 0.0, %v8731
      %v8733 = vpop.f32.mrb[0].mxu0
      %8734 = vmatprep.mubr.f32.mxu0 0.0
      %8735 = vmatmul.mubr.f32.gmra.mrb[0].mxu0 %v8547
      %v8736 = vpop.f32.mrb[0].mxu0
      %v8737 = vadd.f32 0.0, %v8736
      %v8738 = vpop.f32.mrb[0].mxu0
      %8739 = vmatprep.mubr.f32.mxu0 0.0
      %8740 = vmatmul.mubr.f32.gmra.mrb[0].mxu0 %v8550
      %v8741 = vpop.f32.mrb[0].mxu0
      %v8742 = vadd.f32 0.0, %v8741
      %v8743 = vpop.f32.mrb[0].mxu0
      %8744 = vmatprep.mubr.f32.mxu0 0.0
      %8745 = vmatmul.mubr.f32.gmra.mrb[0].mxu0 %v8553
      %v8746 = vpop.f32.mrb[0].mxu0
      %v8747 = vadd.f32 0.0, %v8746
      %v8748 = vpop.f32.mrb[0].mxu0
      %8749 = vmatprep.mubr.f32.mxu0 0.0
      %8750 = vmatmul.mubr.f32.gmra.mrb[0].mxu0 %v8556
      %v8751 = vpop.f32.mrb[0].mxu0
      %v8752 = vadd.f32 0.0, %v8751
      %v8753 = vpop.f32.mrb[0].mxu0
      %8754 = vmatprep.mubr.f32.mxu0 0.0
      %8755 = vmatmul.mubr.f32.gmra.mrb[0].mxu0 %v8559
      %v8756 = vpop.f32.mrb[0].mxu0
      %v8757 = vadd.f32 0.0, %v8756
      %v8758 = vpop.f32.mrb[0].mxu0
      %8759 = vmatprep.mubr.f32.mxu0 0.0
      %8760 = vmatmul.mubr.f32.gmra.mrb[0].mxu0 %v8562
      %v8761 = vpop.f32.mrb[0].mxu0
      %v8762 = vadd.f32 0.0, %v8761
      %v8763 = vpop.f32.mrb[0].mxu0
      %8764 = vmatprep.mubr.f32.mxu0 0.0
      %8765 = vmatmul.mubr.f32.gmra.mrb[0].mxu0 %v8565
      %v8766 = vpop.f32.mrb[0].mxu0
      %v8767 = vadd.f32 0.0, %v8766
      %v8768 = vpop.f32.mrb[0].mxu0
      %8769 = vmatprep.mubr.f32.mxu0 0.0
      %8770 = vmatmul.mubr.f32.gmra.mrb[0].mxu0 %v8568
      %v8771 = vpop.f32.mrb[0].mxu0
      %v8772 = vadd.f32 0.0, %v8771
      %v8773 = vpop.f32.mrb[0].mxu0
      %8774 = vmatprep.mubr.f32.mxu0 0.0
      %8775 = vmatmul.mubr.f32.gmra.mrb[0].mxu0 %v8571
      %v8776 = vpop.f32.mrb[0].mxu0
      %v8777 = vadd.f32 0.0, %v8776
      %v8778 = vpop.f32.mrb[0].mxu0
      %8779 = vmatprep.mubr.f32.mxu0 0.0
      %8780 = vmatmul.mubr.f32.gmra.mrb[0].mxu0 %v8574
      %v8781 = vpop.f32.mrb[0].mxu0
      %v8782 = vadd.f32 0.0, %v8781
      %v8783 = vpop.f32.mrb[0].mxu0
      %8784 = vmatprep.mubr.f32.mxu0 0.0
      %8785 = vmatmul.mubr.f32.gmra.mrb[0].mxu0 %v8577
      %v8786 = vpop.f32.mrb[0].mxu0
      %v8787 = vadd.f32 0.0, %v8786
      %v8788 = vpop.f32.mrb[0].mxu0
      %8789 = vmatprep.mubr.f32.mxu0 0.0
      %8790 = vmatmul.mubr.f32.gmra.mrb[0].mxu0 %v8580
      %v8791 = vpop.f32.mrb[0].mxu0
      %v8792 = vadd.f32 0.0, %v8791
      %v8793 = vpop.f32.mrb[0].mxu0
      %8794 = vmatprep.mubr.f32.mxu0 0.0
      %8795 = vmatmul.mubr.f32.gmra.mrb[0].mxu0 %v8583
      %v8796 = vpop.f32.mrb[0].mxu0
      %v8797 = vadd.f32 0.0, %v8796
      %v8798 = vpop.f32.mrb[0].mxu0
      %8799 = vmatprep.mubr.f32.mxu0 0.0
      %8800 = vmatmul.mubr.f32.gmra.mrb[0].mxu0 %v8586
      %v8801 = vpop.f32.mrb[0].mxu0
      %v8802 = vadd.f32 0.0, %v8801
      %v8803 = vpop.f32.mrb[0].mxu0
      %8804 = vmatprep.mubr.f32.mxu0 0.0
      %8805 = vmatmul.mubr.f32.gmra.mrb[0].mxu0 %v8589
      %v8806 = vpop.f32.mrb[0].mxu0
      %v8807 = vadd.f32 0.0, %v8806
      %v8808 = vpop.f32.mrb[0].mxu0
      %8809 = vmatprep.mubr.f32.mxu0 0.0
      %8810 = vmatmul.mubr.f32.gmra.mrb[0].mxu0 %v8592
      %v8811 = vpop.f32.mrb[0].mxu0
      %v8812 = vadd.f32 0.0, %v8811
      %v8813 = vpop.f32.mrb[0].mxu0
      %8814 = vmatprep.mubr.f32.mxu0 0.0
      %8815 = vmatmul.mubr.f32.gmra.mrb[0].mxu0 %v8595
      %v8816 = vpop.f32.mrb[0].mxu0
      %v8817 = vadd.f32 0.0, %v8816
      %v8818 = vpop.f32.mrb[0].mxu0
      %8819 = vmatprep.mubr.f32.mxu0 0.0
      %8820 = vmatmul.mubr.f32.gmra.mrb[0].mxu0 %v8598
      %v8821 = vpop.f32.mrb[0].mxu0
      %v8822 = vadd.f32 0.0, %v8821
      %v8823 = vpop.f32.mrb[0].mxu0
      %8824 = vdwg.mxu0
      %v8825 = vadd.f32 %v8404, %v8667
      %v8826 = vadd.f32 %v8405, %v8672
      %v8827 = vadd.f32 %v8406, %v8677
      %v8828 = vadd.f32 %v8407, %v8682
      %v8829 = vadd.f32 %v8408, %v8687
      %v8830 = vadd.f32 %v8409, %v8692
      %v8831 = vadd.f32 %v8410, %v8697
      %v8832 = vadd.f32 %v8411, %v8702
      %v8833 = vadd.f32 %v8412, %v8707
      %v8834 = vadd.f32 %v8413, %v8712
      %v8835 = vadd.f32 %v8414, %v8717
      %v8836 = vadd.f32 %v8415, %v8722
      %v8837 = vadd.f32 %v8416, %v8727
      %v8838 = vadd.f32 %v8417, %v8732
      %v8839 = vadd.f32 %v8418, %v8737
      %v8840 = vadd.f32 %v8419, %v8742
      %v8841 = vadd.f32 %v8420, %v8747
      %v8842 = vadd.f32 %v8421, %v8752
      %v8843 = vadd.f32 %v8422, %v8757
      %v8844 = vadd.f32 %v8423, %v8762
      %v8845 = vadd.f32 %v8424, %v8767
      %v8846 = vadd.f32 %v8425, %v8772
      %v8847 = vadd.f32 %v8426, %v8777
      %v8848 = vadd.f32 %v8427, %v8782
      %v8849 = vadd.f32 %v8428, %v8787
      %v8850 = vadd.f32 %v8429, %v8792
      %v8851 = vadd.f32 %v8430, %v8797
      %v8852 = vadd.f32 %v8431, %v8802
      %v8853 = vadd.f32 %v8432, %v8807
      %v8854 = vadd.f32 %v8433, %v8812
      %v8855 = vadd.f32 %v8434, %v8817
      %v8856 = vadd.f32 %v8435, %v8822
      %s8857 = scalar_lea.vmem %s5, 48
      %v8858 = vld [vmem:[%s8857] sm:$0xff]
      %v8860 = vsel %vm3768, %v8470, 0
      %v8863 = vsel %vm3768, %v8471, 0
      %v8866 = vsel %vm3768, %v8472, 0
      %v8869 = vsel %vm3768, %v8473, 0
      %v8872 = vsel %vm3768, %v8474, 0
      %v8875 = vsel %vm3768, %v8475, 0
      %v8878 = vsel %vm3768, %v8476, 0
      %v8881 = vsel %vm3768, %v8477, 0
      %v8884 = vsel %vm3768, %v8478, 0
      %v8887 = vsel %vm3768, %v8479, 0
      %v8890 = vsel %vm3768, %v8480, 0
      %v8893 = vsel %vm3768, %v8481, 0
      %v8896 = vsel %vm3768, %v8482, 0
      %v8899 = vsel %vm3768, %v8483, 0
      %v8902 = vsel %vm3768, %v8484, 0
      %v8905 = vsel %vm3768, %v8485, 0
      %v8908 = vsel %vm3768, %v8486, 0
      %v8911 = vsel %vm3768, %v8487, 0
      %v8914 = vsel %vm3768, %v8488, 0
      %v8917 = vsel %vm3768, %v8489, 0
      %v8920 = vsel %vm3768, %v8490, 0
      %v8923 = vsel %vm3768, %v8491, 0
      %v8926 = vsel %vm3768, %v8492, 0
      %v8929 = vsel %vm3768, %v8493, 0
      %v8932 = vsel %vm3768, %v8494, 0
      %v8935 = vsel %vm3768, %v8495, 0
      %v8938 = vsel %vm3768, %v8496, 0
      %v8941 = vsel %vm3768, %v8497, 0
      %v8944 = vsel %vm3768, %v8498, 0
      %v8947 = vsel %vm3768, %v8499, 0
      %v8950 = vsel %vm3768, %v8500, 0
      %v8953 = vsel %vm3768, %v8501, 0
      %8955 = vmatprep.subr.mxu0 0.0
      %8956 = vmatpush1.msra.mxu0 %v8858
      %8957 = vmatprep.subr.mxu0 0.0
      %8958 = vmatpush1.msra.mxu0 0.0
      %8959 = vmatprep.subr.mxu0 0.0
      %8960 = vmatpush1.msra.mxu0 0.0
      %8961 = vmatprep.subr.mxu0 0.0
      %8962 = vmatpush1.msra.mxu0 0.0
      %8963 = vmatprep.subr.mxu0 0.0
      %8964 = vmatpush1.msra.mxu0 0.0
      %8965 = vmatprep.subr.mxu0 0.0
      %8966 = vmatpush1.msra.mxu0 0.0
      %8967 = vmatprep.subr.mxu0 0.0
      %8968 = vmatpush1.msra.mxu0 0.0
      %8969 = vmatprep.subr.mxu0 0.0
      %8970 = vmatpush1.msra.mxu0 0.0
      %8971 = vmatprep.subr.mxu0 0.0
      %8972 = vmatpush1.msra.mxu0 0.0
      %8973 = vmatprep.subr.mxu0 0.0
      %8974 = vmatpush1.msra.mxu0 0.0
      %8975 = vmatprep.subr.mxu0 0.0
      %8976 = vmatpush1.msra.mxu0 0.0
      %8977 = vmatprep.subr.mxu0 0.0
      %8978 = vmatpush1.msra.mxu0 0.0
      %8979 = vmatprep.subr.mxu0 0.0
      %8980 = vmatpush1.msra.mxu0 0.0
      %8981 = vmatprep.subr.mxu0 0.0
      %8982 = vmatpush1.msra.mxu0 0.0
      %8983 = vmatprep.subr.mxu0 0.0
      %8984 = vmatpush1.msra.mxu0 0.0
      %8985 = vmatprep.subr.mxu0 0.0
      %8986 = vmatpush1.msra.mxu0 0.0
      %8987 = vmatprep.subr.mxu0 0.0
      %8988 = vmatpush1.msra.mxu0 0.0
      %8989 = vmatprep.subr.mxu0 0.0
      %8990 = vmatpush1.msra.mxu0 0.0
      %8991 = vmatprep.subr.mxu0 0.0
      %8992 = vmatpush1.msra.mxu0 0.0
      %8993 = vmatprep.subr.mxu0 0.0
      %8994 = vmatpush1.msra.mxu0 0.0
      %8995 = vmatprep.subr.mxu0 0.0
      %8996 = vmatpush1.msra.mxu0 0.0
      %8997 = vmatprep.subr.mxu0 0.0
      %8998 = vmatpush1.msra.mxu0 0.0
      %8999 = vmatprep.subr.mxu0 0.0
      %9000 = vmatpush1.msra.mxu0 0.0
      %9001 = vmatprep.subr.mxu0 0.0
      %9002 = vmatpush1.msra.mxu0 0.0
      %9003 = vmatprep.subr.mxu0 0.0
      %9004 = vmatpush1.msra.mxu0 0.0
      %9005 = vmatprep.subr.mxu0 0.0
      %9006 = vmatpush1.msra.mxu0 0.0
      %9007 = vmatprep.subr.mxu0 0.0
      %9008 = vmatpush1.msra.mxu0 0.0
      %9009 = vmatprep.subr.mxu0 0.0
      %9010 = vmatpush1.msra.mxu0 0.0
      %9011 = vmatprep.subr.mxu0 0.0
      %9012 = vmatpush1.msra.mxu0 0.0
      %9013 = vmatprep.subr.mxu0 0.0
      %9014 = vmatpush1.msra.mxu0 0.0
      %9015 = vmatprep.subr.mxu0 0.0
      %9016 = vmatpush1.msra.mxu0 0.0
      %9017 = vmatprep.subr.mxu0 0.0
      %9018 = vmatpush1.msra.mxu0 0.0
      %9019 = vmatprep.mubr.f32.mxu0 0.0
      %9020 = vmatmul.mubr.f32.gmra.mrb[0].mxu0 %v8860
      %v9021 = vpop.f32.mrb[0].mxu0
      %v9022 = vadd.f32 0.0, %v9021
      %v9023 = vpop.f32.mrb[0].mxu0
      %9024 = vmatprep.mubr.f32.mxu0 0.0
      %9025 = vmatmul.mubr.f32.gmra.mrb[0].mxu0 %v8863
      %v9026 = vpop.f32.mrb[0].mxu0
      %v9027 = vadd.f32 0.0, %v9026
      %v9028 = vpop.f32.mrb[0].mxu0
      %9029 = vmatprep.mubr.f32.mxu0 0.0
      %9030 = vmatmul.mubr.f32.gmra.mrb[0].mxu0 %v8866
      %v9031 = vpop.f32.mrb[0].mxu0
      %v9032 = vadd.f32 0.0, %v9031
      %v9033 = vpop.f32.mrb[0].mxu0
      %9034 = vmatprep.mubr.f32.mxu0 0.0
      %9035 = vmatmul.mubr.f32.gmra.mrb[0].mxu0 %v8869
      %v9036 = vpop.f32.mrb[0].mxu0
      %v9037 = vadd.f32 0.0, %v9036
      %v9038 = vpop.f32.mrb[0].mxu0
      %9039 = vmatprep.mubr.f32.mxu0 0.0
      %9040 = vmatmul.mubr.f32.gmra.mrb[0].mxu0 %v8872
      %v9041 = vpop.f32.mrb[0].mxu0
      %v9042 = vadd.f32 0.0, %v9041
      %v9043 = vpop.f32.mrb[0].mxu0
      %9044 = vmatprep.mubr.f32.mxu0 0.0
      %9045 = vmatmul.mubr.f32.gmra.mrb[0].mxu0 %v8875
      %v9046 = vpop.f32.mrb[0].mxu0
      %v9047 = vadd.f32 0.0, %v9046
      %v9048 = vpop.f32.mrb[0].mxu0
      %9049 = vmatprep.mubr.f32.mxu0 0.0
      %9050 = vmatmul.mubr.f32.gmra.mrb[0].mxu0 %v8878
      %v9051 = vpop.f32.mrb[0].mxu0
      %v9052 = vadd.f32 0.0, %v9051
      %v9053 = vpop.f32.mrb[0].mxu0
      %9054 = vmatprep.mubr.f32.mxu0 0.0
      %9055 = vmatmul.mubr.f32.gmra.mrb[0].mxu0 %v8881
      %v9056 = vpop.f32.mrb[0].mxu0
      %v9057 = vadd.f32 0.0, %v9056
      %v9058 = vpop.f32.mrb[0].mxu0
      %9059 = vmatprep.mubr.f32.mxu0 0.0
      %9060 = vmatmul.mubr.f32.gmra.mrb[0].mxu0 %v8884
      %v9061 = vpop.f32.mrb[0].mxu0
      %v9062 = vadd.f32 0.0, %v9061
      %v9063 = vpop.f32.mrb[0].mxu0
      %9064 = vmatprep.mubr.f32.mxu0 0.0
      %9065 = vmatmul.mubr.f32.gmra.mrb[0].mxu0 %v8887
      %v9066 = vpop.f32.mrb[0].mxu0
      %v9067 = vadd.f32 0.0, %v9066
      %v9068 = vpop.f32.mrb[0].mxu0
      %9069 = vmatprep.mubr.f32.mxu0 0.0
      %9070 = vmatmul.mubr.f32.gmra.mrb[0].mxu0 %v8890
      %v9071 = vpop.f32.mrb[0].mxu0
      %v9072 = vadd.f32 0.0, %v9071
      %v9073 = vpop.f32.mrb[0].mxu0
      %9074 = vmatprep.mubr.f32.mxu0 0.0
      %9075 = vmatmul.mubr.f32.gmra.mrb[0].mxu0 %v8893
      %v9076 = vpop.f32.mrb[0].mxu0
      %v9077 = vadd.f32 0.0, %v9076
      %v9078 = vpop.f32.mrb[0].mxu0
      %9079 = vmatprep.mubr.f32.mxu0 0.0
      %9080 = vmatmul.mubr.f32.gmra.mrb[0].mxu0 %v8896
      %v9081 = vpop.f32.mrb[0].mxu0
      %v9082 = vadd.f32 0.0, %v9081
      %v9083 = vpop.f32.mrb[0].mxu0
      %9084 = vmatprep.mubr.f32.mxu0 0.0
      %9085 = vmatmul.mubr.f32.gmra.mrb[0].mxu0 %v8899
      %v9086 = vpop.f32.mrb[0].mxu0
      %v9087 = vadd.f32 0.0, %v9086
      %v9088 = vpop.f32.mrb[0].mxu0
      %9089 = vmatprep.mubr.f32.mxu0 0.0
      %9090 = vmatmul.mubr.f32.gmra.mrb[0].mxu0 %v8902
      %v9091 = vpop.f32.mrb[0].mxu0
      %v9092 = vadd.f32 0.0, %v9091
      %v9093 = vpop.f32.mrb[0].mxu0
      %9094 = vmatprep.mubr.f32.mxu0 0.0
      %9095 = vmatmul.mubr.f32.gmra.mrb[0].mxu0 %v8905
      %v9096 = vpop.f32.mrb[0].mxu0
      %v9097 = vadd.f32 0.0, %v9096
      %v9098 = vpop.f32.mrb[0].mxu0
      %9099 = vmatprep.mubr.f32.mxu0 0.0
      %9100 = vmatmul.mubr.f32.gmra.mrb[0].mxu0 %v8908
      %v9101 = vpop.f32.mrb[0].mxu0
      %v9102 = vadd.f32 0.0, %v9101
      %v9103 = vpop.f32.mrb[0].mxu0
      %9104 = vmatprep.mubr.f32.mxu0 0.0
      %9105 = vmatmul.mubr.f32.gmra.mrb[0].mxu0 %v8911
      %v9106 = vpop.f32.mrb[0].mxu0
      %v9107 = vadd.f32 0.0, %v9106
      %v9108 = vpop.f32.mrb[0].mxu0
      %9109 = vmatprep.mubr.f32.mxu0 0.0
      %9110 = vmatmul.mubr.f32.gmra.mrb[0].mxu0 %v8914
      %v9111 = vpop.f32.mrb[0].mxu0
      %v9112 = vadd.f32 0.0, %v9111
      %v9113 = vpop.f32.mrb[0].mxu0
      %9114 = vmatprep.mubr.f32.mxu0 0.0
      %9115 = vmatmul.mubr.f32.gmra.mrb[0].mxu0 %v8917
      %v9116 = vpop.f32.mrb[0].mxu0
      %v9117 = vadd.f32 0.0, %v9116
      %v9118 = vpop.f32.mrb[0].mxu0
      %9119 = vmatprep.mubr.f32.mxu0 0.0
      %9120 = vmatmul.mubr.f32.gmra.mrb[0].mxu0 %v8920
      %v9121 = vpop.f32.mrb[0].mxu0
      %v9122 = vadd.f32 0.0, %v9121
      %v9123 = vpop.f32.mrb[0].mxu0
      %9124 = vmatprep.mubr.f32.mxu0 0.0
      %9125 = vmatmul.mubr.f32.gmra.mrb[0].mxu0 %v8923
      %v9126 = vpop.f32.mrb[0].mxu0
      %v9127 = vadd.f32 0.0, %v9126
      %v9128 = vpop.f32.mrb[0].mxu0
      %9129 = vmatprep.mubr.f32.mxu0 0.0
      %9130 = vmatmul.mubr.f32.gmra.mrb[0].mxu0 %v8926
      %v9131 = vpop.f32.mrb[0].mxu0
      %v9132 = vadd.f32 0.0, %v9131
      %v9133 = vpop.f32.mrb[0].mxu0
      %9134 = vmatprep.mubr.f32.mxu0 0.0
      %9135 = vmatmul.mubr.f32.gmra.mrb[0].mxu0 %v8929
      %v9136 = vpop.f32.mrb[0].mxu0
      %v9137 = vadd.f32 0.0, %v9136
      %v9138 = vpop.f32.mrb[0].mxu0
      %9139 = vmatprep.mubr.f32.mxu0 0.0
      %9140 = vmatmul.mubr.f32.gmra.mrb[0].mxu0 %v8932
      %v9141 = vpop.f32.mrb[0].mxu0
      %v9142 = vadd.f32 0.0, %v9141
      %v9143 = vpop.f32.mrb[0].mxu0
      %9144 = vmatprep.mubr.f32.mxu0 0.0
      %9145 = vmatmul.mubr.f32.gmra.mrb[0].mxu0 %v8935
      %v9146 = vpop.f32.mrb[0].mxu0
      %v9147 = vadd.f32 0.0, %v9146
      %v9148 = vpop.f32.mrb[0].mxu0
      %9149 = vmatprep.mubr.f32.mxu0 0.0
      %9150 = vmatmul.mubr.f32.gmra.mrb[0].mxu0 %v8938
      %v9151 = vpop.f32.mrb[0].mxu0
      %v9152 = vadd.f32 0.0, %v9151
      %v9153 = vpop.f32.mrb[0].mxu0
      %9154 = vmatprep.mubr.f32.mxu0 0.0
      %9155 = vmatmul.mubr.f32.gmra.mrb[0].mxu0 %v8941
      %v9156 = vpop.f32.mrb[0].mxu0
      %v9157 = vadd.f32 0.0, %v9156
      %v9158 = vpop.f32.mrb[0].mxu0
      %9159 = vmatprep.mubr.f32.mxu0 0.0
      %9160 = vmatmul.mubr.f32.gmra.mrb[0].mxu0 %v8944
      %v9161 = vpop.f32.mrb[0].mxu0
      %v9162 = vadd.f32 0.0, %v9161
      %v9163 = vpop.f32.mrb[0].mxu0
      %9164 = vmatprep.mubr.f32.mxu0 0.0
      %9165 = vmatmul.mubr.f32.gmra.mrb[0].mxu0 %v8947
      %v9166 = vpop.f32.mrb[0].mxu0
      %v9167 = vadd.f32 0.0, %v9166
      %v9168 = vpop.f32.mrb[0].mxu0
      %9169 = vmatprep.mubr.f32.mxu0 0.0
      %9170 = vmatmul.mubr.f32.gmra.mrb[0].mxu0 %v8950
      %v9171 = vpop.f32.mrb[0].mxu0
      %v9172 = vadd.f32 0.0, %v9171
      %v9173 = vpop.f32.mrb[0].mxu0
      %9174 = vmatprep.mubr.f32.mxu0 0.0
      %9175 = vmatmul.mubr.f32.gmra.mrb[0].mxu0 %v8953
      %v9176 = vpop.f32.mrb[0].mxu0
      %v9177 = vadd.f32 0.0, %v9176
      %v9178 = vpop.f32.mrb[0].mxu0
      %9179 = vdwg.mxu0
      %v9180 = vadd.f32 %v8825, %v9022
      %v9181 = vadd.f32 %v8826, %v9027
      %v9182 = vadd.f32 %v8827, %v9032
      %v9183 = vadd.f32 %v8828, %v9037
      %v9184 = vadd.f32 %v8829, %v9042
      %v9185 = vadd.f32 %v8830, %v9047
      %v9186 = vadd.f32 %v8831, %v9052
      %v9187 = vadd.f32 %v8832, %v9057
      %v9188 = vadd.f32 %v8833, %v9062
      %v9189 = vadd.f32 %v8834, %v9067
      %v9190 = vadd.f32 %v8835, %v9072
      %v9191 = vadd.f32 %v8836, %v9077
      %v9192 = vadd.f32 %v8837, %v9082
      %v9193 = vadd.f32 %v8838, %v9087
      %v9194 = vadd.f32 %v8839, %v9092
      %v9195 = vadd.f32 %v8840, %v9097
      %v9196 = vadd.f32 %v8841, %v9102
      %v9197 = vadd.f32 %v8842, %v9107
      %v9198 = vadd.f32 %v8843, %v9112
      %v9199 = vadd.f32 %v8844, %v9117
      %v9200 = vadd.f32 %v8845, %v9122
      %v9201 = vadd.f32 %v8846, %v9127
      %v9202 = vadd.f32 %v8847, %v9132
      %v9203 = vadd.f32 %v8848, %v9137
      %v9204 = vadd.f32 %v8849, %v9142
      %v9205 = vadd.f32 %v8850, %v9147
      %v9206 = vadd.f32 %v8851, %v9152
      %v9207 = vadd.f32 %v8852, %v9157
      %v9208 = vadd.f32 %v8853, %v9162
      %v9209 = vadd.f32 %v8854, %v9167
      %v9210 = vadd.f32 %v8855, %v9172
      %v9211 = vadd.f32 %v8856, %v9177
      %v9212 = vld [vmem:[%s8436 + $0x1] sm:$0xff]
      %v9213 = vld [vmem:[%s8436 + $0x9] sm:$0xff]
      %v9214 = vld [vmem:[%s8436 + $0x19] sm:$0xff]
      %v9215 = vld [vmem:[%s8436 + $0x21] sm:$0xff]
      %v9216 = vld [vmem:[%s8436 + $0x31] sm:$0xff]
      %v9217 = vld [vmem:[%s8436 + $0x39] sm:$0xff]
      %v9218 = vld [vmem:[%s8436 + $0x49] sm:$0xff]
      %v9219 = vld [vmem:[%s8436 + $0x51] sm:$0xff]
      %v9220 = vld [vmem:[%s8436 + $0x61] sm:$0xff]
      %v9221 = vld [vmem:[%s8436 + $0x69] sm:$0xff]
      %v9222 = vld [vmem:[%s8436 + $0x79] sm:$0xff]
      %v9223 = vld [vmem:[%s8436 + $0x81] sm:$0xff]
      %v9224 = vld [vmem:[%s8436 + $0x91] sm:$0xff]
      %v9225 = vld [vmem:[%s8436 + $0x99] sm:$0xff]
      %v9226 = vld [vmem:[%s8436 + $0xa9] sm:$0xff]
      %v9227 = vld [vmem:[%s8436 + $0xb1] sm:$0xff]
      %v9228 = vld [vmem:[%s8436 + $0xc1] sm:$0xff]
      %v9229 = vld [vmem:[%s8436 + $0xc9] sm:$0xff]
      %v9230 = vld [vmem:[%s8436 + $0xd9] sm:$0xff]
      %v9231 = vld [vmem:[%s8436 + $0xe1] sm:$0xff]
      %v9232 = vld [vmem:[%s8436 + $0xf1] sm:$0xff]
      %v9233 = vld [vmem:[%s8436 + $0xf9] sm:$0xff]
      %v9234 = vld [vmem:[%s8436 + $0x109] sm:$0xff]
      %v9235 = vld [vmem:[%s8436 + $0x111] sm:$0xff]
      %v9236 = vld [vmem:[%s8436 + $0x121] sm:$0xff]
      %v9237 = vld [vmem:[%s8436 + $0x129] sm:$0xff]
      %v9238 = vld [vmem:[%s8436 + $0x139] sm:$0xff]
      %v9239 = vld [vmem:[%s8436 + $0x141] sm:$0xff]
      %v9240 = vld [vmem:[%s8436 + $0x151] sm:$0xff]
      %v9241 = vld [vmem:[%s8436 + $0x159] sm:$0xff]
      %v9242 = vld [vmem:[%s8436 + $0x169] sm:$0xff]
      %v9243 = vld [vmem:[%s8436 + $0x171] sm:$0xff]
      %v9244 = vld [vmem:[%s8469 + $0x1] sm:$0xff]
      %v9245 = vld [vmem:[%s8469 + $0x9] sm:$0xff]
      %v9246 = vld [vmem:[%s8469 + $0x19] sm:$0xff]
      %v9247 = vld [vmem:[%s8469 + $0x21] sm:$0xff]
      %v9248 = vld [vmem:[%s8469 + $0x31] sm:$0xff]
      %v9249 = vld [vmem:[%s8469 + $0x39] sm:$0xff]
      %v9250 = vld [vmem:[%s8469 + $0x49] sm:$0xff]
      %v9251 = vld [vmem:[%s8469 + $0x51] sm:$0xff]
      %v9252 = vld [vmem:[%s8469 + $0x61] sm:$0xff]
      %v9253 = vld [vmem:[%s8469 + $0x69] sm:$0xff]
      %v9254 = vld [vmem:[%s8469 + $0x79] sm:$0xff]
      %v9255 = vld [vmem:[%s8469 + $0x81] sm:$0xff]
      %v9256 = vld [vmem:[%s8469 + $0x91] sm:$0xff]
      %v9257 = vld [vmem:[%s8469 + $0x99] sm:$0xff]
      %v9258 = vld [vmem:[%s8469 + $0xa9] sm:$0xff]
      %v9259 = vld [vmem:[%s8469 + $0xb1] sm:$0xff]
      %v9260 = vld [vmem:[%s8469 + $0xc1] sm:$0xff]
      %v9261 = vld [vmem:[%s8469 + $0xc9] sm:$0xff]
      %v9262 = vld [vmem:[%s8469 + $0xd9] sm:$0xff]
      %v9263 = vld [vmem:[%s8469 + $0xe1] sm:$0xff]
      %v9264 = vld [vmem:[%s8469 + $0xf1] sm:$0xff]
      %v9265 = vld [vmem:[%s8469 + $0xf9] sm:$0xff]
      %v9266 = vld [vmem:[%s8469 + $0x109] sm:$0xff]
      %v9267 = vld [vmem:[%s8469 + $0x111] sm:$0xff]
      %v9268 = vld [vmem:[%s8469 + $0x121] sm:$0xff]
      %v9269 = vld [vmem:[%s8469 + $0x129] sm:$0xff]
      %v9270 = vld [vmem:[%s8469 + $0x139] sm:$0xff]
      %v9271 = vld [vmem:[%s8469 + $0x141] sm:$0xff]
      %v9272 = vld [vmem:[%s8469 + $0x151] sm:$0xff]
      %v9273 = vld [vmem:[%s8469 + $0x159] sm:$0xff]
      %v9274 = vld [vmem:[%s8469 + $0x169] sm:$0xff]
      %v9275 = vld [vmem:[%s8469 + $0x171] sm:$0xff]
      %s9276 = scalar_lea.vmem %s4, 56
      %v9277 = vld [vmem:[%s9276] sm:$0xff]
      %v9279 = vsel %vm3768, %v9212, 0
      %v9282 = vsel %vm3768, %v9213, 0
      %v9285 = vsel %vm3768, %v9214, 0
      %v9288 = vsel %vm3768, %v9215, 0
      %v9291 = vsel %vm3768, %v9216, 0
      %v9294 = vsel %vm3768, %v9217, 0
      %v9297 = vsel %vm3768, %v9218, 0
      %v9300 = vsel %vm3768, %v9219, 0
      %v9303 = vsel %vm3768, %v9220, 0
      %v9306 = vsel %vm3768, %v9221, 0
      %v9309 = vsel %vm3768, %v9222, 0
      %v9312 = vsel %vm3768, %v9223, 0
      %v9315 = vsel %vm3768, %v9224, 0
      %v9318 = vsel %vm3768, %v9225, 0
      %v9321 = vsel %vm3768, %v9226, 0
      %v9324 = vsel %vm3768, %v9227, 0
      %v9327 = vsel %vm3768, %v9228, 0
      %v9330 = vsel %vm3768, %v9229, 0
      %v9333 = vsel %vm3768, %v9230, 0
      %v9336 = vsel %vm3768, %v9231, 0
      %v9339 = vsel %vm3768, %v9232, 0
      %v9342 = vsel %vm3768, %v9233, 0
      %v9345 = vsel %vm3768, %v9234, 0
      %v9348 = vsel %vm3768, %v9235, 0
      %v9351 = vsel %vm3768, %v9236, 0
      %v9354 = vsel %vm3768, %v9237, 0
      %v9357 = vsel %vm3768, %v9238, 0
      %v9360 = vsel %vm3768, %v9239, 0
      %v9363 = vsel %vm3768, %v9240, 0
      %v9366 = vsel %vm3768, %v9241, 0
      %v9369 = vsel %vm3768, %v9242, 0
      %v9372 = vsel %vm3768, %v9243, 0
      %9374 = vmatprep.subr.mxu0 0.0
      %9375 = vmatpush1.msra.mxu0 %v9277
      %9376 = vmatprep.subr.mxu0 0.0
      %9377 = vmatpush1.msra.mxu0 0.0
      %9378 = vmatprep.subr.mxu0 0.0
      %9379 = vmatpush1.msra.mxu0 0.0
      %9380 = vmatprep.subr.mxu0 0.0
      %9381 = vmatpush1.msra.mxu0 0.0
      %9382 = vmatprep.subr.mxu0 0.0
      %9383 = vmatpush1.msra.mxu0 0.0
      %9384 = vmatprep.subr.mxu0 0.0
      %9385 = vmatpush1.msra.mxu0 0.0
      %9386 = vmatprep.subr.mxu0 0.0
      %9387 = vmatpush1.msra.mxu0 0.0
      %9388 = vmatprep.subr.mxu0 0.0
      %9389 = vmatpush1.msra.mxu0 0.0
      %9390 = vmatprep.subr.mxu0 0.0
      %9391 = vmatpush1.msra.mxu0 0.0
      %9392 = vmatprep.subr.mxu0 0.0
      %9393 = vmatpush1.msra.mxu0 0.0
      %9394 = vmatprep.subr.mxu0 0.0
      %9395 = vmatpush1.msra.mxu0 0.0
      %9396 = vmatprep.subr.mxu0 0.0
      %9397 = vmatpush1.msra.mxu0 0.0
      %9398 = vmatprep.subr.mxu0 0.0
      %9399 = vmatpush1.msra.mxu0 0.0
      %9400 = vmatprep.subr.mxu0 0.0
      %9401 = vmatpush1.msra.mxu0 0.0
      %9402 = vmatprep.subr.mxu0 0.0
      %9403 = vmatpush1.msra.mxu0 0.0
      %9404 = vmatprep.subr.mxu0 0.0
      %9405 = vmatpush1.msra.mxu0 0.0
      %9406 = vmatprep.subr.mxu0 0.0
      %9407 = vmatpush1.msra.mxu0 0.0
      %9408 = vmatprep.subr.mxu0 0.0
      %9409 = vmatpush1.msra.mxu0 0.0
      %9410 = vmatprep.subr.mxu0 0.0
      %9411 = vmatpush1.msra.mxu0 0.0
      %9412 = vmatprep.subr.mxu0 0.0
      %9413 = vmatpush1.msra.mxu0 0.0
      %9414 = vmatprep.subr.mxu0 0.0
      %9415 = vmatpush1.msra.mxu0 0.0
      %9416 = vmatprep.subr.mxu0 0.0
      %9417 = vmatpush1.msra.mxu0 0.0
      %9418 = vmatprep.subr.mxu0 0.0
      %9419 = vmatpush1.msra.mxu0 0.0
      %9420 = vmatprep.subr.mxu0 0.0
      %9421 = vmatpush1.msra.mxu0 0.0
      %9422 = vmatprep.subr.mxu0 0.0
      %9423 = vmatpush1.msra.mxu0 0.0
      %9424 = vmatprep.subr.mxu0 0.0
      %9425 = vmatpush1.msra.mxu0 0.0
      %9426 = vmatprep.subr.mxu0 0.0
      %9427 = vmatpush1.msra.mxu0 0.0
      %9428 = vmatprep.subr.mxu0 0.0
      %9429 = vmatpush1.msra.mxu0 0.0
      %9430 = vmatprep.subr.mxu0 0.0
      %9431 = vmatpush1.msra.mxu0 0.0
      %9432 = vmatprep.subr.mxu0 0.0
      %9433 = vmatpush1.msra.mxu0 0.0
      %9434 = vmatprep.subr.mxu0 0.0
      %9435 = vmatpush1.msra.mxu0 0.0
      %9436 = vmatprep.subr.mxu0 0.0
      %9437 = vmatpush1.msra.mxu0 0.0
      %9438 = vmatprep.mubr.f32.mxu0 0.0
      %9439 = vmatmul.mubr.f32.gmra.mrb[0].mxu0 %v9279
      %v9440 = vpop.f32.mrb[0].mxu0
      %v9441 = vadd.f32 0.0, %v9440
      %v9442 = vpop.f32.mrb[0].mxu0
      %9443 = vmatprep.mubr.f32.mxu0 0.0
      %9444 = vmatmul.mubr.f32.gmra.mrb[0].mxu0 %v9282
      %v9445 = vpop.f32.mrb[0].mxu0
      %v9446 = vadd.f32 0.0, %v9445
      %v9447 = vpop.f32.mrb[0].mxu0
      %9448 = vmatprep.mubr.f32.mxu0 0.0
      %9449 = vmatmul.mubr.f32.gmra.mrb[0].mxu0 %v9285
      %v9450 = vpop.f32.mrb[0].mxu0
      %v9451 = vadd.f32 0.0, %v9450
      %v9452 = vpop.f32.mrb[0].mxu0
      %9453 = vmatprep.mubr.f32.mxu0 0.0
      %9454 = vmatmul.mubr.f32.gmra.mrb[0].mxu0 %v9288
      %v9455 = vpop.f32.mrb[0].mxu0
      %v9456 = vadd.f32 0.0, %v9455
      %v9457 = vpop.f32.mrb[0].mxu0
      %9458 = vmatprep.mubr.f32.mxu0 0.0
      %9459 = vmatmul.mubr.f32.gmra.mrb[0].mxu0 %v9291
      %v9460 = vpop.f32.mrb[0].mxu0
      %v9461 = vadd.f32 0.0, %v9460
      %v9462 = vpop.f32.mrb[0].mxu0
      %9463 = vmatprep.mubr.f32.mxu0 0.0
      %9464 = vmatmul.mubr.f32.gmra.mrb[0].mxu0 %v9294
      %v9465 = vpop.f32.mrb[0].mxu0
      %v9466 = vadd.f32 0.0, %v9465
      %v9467 = vpop.f32.mrb[0].mxu0
      %9468 = vmatprep.mubr.f32.mxu0 0.0
      %9469 = vmatmul.mubr.f32.gmra.mrb[0].mxu0 %v9297
      %v9470 = vpop.f32.mrb[0].mxu0
      %v9471 = vadd.f32 0.0, %v9470
      %v9472 = vpop.f32.mrb[0].mxu0
      %9473 = vmatprep.mubr.f32.mxu0 0.0
      %9474 = vmatmul.mubr.f32.gmra.mrb[0].mxu0 %v9300
      %v9475 = vpop.f32.mrb[0].mxu0
      %v9476 = vadd.f32 0.0, %v9475
      %v9477 = vpop.f32.mrb[0].mxu0
      %9478 = vmatprep.mubr.f32.mxu0 0.0
      %9479 = vmatmul.mubr.f32.gmra.mrb[0].mxu0 %v9303
      %v9480 = vpop.f32.mrb[0].mxu0
      %v9481 = vadd.f32 0.0, %v9480
      %v9482 = vpop.f32.mrb[0].mxu0
      %9483 = vmatprep.mubr.f32.mxu0 0.0
      %9484 = vmatmul.mubr.f32.gmra.mrb[0].mxu0 %v9306
      %v9485 = vpop.f32.mrb[0].mxu0
      %v9486 = vadd.f32 0.0, %v9485
      %v9487 = vpop.f32.mrb[0].mxu0
      %9488 = vmatprep.mubr.f32.mxu0 0.0
      %9489 = vmatmul.mubr.f32.gmra.mrb[0].mxu0 %v9309
      %v9490 = vpop.f32.mrb[0].mxu0
      %v9491 = vadd.f32 0.0, %v9490
      %v9492 = vpop.f32.mrb[0].mxu0
      %9493 = vmatprep.mubr.f32.mxu0 0.0
      %9494 = vmatmul.mubr.f32.gmra.mrb[0].mxu0 %v9312
      %v9495 = vpop.f32.mrb[0].mxu0
      %v9496 = vadd.f32 0.0, %v9495
      %v9497 = vpop.f32.mrb[0].mxu0
      %9498 = vmatprep.mubr.f32.mxu0 0.0
      %9499 = vmatmul.mubr.f32.gmra.mrb[0].mxu0 %v9315
      %v9500 = vpop.f32.mrb[0].mxu0
      %v9501 = vadd.f32 0.0, %v9500
      %v9502 = vpop.f32.mrb[0].mxu0
      %9503 = vmatprep.mubr.f32.mxu0 0.0
      %9504 = vmatmul.mubr.f32.gmra.mrb[0].mxu0 %v9318
      %v9505 = vpop.f32.mrb[0].mxu0
      %v9506 = vadd.f32 0.0, %v9505
      %v9507 = vpop.f32.mrb[0].mxu0
      %9508 = vmatprep.mubr.f32.mxu0 0.0
      %9509 = vmatmul.mubr.f32.gmra.mrb[0].mxu0 %v9321
      %v9510 = vpop.f32.mrb[0].mxu0
      %v9511 = vadd.f32 0.0, %v9510
      %v9512 = vpop.f32.mrb[0].mxu0
      %9513 = vmatprep.mubr.f32.mxu0 0.0
      %9514 = vmatmul.mubr.f32.gmra.mrb[0].mxu0 %v9324
      %v9515 = vpop.f32.mrb[0].mxu0
      %v9516 = vadd.f32 0.0, %v9515
      %v9517 = vpop.f32.mrb[0].mxu0
      %9518 = vmatprep.mubr.f32.mxu0 0.0
      %9519 = vmatmul.mubr.f32.gmra.mrb[0].mxu0 %v9327
      %v9520 = vpop.f32.mrb[0].mxu0
      %v9521 = vadd.f32 0.0, %v9520
      %v9522 = vpop.f32.mrb[0].mxu0
      %9523 = vmatprep.mubr.f32.mxu0 0.0
      %9524 = vmatmul.mubr.f32.gmra.mrb[0].mxu0 %v9330
      %v9525 = vpop.f32.mrb[0].mxu0
      %v9526 = vadd.f32 0.0, %v9525
      %v9527 = vpop.f32.mrb[0].mxu0
      %9528 = vmatprep.mubr.f32.mxu0 0.0
      %9529 = vmatmul.mubr.f32.gmra.mrb[0].mxu0 %v9333
      %v9530 = vpop.f32.mrb[0].mxu0
      %v9531 = vadd.f32 0.0, %v9530
      %v9532 = vpop.f32.mrb[0].mxu0
      %9533 = vmatprep.mubr.f32.mxu0 0.0
      %9534 = vmatmul.mubr.f32.gmra.mrb[0].mxu0 %v9336
      %v9535 = vpop.f32.mrb[0].mxu0
      %v9536 = vadd.f32 0.0, %v9535
      %v9537 = vpop.f32.mrb[0].mxu0
      %9538 = vmatprep.mubr.f32.mxu0 0.0
      %9539 = vmatmul.mubr.f32.gmra.mrb[0].mxu0 %v9339
      %v9540 = vpop.f32.mrb[0].mxu0
      %v9541 = vadd.f32 0.0, %v9540
      %v9542 = vpop.f32.mrb[0].mxu0
      %9543 = vmatprep.mubr.f32.mxu0 0.0
      %9544 = vmatmul.mubr.f32.gmra.mrb[0].mxu0 %v9342
      %v9545 = vpop.f32.mrb[0].mxu0
      %v9546 = vadd.f32 0.0, %v9545
      %v9547 = vpop.f32.mrb[0].mxu0
      %9548 = vmatprep.mubr.f32.mxu0 0.0
      %9549 = vmatmul.mubr.f32.gmra.mrb[0].mxu0 %v9345
      %v9550 = vpop.f32.mrb[0].mxu0
      %v9551 = vadd.f32 0.0, %v9550
      %v9552 = vpop.f32.mrb[0].mxu0
      %9553 = vmatprep.mubr.f32.mxu0 0.0
      %9554 = vmatmul.mubr.f32.gmra.mrb[0].mxu0 %v9348
      %v9555 = vpop.f32.mrb[0].mxu0
      %v9556 = vadd.f32 0.0, %v9555
      %v9557 = vpop.f32.mrb[0].mxu0
      %9558 = vmatprep.mubr.f32.mxu0 0.0
      %9559 = vmatmul.mubr.f32.gmra.mrb[0].mxu0 %v9351
      %v9560 = vpop.f32.mrb[0].mxu0
      %v9561 = vadd.f32 0.0, %v9560
      %v9562 = vpop.f32.mrb[0].mxu0
      %9563 = vmatprep.mubr.f32.mxu0 0.0
      %9564 = vmatmul.mubr.f32.gmra.mrb[0].mxu0 %v9354
      %v9565 = vpop.f32.mrb[0].mxu0
      %v9566 = vadd.f32 0.0, %v9565
      %v9567 = vpop.f32.mrb[0].mxu0
      %9568 = vmatprep.mubr.f32.mxu0 0.0
      %9569 = vmatmul.mubr.f32.gmra.mrb[0].mxu0 %v9357
      %v9570 = vpop.f32.mrb[0].mxu0
      %v9571 = vadd.f32 0.0, %v9570
      %v9572 = vpop.f32.mrb[0].mxu0
      %9573 = vmatprep.mubr.f32.mxu0 0.0
      %9574 = vmatmul.mubr.f32.gmra.mrb[0].mxu0 %v9360
      %v9575 = vpop.f32.mrb[0].mxu0
      %v9576 = vadd.f32 0.0, %v9575
      %v9577 = vpop.f32.mrb[0].mxu0
      %9578 = vmatprep.mubr.f32.mxu0 0.0
      %9579 = vmatmul.mubr.f32.gmra.mrb[0].mxu0 %v9363
      %v9580 = vpop.f32.mrb[0].mxu0
      %v9581 = vadd.f32 0.0, %v9580
      %v9582 = vpop.f32.mrb[0].mxu0
      %9583 = vmatprep.mubr.f32.mxu0 0.0
      %9584 = vmatmul.mubr.f32.gmra.mrb[0].mxu0 %v9366
      %v9585 = vpop.f32.mrb[0].mxu0
      %v9586 = vadd.f32 0.0, %v9585
      %v9587 = vpop.f32.mrb[0].mxu0
      %9588 = vmatprep.mubr.f32.mxu0 0.0
      %9589 = vmatmul.mubr.f32.gmra.mrb[0].mxu0 %v9369
      %v9590 = vpop.f32.mrb[0].mxu0
      %v9591 = vadd.f32 0.0, %v9590
      %v9592 = vpop.f32.mrb[0].mxu0
      %9593 = vmatprep.mubr.f32.mxu0 0.0
      %9594 = vmatmul.mubr.f32.gmra.mrb[0].mxu0 %v9372
      %v9595 = vpop.f32.mrb[0].mxu0
      %v9596 = vadd.f32 0.0, %v9595
      %v9597 = vpop.f32.mrb[0].mxu0
      %9598 = vdwg.mxu0
      %v9599 = vadd.f32 %v9180, %v9441
      %v9600 = vadd.f32 %v9181, %v9446
      %v9601 = vadd.f32 %v9182, %v9451
      %v9602 = vadd.f32 %v9183, %v9456
      %v9603 = vadd.f32 %v9184, %v9461
      %v9604 = vadd.f32 %v9185, %v9466
      %v9605 = vadd.f32 %v9186, %v9471
      %v9606 = vadd.f32 %v9187, %v9476
      %v9607 = vadd.f32 %v9188, %v9481
      %v9608 = vadd.f32 %v9189, %v9486
      %v9609 = vadd.f32 %v9190, %v9491
      %v9610 = vadd.f32 %v9191, %v9496
      %v9611 = vadd.f32 %v9192, %v9501
      %v9612 = vadd.f32 %v9193, %v9506
      %v9613 = vadd.f32 %v9194, %v9511
      %v9614 = vadd.f32 %v9195, %v9516
      %v9615 = vadd.f32 %v9196, %v9521
      %v9616 = vadd.f32 %v9197, %v9526
      %v9617 = vadd.f32 %v9198, %v9531
      %v9618 = vadd.f32 %v9199, %v9536
      %v9619 = vadd.f32 %v9200, %v9541
      %v9620 = vadd.f32 %v9201, %v9546
      %v9621 = vadd.f32 %v9202, %v9551
      %v9622 = vadd.f32 %v9203, %v9556
      %v9623 = vadd.f32 %v9204, %v9561
      %v9624 = vadd.f32 %v9205, %v9566
      %v9625 = vadd.f32 %v9206, %v9571
      %v9626 = vadd.f32 %v9207, %v9576
      %v9627 = vadd.f32 %v9208, %v9581
      %v9628 = vadd.f32 %v9209, %v9586
      %v9629 = vadd.f32 %v9210, %v9591
      %v9630 = vadd.f32 %v9211, %v9596
      %s9631 = scalar_lea.vmem %s5, 56
      %v9632 = vld [vmem:[%s9631] sm:$0xff]
      %v9634 = vsel %vm3768, %v9244, 0
      %v9637 = vsel %vm3768, %v9245, 0
      %v9640 = vsel %vm3768, %v9246, 0
      %v9643 = vsel %vm3768, %v9247, 0
      %v9646 = vsel %vm3768, %v9248, 0
      %v9649 = vsel %vm3768, %v9249, 0
      %v9652 = vsel %vm3768, %v9250, 0
      %v9655 = vsel %vm3768, %v9251, 0
      %v9658 = vsel %vm3768, %v9252, 0
      %v9661 = vsel %vm3768, %v9253, 0
      %v9664 = vsel %vm3768, %v9254, 0
      %v9667 = vsel %vm3768, %v9255, 0
      %v9670 = vsel %vm3768, %v9256, 0
      %v9673 = vsel %vm3768, %v9257, 0
      %v9676 = vsel %vm3768, %v9258, 0
      %v9679 = vsel %vm3768, %v9259, 0
      %v9682 = vsel %vm3768, %v9260, 0
      %v9685 = vsel %vm3768, %v9261, 0
      %v9688 = vsel %vm3768, %v9262, 0
      %v9691 = vsel %vm3768, %v9263, 0
      %v9694 = vsel %vm3768, %v9264, 0
      %v9697 = vsel %vm3768, %v9265, 0
      %v9700 = vsel %vm3768, %v9266, 0
      %v9703 = vsel %vm3768, %v9267, 0
      %v9706 = vsel %vm3768, %v9268, 0
      %v9709 = vsel %vm3768, %v9269, 0
      %v9712 = vsel %vm3768, %v9270, 0
      %v9715 = vsel %vm3768, %v9271, 0
      %v9718 = vsel %vm3768, %v9272, 0
      %v9721 = vsel %vm3768, %v9273, 0
      %v9724 = vsel %vm3768, %v9274, 0
      %v9727 = vsel %vm3768, %v9275, 0
      %9729 = vmatprep.subr.mxu0 0.0
      %9730 = vmatpush1.msra.mxu0 %v9632
      %9731 = vmatprep.subr.mxu0 0.0
      %9732 = vmatpush1.msra.mxu0 0.0
      %9733 = vmatprep.subr.mxu0 0.0
      %9734 = vmatpush1.msra.mxu0 0.0
      %9735 = vmatprep.subr.mxu0 0.0
      %9736 = vmatpush1.msra.mxu0 0.0
      %9737 = vmatprep.subr.mxu0 0.0
      %9738 = vmatpush1.msra.mxu0 0.0
      %9739 = vmatprep.subr.mxu0 0.0
      %9740 = vmatpush1.msra.mxu0 0.0
      %9741 = vmatprep.subr.mxu0 0.0
      %9742 = vmatpush1.msra.mxu0 0.0
      %9743 = vmatprep.subr.mxu0 0.0
      %9744 = vmatpush1.msra.mxu0 0.0
      %9745 = vmatprep.subr.mxu0 0.0
      %9746 = vmatpush1.msra.mxu0 0.0
      %9747 = vmatprep.subr.mxu0 0.0
      %9748 = vmatpush1.msra.mxu0 0.0
      %9749 = vmatprep.subr.mxu0 0.0
      %9750 = vmatpush1.msra.mxu0 0.0
      %9751 = vmatprep.subr.mxu0 0.0
      %9752 = vmatpush1.msra.mxu0 0.0
      %9753 = vmatprep.subr.mxu0 0.0
      %9754 = vmatpush1.msra.mxu0 0.0
      %9755 = vmatprep.subr.mxu0 0.0
      %9756 = vmatpush1.msra.mxu0 0.0
      %9757 = vmatprep.subr.mxu0 0.0
      %9758 = vmatpush1.msra.mxu0 0.0
      %9759 = vmatprep.subr.mxu0 0.0
      %9760 = vmatpush1.msra.mxu0 0.0
      %9761 = vmatprep.subr.mxu0 0.0
      %9762 = vmatpush1.msra.mxu0 0.0
      %9763 = vmatprep.subr.mxu0 0.0
      %9764 = vmatpush1.msra.mxu0 0.0
      %9765 = vmatprep.subr.mxu0 0.0
      %9766 = vmatpush1.msra.mxu0 0.0
      %9767 = vmatprep.subr.mxu0 0.0
      %9768 = vmatpush1.msra.mxu0 0.0
      %9769 = vmatprep.subr.mxu0 0.0
      %9770 = vmatpush1.msra.mxu0 0.0
      %9771 = vmatprep.subr.mxu0 0.0
      %9772 = vmatpush1.msra.mxu0 0.0
      %9773 = vmatprep.subr.mxu0 0.0
      %9774 = vmatpush1.msra.mxu0 0.0
      %9775 = vmatprep.subr.mxu0 0.0
      %9776 = vmatpush1.msra.mxu0 0.0
      %9777 = vmatprep.subr.mxu0 0.0
      %9778 = vmatpush1.msra.mxu0 0.0
      %9779 = vmatprep.subr.mxu0 0.0
      %9780 = vmatpush1.msra.mxu0 0.0
      %9781 = vmatprep.subr.mxu0 0.0
      %9782 = vmatpush1.msra.mxu0 0.0
      %9783 = vmatprep.subr.mxu0 0.0
      %9784 = vmatpush1.msra.mxu0 0.0
      %9785 = vmatprep.subr.mxu0 0.0
      %9786 = vmatpush1.msra.mxu0 0.0
      %9787 = vmatprep.subr.mxu0 0.0
      %9788 = vmatpush1.msra.mxu0 0.0
      %9789 = vmatprep.subr.mxu0 0.0
      %9790 = vmatpush1.msra.mxu0 0.0
      %9791 = vmatprep.subr.mxu0 0.0
      %9792 = vmatpush1.msra.mxu0 0.0
      %9793 = vmatprep.mubr.f32.mxu0 0.0
      %9794 = vmatmul.mubr.f32.gmra.mrb[0].mxu0 %v9634
      %v9795 = vpop.f32.mrb[0].mxu0
      %v9796 = vadd.f32 0.0, %v9795
      %v9797 = vpop.f32.mrb[0].mxu0
      %9798 = vmatprep.mubr.f32.mxu0 0.0
      %9799 = vmatmul.mubr.f32.gmra.mrb[0].mxu0 %v9637
      %v9800 = vpop.f32.mrb[0].mxu0
      %v9801 = vadd.f32 0.0, %v9800
      %v9802 = vpop.f32.mrb[0].mxu0
      %9803 = vmatprep.mubr.f32.mxu0 0.0
      %9804 = vmatmul.mubr.f32.gmra.mrb[0].mxu0 %v9640
      %v9805 = vpop.f32.mrb[0].mxu0
      %v9806 = vadd.f32 0.0, %v9805
      %v9807 = vpop.f32.mrb[0].mxu0
      %9808 = vmatprep.mubr.f32.mxu0 0.0
      %9809 = vmatmul.mubr.f32.gmra.mrb[0].mxu0 %v9643
      %v9810 = vpop.f32.mrb[0].mxu0
      %v9811 = vadd.f32 0.0, %v9810
      %v9812 = vpop.f32.mrb[0].mxu0
      %9813 = vmatprep.mubr.f32.mxu0 0.0
      %9814 = vmatmul.mubr.f32.gmra.mrb[0].mxu0 %v9646
      %v9815 = vpop.f32.mrb[0].mxu0
      %v9816 = vadd.f32 0.0, %v9815
      %v9817 = vpop.f32.mrb[0].mxu0
      %9818 = vmatprep.mubr.f32.mxu0 0.0
      %9819 = vmatmul.mubr.f32.gmra.mrb[0].mxu0 %v9649
      %v9820 = vpop.f32.mrb[0].mxu0
      %v9821 = vadd.f32 0.0, %v9820
      %v9822 = vpop.f32.mrb[0].mxu0
      %9823 = vmatprep.mubr.f32.mxu0 0.0
      %9824 = vmatmul.mubr.f32.gmra.mrb[0].mxu0 %v9652
      %v9825 = vpop.f32.mrb[0].mxu0
      %v9826 = vadd.f32 0.0, %v9825
      %v9827 = vpop.f32.mrb[0].mxu0
      %9828 = vmatprep.mubr.f32.mxu0 0.0
      %9829 = vmatmul.mubr.f32.gmra.mrb[0].mxu0 %v9655
      %v9830 = vpop.f32.mrb[0].mxu0
      %v9831 = vadd.f32 0.0, %v9830
      %v9832 = vpop.f32.mrb[0].mxu0
      %9833 = vmatprep.mubr.f32.mxu0 0.0
      %9834 = vmatmul.mubr.f32.gmra.mrb[0].mxu0 %v9658
      %v9835 = vpop.f32.mrb[0].mxu0
      %v9836 = vadd.f32 0.0, %v9835
      %v9837 = vpop.f32.mrb[0].mxu0
      %9838 = vmatprep.mubr.f32.mxu0 0.0
      %9839 = vmatmul.mubr.f32.gmra.mrb[0].mxu0 %v9661
      %v9840 = vpop.f32.mrb[0].mxu0
      %v9841 = vadd.f32 0.0, %v9840
      %v9842 = vpop.f32.mrb[0].mxu0
      %9843 = vmatprep.mubr.f32.mxu0 0.0
      %9844 = vmatmul.mubr.f32.gmra.mrb[0].mxu0 %v9664
      %v9845 = vpop.f32.mrb[0].mxu0
      %v9846 = vadd.f32 0.0, %v9845
      %v9847 = vpop.f32.mrb[0].mxu0
      %9848 = vmatprep.mubr.f32.mxu0 0.0
      %9849 = vmatmul.mubr.f32.gmra.mrb[0].mxu0 %v9667
      %v9850 = vpop.f32.mrb[0].mxu0
      %v9851 = vadd.f32 0.0, %v9850
      %v9852 = vpop.f32.mrb[0].mxu0
      %9853 = vmatprep.mubr.f32.mxu0 0.0
      %9854 = vmatmul.mubr.f32.gmra.mrb[0].mxu0 %v9670
      %v9855 = vpop.f32.mrb[0].mxu0
      %v9856 = vadd.f32 0.0, %v9855
      %v9857 = vpop.f32.mrb[0].mxu0
      %9858 = vmatprep.mubr.f32.mxu0 0.0
      %9859 = vmatmul.mubr.f32.gmra.mrb[0].mxu0 %v9673
      %v9860 = vpop.f32.mrb[0].mxu0
      %v9861 = vadd.f32 0.0, %v9860
      %v9862 = vpop.f32.mrb[0].mxu0
      %9863 = vmatprep.mubr.f32.mxu0 0.0
      %9864 = vmatmul.mubr.f32.gmra.mrb[0].mxu0 %v9676
      %v9865 = vpop.f32.mrb[0].mxu0
      %v9866 = vadd.f32 0.0, %v9865
      %v9867 = vpop.f32.mrb[0].mxu0
      %9868 = vmatprep.mubr.f32.mxu0 0.0
      %9869 = vmatmul.mubr.f32.gmra.mrb[0].mxu0 %v9679
      %v9870 = vpop.f32.mrb[0].mxu0
      %v9871 = vadd.f32 0.0, %v9870
      %v9872 = vpop.f32.mrb[0].mxu0
      %9873 = vmatprep.mubr.f32.mxu0 0.0
      %9874 = vmatmul.mubr.f32.gmra.mrb[0].mxu0 %v9682
      %v9875 = vpop.f32.mrb[0].mxu0
      %v9876 = vadd.f32 0.0, %v9875
      %v9877 = vpop.f32.mrb[0].mxu0
      %9878 = vmatprep.mubr.f32.mxu0 0.0
      %9879 = vmatmul.mubr.f32.gmra.mrb[0].mxu0 %v9685
      %v9880 = vpop.f32.mrb[0].mxu0
      %v9881 = vadd.f32 0.0, %v9880
      %v9882 = vpop.f32.mrb[0].mxu0
      %9883 = vmatprep.mubr.f32.mxu0 0.0
      %9884 = vmatmul.mubr.f32.gmra.mrb[0].mxu0 %v9688
      %v9885 = vpop.f32.mrb[0].mxu0
      %v9886 = vadd.f32 0.0, %v9885
      %v9887 = vpop.f32.mrb[0].mxu0
      %9888 = vmatprep.mubr.f32.mxu0 0.0
      %9889 = vmatmul.mubr.f32.gmra.mrb[0].mxu0 %v9691
      %v9890 = vpop.f32.mrb[0].mxu0
      %v9891 = vadd.f32 0.0, %v9890
      %v9892 = vpop.f32.mrb[0].mxu0
      %9893 = vmatprep.mubr.f32.mxu0 0.0
      %9894 = vmatmul.mubr.f32.gmra.mrb[0].mxu0 %v9694
      %v9895 = vpop.f32.mrb[0].mxu0
      %v9896 = vadd.f32 0.0, %v9895
      %v9897 = vpop.f32.mrb[0].mxu0
      %9898 = vmatprep.mubr.f32.mxu0 0.0
      %9899 = vmatmul.mubr.f32.gmra.mrb[0].mxu0 %v9697
      %v9900 = vpop.f32.mrb[0].mxu0
      %v9901 = vadd.f32 0.0, %v9900
      %v9902 = vpop.f32.mrb[0].mxu0
      %9903 = vmatprep.mubr.f32.mxu0 0.0
      %9904 = vmatmul.mubr.f32.gmra.mrb[0].mxu0 %v9700
      %v9905 = vpop.f32.mrb[0].mxu0
      %v9906 = vadd.f32 0.0, %v9905
      %v9907 = vpop.f32.mrb[0].mxu0
      %9908 = vmatprep.mubr.f32.mxu0 0.0
      %9909 = vmatmul.mubr.f32.gmra.mrb[0].mxu0 %v9703
      %v9910 = vpop.f32.mrb[0].mxu0
      %v9911 = vadd.f32 0.0, %v9910
      %v9912 = vpop.f32.mrb[0].mxu0
      %9913 = vmatprep.mubr.f32.mxu0 0.0
      %9914 = vmatmul.mubr.f32.gmra.mrb[0].mxu0 %v9706
      %v9915 = vpop.f32.mrb[0].mxu0
      %v9916 = vadd.f32 0.0, %v9915
      %v9917 = vpop.f32.mrb[0].mxu0
      %9918 = vmatprep.mubr.f32.mxu0 0.0
      %9919 = vmatmul.mubr.f32.gmra.mrb[0].mxu0 %v9709
      %v9920 = vpop.f32.mrb[0].mxu0
      %v9921 = vadd.f32 0.0, %v9920
      %v9922 = vpop.f32.mrb[0].mxu0
      %9923 = vmatprep.mubr.f32.mxu0 0.0
      %9924 = vmatmul.mubr.f32.gmra.mrb[0].mxu0 %v9712
      %v9925 = vpop.f32.mrb[0].mxu0
      %v9926 = vadd.f32 0.0, %v9925
      %v9927 = vpop.f32.mrb[0].mxu0
      %9928 = vmatprep.mubr.f32.mxu0 0.0
      %9929 = vmatmul.mubr.f32.gmra.mrb[0].mxu0 %v9715
      %v9930 = vpop.f32.mrb[0].mxu0
      %v9931 = vadd.f32 0.0, %v9930
      %v9932 = vpop.f32.mrb[0].mxu0
      %9933 = vmatprep.mubr.f32.mxu0 0.0
      %9934 = vmatmul.mubr.f32.gmra.mrb[0].mxu0 %v9718
      %v9935 = vpop.f32.mrb[0].mxu0
      %v9936 = vadd.f32 0.0, %v9935
      %v9937 = vpop.f32.mrb[0].mxu0
      %9938 = vmatprep.mubr.f32.mxu0 0.0
      %9939 = vmatmul.mubr.f32.gmra.mrb[0].mxu0 %v9721
      %v9940 = vpop.f32.mrb[0].mxu0
      %v9941 = vadd.f32 0.0, %v9940
      %v9942 = vpop.f32.mrb[0].mxu0
      %9943 = vmatprep.mubr.f32.mxu0 0.0
      %9944 = vmatmul.mubr.f32.gmra.mrb[0].mxu0 %v9724
      %v9945 = vpop.f32.mrb[0].mxu0
      %v9946 = vadd.f32 0.0, %v9945
      %v9947 = vpop.f32.mrb[0].mxu0
      %9948 = vmatprep.mubr.f32.mxu0 0.0
      %9949 = vmatmul.mubr.f32.gmra.mrb[0].mxu0 %v9727
      %v9950 = vpop.f32.mrb[0].mxu0
      %v9951 = vadd.f32 0.0, %v9950
      %v9952 = vpop.f32.mrb[0].mxu0
      %9953 = vdwg.mxu0
      %v9954 = vadd.f32 %v9599, %v9796
      %v9955 = vadd.f32 %v9600, %v9801
      %v9956 = vadd.f32 %v9601, %v9806
      %v9957 = vadd.f32 %v9602, %v9811
      %v9958 = vadd.f32 %v9603, %v9816
      %v9959 = vadd.f32 %v9604, %v9821
      %v9960 = vadd.f32 %v9605, %v9826
      %v9961 = vadd.f32 %v9606, %v9831
      %v9962 = vadd.f32 %v9607, %v9836
      %v9963 = vadd.f32 %v9608, %v9841
      %v9964 = vadd.f32 %v9609, %v9846
      %v9965 = vadd.f32 %v9610, %v9851
      %v9966 = vadd.f32 %v9611, %v9856
      %v9967 = vadd.f32 %v9612, %v9861
      %v9968 = vadd.f32 %v9613, %v9866
      %v9969 = vadd.f32 %v9614, %v9871
      %v9970 = vadd.f32 %v9615, %v9876
      %v9971 = vadd.f32 %v9616, %v9881
      %v9972 = vadd.f32 %v9617, %v9886
      %v9973 = vadd.f32 %v9618, %v9891
      %v9974 = vadd.f32 %v9619, %v9896
      %v9975 = vadd.f32 %v9620, %v9901
      %v9976 = vadd.f32 %v9621, %v9906
      %v9977 = vadd.f32 %v9622, %v9911
      %v9978 = vadd.f32 %v9623, %v9916
      %v9979 = vadd.f32 %v9624, %v9921
      %v9980 = vadd.f32 %v9625, %v9926
      %v9981 = vadd.f32 %v9626, %v9931
      %v9982 = vadd.f32 %v9627, %v9936
      %v9983 = vadd.f32 %v9628, %v9941
      %v9984 = vadd.f32 %v9629, %v9946
      %v9985 = vadd.f32 %v9630, %v9951
      %v9986 = vld [vmem:[%s8436 + $0x2] sm:$0xff]
      %v9987 = vld [vmem:[%s8436 + $0xa] sm:$0xff]
      %v9988 = vld [vmem:[%s8436 + $0x1a] sm:$0xff]
      %v9989 = vld [vmem:[%s8436 + $0x22] sm:$0xff]
      %v9990 = vld [vmem:[%s8436 + $0x32] sm:$0xff]
      %v9991 = vld [vmem:[%s8436 + $0x3a] sm:$0xff]
      %v9992 = vld [vmem:[%s8436 + $0x4a] sm:$0xff]
      %v9993 = vld [vmem:[%s8436 + $0x52] sm:$0xff]
      %v9994 = vld [vmem:[%s8436 + $0x62] sm:$0xff]
      %v9995 = vld [vmem:[%s8436 + $0x6a] sm:$0xff]
      %v9996 = vld [vmem:[%s8436 + $0x7a] sm:$0xff]
      %v9997 = vld [vmem:[%s8436 + $0x82] sm:$0xff]
      %v9998 = vld [vmem:[%s8436 + $0x92] sm:$0xff]
      %v9999 = vld [vmem:[%s8436 + $0x9a] sm:$0xff]
      %v10000 = vld [vmem:[%s8436 + $0xaa] sm:$0xff]
      %v10001 = vld [vmem:[%s8436 + $0xb2] sm:$0xff]
      %v10002 = vld [vmem:[%s8436 + $0xc2] sm:$0xff]
      %v10003 = vld [vmem:[%s8436 + $0xca] sm:$0xff]
      %v10004 = vld [vmem:[%s8436 + $0xda] sm:$0xff]
      %v10005 = vld [vmem:[%s8436 + $0xe2] sm:$0xff]
      %v10006 = vld [vmem:[%s8436 + $0xf2] sm:$0xff]
      %v10007 = vld [vmem:[%s8436 + $0xfa] sm:$0xff]
      %v10008 = vld [vmem:[%s8436 + $0x10a] sm:$0xff]
      %v10009 = vld [vmem:[%s8436 + $0x112] sm:$0xff]
      %v10010 = vld [vmem:[%s8436 + $0x122] sm:$0xff]
      %v10011 = vld [vmem:[%s8436 + $0x12a] sm:$0xff]
      %v10012 = vld [vmem:[%s8436 + $0x13a] sm:$0xff]
      %v10013 = vld [vmem:[%s8436 + $0x142] sm:$0xff]
      %v10014 = vld [vmem:[%s8436 + $0x152] sm:$0xff]
      %v10015 = vld [vmem:[%s8436 + $0x15a] sm:$0xff]
      %v10016 = vld [vmem:[%s8436 + $0x16a] sm:$0xff]
      %v10017 = vld [vmem:[%s8436 + $0x172] sm:$0xff]
      %v10018 = vld [vmem:[%s8469 + $0x2] sm:$0xff]
      %v10019 = vld [vmem:[%s8469 + $0xa] sm:$0xff]
      %v10020 = vld [vmem:[%s8469 + $0x1a] sm:$0xff]
      %v10021 = vld [vmem:[%s8469 + $0x22] sm:$0xff]
      %v10022 = vld [vmem:[%s8469 + $0x32] sm:$0xff]
      %v10023 = vld [vmem:[%s8469 + $0x3a] sm:$0xff]
      %v10024 = vld [vmem:[%s8469 + $0x4a] sm:$0xff]
      %v10025 = vld [vmem:[%s8469 + $0x52] sm:$0xff]
      %v10026 = vld [vmem:[%s8469 + $0x62] sm:$0xff]
      %v10027 = vld [vmem:[%s8469 + $0x6a] sm:$0xff]
      %v10028 = vld [vmem:[%s8469 + $0x7a] sm:$0xff]
      %v10029 = vld [vmem:[%s8469 + $0x82] sm:$0xff]
      %v10030 = vld [vmem:[%s8469 + $0x92] sm:$0xff]
      %v10031 = vld [vmem:[%s8469 + $0x9a] sm:$0xff]
      %v10032 = vld [vmem:[%s8469 + $0xaa] sm:$0xff]
      %v10033 = vld [vmem:[%s8469 + $0xb2] sm:$0xff]
      %v10034 = vld [vmem:[%s8469 + $0xc2] sm:$0xff]
      %v10035 = vld [vmem:[%s8469 + $0xca] sm:$0xff]
      %v10036 = vld [vmem:[%s8469 + $0xda] sm:$0xff]
      %v10037 = vld [vmem:[%s8469 + $0xe2] sm:$0xff]
      %v10038 = vld [vmem:[%s8469 + $0xf2] sm:$0xff]
      %v10039 = vld [vmem:[%s8469 + $0xfa] sm:$0xff]
      %v10040 = vld [vmem:[%s8469 + $0x10a] sm:$0xff]
      %v10041 = vld [vmem:[%s8469 + $0x112] sm:$0xff]
      %v10042 = vld [vmem:[%s8469 + $0x122] sm:$0xff]
      %v10043 = vld [vmem:[%s8469 + $0x12a] sm:$0xff]
      %v10044 = vld [vmem:[%s8469 + $0x13a] sm:$0xff]
      %v10045 = vld [vmem:[%s8469 + $0x142] sm:$0xff]
      %v10046 = vld [vmem:[%s8469 + $0x152] sm:$0xff]
      %v10047 = vld [vmem:[%s8469 + $0x15a] sm:$0xff]
      %v10048 = vld [vmem:[%s8469 + $0x16a] sm:$0xff]
      %v10049 = vld [vmem:[%s8469 + $0x172] sm:$0xff]
      %s10050 = scalar_lea.vmem %s4, 64
      %v10051 = vld [vmem:[%s10050] sm:$0xff]
      %v10053 = vsel %vm3768, %v9986, 0
      %v10056 = vsel %vm3768, %v9987, 0
      %v10059 = vsel %vm3768, %v9988, 0
      %v10062 = vsel %vm3768, %v9989, 0
      %v10065 = vsel %vm3768, %v9990, 0
      %v10068 = vsel %vm3768, %v9991, 0
      %v10071 = vsel %vm3768, %v9992, 0
      %v10074 = vsel %vm3768, %v9993, 0
      %v10077 = vsel %vm3768, %v9994, 0
      %v10080 = vsel %vm3768, %v9995, 0
      %v10083 = vsel %vm3768, %v9996, 0
      %v10086 = vsel %vm3768, %v9997, 0
      %v10089 = vsel %vm3768, %v9998, 0
      %v10092 = vsel %vm3768, %v9999, 0
      %v10095 = vsel %vm3768, %v10000, 0
      %v10098 = vsel %vm3768, %v10001, 0
      %v10101 = vsel %vm3768, %v10002, 0
      %v10104 = vsel %vm3768, %v10003, 0
      %v10107 = vsel %vm3768, %v10004, 0
      %v10110 = vsel %vm3768, %v10005, 0
      %v10113 = vsel %vm3768, %v10006, 0
      %v10116 = vsel %vm3768, %v10007, 0
      %v10119 = vsel %vm3768, %v10008, 0
      %v10122 = vsel %vm3768, %v10009, 0
      %v10125 = vsel %vm3768, %v10010, 0
      %v10128 = vsel %vm3768, %v10011, 0
      %v10131 = vsel %vm3768, %v10012, 0
      %v10134 = vsel %vm3768, %v10013, 0
      %v10137 = vsel %vm3768, %v10014, 0
      %v10140 = vsel %vm3768, %v10015, 0
      %v10143 = vsel %vm3768, %v10016, 0
      %v10146 = vsel %vm3768, %v10017, 0
      %10148 = vmatprep.subr.mxu0 0.0
      %10149 = vmatpush1.msra.mxu0 %v10051
      %10150 = vmatprep.subr.mxu0 0.0
      %10151 = vmatpush1.msra.mxu0 0.0
      %10152 = vmatprep.subr.mxu0 0.0
      %10153 = vmatpush1.msra.mxu0 0.0
      %10154 = vmatprep.subr.mxu0 0.0
      %10155 = vmatpush1.msra.mxu0 0.0
      %10156 = vmatprep.subr.mxu0 0.0
      %10157 = vmatpush1.msra.mxu0 0.0
      %10158 = vmatprep.subr.mxu0 0.0
      %10159 = vmatpush1.msra.mxu0 0.0
      %10160 = vmatprep.subr.mxu0 0.0
      %10161 = vmatpush1.msra.mxu0 0.0
      %10162 = vmatprep.subr.mxu0 0.0
      %10163 = vmatpush1.msra.mxu0 0.0
      %10164 = vmatprep.subr.mxu0 0.0
      %10165 = vmatpush1.msra.mxu0 0.0
      %10166 = vmatprep.subr.mxu0 0.0
      %10167 = vmatpush1.msra.mxu0 0.0
      %10168 = vmatprep.subr.mxu0 0.0
      %10169 = vmatpush1.msra.mxu0 0.0
      %10170 = vmatprep.subr.mxu0 0.0
      %10171 = vmatpush1.msra.mxu0 0.0
      %10172 = vmatprep.subr.mxu0 0.0
      %10173 = vmatpush1.msra.mxu0 0.0
      %10174 = vmatprep.subr.mxu0 0.0
      %10175 = vmatpush1.msra.mxu0 0.0
      %10176 = vmatprep.subr.mxu0 0.0
      %10177 = vmatpush1.msra.mxu0 0.0
      %10178 = vmatprep.subr.mxu0 0.0
      %10179 = vmatpush1.msra.mxu0 0.0
      %10180 = vmatprep.subr.mxu0 0.0
      %10181 = vmatpush1.msra.mxu0 0.0
      %10182 = vmatprep.subr.mxu0 0.0
      %10183 = vmatpush1.msra.mxu0 0.0
      %10184 = vmatprep.subr.mxu0 0.0
      %10185 = vmatpush1.msra.mxu0 0.0
      %10186 = vmatprep.subr.mxu0 0.0
      %10187 = vmatpush1.msra.mxu0 0.0
      %10188 = vmatprep.subr.mxu0 0.0
      %10189 = vmatpush1.msra.mxu0 0.0
      %10190 = vmatprep.subr.mxu0 0.0
      %10191 = vmatpush1.msra.mxu0 0.0
      %10192 = vmatprep.subr.mxu0 0.0
      %10193 = vmatpush1.msra.mxu0 0.0
      %10194 = vmatprep.subr.mxu0 0.0
      %10195 = vmatpush1.msra.mxu0 0.0
      %10196 = vmatprep.subr.mxu0 0.0
      %10197 = vmatpush1.msra.mxu0 0.0
      %10198 = vmatprep.subr.mxu0 0.0
      %10199 = vmatpush1.msra.mxu0 0.0
      %10200 = vmatprep.subr.mxu0 0.0
      %10201 = vmatpush1.msra.mxu0 0.0
      %10202 = vmatprep.subr.mxu0 0.0
      %10203 = vmatpush1.msra.mxu0 0.0
      %10204 = vmatprep.subr.mxu0 0.0
      %10205 = vmatpush1.msra.mxu0 0.0
      %10206 = vmatprep.subr.mxu0 0.0
      %10207 = vmatpush1.msra.mxu0 0.0
      %10208 = vmatprep.subr.mxu0 0.0
      %10209 = vmatpush1.msra.mxu0 0.0
      %10210 = vmatprep.subr.mxu0 0.0
      %10211 = vmatpush1.msra.mxu0 0.0
      %10212 = vmatprep.mubr.f32.mxu0 0.0
      %10213 = vmatmul.mubr.f32.gmra.mrb[0].mxu0 %v10053
      %v10214 = vpop.f32.mrb[0].mxu0
      %v10215 = vadd.f32 0.0, %v10214
      %v10216 = vpop.f32.mrb[0].mxu0
      %10217 = vmatprep.mubr.f32.mxu0 0.0
      %10218 = vmatmul.mubr.f32.gmra.mrb[0].mxu0 %v10056
      %v10219 = vpop.f32.mrb[0].mxu0
      %v10220 = vadd.f32 0.0, %v10219
      %v10221 = vpop.f32.mrb[0].mxu0
      %10222 = vmatprep.mubr.f32.mxu0 0.0
      %10223 = vmatmul.mubr.f32.gmra.mrb[0].mxu0 %v10059
      %v10224 = vpop.f32.mrb[0].mxu0
      %v10225 = vadd.f32 0.0, %v10224
      %v10226 = vpop.f32.mrb[0].mxu0
      %10227 = vmatprep.mubr.f32.mxu0 0.0
      %10228 = vmatmul.mubr.f32.gmra.mrb[0].mxu0 %v10062
      %v10229 = vpop.f32.mrb[0].mxu0
      %v10230 = vadd.f32 0.0, %v10229
      %v10231 = vpop.f32.mrb[0].mxu0
      %10232 = vmatprep.mubr.f32.mxu0 0.0
      %10233 = vmatmul.mubr.f32.gmra.mrb[0].mxu0 %v10065
      %v10234 = vpop.f32.mrb[0].mxu0
      %v10235 = vadd.f32 0.0, %v10234
      %v10236 = vpop.f32.mrb[0].mxu0
      %10237 = vmatprep.mubr.f32.mxu0 0.0
      %10238 = vmatmul.mubr.f32.gmra.mrb[0].mxu0 %v10068
      %v10239 = vpop.f32.mrb[0].mxu0
      %v10240 = vadd.f32 0.0, %v10239
      %v10241 = vpop.f32.mrb[0].mxu0
      %10242 = vmatprep.mubr.f32.mxu0 0.0
      %10243 = vmatmul.mubr.f32.gmra.mrb[0].mxu0 %v10071
      %v10244 = vpop.f32.mrb[0].mxu0
      %v10245 = vadd.f32 0.0, %v10244
      %v10246 = vpop.f32.mrb[0].mxu0
      %10247 = vmatprep.mubr.f32.mxu0 0.0
      %10248 = vmatmul.mubr.f32.gmra.mrb[0].mxu0 %v10074
      %v10249 = vpop.f32.mrb[0].mxu0
      %v10250 = vadd.f32 0.0, %v10249
      %v10251 = vpop.f32.mrb[0].mxu0
      %10252 = vmatprep.mubr.f32.mxu0 0.0
      %10253 = vmatmul.mubr.f32.gmra.mrb[0].mxu0 %v10077
      %v10254 = vpop.f32.mrb[0].mxu0
      %v10255 = vadd.f32 0.0, %v10254
      %v10256 = vpop.f32.mrb[0].mxu0
      %10257 = vmatprep.mubr.f32.mxu0 0.0
      %10258 = vmatmul.mubr.f32.gmra.mrb[0].mxu0 %v10080
      %v10259 = vpop.f32.mrb[0].mxu0
      %v10260 = vadd.f32 0.0, %v10259
      %v10261 = vpop.f32.mrb[0].mxu0
      %10262 = vmatprep.mubr.f32.mxu0 0.0
      %10263 = vmatmul.mubr.f32.gmra.mrb[0].mxu0 %v10083
      %v10264 = vpop.f32.mrb[0].mxu0
      %v10265 = vadd.f32 0.0, %v10264
      %v10266 = vpop.f32.mrb[0].mxu0
      %10267 = vmatprep.mubr.f32.mxu0 0.0
      %10268 = vmatmul.mubr.f32.gmra.mrb[0].mxu0 %v10086
      %v10269 = vpop.f32.mrb[0].mxu0
      %v10270 = vadd.f32 0.0, %v10269
      %v10271 = vpop.f32.mrb[0].mxu0
      %10272 = vmatprep.mubr.f32.mxu0 0.0
      %10273 = vmatmul.mubr.f32.gmra.mrb[0].mxu0 %v10089
      %v10274 = vpop.f32.mrb[0].mxu0
      %v10275 = vadd.f32 0.0, %v10274
      %v10276 = vpop.f32.mrb[0].mxu0
      %10277 = vmatprep.mubr.f32.mxu0 0.0
      %10278 = vmatmul.mubr.f32.gmra.mrb[0].mxu0 %v10092
      %v10279 = vpop.f32.mrb[0].mxu0
      %v10280 = vadd.f32 0.0, %v10279
      %v10281 = vpop.f32.mrb[0].mxu0
      %10282 = vmatprep.mubr.f32.mxu0 0.0
      %10283 = vmatmul.mubr.f32.gmra.mrb[0].mxu0 %v10095
      %v10284 = vpop.f32.mrb[0].mxu0
      %v10285 = vadd.f32 0.0, %v10284
      %v10286 = vpop.f32.mrb[0].mxu0
      %10287 = vmatprep.mubr.f32.mxu0 0.0
      %10288 = vmatmul.mubr.f32.gmra.mrb[0].mxu0 %v10098
      %v10289 = vpop.f32.mrb[0].mxu0
      %v10290 = vadd.f32 0.0, %v10289
      %v10291 = vpop.f32.mrb[0].mxu0
      %10292 = vmatprep.mubr.f32.mxu0 0.0
      %10293 = vmatmul.mubr.f32.gmra.mrb[0].mxu0 %v10101
      %v10294 = vpop.f32.mrb[0].mxu0
      %v10295 = vadd.f32 0.0, %v10294
      %v10296 = vpop.f32.mrb[0].mxu0
      %10297 = vmatprep.mubr.f32.mxu0 0.0
      %10298 = vmatmul.mubr.f32.gmra.mrb[0].mxu0 %v10104
      %v10299 = vpop.f32.mrb[0].mxu0
      %v10300 = vadd.f32 0.0, %v10299
      %v10301 = vpop.f32.mrb[0].mxu0
      %10302 = vmatprep.mubr.f32.mxu0 0.0
      %10303 = vmatmul.mubr.f32.gmra.mrb[0].mxu0 %v10107
      %v10304 = vpop.f32.mrb[0].mxu0
      %v10305 = vadd.f32 0.0, %v10304
      %v10306 = vpop.f32.mrb[0].mxu0
      %10307 = vmatprep.mubr.f32.mxu0 0.0
      %10308 = vmatmul.mubr.f32.gmra.mrb[0].mxu0 %v10110
      %v10309 = vpop.f32.mrb[0].mxu0
      %v10310 = vadd.f32 0.0, %v10309
      %v10311 = vpop.f32.mrb[0].mxu0
      %10312 = vmatprep.mubr.f32.mxu0 0.0
      %10313 = vmatmul.mubr.f32.gmra.mrb[0].mxu0 %v10113
      %v10314 = vpop.f32.mrb[0].mxu0
      %v10315 = vadd.f32 0.0, %v10314
      %v10316 = vpop.f32.mrb[0].mxu0
      %10317 = vmatprep.mubr.f32.mxu0 0.0
      %10318 = vmatmul.mubr.f32.gmra.mrb[0].mxu0 %v10116
      %v10319 = vpop.f32.mrb[0].mxu0
      %v10320 = vadd.f32 0.0, %v10319
      %v10321 = vpop.f32.mrb[0].mxu0
      %10322 = vmatprep.mubr.f32.mxu0 0.0
      %10323 = vmatmul.mubr.f32.gmra.mrb[0].mxu0 %v10119
      %v10324 = vpop.f32.mrb[0].mxu0
      %v10325 = vadd.f32 0.0, %v10324
      %v10326 = vpop.f32.mrb[0].mxu0
      %10327 = vmatprep.mubr.f32.mxu0 0.0
      %10328 = vmatmul.mubr.f32.gmra.mrb[0].mxu0 %v10122
      %v10329 = vpop.f32.mrb[0].mxu0
      %v10330 = vadd.f32 0.0, %v10329
      %v10331 = vpop.f32.mrb[0].mxu0
      %10332 = vmatprep.mubr.f32.mxu0 0.0
      %10333 = vmatmul.mubr.f32.gmra.mrb[0].mxu0 %v10125
      %v10334 = vpop.f32.mrb[0].mxu0
      %v10335 = vadd.f32 0.0, %v10334
      %v10336 = vpop.f32.mrb[0].mxu0
      %10337 = vmatprep.mubr.f32.mxu0 0.0
      %10338 = vmatmul.mubr.f32.gmra.mrb[0].mxu0 %v10128
      %v10339 = vpop.f32.mrb[0].mxu0
      %v10340 = vadd.f32 0.0, %v10339
      %v10341 = vpop.f32.mrb[0].mxu0
      %10342 = vmatprep.mubr.f32.mxu0 0.0
      %10343 = vmatmul.mubr.f32.gmra.mrb[0].mxu0 %v10131
      %v10344 = vpop.f32.mrb[0].mxu0
      %v10345 = vadd.f32 0.0, %v10344
      %v10346 = vpop.f32.mrb[0].mxu0
      %10347 = vmatprep.mubr.f32.mxu0 0.0
      %10348 = vmatmul.mubr.f32.gmra.mrb[0].mxu0 %v10134
      %v10349 = vpop.f32.mrb[0].mxu0
      %v10350 = vadd.f32 0.0, %v10349
      %v10351 = vpop.f32.mrb[0].mxu0
      %10352 = vmatprep.mubr.f32.mxu0 0.0
      %10353 = vmatmul.mubr.f32.gmra.mrb[0].mxu0 %v10137
      %v10354 = vpop.f32.mrb[0].mxu0
      %v10355 = vadd.f32 0.0, %v10354
      %v10356 = vpop.f32.mrb[0].mxu0
      %10357 = vmatprep.mubr.f32.mxu0 0.0
      %10358 = vmatmul.mubr.f32.gmra.mrb[0].mxu0 %v10140
      %v10359 = vpop.f32.mrb[0].mxu0
      %v10360 = vadd.f32 0.0, %v10359
      %v10361 = vpop.f32.mrb[0].mxu0
      %10362 = vmatprep.mubr.f32.mxu0 0.0
      %10363 = vmatmul.mubr.f32.gmra.mrb[0].mxu0 %v10143
      %v10364 = vpop.f32.mrb[0].mxu0
      %v10365 = vadd.f32 0.0, %v10364
      %v10366 = vpop.f32.mrb[0].mxu0
      %10367 = vmatprep.mubr.f32.mxu0 0.0
      %10368 = vmatmul.mubr.f32.gmra.mrb[0].mxu0 %v10146
      %v10369 = vpop.f32.mrb[0].mxu0
      %v10370 = vadd.f32 0.0, %v10369
      %v10371 = vpop.f32.mrb[0].mxu0
      %10372 = vdwg.mxu0
      %v10373 = vadd.f32 %v9954, %v10215
      %v10374 = vadd.f32 %v9955, %v10220
      %v10375 = vadd.f32 %v9956, %v10225
      %v10376 = vadd.f32 %v9957, %v10230
      %v10377 = vadd.f32 %v9958, %v10235
      %v10378 = vadd.f32 %v9959, %v10240
      %v10379 = vadd.f32 %v9960, %v10245
      %v10380 = vadd.f32 %v9961, %v10250
      %v10381 = vadd.f32 %v9962, %v10255
      %v10382 = vadd.f32 %v9963, %v10260
      %v10383 = vadd.f32 %v9964, %v10265
      %v10384 = vadd.f32 %v9965, %v10270
      %v10385 = vadd.f32 %v9966, %v10275
      %v10386 = vadd.f32 %v9967, %v10280
      %v10387 = vadd.f32 %v9968, %v10285
      %v10388 = vadd.f32 %v9969, %v10290
      %v10389 = vadd.f32 %v9970, %v10295
      %v10390 = vadd.f32 %v9971, %v10300
      %v10391 = vadd.f32 %v9972, %v10305
      %v10392 = vadd.f32 %v9973, %v10310
      %v10393 = vadd.f32 %v9974, %v10315
      %v10394 = vadd.f32 %v9975, %v10320
      %v10395 = vadd.f32 %v9976, %v10325
      %v10396 = vadd.f32 %v9977, %v10330
      %v10397 = vadd.f32 %v9978, %v10335
      %v10398 = vadd.f32 %v9979, %v10340
      %v10399 = vadd.f32 %v9980, %v10345
      %v10400 = vadd.f32 %v9981, %v10350
      %v10401 = vadd.f32 %v9982, %v10355
      %v10402 = vadd.f32 %v9983, %v10360
      %v10403 = vadd.f32 %v9984, %v10365
      %v10404 = vadd.f32 %v9985, %v10370
      %s10405 = scalar_lea.vmem %s5, 64
      %v10406 = vld [vmem:[%s10405] sm:$0xff]
      %v10408 = vsel %vm3768, %v10018, 0
      %v10411 = vsel %vm3768, %v10019, 0
      %v10414 = vsel %vm3768, %v10020, 0
      %v10417 = vsel %vm3768, %v10021, 0
      %v10420 = vsel %vm3768, %v10022, 0
      %v10423 = vsel %vm3768, %v10023, 0
      %v10426 = vsel %vm3768, %v10024, 0
      %v10429 = vsel %vm3768, %v10025, 0
      %v10432 = vsel %vm3768, %v10026, 0
      %v10435 = vsel %vm3768, %v10027, 0
      %v10438 = vsel %vm3768, %v10028, 0
      %v10441 = vsel %vm3768, %v10029, 0
      %v10444 = vsel %vm3768, %v10030, 0
      %v10447 = vsel %vm3768, %v10031, 0
      %v10450 = vsel %vm3768, %v10032, 0
      %v10453 = vsel %vm3768, %v10033, 0
      %v10456 = vsel %vm3768, %v10034, 0
      %v10459 = vsel %vm3768, %v10035, 0
      %v10462 = vsel %vm3768, %v10036, 0
      %v10465 = vsel %vm3768, %v10037, 0
      %v10468 = vsel %vm3768, %v10038, 0
      %v10471 = vsel %vm3768, %v10039, 0
      %v10474 = vsel %vm3768, %v10040, 0
      %v10477 = vsel %vm3768, %v10041, 0
      %v10480 = vsel %vm3768, %v10042, 0
      %v10483 = vsel %vm3768, %v10043, 0
      %v10486 = vsel %vm3768, %v10044, 0
      %v10489 = vsel %vm3768, %v10045, 0
      %v10492 = vsel %vm3768, %v10046, 0
      %v10495 = vsel %vm3768, %v10047, 0
      %v10498 = vsel %vm3768, %v10048, 0
      %v10501 = vsel %vm3768, %v10049, 0
      %10503 = vmatprep.subr.mxu0 0.0
      %10504 = vmatpush1.msra.mxu0 %v10406
      %10505 = vmatprep.subr.mxu0 0.0
      %10506 = vmatpush1.msra.mxu0 0.0
      %10507 = vmatprep.subr.mxu0 0.0
      %10508 = vmatpush1.msra.mxu0 0.0
      %10509 = vmatprep.subr.mxu0 0.0
      %10510 = vmatpush1.msra.mxu0 0.0
      %10511 = vmatprep.subr.mxu0 0.0
      %10512 = vmatpush1.msra.mxu0 0.0
      %10513 = vmatprep.subr.mxu0 0.0
      %10514 = vmatpush1.msra.mxu0 0.0
      %10515 = vmatprep.subr.mxu0 0.0
      %10516 = vmatpush1.msra.mxu0 0.0
      %10517 = vmatprep.subr.mxu0 0.0
      %10518 = vmatpush1.msra.mxu0 0.0
      %10519 = vmatprep.subr.mxu0 0.0
      %10520 = vmatpush1.msra.mxu0 0.0
      %10521 = vmatprep.subr.mxu0 0.0
      %10522 = vmatpush1.msra.mxu0 0.0
      %10523 = vmatprep.subr.mxu0 0.0
      %10524 = vmatpush1.msra.mxu0 0.0
      %10525 = vmatprep.subr.mxu0 0.0
      %10526 = vmatpush1.msra.mxu0 0.0
      %10527 = vmatprep.subr.mxu0 0.0
      %10528 = vmatpush1.msra.mxu0 0.0
      %10529 = vmatprep.subr.mxu0 0.0
      %10530 = vmatpush1.msra.mxu0 0.0
      %10531 = vmatprep.subr.mxu0 0.0
      %10532 = vmatpush1.msra.mxu0 0.0
      %10533 = vmatprep.subr.mxu0 0.0
      %10534 = vmatpush1.msra.mxu0 0.0
      %10535 = vmatprep.subr.mxu0 0.0
      %10536 = vmatpush1.msra.mxu0 0.0
      %10537 = vmatprep.subr.mxu0 0.0
      %10538 = vmatpush1.msra.mxu0 0.0
      %10539 = vmatprep.subr.mxu0 0.0
      %10540 = vmatpush1.msra.mxu0 0.0
      %10541 = vmatprep.subr.mxu0 0.0
      %10542 = vmatpush1.msra.mxu0 0.0
      %10543 = vmatprep.subr.mxu0 0.0
      %10544 = vmatpush1.msra.mxu0 0.0
      %10545 = vmatprep.subr.mxu0 0.0
      %10546 = vmatpush1.msra.mxu0 0.0
      %10547 = vmatprep.subr.mxu0 0.0
      %10548 = vmatpush1.msra.mxu0 0.0
      %10549 = vmatprep.subr.mxu0 0.0
      %10550 = vmatpush1.msra.mxu0 0.0
      %10551 = vmatprep.subr.mxu0 0.0
      %10552 = vmatpush1.msra.mxu0 0.0
      %10553 = vmatprep.subr.mxu0 0.0
      %10554 = vmatpush1.msra.mxu0 0.0
      %10555 = vmatprep.subr.mxu0 0.0
      %10556 = vmatpush1.msra.mxu0 0.0
      %10557 = vmatprep.subr.mxu0 0.0
      %10558 = vmatpush1.msra.mxu0 0.0
      %10559 = vmatprep.subr.mxu0 0.0
      %10560 = vmatpush1.msra.mxu0 0.0
      %10561 = vmatprep.subr.mxu0 0.0
      %10562 = vmatpush1.msra.mxu0 0.0
      %10563 = vmatprep.subr.mxu0 0.0
      %10564 = vmatpush1.msra.mxu0 0.0
      %10565 = vmatprep.subr.mxu0 0.0
      %10566 = vmatpush1.msra.mxu0 0.0
      %10567 = vmatprep.mubr.f32.mxu0 0.0
      %10568 = vmatmul.mubr.f32.gmra.mrb[0].mxu0 %v10408
      %v10569 = vpop.f32.mrb[0].mxu0
      %v10570 = vadd.f32 0.0, %v10569
      %v10571 = vpop.f32.mrb[0].mxu0
      %10572 = vmatprep.mubr.f32.mxu0 0.0
      %10573 = vmatmul.mubr.f32.gmra.mrb[0].mxu0 %v10411
      %v10574 = vpop.f32.mrb[0].mxu0
      %v10575 = vadd.f32 0.0, %v10574
      %v10576 = vpop.f32.mrb[0].mxu0
      %10577 = vmatprep.mubr.f32.mxu0 0.0
      %10578 = vmatmul.mubr.f32.gmra.mrb[0].mxu0 %v10414
      %v10579 = vpop.f32.mrb[0].mxu0
      %v10580 = vadd.f32 0.0, %v10579
      %v10581 = vpop.f32.mrb[0].mxu0
      %10582 = vmatprep.mubr.f32.mxu0 0.0
      %10583 = vmatmul.mubr.f32.gmra.mrb[0].mxu0 %v10417
      %v10584 = vpop.f32.mrb[0].mxu0
      %v10585 = vadd.f32 0.0, %v10584
      %v10586 = vpop.f32.mrb[0].mxu0
      %10587 = vmatprep.mubr.f32.mxu0 0.0
      %10588 = vmatmul.mubr.f32.gmra.mrb[0].mxu0 %v10420
      %v10589 = vpop.f32.mrb[0].mxu0
      %v10590 = vadd.f32 0.0, %v10589
      %v10591 = vpop.f32.mrb[0].mxu0
      %10592 = vmatprep.mubr.f32.mxu0 0.0
      %10593 = vmatmul.mubr.f32.gmra.mrb[0].mxu0 %v10423
      %v10594 = vpop.f32.mrb[0].mxu0
      %v10595 = vadd.f32 0.0, %v10594
      %v10596 = vpop.f32.mrb[0].mxu0
      %10597 = vmatprep.mubr.f32.mxu0 0.0
      %10598 = vmatmul.mubr.f32.gmra.mrb[0].mxu0 %v10426
      %v10599 = vpop.f32.mrb[0].mxu0
      %v10600 = vadd.f32 0.0, %v10599
      %v10601 = vpop.f32.mrb[0].mxu0
      %10602 = vmatprep.mubr.f32.mxu0 0.0
      %10603 = vmatmul.mubr.f32.gmra.mrb[0].mxu0 %v10429
      %v10604 = vpop.f32.mrb[0].mxu0
      %v10605 = vadd.f32 0.0, %v10604
      %v10606 = vpop.f32.mrb[0].mxu0
      %10607 = vmatprep.mubr.f32.mxu0 0.0
      %10608 = vmatmul.mubr.f32.gmra.mrb[0].mxu0 %v10432
      %v10609 = vpop.f32.mrb[0].mxu0
      %v10610 = vadd.f32 0.0, %v10609
      %v10611 = vpop.f32.mrb[0].mxu0
      %10612 = vmatprep.mubr.f32.mxu0 0.0
      %10613 = vmatmul.mubr.f32.gmra.mrb[0].mxu0 %v10435
      %v10614 = vpop.f32.mrb[0].mxu0
      %v10615 = vadd.f32 0.0, %v10614
      %v10616 = vpop.f32.mrb[0].mxu0
      %10617 = vmatprep.mubr.f32.mxu0 0.0
      %10618 = vmatmul.mubr.f32.gmra.mrb[0].mxu0 %v10438
      %v10619 = vpop.f32.mrb[0].mxu0
      %v10620 = vadd.f32 0.0, %v10619
      %v10621 = vpop.f32.mrb[0].mxu0
      %10622 = vmatprep.mubr.f32.mxu0 0.0
      %10623 = vmatmul.mubr.f32.gmra.mrb[0].mxu0 %v10441
      %v10624 = vpop.f32.mrb[0].mxu0
      %v10625 = vadd.f32 0.0, %v10624
      %v10626 = vpop.f32.mrb[0].mxu0
      %10627 = vmatprep.mubr.f32.mxu0 0.0
      %10628 = vmatmul.mubr.f32.gmra.mrb[0].mxu0 %v10444
      %v10629 = vpop.f32.mrb[0].mxu0
      %v10630 = vadd.f32 0.0, %v10629
      %v10631 = vpop.f32.mrb[0].mxu0
      %10632 = vmatprep.mubr.f32.mxu0 0.0
      %10633 = vmatmul.mubr.f32.gmra.mrb[0].mxu0 %v10447
      %v10634 = vpop.f32.mrb[0].mxu0
      %v10635 = vadd.f32 0.0, %v10634
      %v10636 = vpop.f32.mrb[0].mxu0
      %10637 = vmatprep.mubr.f32.mxu0 0.0
      %10638 = vmatmul.mubr.f32.gmra.mrb[0].mxu0 %v10450
      %v10639 = vpop.f32.mrb[0].mxu0
      %v10640 = vadd.f32 0.0, %v10639
      %v10641 = vpop.f32.mrb[0].mxu0
      %10642 = vmatprep.mubr.f32.mxu0 0.0
      %10643 = vmatmul.mubr.f32.gmra.mrb[0].mxu0 %v10453
      %v10644 = vpop.f32.mrb[0].mxu0
      %v10645 = vadd.f32 0.0, %v10644
      %v10646 = vpop.f32.mrb[0].mxu0
      %10647 = vmatprep.mubr.f32.mxu0 0.0
      %10648 = vmatmul.mubr.f32.gmra.mrb[0].mxu0 %v10456
      %v10649 = vpop.f32.mrb[0].mxu0
      %v10650 = vadd.f32 0.0, %v10649
      %v10651 = vpop.f32.mrb[0].mxu0
      %10652 = vmatprep.mubr.f32.mxu0 0.0
      %10653 = vmatmul.mubr.f32.gmra.mrb[0].mxu0 %v10459
      %v10654 = vpop.f32.mrb[0].mxu0
      %v10655 = vadd.f32 0.0, %v10654
      %v10656 = vpop.f32.mrb[0].mxu0
      %10657 = vmatprep.mubr.f32.mxu0 0.0
      %10658 = vmatmul.mubr.f32.gmra.mrb[0].mxu0 %v10462
      %v10659 = vpop.f32.mrb[0].mxu0
      %v10660 = vadd.f32 0.0, %v10659
      %v10661 = vpop.f32.mrb[0].mxu0
      %10662 = vmatprep.mubr.f32.mxu0 0.0
      %10663 = vmatmul.mubr.f32.gmra.mrb[0].mxu0 %v10465
      %v10664 = vpop.f32.mrb[0].mxu0
      %v10665 = vadd.f32 0.0, %v10664
      %v10666 = vpop.f32.mrb[0].mxu0
      %10667 = vmatprep.mubr.f32.mxu0 0.0
      %10668 = vmatmul.mubr.f32.gmra.mrb[0].mxu0 %v10468
      %v10669 = vpop.f32.mrb[0].mxu0
      %v10670 = vadd.f32 0.0, %v10669
      %v10671 = vpop.f32.mrb[0].mxu0
      %10672 = vmatprep.mubr.f32.mxu0 0.0
      %10673 = vmatmul.mubr.f32.gmra.mrb[0].mxu0 %v10471
      %v10674 = vpop.f32.mrb[0].mxu0
      %v10675 = vadd.f32 0.0, %v10674
      %v10676 = vpop.f32.mrb[0].mxu0
      %10677 = vmatprep.mubr.f32.mxu0 0.0
      %10678 = vmatmul.mubr.f32.gmra.mrb[0].mxu0 %v10474
      %v10679 = vpop.f32.mrb[0].mxu0
      %v10680 = vadd.f32 0.0, %v10679
      %v10681 = vpop.f32.mrb[0].mxu0
      %10682 = vmatprep.mubr.f32.mxu0 0.0
      %10683 = vmatmul.mubr.f32.gmra.mrb[0].mxu0 %v10477
      %v10684 = vpop.f32.mrb[0].mxu0
      %v10685 = vadd.f32 0.0, %v10684
      %v10686 = vpop.f32.mrb[0].mxu0
      %10687 = vmatprep.mubr.f32.mxu0 0.0
      %10688 = vmatmul.mubr.f32.gmra.mrb[0].mxu0 %v10480
      %v10689 = vpop.f32.mrb[0].mxu0
      %v10690 = vadd.f32 0.0, %v10689
      %v10691 = vpop.f32.mrb[0].mxu0
      %10692 = vmatprep.mubr.f32.mxu0 0.0
      %10693 = vmatmul.mubr.f32.gmra.mrb[0].mxu0 %v10483
      %v10694 = vpop.f32.mrb[0].mxu0
      %v10695 = vadd.f32 0.0, %v10694
      %v10696 = vpop.f32.mrb[0].mxu0
      %10697 = vmatprep.mubr.f32.mxu0 0.0
      %10698 = vmatmul.mubr.f32.gmra.mrb[0].mxu0 %v10486
      %v10699 = vpop.f32.mrb[0].mxu0
      %v10700 = vadd.f32 0.0, %v10699
      %v10701 = vpop.f32.mrb[0].mxu0
      %10702 = vmatprep.mubr.f32.mxu0 0.0
      %10703 = vmatmul.mubr.f32.gmra.mrb[0].mxu0 %v10489
      %v10704 = vpop.f32.mrb[0].mxu0
      %v10705 = vadd.f32 0.0, %v10704
      %v10706 = vpop.f32.mrb[0].mxu0
      %10707 = vmatprep.mubr.f32.mxu0 0.0
      %10708 = vmatmul.mubr.f32.gmra.mrb[0].mxu0 %v10492
      %v10709 = vpop.f32.mrb[0].mxu0
      %v10710 = vadd.f32 0.0, %v10709
      %v10711 = vpop.f32.mrb[0].mxu0
      %10712 = vmatprep.mubr.f32.mxu0 0.0
      %10713 = vmatmul.mubr.f32.gmra.mrb[0].mxu0 %v10495
      %v10714 = vpop.f32.mrb[0].mxu0
      %v10715 = vadd.f32 0.0, %v10714
      %v10716 = vpop.f32.mrb[0].mxu0
      %10717 = vmatprep.mubr.f32.mxu0 0.0
      %10718 = vmatmul.mubr.f32.gmra.mrb[0].mxu0 %v10498
      %v10719 = vpop.f32.mrb[0].mxu0
      %v10720 = vadd.f32 0.0, %v10719
      %v10721 = vpop.f32.mrb[0].mxu0
      %10722 = vmatprep.mubr.f32.mxu0 0.0
      %10723 = vmatmul.mubr.f32.gmra.mrb[0].mxu0 %v10501
      %v10724 = vpop.f32.mrb[0].mxu0
      %v10725 = vadd.f32 0.0, %v10724
      %v10726 = vpop.f32.mrb[0].mxu0
      %10727 = vdwg.mxu0
      %v10728 = vadd.f32 %v10373, %v10570
      %v10729 = vadd.f32 %v10374, %v10575
      %v10730 = vadd.f32 %v10375, %v10580
      %v10731 = vadd.f32 %v10376, %v10585
      %v10732 = vadd.f32 %v10377, %v10590
      %v10733 = vadd.f32 %v10378, %v10595
      %v10734 = vadd.f32 %v10379, %v10600
      %v10735 = vadd.f32 %v10380, %v10605
      %v10736 = vadd.f32 %v10381, %v10610
      %v10737 = vadd.f32 %v10382, %v10615
      %v10738 = vadd.f32 %v10383, %v10620
      %v10739 = vadd.f32 %v10384, %v10625
      %v10740 = vadd.f32 %v10385, %v10630
      %v10741 = vadd.f32 %v10386, %v10635
      %v10742 = vadd.f32 %v10387, %v10640
      %v10743 = vadd.f32 %v10388, %v10645
      %v10744 = vadd.f32 %v10389, %v10650
      %v10745 = vadd.f32 %v10390, %v10655
      %v10746 = vadd.f32 %v10391, %v10660
      %v10747 = vadd.f32 %v10392, %v10665
      %v10748 = vadd.f32 %v10393, %v10670
      %v10749 = vadd.f32 %v10394, %v10675
      %v10750 = vadd.f32 %v10395, %v10680
      %v10751 = vadd.f32 %v10396, %v10685
      %v10752 = vadd.f32 %v10397, %v10690
      %v10753 = vadd.f32 %v10398, %v10695
      %v10754 = vadd.f32 %v10399, %v10700
      %v10755 = vadd.f32 %v10400, %v10705
      %v10756 = vadd.f32 %v10401, %v10710
      %v10757 = vadd.f32 %v10402, %v10715
      %v10758 = vadd.f32 %v10403, %v10720
      %v10759 = vadd.f32 %v10404, %v10725
      %v10760 = vld [vmem:[%s6] sm:$0x1]
      %v10762 = vlaneseq
      %v10763 = vshrl.u32 %v10762, 7
      %v10764 = vsub.s32 0, %v10763
      %v10765 = vrot.slane %v10760, %v10764
      %v10767 = vadd.f32 %v10728, %v10765
      %v10768 = vadd.f32 %v10729, %v10765
      %v10769 = vadd.f32 %v10730, %v10765
      %v10770 = vadd.f32 %v10731, %v10765
      %v10771 = vadd.f32 %v10732, %v10765
      %v10772 = vadd.f32 %v10733, %v10765
      %v10773 = vadd.f32 %v10734, %v10765
      %v10774 = vadd.f32 %v10735, %v10765
      %v10775 = vadd.f32 %v10736, %v10765
      %v10776 = vadd.f32 %v10737, %v10765
      %v10777 = vadd.f32 %v10738, %v10765
      %v10778 = vadd.f32 %v10739, %v10765
      %v10779 = vadd.f32 %v10740, %v10765
      %v10780 = vadd.f32 %v10741, %v10765
      %v10781 = vadd.f32 %v10742, %v10765
      %v10782 = vadd.f32 %v10743, %v10765
      %v10783 = vadd.f32 %v10744, %v10765
      %v10784 = vadd.f32 %v10745, %v10765
      %v10785 = vadd.f32 %v10746, %v10765
      %v10786 = vadd.f32 %v10747, %v10765
      %v10787 = vadd.f32 %v10748, %v10765
      %v10788 = vadd.f32 %v10749, %v10765
      %v10789 = vadd.f32 %v10750, %v10765
      %v10790 = vadd.f32 %v10751, %v10765
      %v10791 = vadd.f32 %v10752, %v10765
      %v10792 = vadd.f32 %v10753, %v10765
      %v10793 = vadd.f32 %v10754, %v10765
      %v10794 = vadd.f32 %v10755, %v10765
      %v10795 = vadd.f32 %v10756, %v10765
      %v10796 = vadd.f32 %v10757, %v10765
      %v10797 = vadd.f32 %v10758, %v10765
      %v10798 = vadd.f32 %v10759, %v10765
      %v10799 = vsel %vm3768, %v10767, 0.0
      %v10800 = vsel %vm3768, %v10768, 0.0
      %v10801 = vadd.f32 %v10799, %v10800
      %v10802 = vsel %vm3768, %v10769, 0.0
      %v10803 = vadd.f32 %v10801, %v10802
      %v10804 = vsel %vm3768, %v10770, 0.0
      %v10805 = vadd.f32 %v10803, %v10804
      %v10806 = vsel %vm3768, %v10771, 0.0
      %v10807 = vadd.f32 %v10805, %v10806
      %v10808 = vsel %vm3768, %v10772, 0.0
      %v10809 = vadd.f32 %v10807, %v10808
      %v10810 = vsel %vm3768, %v10773, 0.0
      %v10811 = vadd.f32 %v10809, %v10810
      %v10812 = vsel %vm3768, %v10774, 0.0
      %v10813 = vadd.f32 %v10811, %v10812
      %v10814 = vsel %vm3768, %v10775, 0.0
      %v10815 = vadd.f32 %v10813, %v10814
      %v10816 = vsel %vm3768, %v10776, 0.0
      %v10817 = vadd.f32 %v10815, %v10816
      %v10818 = vsel %vm3768, %v10777, 0.0
      %v10819 = vadd.f32 %v10817, %v10818
      %v10820 = vsel %vm3768, %v10778, 0.0
      %v10821 = vadd.f32 %v10819, %v10820
      %v10822 = vsel %vm3768, %v10779, 0.0
      %v10823 = vadd.f32 %v10821, %v10822
      %v10824 = vsel %vm3768, %v10780, 0.0
      %v10825 = vadd.f32 %v10823, %v10824
      %v10826 = vsel %vm3768, %v10781, 0.0
      %v10827 = vadd.f32 %v10825, %v10826
      %v10828 = vsel %vm3768, %v10782, 0.0
      %v10829 = vadd.f32 %v10827, %v10828
      %v10830 = vsel %vm3768, %v10783, 0.0
      %v10831 = vadd.f32 %v10829, %v10830
      %v10832 = vsel %vm3768, %v10784, 0.0
      %v10833 = vadd.f32 %v10831, %v10832
      %v10834 = vsel %vm3768, %v10785, 0.0
      %v10835 = vadd.f32 %v10833, %v10834
      %v10836 = vsel %vm3768, %v10786, 0.0
      %v10837 = vadd.f32 %v10835, %v10836
      %v10838 = vsel %vm3768, %v10787, 0.0
      %v10839 = vadd.f32 %v10837, %v10838
      %v10840 = vsel %vm3768, %v10788, 0.0
      %v10841 = vadd.f32 %v10839, %v10840
      %v10842 = vsel %vm3768, %v10789, 0.0
      %v10843 = vadd.f32 %v10841, %v10842
      %v10844 = vsel %vm3768, %v10790, 0.0
      %v10845 = vadd.f32 %v10843, %v10844
      %v10846 = vsel %vm3768, %v10791, 0.0
      %v10847 = vadd.f32 %v10845, %v10846
      %v10848 = vsel %vm3768, %v10792, 0.0
      %v10849 = vadd.f32 %v10847, %v10848
      %v10850 = vsel %vm3768, %v10793, 0.0
      %v10851 = vadd.f32 %v10849, %v10850
      %v10852 = vsel %vm3768, %v10794, 0.0
      %v10853 = vadd.f32 %v10851, %v10852
      %v10854 = vsel %vm3768, %v10795, 0.0
      %v10855 = vadd.f32 %v10853, %v10854
      %v10856 = vsel %vm3768, %v10796, 0.0
      %v10857 = vadd.f32 %v10855, %v10856
      %v10858 = vsel %vm3768, %v10797, 0.0
      %v10859 = vadd.f32 %v10857, %v10858
      %v10860 = vsel %vm3768, %v10798, 0.0
      %v10861 = vadd.f32 %v10859, %v10860
      %v10862 = vrot.slane %v10861, 4
      %v10863 = vadd.f32 %v10861, %v10862
      %v10864 = vrot.slane %v10863, 2
      %v10865 = vadd.f32 %v10863, %v10864
      %v10866 = vrot.slane %v10865, 1
      %v10867 = vadd.f32 %v10865, %v10866
      %v10868 = vrcp.pop 256.0
      %v10869 = vmul.f32 %v10867, %v10868
      %v10870 = vsub.f32 %v10767, %v10869
      %v10871 = vsub.f32 %v10768, %v10869
      %v10872 = vsub.f32 %v10769, %v10869
      %v10873 = vsub.f32 %v10770, %v10869
      %v10874 = vsub.f32 %v10771, %v10869
      %v10875 = vsub.f32 %v10772, %v10869
      %v10876 = vsub.f32 %v10773, %v10869
      %v10877 = vsub.f32 %v10774, %v10869
      %v10878 = vsub.f32 %v10775, %v10869
      %v10879 = vsub.f32 %v10776, %v10869
      %v10880 = vsub.f32 %v10777, %v10869
      %v10881 = vsub.f32 %v10778, %v10869
      %v10882 = vsub.f32 %v10779, %v10869
      %v10883 = vsub.f32 %v10780, %v10869
      %v10884 = vsub.f32 %v10781, %v10869
      %v10885 = vsub.f32 %v10782, %v10869
      %v10886 = vsub.f32 %v10783, %v10869
      %v10887 = vsub.f32 %v10784, %v10869
      %v10888 = vsub.f32 %v10785, %v10869
      %v10889 = vsub.f32 %v10786, %v10869
      %v10890 = vsub.f32 %v10787, %v10869
      %v10891 = vsub.f32 %v10788, %v10869
      %v10892 = vsub.f32 %v10789, %v10869
      %v10893 = vsub.f32 %v10790, %v10869
      %v10894 = vsub.f32 %v10791, %v10869
      %v10895 = vsub.f32 %v10792, %v10869
      %v10896 = vsub.f32 %v10793, %v10869
      %v10897 = vsub.f32 %v10794, %v10869
      %v10898 = vsub.f32 %v10795, %v10869
      %v10899 = vsub.f32 %v10796, %v10869
      %v10900 = vsub.f32 %v10797, %v10869
      %v10901 = vsub.f32 %v10798, %v10869
      %v10902 = vmul.f32 %v10870, %v10870
      %v10903 = vmul.f32 %v10871, %v10871
      %v10904 = vmul.f32 %v10872, %v10872
      %v10905 = vmul.f32 %v10873, %v10873
      %v10906 = vmul.f32 %v10874, %v10874
      %v10907 = vmul.f32 %v10875, %v10875
      %v10908 = vmul.f32 %v10876, %v10876
      %v10909 = vmul.f32 %v10877, %v10877
      %v10910 = vmul.f32 %v10878, %v10878
      %v10911 = vmul.f32 %v10879, %v10879
      %v10912 = vmul.f32 %v10880, %v10880
      %v10913 = vmul.f32 %v10881, %v10881
      %v10914 = vmul.f32 %v10882, %v10882
      %v10915 = vmul.f32 %v10883, %v10883
      %v10916 = vmul.f32 %v10884, %v10884
      %v10917 = vmul.f32 %v10885, %v10885
      %v10918 = vmul.f32 %v10886, %v10886
      %v10919 = vmul.f32 %v10887, %v10887
      %v10920 = vmul.f32 %v10888, %v10888
      %v10921 = vmul.f32 %v10889, %v10889
      %v10922 = vmul.f32 %v10890, %v10890
      %v10923 = vmul.f32 %v10891, %v10891
      %v10924 = vmul.f32 %v10892, %v10892
      %v10925 = vmul.f32 %v10893, %v10893
      %v10926 = vmul.f32 %v10894, %v10894
      %v10927 = vmul.f32 %v10895, %v10895
      %v10928 = vmul.f32 %v10896, %v10896
      %v10929 = vmul.f32 %v10897, %v10897
      %v10930 = vmul.f32 %v10898, %v10898
      %v10931 = vmul.f32 %v10899, %v10899
      %v10932 = vmul.f32 %v10900, %v10900
      %v10933 = vmul.f32 %v10901, %v10901
      %v10934 = vsel %vm3768, %v10902, 0.0
      %v10935 = vsel %vm3768, %v10903, 0.0
      %v10936 = vadd.f32 %v10934, %v10935
      %v10937 = vsel %vm3768, %v10904, 0.0
      %v10938 = vadd.f32 %v10936, %v10937
      %v10939 = vsel %vm3768, %v10905, 0.0
      %v10940 = vadd.f32 %v10938, %v10939
      %v10941 = vsel %vm3768, %v10906, 0.0
      %v10942 = vadd.f32 %v10940, %v10941
      %v10943 = vsel %vm3768, %v10907, 0.0
      %v10944 = vadd.f32 %v10942, %v10943
      %v10945 = vsel %vm3768, %v10908, 0.0
      %v10946 = vadd.f32 %v10944, %v10945
      %v10947 = vsel %vm3768, %v10909, 0.0
      %v10948 = vadd.f32 %v10946, %v10947
      %v10949 = vsel %vm3768, %v10910, 0.0
      %v10950 = vadd.f32 %v10948, %v10949
      %v10951 = vsel %vm3768, %v10911, 0.0
      %v10952 = vadd.f32 %v10950, %v10951
      %v10953 = vsel %vm3768, %v10912, 0.0
      %v10954 = vadd.f32 %v10952, %v10953
      %v10955 = vsel %vm3768, %v10913, 0.0
      %v10956 = vadd.f32 %v10954, %v10955
      %v10957 = vsel %vm3768, %v10914, 0.0
      %v10958 = vadd.f32 %v10956, %v10957
      %v10959 = vsel %vm3768, %v10915, 0.0
      %v10960 = vadd.f32 %v10958, %v10959
      %v10961 = vsel %vm3768, %v10916, 0.0
      %v10962 = vadd.f32 %v10960, %v10961
      %v10963 = vsel %vm3768, %v10917, 0.0
      %v10964 = vadd.f32 %v10962, %v10963
      %v10965 = vsel %vm3768, %v10918, 0.0
      %v10966 = vadd.f32 %v10964, %v10965
      %v10967 = vsel %vm3768, %v10919, 0.0
      %v10968 = vadd.f32 %v10966, %v10967
      %v10969 = vsel %vm3768, %v10920, 0.0
      %v10970 = vadd.f32 %v10968, %v10969
      %v10971 = vsel %vm3768, %v10921, 0.0
      %v10972 = vadd.f32 %v10970, %v10971
      %v10973 = vsel %vm3768, %v10922, 0.0
      %v10974 = vadd.f32 %v10972, %v10973
      %v10975 = vsel %vm3768, %v10923, 0.0
      %v10976 = vadd.f32 %v10974, %v10975
      %v10977 = vsel %vm3768, %v10924, 0.0
      %v10978 = vadd.f32 %v10976, %v10977
      %v10979 = vsel %vm3768, %v10925, 0.0
      %v10980 = vadd.f32 %v10978, %v10979
      %v10981 = vsel %vm3768, %v10926, 0.0
      %v10982 = vadd.f32 %v10980, %v10981
      %v10983 = vsel %vm3768, %v10927, 0.0
      %v10984 = vadd.f32 %v10982, %v10983
      %v10985 = vsel %vm3768, %v10928, 0.0
      %v10986 = vadd.f32 %v10984, %v10985
      %v10987 = vsel %vm3768, %v10929, 0.0
      %v10988 = vadd.f32 %v10986, %v10987
      %v10989 = vsel %vm3768, %v10930, 0.0
      %v10990 = vadd.f32 %v10988, %v10989
      %v10991 = vsel %vm3768, %v10931, 0.0
      %v10992 = vadd.f32 %v10990, %v10991
      %v10993 = vsel %vm3768, %v10932, 0.0
      %v10994 = vadd.f32 %v10992, %v10993
      %v10995 = vsel %vm3768, %v10933, 0.0
      %v10996 = vadd.f32 %v10994, %v10995
      %v10997 = vrot.slane %v10996, 4
      %v10998 = vadd.f32 %v10996, %v10997
      %v10999 = vrot.slane %v10998, 2
      %v11000 = vadd.f32 %v10998, %v10999
      %v11001 = vrot.slane %v11000, 1
      %v11002 = vadd.f32 %v11000, %v11001
      %v11003 = vmul.f32 %v11002, %v10868
      %v11004 = vadd.f32 %v11003, 1e-05
      %v11005 = vrsqrt.pop %v11004
      %v11006 = vmul.f32 %v10870, %v11005
      %v11007 = vmul.f32 %v10871, %v11005
      %v11008 = vmul.f32 %v10872, %v11005
      %v11009 = vmul.f32 %v10873, %v11005
      %v11010 = vmul.f32 %v10874, %v11005
      %v11011 = vmul.f32 %v10875, %v11005
      %v11012 = vmul.f32 %v10876, %v11005
      %v11013 = vmul.f32 %v10877, %v11005
      %v11014 = vmul.f32 %v10878, %v11005
      %v11015 = vmul.f32 %v10879, %v11005
      %v11016 = vmul.f32 %v10880, %v11005
      %v11017 = vmul.f32 %v10881, %v11005
      %v11018 = vmul.f32 %v10882, %v11005
      %v11019 = vmul.f32 %v10883, %v11005
      %v11020 = vmul.f32 %v10884, %v11005
      %v11021 = vmul.f32 %v10885, %v11005
      %v11022 = vmul.f32 %v10886, %v11005
      %v11023 = vmul.f32 %v10887, %v11005
      %v11024 = vmul.f32 %v10888, %v11005
      %v11025 = vmul.f32 %v10889, %v11005
      %v11026 = vmul.f32 %v10890, %v11005
      %v11027 = vmul.f32 %v10891, %v11005
      %v11028 = vmul.f32 %v10892, %v11005
      %v11029 = vmul.f32 %v10893, %v11005
      %v11030 = vmul.f32 %v10894, %v11005
      %v11031 = vmul.f32 %v10895, %v11005
      %v11032 = vmul.f32 %v10896, %v11005
      %v11033 = vmul.f32 %v10897, %v11005
      %v11034 = vmul.f32 %v10898, %v11005
      %v11035 = vmul.f32 %v10899, %v11005
      %v11036 = vmul.f32 %v10900, %v11005
      %v11037 = vmul.f32 %v10901, %v11005
      %vm11038 = vcmp.gt.f32.partialorder %v11006, 0.0
      %vm11039 = vcmp.gt.f32.partialorder %v11007, 0.0
      %vm11040 = vcmp.gt.f32.partialorder %v11008, 0.0
      %vm11041 = vcmp.gt.f32.partialorder %v11009, 0.0
      %vm11042 = vcmp.gt.f32.partialorder %v11010, 0.0
      %vm11043 = vcmp.gt.f32.partialorder %v11011, 0.0
      %vm11044 = vcmp.gt.f32.partialorder %v11012, 0.0
      %vm11045 = vcmp.gt.f32.partialorder %v11013, 0.0
      %vm11046 = vcmp.gt.f32.partialorder %v11014, 0.0
      %vm11047 = vcmp.gt.f32.partialorder %v11015, 0.0
      %vm11048 = vcmp.gt.f32.partialorder %v11016, 0.0
      %vm11049 = vcmp.gt.f32.partialorder %v11017, 0.0
      %vm11050 = vcmp.gt.f32.partialorder %v11018, 0.0
      %vm11051 = vcmp.gt.f32.partialorder %v11019, 0.0
      %vm11052 = vcmp.gt.f32.partialorder %v11020, 0.0
      %vm11053 = vcmp.gt.f32.partialorder %v11021, 0.0
      %vm11054 = vcmp.gt.f32.partialorder %v11022, 0.0
      %vm11055 = vcmp.gt.f32.partialorder %v11023, 0.0
      %vm11056 = vcmp.gt.f32.partialorder %v11024, 0.0
      %vm11057 = vcmp.gt.f32.partialorder %v11025, 0.0
      %vm11058 = vcmp.gt.f32.partialorder %v11026, 0.0
      %vm11059 = vcmp.gt.f32.partialorder %v11027, 0.0
      %vm11060 = vcmp.gt.f32.partialorder %v11028, 0.0
      %vm11061 = vcmp.gt.f32.partialorder %v11029, 0.0
      %vm11062 = vcmp.gt.f32.partialorder %v11030, 0.0
      %vm11063 = vcmp.gt.f32.partialorder %v11031, 0.0
      %vm11064 = vcmp.gt.f32.partialorder %v11032, 0.0
      %vm11065 = vcmp.gt.f32.partialorder %v11033, 0.0
      %vm11066 = vcmp.gt.f32.partialorder %v11034, 0.0
      %vm11067 = vcmp.gt.f32.partialorder %v11035, 0.0
      %vm11068 = vcmp.gt.f32.partialorder %v11036, 0.0
      %vm11069 = vcmp.gt.f32.partialorder %v11037, 0.0
      %v11070 = vmul.f32 %v11006, 0.2
      %v11071 = vmul.f32 %v11007, 0.2
      %v11072 = vmul.f32 %v11008, 0.2
      %v11073 = vmul.f32 %v11009, 0.2
      %v11074 = vmul.f32 %v11010, 0.2
      %v11075 = vmul.f32 %v11011, 0.2
      %v11076 = vmul.f32 %v11012, 0.2
      %v11077 = vmul.f32 %v11013, 0.2
      %v11078 = vmul.f32 %v11014, 0.2
      %v11079 = vmul.f32 %v11015, 0.2
      %v11080 = vmul.f32 %v11016, 0.2
      %v11081 = vmul.f32 %v11017, 0.2
      %v11082 = vmul.f32 %v11018, 0.2
      %v11083 = vmul.f32 %v11019, 0.2
      %v11084 = vmul.f32 %v11020, 0.2
      %v11085 = vmul.f32 %v11021, 0.2
      %v11086 = vmul.f32 %v11022, 0.2
      %v11087 = vmul.f32 %v11023, 0.2
      %v11088 = vmul.f32 %v11024, 0.2
      %v11089 = vmul.f32 %v11025, 0.2
      %v11090 = vmul.f32 %v11026, 0.2
      %v11091 = vmul.f32 %v11027, 0.2
      %v11092 = vmul.f32 %v11028, 0.2
      %v11093 = vmul.f32 %v11029, 0.2
      %v11094 = vmul.f32 %v11030, 0.2
      %v11095 = vmul.f32 %v11031, 0.2
      %v11096 = vmul.f32 %v11032, 0.2
      %v11097 = vmul.f32 %v11033, 0.2
      %v11098 = vmul.f32 %v11034, 0.2
      %v11099 = vmul.f32 %v11035, 0.2
      %v11100 = vmul.f32 %v11036, 0.2
      %v11101 = vmul.f32 %v11037, 0.2
      %v11102 = vsel %vm11038, %v11006, %v11070
      %v11103 = vsel %vm11039, %v11007, %v11071
      %v11104 = vsel %vm11040, %v11008, %v11072
      %v11105 = vsel %vm11041, %v11009, %v11073
      %v11106 = vsel %vm11042, %v11010, %v11074
      %v11107 = vsel %vm11043, %v11011, %v11075
      %v11108 = vsel %vm11044, %v11012, %v11076
      %v11109 = vsel %vm11045, %v11013, %v11077
      %v11110 = vsel %vm11046, %v11014, %v11078
      %v11111 = vsel %vm11047, %v11015, %v11079
      %v11112 = vsel %vm11048, %v11016, %v11080
      %v11113 = vsel %vm11049, %v11017, %v11081
      %v11114 = vsel %vm11050, %v11018, %v11082
      %v11115 = vsel %vm11051, %v11019, %v11083
      %v11116 = vsel %vm11052, %v11020, %v11084
      %v11117 = vsel %vm11053, %v11021, %v11085
      %v11118 = vsel %vm11054, %v11022, %v11086
      %v11119 = vsel %vm11055, %v11023, %v11087
      %v11120 = vsel %vm11056, %v11024, %v11088
      %v11121 = vsel %vm11057, %v11025, %v11089
      %v11122 = vsel %vm11058, %v11026, %v11090
      %v11123 = vsel %vm11059, %v11027, %v11091
      %v11124 = vsel %vm11060, %v11028, %v11092
      %v11125 = vsel %vm11061, %v11029, %v11093
      %v11126 = vsel %vm11062, %v11030, %v11094
      %v11127 = vsel %vm11063, %v11031, %v11095
      %v11128 = vsel %vm11064, %v11032, %v11096
      %v11129 = vsel %vm11065, %v11033, %v11097
      %v11130 = vsel %vm11066, %v11034, %v11098
      %v11131 = vsel %vm11067, %v11035, %v11099
      %v11132 = vsel %vm11068, %v11036, %v11100
      %v11133 = vsel %vm11069, %v11037, %v11101
      %11134 = vst.msk [vmem:[%s298] sm:$0xff] %vm3768, %v11102
      %11135 = vst.msk [vmem:[%s298 + $0x8] sm:$0xff] %vm3768, %v11103
      %11136 = vst.msk [vmem:[%s298 + $0x10] sm:$0xff] %vm3768, %v11104
      %11137 = vst.msk [vmem:[%s298 + $0x18] sm:$0xff] %vm3768, %v11105
      %11138 = vst.msk [vmem:[%s298 + $0x20] sm:$0xff] %vm3768, %v11106
      %11139 = vst.msk [vmem:[%s298 + $0x28] sm:$0xff] %vm3768, %v11107
      %11140 = vst.msk [vmem:[%s298 + $0x30] sm:$0xff] %vm3768, %v11108
      %11141 = vst.msk [vmem:[%s298 + $0x38] sm:$0xff] %vm3768, %v11109
      %11142 = vst.msk [vmem:[%s298 + $0x40] sm:$0xff] %vm3768, %v11110
      %11143 = vst.msk [vmem:[%s298 + $0x48] sm:$0xff] %vm3768, %v11111
      %11144 = vst.msk [vmem:[%s298 + $0x50] sm:$0xff] %vm3768, %v11112
      %11145 = vst.msk [vmem:[%s298 + $0x58] sm:$0xff] %vm3768, %v11113
      %11146 = vst.msk [vmem:[%s298 + $0x60] sm:$0xff] %vm3768, %v11114
      %11147 = vst.msk [vmem:[%s298 + $0x68] sm:$0xff] %vm3768, %v11115
      %11148 = vst.msk [vmem:[%s298 + $0x70] sm:$0xff] %vm3768, %v11116
      %11149 = vst.msk [vmem:[%s298 + $0x78] sm:$0xff] %vm3768, %v11117
      %11150 = vst.msk [vmem:[%s298 + $0x80] sm:$0xff] %vm3768, %v11118
      %11151 = vst.msk [vmem:[%s298 + $0x88] sm:$0xff] %vm3768, %v11119
      %11152 = vst.msk [vmem:[%s298 + $0x90] sm:$0xff] %vm3768, %v11120
      %11153 = vst.msk [vmem:[%s298 + $0x98] sm:$0xff] %vm3768, %v11121
      %11154 = vst.msk [vmem:[%s298 + $0xa0] sm:$0xff] %vm3768, %v11122
      %11155 = vst.msk [vmem:[%s298 + $0xa8] sm:$0xff] %vm3768, %v11123
      %11156 = vst.msk [vmem:[%s298 + $0xb0] sm:$0xff] %vm3768, %v11124
      %11157 = vst.msk [vmem:[%s298 + $0xb8] sm:$0xff] %vm3768, %v11125
      %11158 = vst.msk [vmem:[%s298 + $0xc0] sm:$0xff] %vm3768, %v11126
      %11159 = vst.msk [vmem:[%s298 + $0xc8] sm:$0xff] %vm3768, %v11127
      %11160 = vst.msk [vmem:[%s298 + $0xd0] sm:$0xff] %vm3768, %v11128
      %11161 = vst.msk [vmem:[%s298 + $0xd8] sm:$0xff] %vm3768, %v11129
      %11162 = vst.msk [vmem:[%s298 + $0xe0] sm:$0xff] %vm3768, %v11130
      %11163 = vst.msk [vmem:[%s298 + $0xe8] sm:$0xff] %vm3768, %v11131
      %11164 = vst.msk [vmem:[%s298 + $0xf0] sm:$0xff] %vm3768, %v11132
      %11165 = vst.msk [vmem:[%s298 + $0xf8] sm:$0xff] %vm3768, %v11133
      %p11166 = scmp.lt.s32.totalorder %s18, 1
      %s11167 = scalar_select %p11166, %s18, 1
      %s11168 = smul.addr %s11167, 32
      %s11169 = smul.addr %s11168, 8
      %s11170 = scalar_lea.vmem %s7, %s11169
      // Predicated region
      $region49: #{expanding_block.1} parent=47 // pred_check
        %p11171 = pneg %p193
      $region50: #{expanding_block.1} parent=47 // pred_check_branch
        %11173 = sbr.rel (%p11171) target = $region52
      $region51: #{expanding_block.1} parent=47 // pred_region
        _
      $region52: #{expanding_block.1} parent=47 // pred_fallthru
        _
    $region48: #{expanding_block.1} parent=5 // pred_fallthru
      _
    %p11174 = scmp.le.s32.totalorder 2, %s13
    // Predicated region
    $region53: #{expanding_block.1} parent=5 // pred_check
      %p11175 = pneg %p11174
    $region54: #{expanding_block.1} parent=5 // pred_check_branch
      %11177 = sbr.rel (%p11175) target = $region56
    $region55: #{expanding_block.1} parent=5 // pred_region
      %s11178 = ssub.s32 %s13, 2
      // Predicated region
      $region57: #{expanding_block.1} parent=55 // pred_check
        %p11179 = pneg %p199
      $region58: #{expanding_block.1} parent=55 // pred_check_branch
        %11181 = sbr.rel (%p11179) target = $region60
      $region59: #{expanding_block.1} parent=55 // pred_region
        %p11182 = scmp.lt.s32.totalorder %s19, 1
        %s11183 = scalar_select %p11182, %s19, 1
        %s11184 = smul.addr %s11183, 32
        %s11185 = smul.addr %s11184, 8
        %s11186 = scalar_lea.vmem %s7, %s11185
      $region60: #{expanding_block.1} parent=55 // pred_fallthru
        _
    $region56: #{expanding_block.1} parent=5 // pred_fallthru
      _
  $region6: #{expanding_block.1} parent=0 // loop_footer
    %s17 = sadd.s32 1, %s13
  $region7: #{expanding_block.1} parent=0 // loop_footer_branch
    %12 = sbr.rel target = $region3
  $region8: #{expanding_block.1} parent=0 // loop_exit
    _

</llo_original>
